<compile_context>
chip_gen: v6e
topology: v6e:2x2x1
jax: 0.10.0
libtpu: 0.0.40
codegen_flags: <defaults>
</compile_context>

<pallas_src>
import math

import numpy as np

import jax
import jax.numpy as jnp
from jax import lax
from jax.experimental import pallas as pl
from jax.experimental.pallas import tpu as pltpu

_VMEM_LIMIT = 32 * 1024 * 1024
_NEG_INF = -1e9


def _full_spec(shape):
    shape = tuple(shape)
    return pl.BlockSpec(shape, lambda *_: (0,) * len(shape))


# ------------------------------ Pallas kernels ------------------------------

def _gemm_bias_relu_kernel(x_ref, w_ref, b_ref, o_ref):
    """(M,K)bf16 @ (K,N)bf16 -> f32 acc, +bias, ReLU, cast to out dtype."""
    acc = jnp.dot(x_ref[...], w_ref[...], preferred_element_type=jnp.float32)
    o_ref[...] = jnp.maximum(acc + b_ref[...], 0.0).astype(o_ref.dtype)


def gemm_bias_relu(x, w, b, out_dtype=jnp.bfloat16):
    """Single-block GEMM + bias + ReLU (inputs are tiny; biggest-block rule)."""
    M, K = x.shape
    N = w.shape[1]
    return pl.pallas_call(
        _gemm_bias_relu_kernel,
        out_shape=jax.ShapeDtypeStruct((M, N), out_dtype),
        grid=(1,),
        in_specs=[_full_spec((M, K)), _full_spec((K, N)), _full_spec((1, N))],
        out_specs=_full_spec((M, N)),
        compiler_params=pltpu.CompilerParams(
            dimension_semantics=("arbitrary",),
            vmem_limit_bytes=_VMEM_LIMIT),
    )(x, w, b)


def _tail_kernel(y2_ref, w3_ref, b3_ref, w4_ref, b4_ref,
                 wfc1_ref, bfc1_ref, wfc2_ref, bfc2_ref, ss_ref, o_ref):
    """Fused conv3 + conv4 + fc1 + fc2 + per-action softmax (C51 head).

    y2_ref   : (B, 1600)      conv2 output, flattened (h, w, c) per batch.
    w3_ref   : (1600, 576)    conv3 expressed as a dense matrix (patch gather
                              folded into the zero-padded weight).
    w4_ref   : (576, 1024)    conv4 (1x1 output -> plain patch-ordered matrix).
    wfc2_ref : (512, A*Zp)    fc2 with atoms padded to Zp lanes per action.
    bfc2_ref : (1, A*Zp)      fc2 bias, -1e9 on pad lanes (masks the softmax).
    ss_ref   : (A*Zp, A*Zp)   block-ones grouping matrix (per-action sums).
    o_ref    : (B, A*Zp)      lane-dense atom distributions, f32.
    """
    # conv3 (dense) + ReLU
    h3 = jnp.dot(y2_ref[...], w3_ref[...], preferred_element_type=jnp.float32)
    h3 = jnp.maximum(h3 + b3_ref[...], 0.0).astype(jnp.bfloat16)          # (B, 576)
    # conv4 + ReLU
    feat = jnp.dot(h3, w4_ref[...], preferred_element_type=jnp.float32)
    feat = jnp.maximum(feat + b4_ref[...], 0.0).astype(jnp.bfloat16)      # (B, 1024)
    # fc1 + ReLU
    h = jnp.dot(feat, wfc1_ref[...], preferred_element_type=jnp.float32)
    h = jnp.maximum(h + bfc1_ref[...], 0.0).astype(jnp.bfloat16)          # (B, 512)
    # fc2 (all actions in one lane-aligned GEMM) + grouped softmax over atoms.
    logits = jnp.dot(h, wfc2_ref[...],
                     preferred_element_type=jnp.float32) + bfc2_ref[...]  # (B, A*Zp)
    logits = logits - jnp.max(logits, axis=-1, keepdims=True)             # row shift (per-group valid)
    e = jnp.exp(logits)                                                   # pad lanes -> 0
    denom = jnp.dot(e, ss_ref[...], preferred_element_type=jnp.float32)   # per-group sum, broadcast
    o_ref[...] = e * pl.reciprocal(denom + 1e-30, approx=True)


def fused_tail(y2_flat, kp):
    B = y2_flat.shape[0]
    A, Zp = kp["num_actions"], kp["atoms_padded"]
    args = (y2_flat, kp["w3d"], kp["b3d"], kp["w4d"], kp["b4"],
            kp["wfc1"], kp["bfc1"], kp["wfc2"], kp["bfc2"], kp["ss"])
    return pl.pallas_call(
        _tail_kernel,
        out_shape=jax.ShapeDtypeStruct((B, A * Zp), jnp.float32),
        grid=(1,),
        in_specs=[_full_spec(a.shape) for a in args],
        out_specs=_full_spec((B, A * Zp)),
        compiler_params=pltpu.CompilerParams(
            dimension_semantics=("arbitrary",),
            vmem_limit_bytes=_VMEM_LIMIT),
    )(*args)


# -------------------------------- glue (JAX) --------------------------------

def _im2col_strided(x, k, s):
    """x: (B,H,W,C) -> (B*OH*OW, k*k*C), patch element order (kh, kw, c)."""
    B, H, W, C = x.shape
    OH = (H - k) // s + 1
    OW = (W - k) // s + 1
    taps = []
    for di in range(k):
        for dj in range(k):
            taps.append(x[:, di:di + (OH - 1) * s + 1:s,
                          dj:dj + (OW - 1) * s + 1:s, :])      # (B, OH, OW, C)
    cols = jnp.concatenate(taps, axis=-1)                      # (B, OH, OW, k*k*C)
    return cols.reshape(B * OH * OW, k * k * C), (B, OH, OW)


def categorical_dqn_forward(x_nchw, kp):
    """Forward pass using the packed (relayouted, bf16) kernel params."""
    x = jnp.transpose(x_nchw, (0, 2, 3, 1)).astype(jnp.bfloat16)   # NHWC, bf16

    # conv1 / conv2: im2col (XLA) + single-block Pallas GEMM (bias + ReLU fused)
    c1, (B, H1, W1) = _im2col_strided(x, 8, 4)                      # (B*144, 256)
    y1 = gemm_bias_relu(c1, kp["w1"], kp["b1"]).reshape(B, H1, W1, 32)
    c2, (_, H2, W2) = _im2col_strided(y1, 4, 2)                     # (B*25, 512)
    y2 = gemm_bias_relu(c2, kp["w2"], kp["b2"])                     # (B*25, 64)

    # Flatten per batch (pure metadata reshape in XLA: row b*25+p, col c
    # maps row-major to (b, p*64+c)), then the fully fused tail.
    assert H2 == 5 and W2 == 5, "dense conv3 matrix was built for a 5x5 input"
    y2_flat = y2.reshape(B, H2 * W2 * 64)                           # (B, 1600)
    out = fused_tail(y2_flat, kp)                                   # (B, A*Zp) f32

    A, Z, Zp = kp["num_actions"], kp["num_atoms"], kp["atoms_padded"]
    return out.reshape(B, A, Zp)[:, :, :Z]                          # (B, A, Z)


# ----------------------------- parameter setup ------------------------------

def kaiming_normal(key, shape, fan_in):
    # nn.init.kaiming_normal_(nonlinearity='relu', mode='fan_in'): std = sqrt(2/fan_in)
    return jax.random.normal(key, shape, jnp.float32) * math.sqrt(2.0 / fan_in)


def init_raw_params(key, in_ch, num_actions, num_atoms, feat_size):
    """PyTorch-layout f32 parameters (also used by the XLA reference)."""
    ks = jax.random.split(key, 6)
    conv_cfg = [(in_ch, 32, 8, 4), (32, 64, 4, 2), (64, 64, 3, 1), (64, 1024, 3, 1)]
    convs = []
    for i, (ci, co, k, s) in enumerate(conv_cfg):
        w = kaiming_normal(ks[i], (co, ci, k, k), ci * k * k)
        convs.append((w, jnp.zeros((co,), jnp.float32), s))          # bias.fill_(0)
    wfc1 = kaiming_normal(ks[4], (512, feat_size), feat_size)
    wfc2 = kaiming_normal(ks[5], (num_actions * num_atoms, 512), 512)
    return dict(convs=convs,
                wfc1=wfc1, bfc1=jnp.zeros((512,), jnp.float32),
                wfc2=wfc2, bfc2=jnp.zeros((num_actions * num_atoms,), jnp.float32),
                num_actions=num_actions, num_atoms=num_atoms)


def pack_params(raw):
    """Precompute every weight relayout / pad / bf16 cast once (out of forward)."""
    (w1, b1, _), (w2, b2, _), (w3, b3, _), (w4, b4, _) = raw["convs"]
    A, Z = raw["num_actions"], raw["num_atoms"]
    Zp = 64 if Z <= 64 else int(math.ceil(Z / 128)) * 128   # atoms padded per action

    def conv_w2d(w):      # OIHW -> (KH*KW*InC, OutC), patch order (kh, kw, c)
        co, ci, kh, kw = w.shape
        return jnp.transpose(w, (2, 3, 1, 0)).reshape(kh * kw * ci, co).astype(jnp.bfloat16)

    # conv3 as a dense (5*5*64, 3*3*64) matrix: patch gather folded into weights.
    w3_np = np.asarray(jax.device_get(w3))                  # (64, 64, 3, 3) OIHW
    IH = IW = 5
    OH = OW = 3
    C3 = 64
    W3d = np.zeros((IH * IW * C3, OH * OW * C3), np.float32)
    for oi in range(OH):
        for oj in range(OW):
            for di in range(3):
                for dj in range(3):
                    i, j = oi + di, oj + dj
                    W3d[(i * IW + j) * C3:(i * IW + j + 1) * C3,
                        (oi * OW + oj) * C3:(oi * OW + oj + 1) * C3] = w3_np[:, :, di, dj].T
    b3d = np.tile(np.asarray(jax.device_get(b3)), OH * OW).reshape(1, -1)   # (1, 576)

    # fc2 fused across actions: atoms padded to Zp lanes, pad bias = -1e9.
    wfc2_np = np.asarray(jax.device_get(raw["wfc2"]))       # (A*Z, 512)
    bfc2_np = np.asarray(jax.device_get(raw["bfc2"]))
    wfc2p = np.zeros((512, A * Zp), np.float32)
    bfc2p = np.full((1, A * Zp), _NEG_INF, np.float32)
    for a in range(A):
        wfc2p[:, a * Zp:a * Zp + Z] = wfc2_np[a * Z:(a + 1) * Z, :].T
        bfc2p[0, a * Zp:a * Zp + Z] = bfc2_np[a * Z:(a + 1) * Z]

    # Block-ones grouping matrix: (e @ ss)[b, a*Zp+z] = sum_z' e[b, a*Zp+z'].
    ss = np.kron(np.eye(A, dtype=np.float32), np.ones((Zp, Zp), np.float32))

    return dict(
        w1=conv_w2d(w1), b1=b1.reshape(1, -1),
        w2=conv_w2d(w2), b2=b2.reshape(1, -1),
        w3d=jnp.asarray(W3d, jnp.bfloat16), b3d=jnp.asarray(b3d, jnp.float32),
        w4d=conv_w2d(w4), b4=b4.reshape(1, -1),
        wfc1=raw["wfc1"].T.astype(jnp.bfloat16), bfc1=raw["bfc1"].reshape(1, -1),
        wfc2=jnp.asarray(wfc2p, jnp.bfloat16), bfc2=jnp.asarray(bfc2p, jnp.float32),
        ss=jnp.asarray(ss, jnp.float32),
        num_actions=A, num_atoms=Z, atoms_padded=Zp,
    )


# --------------------------- all-XLA f32 reference ---------------------------

def reference_forward(x_nchw, raw):
    x = x_nchw
    for w, b, s in raw["convs"]:
        x = lax.conv_general_dilated(x, w, (s, s), "VALID",
                                     dimension_numbers=("NCHW", "OIHW", "NCHW"))
        x = jax.nn.relu(x + b.reshape(1, -1, 1, 1))
    B = x.shape[0]
    feat = x.reshape(B, -1)                                    # NCHW flatten
    h = jax.nn.relu(feat @ raw["wfc1"].T + raw["bfc1"])
    logits = h @ raw["wfc2"].T + raw["bfc2"]
    A, Z = raw["num_actions"], raw["num_atoms"]
    return jax.nn.softmax(logits.reshape(-1, Z), axis=1).reshape(B, A, Z)


# ----------------------------------- main ------------------------------------

if __name__ == "__main__":
    key = jax.random.PRNGKey(0)
    kx, kparam = jax.random.split(key)

    # Smallest spatial size the conv stack (k8s4, k4s2, k3s1, k3s1) accepts:
    # 52 -> 12 -> 5 -> 3 -> 1, so feat_size = 1024 (matches _feature_size()).
    B, C, H, W = 2, 4, 52, 52
    num_actions, num_atoms = 6, 51
    feat_size = 1024

    x = jax.random.normal(kx, (B, C, H, W), jnp.float32)
    raw = init_raw_params(kparam, C, num_actions, num_atoms, feat_size)
    kp = pack_params(raw)

    fwd = jax.jit(lambda inp: categorical_dqn_forward(inp, kp))
    q_dist = jax.block_until_ready(fwd(x))
    assert q_dist.shape == (B, num_actions, num_atoms) and q_dist.dtype == jnp.float32

    # Validate the bf16 Pallas path against the all-XLA f32 reference
    # (relaxed tolerance for bf16 MXU operands; softmax epilogue is f32).
    ref = jax.block_until_ready(jax.jit(lambda inp: reference_forward(inp, raw))(x))
    max_err = float(jnp.max(jnp.abs(q_dist - ref)))
    sum_err = float(jnp.max(jnp.abs(jnp.sum(q_dist, axis=-1) - 1.0)))
    assert max_err < 5e-2, f"mismatch vs f32 reference: {max_err}"
    assert sum_err < 1e-2, f"atom distributions do not sum to 1: {sum_err}"

    # TODO(synk): NoisyLinear / use_mem / TrjMemory / LSTM branches and the
    # support/offset buffers (used only in act()/projection, not forward) are
    # intentionally omitted from this forward path.
    print("KERNEL_OK")
</pallas_src>

<mosaic_0001>
module attributes {stable_mosaic.version = 11 : i64} {
  func.func @_gemm_bias_relu_kernel(%arg0: i32, %arg1: memref<288x256xbf16, #tpu.memory_space<vmem>>, %arg2: memref<256x32xbf16, #tpu.memory_space<vmem>>, %arg3: memref<1x32xf32, #tpu.memory_space<vmem>>, %arg4: memref<288x32xbf16, #tpu.memory_space<vmem>>) attributes {dimension_semantics = [#tpu.dimension_semantics<arbitrary>], iteration_bounds = array<i64: 1>, scalar_prefetch = 0 : i64, scratch_operands = 0 : i64, tpu.core_type = #tpu.core_type<tc>, window_params = [{pipeline_mode = #tpu.pipeline_mode<synchronous>, transform_indices = @transform_0, window_bounds = array<i64: 288, 256>}, {pipeline_mode = #tpu.pipeline_mode<synchronous>, transform_indices = @transform_1, window_bounds = array<i64: 256, 32>}, {pipeline_mode = #tpu.pipeline_mode<synchronous>, transform_indices = @transform_2, window_bounds = array<i64: 1, 32>}, {pipeline_mode = #tpu.pipeline_mode<synchronous>, transform_indices = @transform_3, window_bounds = array<i64: 288, 32>}]} {
    %c0 = arith.constant 0 : index
    %c0_0 = arith.constant 0 : index
    %0 = vector.load %arg1[%c0, %c0_0] : memref<288x256xbf16, #tpu.memory_space<vmem>>, vector<288x256xbf16>
    %c0_1 = arith.constant 0 : index
    %c0_2 = arith.constant 0 : index
    %1 = vector.load %arg2[%c0_1, %c0_2] : memref<256x32xbf16, #tpu.memory_space<vmem>>, vector<256x32xbf16>
    %cst = arith.constant dense<0.000000e+00> : vector<288x32xf32>
    %2 = tpu.matmul %0, %1, %cst {dimension_numbers = #tpu.dot_dimension_numbers<[1], [0], [0], [1], [0, 0, 1, 1], [], []>} : vector<288x256xbf16>, vector<256x32xbf16>, vector<288x32xf32> -> vector<288x32xf32>
    %c0_3 = arith.constant 0 : index
    %c0_4 = arith.constant 0 : index
    %3 = vector.load %arg3[%c0_3, %c0_4] : memref<1x32xf32, #tpu.memory_space<vmem>>, vector<1x32xf32>
    %4 = vector.broadcast %3 : vector<1x32xf32> to vector<288x32xf32>
    %5 = arith.addf %2, %4 : vector<288x32xf32>
    %cst_5 = arith.constant 0.000000e+00 : f32
    %6 = vector.broadcast %cst_5 : f32 to vector<288x32xf32>
    %7 = arith.maximumf %5, %6 : vector<288x32xf32>
    %8 = arith.truncf %7 : vector<288x32xf32> to vector<288x32xbf16>
    %c0_6 = arith.constant 0 : index
    %c0_7 = arith.constant 0 : index
    %9 = vector.load %arg4[%c0_6, %c0_7] : memref<288x32xbf16, #tpu.memory_space<vmem>>, vector<288x32xbf16>
    tpu.vector_store %arg4[%c0_6, %c0_7], %8 {strides = array<i32>} : memref<288x32xbf16, #tpu.memory_space<vmem>>, vector<288x32xbf16>,
    return
  }
  func.func @transform_0(%arg0: i32) -> (i32, i32) {
    %c0_i32 = arith.constant 0 : i32
    %c0_i32_0 = arith.constant 0 : i32
    %c0_i32_1 = arith.constant 0 : i32
    return %c0_i32, %c0_i32_0 : i32, i32
  }
  func.func @transform_1(%arg0: i32) -> (i32, i32) {
    %c0_i32 = arith.constant 0 : i32
    %c0_i32_0 = arith.constant 0 : i32
    %c0_i32_1 = arith.constant 0 : i32
    return %c0_i32, %c0_i32_0 : i32, i32
  }
  func.func @transform_2(%arg0: i32) -> (i32, i32) {
    %c0_i32 = arith.constant 0 : i32
    %c0_i32_0 = arith.constant 0 : i32
    %c0_i32_1 = arith.constant 0 : i32
    return %c0_i32, %c0_i32_0 : i32, i32
  }
  func.func @transform_3(%arg0: i32) -> (i32, i32) {
    %c0_i32 = arith.constant 0 : i32
    %c0_i32_0 = arith.constant 0 : i32
    %c0_i32_1 = arith.constant 0 : i32
    return %c0_i32, %c0_i32_0 : i32, i32
  }
}

module attributes {stable_mosaic.version = 11 : i64} {
  func.func @_gemm_bias_relu_kernel(%arg0: i32, %arg1: memref<50x512xbf16, #tpu.memory_space<vmem>>, %arg2: memref<512x64xbf16, #tpu.memory_space<vmem>>, %arg3: memref<1x64xf32, #tpu.memory_space<vmem>>, %arg4: memref<50x64xbf16, #tpu.memory_space<vmem>>) attributes {dimension_semantics = [#tpu.dimension_semantics<arbitrary>], iteration_bounds = array<i64: 1>, scalar_prefetch = 0 : i64, scratch_operands = 0 : i64, tpu.core_type = #tpu.core_type<tc>, window_params = [{pipeline_mode = #tpu.pipeline_mode<synchronous>, transform_indices = @transform_0, window_bounds = array<i64: 50, 512>}, {pipeline_mode = #tpu.pipeline_mode<synchronous>, transform_indices = @transform_1, window_bounds = array<i64: 512, 64>}, {pipeline_mode = #tpu.pipeline_mode<synchronous>, transform_indices = @transform_2, window_bounds = array<i64: 1, 64>}, {pipeline_mode = #tpu.pipeline_mode<synchronous>, transform_indices = @transform_3, window_bounds = array<i64: 50, 64>}]} {
    %c0 = arith.constant 0 : index
    %c0_0 = arith.constant 0 : index
    %0 = vector.load %arg1[%c0, %c0_0] : memref<50x512xbf16, #tpu.memory_space<vmem>>, vector<50x512xbf16>
    %c0_1 = arith.constant 0 : index
    %c0_2 = arith.constant 0 : index
    %1 = vector.load %arg2[%c0_1, %c0_2] : memref<512x64xbf16, #tpu.memory_space<vmem>>, vector<512x64xbf16>
    %cst = arith.constant dense<0.000000e+00> : vector<50x64xf32>
    %2 = tpu.matmul %0, %1, %cst {dimension_numbers = #tpu.dot_dimension_numbers<[1], [0], [0], [1], [0, 0, 1, 1], [], []>} : vector<50x512xbf16>, vector<512x64xbf16>, vector<50x64xf32> -> vector<50x64xf32>
    %c0_3 = arith.constant 0 : index
    %c0_4 = arith.constant 0 : index
    %3 = vector.load %arg3[%c0_3, %c0_4] : memref<1x64xf32, #tpu.memory_space<vmem>>, vector<1x64xf32>
    %4 = vector.broadcast %3 : vector<1x64xf32> to vector<50x64xf32>
    %5 = arith.addf %2, %4 : vector<50x64xf32>
    %cst_5 = arith.constant 0.000000e+00 : f32
    %6 = vector.broadcast %cst_5 : f32 to vector<50x64xf32>
    %7 = arith.maximumf %5, %6 : vector<50x64xf32>
    %8 = arith.truncf %7 : vector<50x64xf32> to vector<50x64xbf16>
    %c0_6 = arith.constant 0 : index
    %c0_7 = arith.constant 0 : index
    %9 = vector.load %arg4[%c0_6, %c0_7] : memref<50x64xbf16, #tpu.memory_space<vmem>>, vector<50x64xbf16>
    tpu.vector_store %arg4[%c0_6, %c0_7], %8 {strides = array<i32>} : memref<50x64xbf16, #tpu.memory_space<vmem>>, vector<50x64xbf16>,
    return
  }
  func.func @transform_0(%arg0: i32) -> (i32, i32) {
    %c0_i32 = arith.constant 0 : i32
    %c0_i32_0 = arith.constant 0 : i32
    %c0_i32_1 = arith.constant 0 : i32
    return %c0_i32, %c0_i32_0 : i32, i32
  }
  func.func @transform_1(%arg0: i32) -> (i32, i32) {
    %c0_i32 = arith.constant 0 : i32
    %c0_i32_0 = arith.constant 0 : i32
    %c0_i32_1 = arith.constant 0 : i32
    return %c0_i32, %c0_i32_0 : i32, i32
  }
  func.func @transform_2(%arg0: i32) -> (i32, i32) {
    %c0_i32 = arith.constant 0 : i32
    %c0_i32_0 = arith.constant 0 : i32
    %c0_i32_1 = arith.constant 0 : i32
    return %c0_i32, %c0_i32_0 : i32, i32
  }
  func.func @transform_3(%arg0: i32) -> (i32, i32) {
    %c0_i32 = arith.constant 0 : i32
    %c0_i32_0 = arith.constant 0 : i32
    %c0_i32_1 = arith.constant 0 : i32
    return %c0_i32, %c0_i32_0 : i32, i32
  }
}

module attributes {stable_mosaic.version = 11 : i64} {
  func.func @_tail_kernel(%arg0: i32, %arg1: memref<2x1600xbf16, #tpu.memory_space<vmem>>, %arg2: memref<1600x576xbf16, #tpu.memory_space<vmem>>, %arg3: memref<1x576xf32, #tpu.memory_space<vmem>>, %arg4: memref<576x1024xbf16, #tpu.memory_space<vmem>>, %arg5: memref<1x1024xf32, #tpu.memory_space<vmem>>, %arg6: memref<1024x512xbf16, #tpu.memory_space<vmem>>, %arg7: memref<1x512xf32, #tpu.memory_space<vmem>>, %arg8: memref<512x384xbf16, #tpu.memory_space<vmem>>, %arg9: memref<1x384xf32, #tpu.memory_space<vmem>>, %arg10: memref<384x384xf32, #tpu.memory_space<vmem>>, %arg11: memref<2x384xf32, #tpu.memory_space<vmem>>) attributes {dimension_semantics = [#tpu.dimension_semantics<arbitrary>], iteration_bounds = array<i64: 1>, scalar_prefetch = 0 : i64, scratch_operands = 0 : i64, tpu.core_type = #tpu.core_type<tc>, window_params = [{pipeline_mode = #tpu.pipeline_mode<synchronous>, transform_indices = @transform_0, window_bounds = array<i64: 2, 1600>}, {pipeline_mode = #tpu.pipeline_mode<synchronous>, transform_indices = @transform_1, window_bounds = array<i64: 1600, 576>}, {pipeline_mode = #tpu.pipeline_mode<synchronous>, transform_indices = @transform_2, window_bounds = array<i64: 1, 576>}, {pipeline_mode = #tpu.pipeline_mode<synchronous>, transform_indices = @transform_3, window_bounds = array<i64: 576, 1024>}, {pipeline_mode = #tpu.pipeline_mode<synchronous>, transform_indices = @transform_4, window_bounds = array<i64: 1, 1024>}, {pipeline_mode = #tpu.pipeline_mode<synchronous>, transform_indices = @transform_5, window_bounds = array<i64: 1024, 512>}, {pipeline_mode = #tpu.pipeline_mode<synchronous>, transform_indices = @transform_6, window_bounds = array<i64: 1, 512>}, {pipeline_mode = #tpu.pipeline_mode<synchronous>, transform_indices = @transform_7, window_bounds = array<i64: 512, 384>}, {pipeline_mode = #tpu.pipeline_mode<synchronous>, transform_indices = @transform_8, window_bounds = array<i64: 1, 384>}, {pipeline_mode = #tpu.pipeline_mode<synchronous>, transform_indices = @transform_9, window_bounds = array<i64: 384, 384>}, {pipeline_mode = #tpu.pipeline_mode<synchronous>, transform_indices = @transform_10, window_bounds = array<i64: 2, 384>}]} {
    %c0 = arith.constant 0 : index
    %c0_0 = arith.constant 0 : index
    %0 = vector.load %arg1[%c0, %c0_0] : memref<2x1600xbf16, #tpu.memory_space<vmem>>, vector<2x1600xbf16>
    %c0_1 = arith.constant 0 : index
    %c0_2 = arith.constant 0 : index
    %1 = vector.load %arg2[%c0_1, %c0_2] : memref<1600x576xbf16, #tpu.memory_space<vmem>>, vector<1600x576xbf16>
    %cst = arith.constant dense<0.000000e+00> : vector<2x576xf32>
    %2 = tpu.matmul %0, %1, %cst {dimension_numbers = #tpu.dot_dimension_numbers<[1], [0], [0], [1], [0, 0, 1, 1], [], []>} : vector<2x1600xbf16>, vector<1600x576xbf16>, vector<2x576xf32> -> vector<2x576xf32>
    %c0_3 = arith.constant 0 : index
    %c0_4 = arith.constant 0 : index
    %3 = vector.load %arg3[%c0_3, %c0_4] : memref<1x576xf32, #tpu.memory_space<vmem>>, vector<1x576xf32>
    %4 = vector.broadcast %3 : vector<1x576xf32> to vector<2x576xf32>
    %5 = arith.addf %2, %4 : vector<2x576xf32>
    %cst_5 = arith.constant 0.000000e+00 : f32
    %6 = vector.broadcast %cst_5 : f32 to vector<2x576xf32>
    %7 = arith.maximumf %5, %6 : vector<2x576xf32>
    %8 = arith.truncf %7 : vector<2x576xf32> to vector<2x576xbf16>
    %c0_6 = arith.constant 0 : index
    %c0_7 = arith.constant 0 : index
    %9 = vector.load %arg4[%c0_6, %c0_7] : memref<576x1024xbf16, #tpu.memory_space<vmem>>, vector<576x1024xbf16>
    %cst_8 = arith.constant dense<0.000000e+00> : vector<2x1024xf32>
    %10 = tpu.matmul %8, %9, %cst_8 {dimension_numbers = #tpu.dot_dimension_numbers<[1], [0], [0], [1], [0, 0, 1, 1], [], []>} : vector<2x576xbf16>, vector<576x1024xbf16>, vector<2x1024xf32> -> vector<2x1024xf32>
    %c0_9 = arith.constant 0 : index
    %c0_10 = arith.constant 0 : index
    %11 = vector.load %arg5[%c0_9, %c0_10] : memref<1x1024xf32, #tpu.memory_space<vmem>>, vector<1x1024xf32>
    %12 = vector.broadcast %11 : vector<1x1024xf32> to vector<2x1024xf32>
    %13 = arith.addf %10, %12 : vector<2x1024xf32>
    %cst_11 = arith.constant 0.000000e+00 : f32
    %14 = vector.broadcast %cst_11 : f32 to vector<2x1024xf32>
    %15 = arith.maximumf %13, %14 : vector<2x1024xf32>
    %16 = arith.truncf %15 : vector<2x1024xf32> to vector<2x1024xbf16>
    %c0_12 = arith.constant 0 : index
    %c0_13 = arith.constant 0 : index
    %17 = vector.load %arg6[%c0_12, %c0_13] : memref<1024x512xbf16, #tpu.memory_space<vmem>>, vector<1024x512xbf16>
    %cst_14 = arith.constant dense<0.000000e+00> : vector<2x512xf32>
    %18 = tpu.matmul %16, %17, %cst_14 {dimension_numbers = #tpu.dot_dimension_numbers<[1], [0], [0], [1], [0, 0, 1, 1], [], []>} : vector<2x1024xbf16>, vector<1024x512xbf16>, vector<2x512xf32> -> vector<2x512xf32>
    %c0_15 = arith.constant 0 : index
    %c0_16 = arith.constant 0 : index
    %19 = vector.load %arg7[%c0_15, %c0_16] : memref<1x512xf32, #tpu.memory_space<vmem>>, vector<1x512xf32>
    %20 = vector.broadcast %19 : vector<1x512xf32> to vector<2x512xf32>
    %21 = arith.addf %18, %20 : vector<2x512xf32>
    %cst_17 = arith.constant 0.000000e+00 : f32
    %22 = vector.broadcast %cst_17 : f32 to vector<2x512xf32>
    %23 = arith.maximumf %21, %22 : vector<2x512xf32>
    %24 = arith.truncf %23 : vector<2x512xf32> to vector<2x512xbf16>
    %c0_18 = arith.constant 0 : index
    %c0_19 = arith.constant 0 : index
    %25 = vector.load %arg8[%c0_18, %c0_19] : memref<512x384xbf16, #tpu.memory_space<vmem>>, vector<512x384xbf16>
    %cst_20 = arith.constant dense<0.000000e+00> : vector<2x384xf32>
    %26 = tpu.matmul %24, %25, %cst_20 {dimension_numbers = #tpu.dot_dimension_numbers<[1], [0], [0], [1], [0, 0, 1, 1], [], []>} : vector<2x512xbf16>, vector<512x384xbf16>, vector<2x384xf32> -> vector<2x384xf32>
    %c0_21 = arith.constant 0 : index
    %c0_22 = arith.constant 0 : index
    %27 = vector.load %arg9[%c0_21, %c0_22] : memref<1x384xf32, #tpu.memory_space<vmem>>, vector<1x384xf32>
    %28 = vector.broadcast %27 : vector<1x384xf32> to vector<2x384xf32>
    %29 = arith.addf %26, %28 : vector<2x384xf32>
    %cst_23 = arith.constant dense<0xFF800000> : vector<2xf32>
    %30 = vector.multi_reduction <maximumf>, %29, %cst_23 [1] : vector<2x384xf32> to vector<2xf32>
    %31 = vector.shape_cast %30 : vector<2xf32> to vector<2x1xf32>
    %32 = vector.broadcast %31 : vector<2x1xf32> to vector<2x384xf32>
    %33 = arith.subf %29, %32 : vector<2x384xf32>
    %34 = math.exp %33 : vector<2x384xf32>
    %c0_24 = arith.constant 0 : index
    %c0_25 = arith.constant 0 : index
    %35 = vector.load %arg10[%c0_24, %c0_25] : memref<384x384xf32, #tpu.memory_space<vmem>>, vector<384x384xf32>
    %cst_26 = arith.constant dense<0.000000e+00> : vector<2x384xf32>
    %36 = tpu.matmul %34, %35, %cst_26 {dimension_numbers = #tpu.dot_dimension_numbers<[1], [0], [0], [1], [0, 0, 1, 1], [], []>} : vector<2x384xf32>, vector<384x384xf32>, vector<2x384xf32> -> vector<2x384xf32>
    %cst_27 = arith.constant 1.000000e-30 : f32
    %37 = vector.broadcast %cst_27 : f32 to vector<2x384xf32>
    %38 = arith.addf %36, %37 : vector<2x384xf32>
    %39 = tpu.reciprocal %38 {approx = true} : vector<2x384xf32> -> vector<2x384xf32>
    %40 = arith.mulf %34, %39 : vector<2x384xf32>
    %c0_28 = arith.constant 0 : index
    %c0_29 = arith.constant 0 : index
    %41 = vector.load %arg11[%c0_28, %c0_29] : memref<2x384xf32, #tpu.memory_space<vmem>>, vector<2x384xf32>
    tpu.vector_store %arg11[%c0_28, %c0_29], %40 {strides = array<i32>} : memref<2x384xf32, #tpu.memory_space<vmem>>, vector<2x384xf32>,
    return
  }
  func.func @transform_0(%arg0: i32) -> (i32, i32) {
    %c0_i32 = arith.constant 0 : i32
    %c0_i32_0 = arith.constant 0 : i32
    %c0_i32_1 = arith.constant 0 : i32
    return %c0_i32, %c0_i32_0 : i32, i32
  }
  func.func @transform_1(%arg0: i32) -> (i32, i32) {
    %c0_i32 = arith.constant 0 : i32
    %c0_i32_0 = arith.constant 0 : i32
    %c0_i32_1 = arith.constant 0 : i32
    return %c0_i32, %c0_i32_0 : i32, i32
  }
  func.func @transform_2(%arg0: i32) -> (i32, i32) {
    %c0_i32 = arith.constant 0 : i32
    %c0_i32_0 = arith.constant 0 : i32
    %c0_i32_1 = arith.constant 0 : i32
    return %c0_i32, %c0_i32_0 : i32, i32
  }
  func.func @transform_3(%arg0: i32) -> (i32, i32) {
    %c0_i32 = arith.constant 0 : i32
    %c0_i32_0 = arith.constant 0 : i32
    %c0_i32_1 = arith.constant 0 : i32
    return %c0_i32, %c0_i32_0 : i32, i32
  }
  func.func @transform_4(%arg0: i32) -> (i32, i32) {
    %c0_i32 = arith.constant 0 : i32
    %c0_i32_0 = arith.constant 0 : i32
    %c0_i32_1 = arith.constant 0 : i32
    return %c0_i32, %c0_i32_0 : i32, i32
  }
  func.func @transform_5(%arg0: i32) -> (i32, i32) {
    %c0_i32 = arith.constant 0 : i32
    %c0_i32_0 = arith.constant 0 : i32
    %c0_i32_1 = arith.constant 0 : i32
    return %c0_i32, %c0_i32_0 : i32, i32
  }
  func.func @transform_6(%arg0: i32) -> (i32, i32) {
    %c0_i32 = arith.constant 0 : i32
    %c0_i32_0 = arith.constant 0 : i32
    %c0_i32_1 = arith.constant 0 : i32
    return %c0_i32, %c0_i32_0 : i32, i32
  }
  func.func @transform_7(%arg0: i32) -> (i32, i32) {
    %c0_i32 = arith.constant 0 : i32
    %c0_i32_0 = arith.constant 0 : i32
    %c0_i32_1 = arith.constant 0 : i32
    return %c0_i32, %c0_i32_0 : i32, i32
  }
  func.func @transform_8(%arg0: i32) -> (i32, i32) {
    %c0_i32 = arith.constant 0 : i32
    %c0_i32_0 = arith.constant 0 : i32
    %c0_i32_1 = arith.constant 0 : i32
    return %c0_i32, %c0_i32_0 : i32, i32
  }
  func.func @transform_9(%arg0: i32) -> (i32, i32) {
    %c0_i32 = arith.constant 0 : i32
    %c0_i32_0 = arith.constant 0 : i32
    %c0_i32_1 = arith.constant 0 : i32
    return %c0_i32, %c0_i32_0 : i32, i32
  }
  func.func @transform_10(%arg0: i32) -> (i32, i32) {
    %c0_i32 = arith.constant 0 : i32
    %c0_i32_0 = arith.constant 0 : i32
    %c0_i32_1 = arith.constant 0 : i32
    return %c0_i32, %c0_i32_0 : i32, i32
  }
}

</mosaic_0001>

<llo_original>
// kernel: _lambda_.3
$region0: #{_lambda_.3}
  #allocation0 [shape = 'u32[]', space=smem, size = 0x4, offset = 0x4, fixed_abs, tag = 'smem constant byte address 0x4 - core index']
  #allocation1 [shape = 'u32[144,128]{1,0:T(1,128)}', space=vmem, size = 0x12000, scoped, tag = 'internal scratch']
  %s0 = inlined_call_operand.vmem [shape: bf16[288,256], index: 0, kind: input, shape index: {}]
  %s1 = inlined_call_operand.vmem [shape: bf16[256,32], index: 1, kind: input, shape index: {}]
  %s2 = inlined_call_operand.vmem [shape: f32[1,32], index: 2, kind: input, shape index: {}]
  %s3 = inlined_call_operand.vmem [shape: bf16[288,32], index: 3, kind: output, shape index: {}]
  %s4 = sld [smem:[#allocation0]]
  $region22: #{_lambda_.3} parent=0
    _
  %s6 = ssub.s32 1, %s4
  %s7 = scalar_select 0, %s6, %s4
  // Predicated region
  $region2: #{_lambda_.3} parent=0 // pred_check
    _
  $region3: #{_lambda_.3} parent=0 // pred_check_branch
    %9 = sbr.rel (0) target = $region5
  $region4: #{_lambda_.3} parent=0 // pred_region
    _
  $region5: #{_lambda_.3} parent=0 // pred_fallthru
    _
  // Predicated region
  $region6: #{_lambda_.3} parent=0 // pred_check
    _
  $region7: #{_lambda_.3} parent=0 // pred_check_branch
    %11 = sbr.rel (0) target = $region9
  $region8: #{_lambda_.3} parent=0 // pred_region
    _
  $region9: #{_lambda_.3} parent=0 // pred_fallthru
    _
  // Predicated region
  $region10: #{_lambda_.3} parent=0 // pred_check
    _
  $region11: #{_lambda_.3} parent=0 // pred_check_branch
    %13 = sbr.rel (0) target = $region13
  $region12: #{_lambda_.3} parent=0 // pred_region
    _
  $region13: #{_lambda_.3} parent=0 // pred_fallthru
    _
  %v15 = vld [vmem:[%s0] sm:$0xff]
  %v16 = vld [vmem:[%s0 + $0x8] sm:$0xff]
  %v17 = vld [vmem:[%s0 + $0x10] sm:$0xff]
  %v18 = vld [vmem:[%s0 + $0x18] sm:$0xff]
  %v19 = vld [vmem:[%s0 + $0x20] sm:$0xff]
  %v20 = vld [vmem:[%s0 + $0x28] sm:$0xff]
  %v21 = vld [vmem:[%s0 + $0x30] sm:$0xff]
  %v22 = vld [vmem:[%s0 + $0x38] sm:$0xff]
  %v23 = vld [vmem:[%s0 + $0x40] sm:$0xff]
  %v24 = vld [vmem:[%s0 + $0x48] sm:$0xff]
  %v25 = vld [vmem:[%s0 + $0x50] sm:$0xff]
  %v26 = vld [vmem:[%s0 + $0x58] sm:$0xff]
  %v27 = vld [vmem:[%s0 + $0x60] sm:$0xff]
  %v28 = vld [vmem:[%s0 + $0x68] sm:$0xff]
  %v29 = vld [vmem:[%s0 + $0x70] sm:$0xff]
  %v30 = vld [vmem:[%s0 + $0x78] sm:$0xff]
  %v31 = vld [vmem:[%s0 + $0x80] sm:$0xff]
  %v32 = vld [vmem:[%s0 + $0x88] sm:$0xff]
  %v33 = vld [vmem:[%s0 + $0x90] sm:$0xff]
  %v34 = vld [vmem:[%s0 + $0x98] sm:$0xff]
  %v35 = vld [vmem:[%s0 + $0xa0] sm:$0xff]
  %v36 = vld [vmem:[%s0 + $0xa8] sm:$0xff]
  %v37 = vld [vmem:[%s0 + $0xb0] sm:$0xff]
  %v38 = vld [vmem:[%s0 + $0xb8] sm:$0xff]
  %v39 = vld [vmem:[%s0 + $0xc0] sm:$0xff]
  %v40 = vld [vmem:[%s0 + $0xc8] sm:$0xff]
  %v41 = vld [vmem:[%s0 + $0xd0] sm:$0xff]
  %v42 = vld [vmem:[%s0 + $0xd8] sm:$0xff]
  %v43 = vld [vmem:[%s0 + $0xe0] sm:$0xff]
  %v44 = vld [vmem:[%s0 + $0xe8] sm:$0xff]
  %v45 = vld [vmem:[%s0 + $0xf0] sm:$0xff]
  %v46 = vld [vmem:[%s0 + $0xf8] sm:$0xff]
  %v47 = vld [vmem:[%s0 + $0x100] sm:$0xff]
  %v48 = vld [vmem:[%s0 + $0x108] sm:$0xff]
  %v49 = vld [vmem:[%s0 + $0x110] sm:$0xff]
  %v50 = vld [vmem:[%s0 + $0x118] sm:$0xff]
  %v51 = vld [vmem:[%s1] sm:$0xf]
  %v52 = vld [vmem:[%s1 + $0x4] sm:$0xf]
  %v53 = vld [vmem:[%s1 + $0x8] sm:$0xf]
  %v54 = vld [vmem:[%s1 + $0xc] sm:$0xf]
  %v55 = vld [vmem:[%s1 + $0x10] sm:$0xf]
  %v56 = vld [vmem:[%s1 + $0x14] sm:$0xf]
  %v57 = vld [vmem:[%s1 + $0x18] sm:$0xf]
  %v58 = vld [vmem:[%s1 + $0x1c] sm:$0xf]
  %v59 = vld [vmem:[%s1 + $0x20] sm:$0xf]
  %v60 = vld [vmem:[%s1 + $0x24] sm:$0xf]
  %v61 = vld [vmem:[%s1 + $0x28] sm:$0xf]
  %v62 = vld [vmem:[%s1 + $0x2c] sm:$0xf]
  %v63 = vld [vmem:[%s1 + $0x30] sm:$0xf]
  %v64 = vld [vmem:[%s1 + $0x34] sm:$0xf]
  %v65 = vld [vmem:[%s1 + $0x38] sm:$0xf]
  %v66 = vld [vmem:[%s1 + $0x3c] sm:$0xf]
  %v67 = vld [vmem:[%s1 + $0x40] sm:$0xf]
  %v68 = vld [vmem:[%s1 + $0x44] sm:$0xf]
  %v69 = vld [vmem:[%s1 + $0x48] sm:$0xf]
  %v70 = vld [vmem:[%s1 + $0x4c] sm:$0xf]
  %v71 = vld [vmem:[%s1 + $0x50] sm:$0xf]
  %v72 = vld [vmem:[%s1 + $0x54] sm:$0xf]
  %v73 = vld [vmem:[%s1 + $0x58] sm:$0xf]
  %v74 = vld [vmem:[%s1 + $0x5c] sm:$0xf]
  %v75 = vld [vmem:[%s1 + $0x60] sm:$0xf]
  %v76 = vld [vmem:[%s1 + $0x64] sm:$0xf]
  %v77 = vld [vmem:[%s1 + $0x68] sm:$0xf]
  %v78 = vld [vmem:[%s1 + $0x6c] sm:$0xf]
  %v79 = vld [vmem:[%s1 + $0x70] sm:$0xf]
  %v80 = vld [vmem:[%s1 + $0x74] sm:$0xf]
  %v81 = vld [vmem:[%s1 + $0x78] sm:$0xf]
  %v82 = vld [vmem:[%s1 + $0x7c] sm:$0xf]
  %v83 = vld [vmem:[%s2] sm:$0x1]
  %v85 = vlaneseq
  %v86 = vshrl.u32 %v85, 7
  %v87 = vsub.s32 0, %v86
  %v88 = vrot.slane %v83, %v87
  %v126 = vunpack.c.l.b16 %v15
  %v127 = vunpack.c.h.b16 %v15
  %v128 = vunpack.c.l.b16 %v16
  %v129 = vunpack.c.h.b16 %v16
  %v130 = vunpack.c.l.b16 %v17
  %v131 = vunpack.c.h.b16 %v17
  %v132 = vunpack.c.l.b16 %v18
  %v133 = vunpack.c.h.b16 %v18
  %v134 = vunpack.c.l.b16 %v19
  %v135 = vunpack.c.h.b16 %v19
  %v136 = vunpack.c.l.b16 %v20
  %v137 = vunpack.c.h.b16 %v20
  %v138 = vunpack.c.l.b16 %v21
  %v139 = vunpack.c.h.b16 %v21
  %v140 = vunpack.c.l.b16 %v22
  %v141 = vunpack.c.h.b16 %v22
  %v142 = vunpack.c.l.b16 %v23
  %v143 = vunpack.c.h.b16 %v23
  %v144 = vunpack.c.l.b16 %v24
  %v145 = vunpack.c.h.b16 %v24
  %v146 = vunpack.c.l.b16 %v25
  %v147 = vunpack.c.h.b16 %v25
  %v148 = vunpack.c.l.b16 %v26
  %v149 = vunpack.c.h.b16 %v26
  %v150 = vunpack.c.l.b16 %v27
  %v151 = vunpack.c.h.b16 %v27
  %v152 = vunpack.c.l.b16 %v28
  %v153 = vunpack.c.h.b16 %v28
  %v154 = vunpack.c.l.b16 %v29
  %v155 = vunpack.c.h.b16 %v29
  %v156 = vunpack.c.l.b16 %v30
  %v157 = vunpack.c.h.b16 %v30
  %v158 = vunpack.c.l.b16 %v31
  %v159 = vunpack.c.h.b16 %v31
  %v160 = vunpack.c.l.b16 %v32
  %v161 = vunpack.c.h.b16 %v32
  %v162 = vunpack.c.l.b16 %v33
  %v163 = vunpack.c.h.b16 %v33
  %v164 = vunpack.c.l.b16 %v34
  %v165 = vunpack.c.h.b16 %v34
  %v166 = vunpack.c.l.b16 %v35
  %v167 = vunpack.c.h.b16 %v35
  %v168 = vunpack.c.l.b16 %v36
  %v169 = vunpack.c.h.b16 %v36
  %v170 = vunpack.c.l.b16 %v37
  %v171 = vunpack.c.h.b16 %v37
  %v172 = vunpack.c.l.b16 %v38
  %v173 = vunpack.c.h.b16 %v38
  %v174 = vunpack.c.l.b16 %v39
  %v175 = vunpack.c.h.b16 %v39
  %v176 = vunpack.c.l.b16 %v40
  %v177 = vunpack.c.h.b16 %v40
  %v178 = vunpack.c.l.b16 %v41
  %v179 = vunpack.c.h.b16 %v41
  %v180 = vunpack.c.l.b16 %v42
  %v181 = vunpack.c.h.b16 %v42
  %v182 = vunpack.c.l.b16 %v43
  %v183 = vunpack.c.h.b16 %v43
  %v184 = vunpack.c.l.b16 %v44
  %v185 = vunpack.c.h.b16 %v44
  %v186 = vunpack.c.l.b16 %v45
  %v187 = vunpack.c.h.b16 %v45
  %v188 = vunpack.c.l.b16 %v46
  %v189 = vunpack.c.h.b16 %v46
  %v190 = vunpack.c.l.b16 %v47
  %v191 = vunpack.c.h.b16 %v47
  %v192 = vunpack.c.l.b16 %v48
  %v193 = vunpack.c.h.b16 %v48
  %v194 = vunpack.c.l.b16 %v49
  %v195 = vunpack.c.h.b16 %v49
  %v196 = vunpack.c.l.b16 %v50
  %v197 = vunpack.c.h.b16 %v50
  %v198 = vpack.c.b16 %v128, %v126
  %v199 = vpack.c.b16 %v129, %v127
  %v200 = vpack.c.b16 %v132, %v130
  %v201 = vpack.c.b16 %v133, %v131
  %v202 = vpack.c.b16 %v136, %v134
  %v203 = vpack.c.b16 %v137, %v135
  %v204 = vpack.c.b16 %v140, %v138
  %v205 = vpack.c.b16 %v141, %v139
  %v206 = vpack.c.b16 %v144, %v142
  %v207 = vpack.c.b16 %v145, %v143
  %v208 = vpack.c.b16 %v148, %v146
  %v209 = vpack.c.b16 %v149, %v147
  %v210 = vpack.c.b16 %v152, %v150
  %v211 = vpack.c.b16 %v153, %v151
  %v212 = vpack.c.b16 %v156, %v154
  %v213 = vpack.c.b16 %v157, %v155
  %v214 = vpack.c.b16 %v160, %v158
  %v215 = vpack.c.b16 %v161, %v159
  %v216 = vpack.c.b16 %v164, %v162
  %v217 = vpack.c.b16 %v165, %v163
  %v218 = vpack.c.b16 %v168, %v166
  %v219 = vpack.c.b16 %v169, %v167
  %v220 = vpack.c.b16 %v172, %v170
  %v221 = vpack.c.b16 %v173, %v171
  %v222 = vpack.c.b16 %v176, %v174
  %v223 = vpack.c.b16 %v177, %v175
  %v224 = vpack.c.b16 %v180, %v178
  %v225 = vpack.c.b16 %v181, %v179
  %v226 = vpack.c.b16 %v184, %v182
  %v227 = vpack.c.b16 %v185, %v183
  %v228 = vpack.c.b16 %v188, %v186
  %v229 = vpack.c.b16 %v189, %v187
  %v230 = vpack.c.b16 %v192, %v190
  %v231 = vpack.c.b16 %v193, %v191
  %v232 = vpack.c.b16 %v196, %v194
  %v233 = vpack.c.b16 %v197, %v195
  %v302 = vunpack.c.l.b16 %v51
  %v303 = vunpack.c.l.b16 %v52
  %v304 = vunpack.c.l.b16 %v53
  %v305 = vunpack.c.l.b16 %v54
  %v306 = vunpack.c.l.b16 %v55
  %v307 = vunpack.c.l.b16 %v56
  %v308 = vunpack.c.l.b16 %v57
  %v309 = vunpack.c.l.b16 %v58
  %v310 = vunpack.c.l.b16 %v59
  %v311 = vunpack.c.l.b16 %v60
  %v312 = vunpack.c.l.b16 %v61
  %v313 = vunpack.c.l.b16 %v62
  %v314 = vunpack.c.l.b16 %v63
  %v315 = vunpack.c.l.b16 %v64
  %v316 = vunpack.c.l.b16 %v65
  %v317 = vunpack.c.l.b16 %v66
  %v318 = vunpack.c.l.b16 %v67
  %v319 = vunpack.c.l.b16 %v68
  %v320 = vunpack.c.l.b16 %v69
  %v321 = vunpack.c.l.b16 %v70
  %v322 = vunpack.c.l.b16 %v71
  %v323 = vunpack.c.l.b16 %v72
  %v324 = vunpack.c.l.b16 %v73
  %v325 = vunpack.c.l.b16 %v74
  %v326 = vunpack.c.l.b16 %v75
  %v327 = vunpack.c.l.b16 %v76
  %v328 = vunpack.c.l.b16 %v77
  %v329 = vunpack.c.l.b16 %v78
  %v330 = vunpack.c.l.b16 %v79
  %v331 = vunpack.c.l.b16 %v80
  %v332 = vunpack.c.l.b16 %v81
  %v333 = vunpack.c.l.b16 %v82
  %v334 = vpack.c.b16 %v303, %v302
  %v335 = vpack.c.b16 %v305, %v304
  %v336 = vpack.c.b16 %v307, %v306
  %v337 = vpack.c.b16 %v309, %v308
  %v338 = vpack.c.b16 %v311, %v310
  %v339 = vpack.c.b16 %v313, %v312
  %v340 = vpack.c.b16 %v315, %v314
  %v341 = vpack.c.b16 %v317, %v316
  %v342 = vpack.c.b16 %v319, %v318
  %v343 = vpack.c.b16 %v321, %v320
  %v344 = vpack.c.b16 %v323, %v322
  %v345 = vpack.c.b16 %v325, %v324
  %v346 = vpack.c.b16 %v327, %v326
  %v347 = vpack.c.b16 %v329, %v328
  %v348 = vpack.c.b16 %v331, %v330
  %v349 = vpack.c.b16 %v333, %v332
  %366 = vmatprep.subr.bf16.mxu0 0
  %367 = vmatpush1.bf16.msra.mxu0 %v341
  %368 = vmatprep.subr.bf16.mxu0 0
  %369 = vmatpush1.bf16.msra.mxu0 %v340
  %370 = vmatprep.subr.bf16.mxu0 0
  %371 = vmatpush1.bf16.msra.mxu0 %v339
  %372 = vmatprep.subr.bf16.mxu0 0
  %373 = vmatpush1.bf16.msra.mxu0 %v338
  %374 = vmatprep.subr.bf16.mxu0 0
  %375 = vmatpush1.bf16.msra.mxu0 %v337
  %376 = vmatprep.subr.bf16.mxu0 0
  %377 = vmatpush1.bf16.msra.mxu0 %v336
  %378 = vmatprep.subr.bf16.mxu0 0
  %379 = vmatpush1.bf16.msra.mxu0 %v335
  %380 = vmatprep.subr.bf16.mxu0 0
  %381 = vmatpush1.bf16.msra.mxu0 %v334
  %382 = vmatprep.subr.bf16.mxu0 0
  %383 = vmatpush2.bf16.msra.mxu0 %v349
  %384 = vmatprep.subr.bf16.mxu0 0
  %385 = vmatpush2.bf16.msra.mxu0 %v348
  %386 = vmatprep.subr.bf16.mxu0 0
  %387 = vmatpush2.bf16.msra.mxu0 %v347
  %388 = vmatprep.subr.bf16.mxu0 0
  %389 = vmatpush2.bf16.msra.mxu0 %v346
  %390 = vmatprep.subr.bf16.mxu0 0
  %391 = vmatpush2.bf16.msra.mxu0 %v345
  %392 = vmatprep.subr.bf16.mxu0 0
  %393 = vmatpush2.bf16.msra.mxu0 %v344
  %394 = vmatprep.subr.bf16.mxu0 0
  %395 = vmatpush2.bf16.msra.mxu0 %v343
  %396 = vmatprep.subr.bf16.mxu0 0
  %397 = vmatpush2.bf16.msra.mxu0 %v342
  %398 = vmatprep.mubr.bf16.mxu0 %v199
  %399 = vmatmul.mubr.bf16.gmra.mxu0 %v198
  %v400 = vpop.f32.mrf.mxu0
  %v401 = vadd.f32 %v88, %v400
  %v402 = vpop.f32.mrf.mxu0
  %v403 = vpop.f32.mrf.mxu0
  %v404 = vadd.f32 %v88, %v403
  %v405 = vpop.f32.mrf.mxu0
  %406 = vmatprep.mubr.bf16.mxu0 %v201
  %407 = vmatmul.mubr.bf16.gmra.mxu0 %v200
  %v408 = vpop.f32.mrf.mxu0
  %v409 = vadd.f32 %v88, %v408
  %v410 = vpop.f32.mrf.mxu0
  %v411 = vpop.f32.mrf.mxu0
  %v412 = vadd.f32 %v88, %v411
  %v413 = vpop.f32.mrf.mxu0
  %414 = vmatprep.mubr.bf16.mxu0 %v203
  %415 = vmatmul.mubr.bf16.gmra.mxu0 %v202
  %v416 = vpop.f32.mrf.mxu0
  %v417 = vadd.f32 %v88, %v416
  %v418 = vpop.f32.mrf.mxu0
  %v419 = vpop.f32.mrf.mxu0
  %v420 = vadd.f32 %v88, %v419
  %v421 = vpop.f32.mrf.mxu0
  %422 = vmatprep.mubr.bf16.mxu0 %v205
  %423 = vmatmul.mubr.bf16.gmra.mxu0 %v204
  %v424 = vpop.f32.mrf.mxu0
  %v425 = vadd.f32 %v88, %v424
  %v426 = vpop.f32.mrf.mxu0
  %v427 = vpop.f32.mrf.mxu0
  %v428 = vadd.f32 %v88, %v427
  %v429 = vpop.f32.mrf.mxu0
  %430 = vmatprep.mubr.bf16.mxu0 %v207
  %431 = vmatmul.mubr.bf16.gmra.mxu0 %v206
  %v432 = vpop.f32.mrf.mxu0
  %v433 = vadd.f32 %v88, %v432
  %v434 = vpop.f32.mrf.mxu0
  %v435 = vpop.f32.mrf.mxu0
  %v436 = vadd.f32 %v88, %v435
  %v437 = vpop.f32.mrf.mxu0
  %438 = vmatprep.mubr.bf16.mxu0 %v209
  %439 = vmatmul.mubr.bf16.gmra.mxu0 %v208
  %v440 = vpop.f32.mrf.mxu0
  %v441 = vadd.f32 %v88, %v440
  %v442 = vpop.f32.mrf.mxu0
  %v443 = vpop.f32.mrf.mxu0
  %v444 = vadd.f32 %v88, %v443
  %v445 = vpop.f32.mrf.mxu0
  %446 = vmatprep.mubr.bf16.mxu0 %v211
  %447 = vmatmul.mubr.bf16.gmra.mxu0 %v210
  %v448 = vpop.f32.mrf.mxu0
  %v449 = vadd.f32 %v88, %v448
  %v450 = vpop.f32.mrf.mxu0
  %v451 = vpop.f32.mrf.mxu0
  %v452 = vadd.f32 %v88, %v451
  %v453 = vpop.f32.mrf.mxu0
  %454 = vmatprep.mubr.bf16.mxu0 %v213
  %455 = vmatmul.mubr.bf16.gmra.mxu0 %v212
  %v456 = vpop.f32.mrf.mxu0
  %v457 = vadd.f32 %v88, %v456
  %v458 = vpop.f32.mrf.mxu0
  %v459 = vpop.f32.mrf.mxu0
  %v460 = vadd.f32 %v88, %v459
  %v461 = vpop.f32.mrf.mxu0
  %462 = vmatprep.mubr.bf16.mxu0 %v215
  %463 = vmatmul.mubr.bf16.gmra.mxu0 %v214
  %v464 = vpop.f32.mrf.mxu0
  %v465 = vadd.f32 %v88, %v464
  %v466 = vpop.f32.mrf.mxu0
  %v467 = vpop.f32.mrf.mxu0
  %v468 = vadd.f32 %v88, %v467
  %v469 = vpop.f32.mrf.mxu0
  %470 = vmatprep.mubr.bf16.mxu0 %v217
  %471 = vmatmul.mubr.bf16.gmra.mxu0 %v216
  %v472 = vpop.f32.mrf.mxu0
  %v473 = vadd.f32 %v88, %v472
  %v474 = vpop.f32.mrf.mxu0
  %v475 = vpop.f32.mrf.mxu0
  %v476 = vadd.f32 %v88, %v475
  %v477 = vpop.f32.mrf.mxu0
  %478 = vmatprep.mubr.bf16.mxu0 %v219
  %479 = vmatmul.mubr.bf16.gmra.mxu0 %v218
  %v480 = vpop.f32.mrf.mxu0
  %v481 = vadd.f32 %v88, %v480
  %v482 = vpop.f32.mrf.mxu0
  %v483 = vpop.f32.mrf.mxu0
  %v484 = vadd.f32 %v88, %v483
  %v485 = vpop.f32.mrf.mxu0
  %486 = vmatprep.mubr.bf16.mxu0 %v221
  %487 = vmatmul.mubr.bf16.gmra.mxu0 %v220
  %v488 = vpop.f32.mrf.mxu0
  %v489 = vadd.f32 %v88, %v488
  %v490 = vpop.f32.mrf.mxu0
  %v491 = vpop.f32.mrf.mxu0
  %v492 = vadd.f32 %v88, %v491
  %v493 = vpop.f32.mrf.mxu0
  %494 = vmatprep.mubr.bf16.mxu0 %v223
  %495 = vmatmul.mubr.bf16.gmra.mxu0 %v222
  %v496 = vpop.f32.mrf.mxu0
  %v497 = vadd.f32 %v88, %v496
  %v498 = vpop.f32.mrf.mxu0
  %v499 = vpop.f32.mrf.mxu0
  %v500 = vadd.f32 %v88, %v499
  %v501 = vpop.f32.mrf.mxu0
  %502 = vmatprep.mubr.bf16.mxu0 %v225
  %503 = vmatmul.mubr.bf16.gmra.mxu0 %v224
  %v504 = vpop.f32.mrf.mxu0
  %v505 = vadd.f32 %v88, %v504
  %v506 = vpop.f32.mrf.mxu0
  %v507 = vpop.f32.mrf.mxu0
  %v508 = vadd.f32 %v88, %v507
  %v509 = vpop.f32.mrf.mxu0
  %510 = vmatprep.mubr.bf16.mxu0 %v227
  %511 = vmatmul.mubr.bf16.gmra.mxu0 %v226
  %v512 = vpop.f32.mrf.mxu0
  %v513 = vadd.f32 %v88, %v512
  %v514 = vpop.f32.mrf.mxu0
  %v515 = vpop.f32.mrf.mxu0
  %v516 = vadd.f32 %v88, %v515
  %v517 = vpop.f32.mrf.mxu0
  %518 = vmatprep.mubr.bf16.mxu0 %v229
  %519 = vmatmul.mubr.bf16.gmra.mxu0 %v228
  %v520 = vpop.f32.mrf.mxu0
  %v521 = vadd.f32 %v88, %v520
  %v522 = vpop.f32.mrf.mxu0
  %v523 = vpop.f32.mrf.mxu0
  %v524 = vadd.f32 %v88, %v523
  %v525 = vpop.f32.mrf.mxu0
  %526 = vmatprep.mubr.bf16.mxu0 %v231
  %527 = vmatmul.mubr.bf16.gmra.mxu0 %v230
  %v528 = vpop.f32.mrf.mxu0
  %v529 = vadd.f32 %v88, %v528
  %v530 = vpop.f32.mrf.mxu0
  %v531 = vpop.f32.mrf.mxu0
  %v532 = vadd.f32 %v88, %v531
  %v533 = vpop.f32.mrf.mxu0
  %534 = vmatprep.mubr.bf16.mxu0 %v233
  %535 = vmatmul.mubr.bf16.gmra.mxu0 %v232
  %v536 = vpop.f32.mrf.mxu0
  %v537 = vadd.f32 %v88, %v536
  %v538 = vpop.f32.mrf.mxu0
  %v539 = vpop.f32.mrf.mxu0
  %v540 = vadd.f32 %v88, %v539
  %v541 = vpop.f32.mrf.mxu0
  %542 = vdwg.mxu0
  %v543 = vmax.f32 %v401, 0.0
  %v544 = vmax.f32 %v404, 0.0
  %v545 = vmax.f32 %v409, 0.0
  %v546 = vmax.f32 %v412, 0.0
  %v547 = vmax.f32 %v417, 0.0
  %v548 = vmax.f32 %v420, 0.0
  %v549 = vmax.f32 %v425, 0.0
  %v550 = vmax.f32 %v428, 0.0
  %v551 = vmax.f32 %v433, 0.0
  %v552 = vmax.f32 %v436, 0.0
  %v553 = vmax.f32 %v441, 0.0
  %v554 = vmax.f32 %v444, 0.0
  %v555 = vmax.f32 %v449, 0.0
  %v556 = vmax.f32 %v452, 0.0
  %v557 = vmax.f32 %v457, 0.0
  %v558 = vmax.f32 %v460, 0.0
  %v559 = vmax.f32 %v465, 0.0
  %v560 = vmax.f32 %v468, 0.0
  %v561 = vmax.f32 %v473, 0.0
  %v562 = vmax.f32 %v476, 0.0
  %v563 = vmax.f32 %v481, 0.0
  %v564 = vmax.f32 %v484, 0.0
  %v565 = vmax.f32 %v489, 0.0
  %v566 = vmax.f32 %v492, 0.0
  %v567 = vmax.f32 %v497, 0.0
  %v568 = vmax.f32 %v500, 0.0
  %v569 = vmax.f32 %v505, 0.0
  %v570 = vmax.f32 %v508, 0.0
  %v571 = vmax.f32 %v513, 0.0
  %v572 = vmax.f32 %v516, 0.0
  %v573 = vmax.f32 %v521, 0.0
  %v574 = vmax.f32 %v524, 0.0
  %v575 = vmax.f32 %v529, 0.0
  %v576 = vmax.f32 %v532, 0.0
  %v577 = vmax.f32 %v537, 0.0
  %v578 = vmax.f32 %v540, 0.0
  %v579 = vpack.c.bf16 %v544, %v543
  %v580 = vpack.c.bf16 %v546, %v545
  %v581 = vpack.c.bf16 %v548, %v547
  %v582 = vpack.c.bf16 %v550, %v549
  %v583 = vpack.c.bf16 %v552, %v551
  %v584 = vpack.c.bf16 %v554, %v553
  %v585 = vpack.c.bf16 %v556, %v555
  %v586 = vpack.c.bf16 %v558, %v557
  %v587 = vpack.c.bf16 %v560, %v559
  %v588 = vpack.c.bf16 %v562, %v561
  %v589 = vpack.c.bf16 %v564, %v563
  %v590 = vpack.c.bf16 %v566, %v565
  %v591 = vpack.c.bf16 %v568, %v567
  %v592 = vpack.c.bf16 %v570, %v569
  %v593 = vpack.c.bf16 %v572, %v571
  %v594 = vpack.c.bf16 %v574, %v573
  %v595 = vpack.c.bf16 %v576, %v575
  %v596 = vpack.c.bf16 %v578, %v577
  %v615 = vunpack.c.l.b16 %v579
  %v616 = vunpack.c.h.b16 %v579
  %v617 = vunpack.c.l.b16 %v580
  %v618 = vunpack.c.h.b16 %v580
  %v619 = vunpack.c.l.b16 %v581
  %v620 = vunpack.c.h.b16 %v581
  %v621 = vunpack.c.l.b16 %v582
  %v622 = vunpack.c.h.b16 %v582
  %v623 = vunpack.c.l.b16 %v583
  %v624 = vunpack.c.h.b16 %v583
  %v625 = vunpack.c.l.b16 %v584
  %v626 = vunpack.c.h.b16 %v584
  %v627 = vunpack.c.l.b16 %v585
  %v628 = vunpack.c.h.b16 %v585
  %v629 = vunpack.c.l.b16 %v586
  %v630 = vunpack.c.h.b16 %v586
  %v631 = vunpack.c.l.b16 %v587
  %v632 = vunpack.c.h.b16 %v587
  %v633 = vunpack.c.l.b16 %v588
  %v634 = vunpack.c.h.b16 %v588
  %v635 = vunpack.c.l.b16 %v589
  %v636 = vunpack.c.h.b16 %v589
  %v637 = vunpack.c.l.b16 %v590
  %v638 = vunpack.c.h.b16 %v590
  %v639 = vunpack.c.l.b16 %v591
  %v640 = vunpack.c.h.b16 %v591
  %v641 = vunpack.c.l.b16 %v592
  %v642 = vunpack.c.h.b16 %v592
  %v643 = vunpack.c.l.b16 %v593
  %v644 = vunpack.c.h.b16 %v593
  %v645 = vunpack.c.l.b16 %v594
  %v646 = vunpack.c.h.b16 %v594
  %v647 = vunpack.c.l.b16 %v595
  %v648 = vunpack.c.h.b16 %v595
  %v649 = vunpack.c.l.b16 %v596
  %v650 = vunpack.c.h.b16 %v596
  %v651 = vpack.c.b16 %v615, %v615
  %v652 = vpack.c.b16 %v616, %v616
  %v653 = vpack.c.b16 %v617, %v617
  %v654 = vpack.c.b16 %v618, %v618
  %v655 = vpack.c.b16 %v619, %v619
  %v656 = vpack.c.b16 %v620, %v620
  %v657 = vpack.c.b16 %v621, %v621
  %v658 = vpack.c.b16 %v622, %v622
  %v659 = vpack.c.b16 %v623, %v623
  %v660 = vpack.c.b16 %v624, %v624
  %v661 = vpack.c.b16 %v625, %v625
  %v662 = vpack.c.b16 %v626, %v626
  %v663 = vpack.c.b16 %v627, %v627
  %v664 = vpack.c.b16 %v628, %v628
  %v665 = vpack.c.b16 %v629, %v629
  %v666 = vpack.c.b16 %v630, %v630
  %v667 = vpack.c.b16 %v631, %v631
  %v668 = vpack.c.b16 %v632, %v632
  %v669 = vpack.c.b16 %v633, %v633
  %v670 = vpack.c.b16 %v634, %v634
  %v671 = vpack.c.b16 %v635, %v635
  %v672 = vpack.c.b16 %v636, %v636
  %v673 = vpack.c.b16 %v637, %v637
  %v674 = vpack.c.b16 %v638, %v638
  %v675 = vpack.c.b16 %v639, %v639
  %v676 = vpack.c.b16 %v640, %v640
  %v677 = vpack.c.b16 %v641, %v641
  %v678 = vpack.c.b16 %v642, %v642
  %v679 = vpack.c.b16 %v643, %v643
  %v680 = vpack.c.b16 %v644, %v644
  %v681 = vpack.c.b16 %v645, %v645
  %v682 = vpack.c.b16 %v646, %v646
  %v683 = vpack.c.b16 %v647, %v647
  %v684 = vpack.c.b16 %v648, %v648
  %v685 = vpack.c.b16 %v649, %v649
  %v686 = vpack.c.b16 %v650, %v650
  %vm723 = vcmask 257024
  %724 = vst.msk [vmem:[%s3] sm:$0xf] %vm723, %v651
  %725 = vst.msk [vmem:[%s3 + $0x4] sm:$0xf] %vm723, %v652
  %726 = vst.msk [vmem:[%s3 + $0x8] sm:$0xf] %vm723, %v653
  %727 = vst.msk [vmem:[%s3 + $0xc] sm:$0xf] %vm723, %v654
  %728 = vst.msk [vmem:[%s3 + $0x10] sm:$0xf] %vm723, %v655
  %729 = vst.msk [vmem:[%s3 + $0x14] sm:$0xf] %vm723, %v656
  %730 = vst.msk [vmem:[%s3 + $0x18] sm:$0xf] %vm723, %v657
  %731 = vst.msk [vmem:[%s3 + $0x1c] sm:$0xf] %vm723, %v658
  %732 = vst.msk [vmem:[%s3 + $0x20] sm:$0xf] %vm723, %v659
  %733 = vst.msk [vmem:[%s3 + $0x24] sm:$0xf] %vm723, %v660
  %734 = vst.msk [vmem:[%s3 + $0x28] sm:$0xf] %vm723, %v661
  %735 = vst.msk [vmem:[%s3 + $0x2c] sm:$0xf] %vm723, %v662
  %736 = vst.msk [vmem:[%s3 + $0x30] sm:$0xf] %vm723, %v663
  %737 = vst.msk [vmem:[%s3 + $0x34] sm:$0xf] %vm723, %v664
  %738 = vst.msk [vmem:[%s3 + $0x38] sm:$0xf] %vm723, %v665
  %739 = vst.msk [vmem:[%s3 + $0x3c] sm:$0xf] %vm723, %v666
  %740 = vst.msk [vmem:[%s3 + $0x40] sm:$0xf] %vm723, %v667
  %741 = vst.msk [vmem:[%s3 + $0x44] sm:$0xf] %vm723, %v668
  %742 = vst.msk [vmem:[%s3 + $0x48] sm:$0xf] %vm723, %v669
  %743 = vst.msk [vmem:[%s3 + $0x4c] sm:$0xf] %vm723, %v670
  %744 = vst.msk [vmem:[%s3 + $0x50] sm:$0xf] %vm723, %v671
  %745 = vst.msk [vmem:[%s3 + $0x54] sm:$0xf] %vm723, %v672
  %746 = vst.msk [vmem:[%s3 + $0x58] sm:$0xf] %vm723, %v673
  %747 = vst.msk [vmem:[%s3 + $0x5c] sm:$0xf] %vm723, %v674
  %748 = vst.msk [vmem:[%s3 + $0x60] sm:$0xf] %vm723, %v675
  %749 = vst.msk [vmem:[%s3 + $0x64] sm:$0xf] %vm723, %v676
  %750 = vst.msk [vmem:[%s3 + $0x68] sm:$0xf] %vm723, %v677
  %751 = vst.msk [vmem:[%s3 + $0x6c] sm:$0xf] %vm723, %v678
  %752 = vst.msk [vmem:[%s3 + $0x70] sm:$0xf] %vm723, %v679
  %753 = vst.msk [vmem:[%s3 + $0x74] sm:$0xf] %vm723, %v680
  %754 = vst.msk [vmem:[%s3 + $0x78] sm:$0xf] %vm723, %v681
  %755 = vst.msk [vmem:[%s3 + $0x7c] sm:$0xf] %vm723, %v682
  %756 = vst.msk [vmem:[%s3 + $0x80] sm:$0xf] %vm723, %v683
  %757 = vst.msk [vmem:[%s3 + $0x84] sm:$0xf] %vm723, %v684
  %758 = vst.msk [vmem:[%s3 + $0x88] sm:$0xf] %vm723, %v685
  %759 = vst.msk [vmem:[%s3 + $0x8c] sm:$0xf] %vm723, %v686
  // Predicated region
  $region14: #{_lambda_.3} parent=0 // pred_check
    _
  $region15: #{_lambda_.3} parent=0 // pred_check_branch
    %761 = sbr.rel (0) target = $region17
  $region16: #{_lambda_.3} parent=0 // pred_region
    _
  $region17: #{_lambda_.3} parent=0 // pred_fallthru
    _
  // Predicated region
  $region18: #{_lambda_.3} parent=0 // pred_check
    _
  $region19: #{_lambda_.3} parent=0 // pred_check_branch
    %763 = sbr.rel (0) target = $region21
  $region20: #{_lambda_.3} parent=0 // pred_region
    _
  $region21: #{_lambda_.3} parent=0 // pred_fallthru
    _

// kernel: _lambda_.4
$region0: #{_lambda_.4}
  #allocation0 [shape = 'u32[]', space=smem, size = 0x4, offset = 0x4, fixed_abs, tag = 'smem constant byte address 0x4 - core index']
  #allocation1 [shape = 'u32[144,128]{1,0:T(1,128)}', space=vmem, size = 0x12000, scoped, tag = 'internal scratch']
  %s0 = inlined_call_operand.vmem [shape: bf16[50,512], index: 0, kind: input, shape index: {}]
  %s1 = inlined_call_operand.vmem [shape: bf16[512,64], index: 1, kind: input, shape index: {}]
  %s2 = inlined_call_operand.vmem [shape: f32[1,64], index: 2, kind: input, shape index: {}]
  %s3 = inlined_call_operand.vmem [shape: bf16[50,64], index: 3, kind: output, shape index: {}]
  %s4 = sld [smem:[#allocation0]]
  $region22: #{_lambda_.4} parent=0
    _
  %s6 = ssub.s32 1, %s4
  %s7 = scalar_select 0, %s6, %s4
  // Predicated region
  $region2: #{_lambda_.4} parent=0 // pred_check
    _
  $region3: #{_lambda_.4} parent=0 // pred_check_branch
    %9 = sbr.rel (0) target = $region5
  $region4: #{_lambda_.4} parent=0 // pred_region
    _
  $region5: #{_lambda_.4} parent=0 // pred_fallthru
    _
  // Predicated region
  $region6: #{_lambda_.4} parent=0 // pred_check
    _
  $region7: #{_lambda_.4} parent=0 // pred_check_branch
    %11 = sbr.rel (0) target = $region9
  $region8: #{_lambda_.4} parent=0 // pred_region
    _
  $region9: #{_lambda_.4} parent=0 // pred_fallthru
    _
  // Predicated region
  $region10: #{_lambda_.4} parent=0 // pred_check
    _
  $region11: #{_lambda_.4} parent=0 // pred_check_branch
    %13 = sbr.rel (0) target = $region13
  $region12: #{_lambda_.4} parent=0 // pred_region
    _
  $region13: #{_lambda_.4} parent=0 // pred_fallthru
    _
  %v15 = vld [vmem:[%s0] sm:$0xff]
  %v16 = vld [vmem:[%s0 + $0x8] sm:$0xff]
  %v17 = vld [vmem:[%s0 + $0x10] sm:$0xff]
  %v18 = vld [vmem:[%s0 + $0x18] sm:$0xff]
  %v19 = vld [vmem:[%s0 + $0x20] sm:$0xff]
  %v20 = vld [vmem:[%s0 + $0x28] sm:$0xff]
  %v21 = vld [vmem:[%s0 + $0x30] sm:$0xff]
  %v22 = vld [vmem:[%s0 + $0x38] sm:$0xff]
  %v23 = vld [vmem:[%s0 + $0x40] sm:$0xff]
  %v24 = vld [vmem:[%s0 + $0x48] sm:$0xff]
  %v25 = vld [vmem:[%s0 + $0x50] sm:$0xff]
  %v26 = vld [vmem:[%s0 + $0x58] sm:$0xff]
  %v27 = vld [vmem:[%s0 + $0x60] sm:$0x11]
  %v28 = vld [vmem:[%s0 + $0x68] sm:$0x11]
  %v29 = vld [vmem:[%s1] sm:$0xf]
  %v30 = vld [vmem:[%s1 + $0x4] sm:$0xf]
  %v31 = vld [vmem:[%s1 + $0x8] sm:$0xf]
  %v32 = vld [vmem:[%s1 + $0xc] sm:$0xf]
  %v33 = vld [vmem:[%s1 + $0x10] sm:$0xf]
  %v34 = vld [vmem:[%s1 + $0x14] sm:$0xf]
  %v35 = vld [vmem:[%s1 + $0x18] sm:$0xf]
  %v36 = vld [vmem:[%s1 + $0x1c] sm:$0xf]
  %v37 = vld [vmem:[%s1 + $0x20] sm:$0xf]
  %v38 = vld [vmem:[%s1 + $0x24] sm:$0xf]
  %v39 = vld [vmem:[%s1 + $0x28] sm:$0xf]
  %v40 = vld [vmem:[%s1 + $0x2c] sm:$0xf]
  %v41 = vld [vmem:[%s1 + $0x30] sm:$0xf]
  %v42 = vld [vmem:[%s1 + $0x34] sm:$0xf]
  %v43 = vld [vmem:[%s1 + $0x38] sm:$0xf]
  %v44 = vld [vmem:[%s1 + $0x3c] sm:$0xf]
  %v45 = vld [vmem:[%s1 + $0x40] sm:$0xf]
  %v46 = vld [vmem:[%s1 + $0x44] sm:$0xf]
  %v47 = vld [vmem:[%s1 + $0x48] sm:$0xf]
  %v48 = vld [vmem:[%s1 + $0x4c] sm:$0xf]
  %v49 = vld [vmem:[%s1 + $0x50] sm:$0xf]
  %v50 = vld [vmem:[%s1 + $0x54] sm:$0xf]
  %v51 = vld [vmem:[%s1 + $0x58] sm:$0xf]
  %v52 = vld [vmem:[%s1 + $0x5c] sm:$0xf]
  %v53 = vld [vmem:[%s1 + $0x60] sm:$0xf]
  %v54 = vld [vmem:[%s1 + $0x64] sm:$0xf]
  %v55 = vld [vmem:[%s1 + $0x68] sm:$0xf]
  %v56 = vld [vmem:[%s1 + $0x6c] sm:$0xf]
  %v57 = vld [vmem:[%s1 + $0x70] sm:$0xf]
  %v58 = vld [vmem:[%s1 + $0x74] sm:$0xf]
  %v59 = vld [vmem:[%s1 + $0x78] sm:$0xf]
  %v60 = vld [vmem:[%s1 + $0x7c] sm:$0xf]
  %v61 = vld [vmem:[%s1 + $0x80] sm:$0xf]
  %v62 = vld [vmem:[%s1 + $0x84] sm:$0xf]
  %v63 = vld [vmem:[%s1 + $0x88] sm:$0xf]
  %v64 = vld [vmem:[%s1 + $0x8c] sm:$0xf]
  %v65 = vld [vmem:[%s1 + $0x90] sm:$0xf]
  %v66 = vld [vmem:[%s1 + $0x94] sm:$0xf]
  %v67 = vld [vmem:[%s1 + $0x98] sm:$0xf]
  %v68 = vld [vmem:[%s1 + $0x9c] sm:$0xf]
  %v69 = vld [vmem:[%s1 + $0xa0] sm:$0xf]
  %v70 = vld [vmem:[%s1 + $0xa4] sm:$0xf]
  %v71 = vld [vmem:[%s1 + $0xa8] sm:$0xf]
  %v72 = vld [vmem:[%s1 + $0xac] sm:$0xf]
  %v73 = vld [vmem:[%s1 + $0xb0] sm:$0xf]
  %v74 = vld [vmem:[%s1 + $0xb4] sm:$0xf]
  %v75 = vld [vmem:[%s1 + $0xb8] sm:$0xf]
  %v76 = vld [vmem:[%s1 + $0xbc] sm:$0xf]
  %v77 = vld [vmem:[%s1 + $0xc0] sm:$0xf]
  %v78 = vld [vmem:[%s1 + $0xc4] sm:$0xf]
  %v79 = vld [vmem:[%s1 + $0xc8] sm:$0xf]
  %v80 = vld [vmem:[%s1 + $0xcc] sm:$0xf]
  %v81 = vld [vmem:[%s1 + $0xd0] sm:$0xf]
  %v82 = vld [vmem:[%s1 + $0xd4] sm:$0xf]
  %v83 = vld [vmem:[%s1 + $0xd8] sm:$0xf]
  %v84 = vld [vmem:[%s1 + $0xdc] sm:$0xf]
  %v85 = vld [vmem:[%s1 + $0xe0] sm:$0xf]
  %v86 = vld [vmem:[%s1 + $0xe4] sm:$0xf]
  %v87 = vld [vmem:[%s1 + $0xe8] sm:$0xf]
  %v88 = vld [vmem:[%s1 + $0xec] sm:$0xf]
  %v89 = vld [vmem:[%s1 + $0xf0] sm:$0xf]
  %v90 = vld [vmem:[%s1 + $0xf4] sm:$0xf]
  %v91 = vld [vmem:[%s1 + $0xf8] sm:$0xf]
  %v92 = vld [vmem:[%s1 + $0xfc] sm:$0xf]
  %v93 = vld [vmem:[%s2] sm:$0x1]
  %v95 = vlaneseq
  %v96 = vshrl.u32 %v95, 7
  %v97 = vsub.s32 0, %v96
  %v98 = vrot.slane %v93, %v97
  %v114 = vunpack.c.l.b16 %v15
  %v115 = vunpack.c.h.b16 %v15
  %v116 = vunpack.c.l.b16 %v16
  %v117 = vunpack.c.h.b16 %v16
  %v118 = vunpack.c.l.b16 %v17
  %v119 = vunpack.c.h.b16 %v17
  %v120 = vunpack.c.l.b16 %v18
  %v121 = vunpack.c.h.b16 %v18
  %v122 = vunpack.c.l.b16 %v19
  %v123 = vunpack.c.h.b16 %v19
  %v124 = vunpack.c.l.b16 %v20
  %v125 = vunpack.c.h.b16 %v20
  %v126 = vunpack.c.l.b16 %v21
  %v127 = vunpack.c.h.b16 %v21
  %v128 = vunpack.c.l.b16 %v22
  %v129 = vunpack.c.h.b16 %v22
  %v130 = vunpack.c.l.b16 %v23
  %v131 = vunpack.c.h.b16 %v23
  %v132 = vunpack.c.l.b16 %v24
  %v133 = vunpack.c.h.b16 %v24
  %v134 = vunpack.c.l.b16 %v25
  %v135 = vunpack.c.h.b16 %v25
  %v136 = vunpack.c.l.b16 %v26
  %v137 = vunpack.c.h.b16 %v26
  %v138 = vunpack.c.l.b16 %v27
  %v139 = vunpack.c.h.b16 %v27
  %v140 = vunpack.c.l.b16 %v28
  %v141 = vunpack.c.h.b16 %v28
  %v142 = vpack.c.b16 %v118, %v114
  %v143 = vpack.c.b16 %v119, %v115
  %v144 = vpack.c.b16 %v120, %v116
  %v145 = vpack.c.b16 %v121, %v117
  %v146 = vpack.c.b16 %v126, %v122
  %v147 = vpack.c.b16 %v127, %v123
  %v148 = vpack.c.b16 %v128, %v124
  %v149 = vpack.c.b16 %v129, %v125
  %v150 = vpack.c.b16 %v134, %v130
  %v151 = vpack.c.b16 %v135, %v131
  %v152 = vpack.c.b16 %v136, %v132
  %v153 = vpack.c.b16 %v137, %v133
  %v154 = vpack.c.b16 %v138, %v138
  %v155 = vpack.c.b16 %v139, %v139
  %v156 = vpack.c.b16 %v140, %v140
  %v157 = vpack.c.b16 %v141, %v141
  %v238 = vunpack.c.l.b16 %v29
  %v239 = vunpack.c.l.b16 %v30
  %v240 = vunpack.c.l.b16 %v31
  %v241 = vunpack.c.l.b16 %v32
  %v242 = vunpack.c.l.b16 %v33
  %v243 = vunpack.c.l.b16 %v34
  %v244 = vunpack.c.l.b16 %v35
  %v245 = vunpack.c.l.b16 %v36
  %v246 = vunpack.c.l.b16 %v37
  %v247 = vunpack.c.l.b16 %v38
  %v248 = vunpack.c.l.b16 %v39
  %v249 = vunpack.c.l.b16 %v40
  %v250 = vunpack.c.l.b16 %v41
  %v251 = vunpack.c.l.b16 %v42
  %v252 = vunpack.c.l.b16 %v43
  %v253 = vunpack.c.l.b16 %v44
  %v254 = vunpack.c.l.b16 %v45
  %v255 = vunpack.c.l.b16 %v46
  %v256 = vunpack.c.l.b16 %v47
  %v257 = vunpack.c.l.b16 %v48
  %v258 = vunpack.c.l.b16 %v49
  %v259 = vunpack.c.l.b16 %v50
  %v260 = vunpack.c.l.b16 %v51
  %v261 = vunpack.c.l.b16 %v52
  %v262 = vunpack.c.l.b16 %v53
  %v263 = vunpack.c.l.b16 %v54
  %v264 = vunpack.c.l.b16 %v55
  %v265 = vunpack.c.l.b16 %v56
  %v266 = vunpack.c.l.b16 %v57
  %v267 = vunpack.c.l.b16 %v58
  %v268 = vunpack.c.l.b16 %v59
  %v269 = vunpack.c.l.b16 %v60
  %v270 = vunpack.c.l.b16 %v61
  %v271 = vunpack.c.l.b16 %v62
  %v272 = vunpack.c.l.b16 %v63
  %v273 = vunpack.c.l.b16 %v64
  %v274 = vunpack.c.l.b16 %v65
  %v275 = vunpack.c.l.b16 %v66
  %v276 = vunpack.c.l.b16 %v67
  %v277 = vunpack.c.l.b16 %v68
  %v278 = vunpack.c.l.b16 %v69
  %v279 = vunpack.c.l.b16 %v70
  %v280 = vunpack.c.l.b16 %v71
  %v281 = vunpack.c.l.b16 %v72
  %v282 = vunpack.c.l.b16 %v73
  %v283 = vunpack.c.l.b16 %v74
  %v284 = vunpack.c.l.b16 %v75
  %v285 = vunpack.c.l.b16 %v76
  %v286 = vunpack.c.l.b16 %v77
  %v287 = vunpack.c.l.b16 %v78
  %v288 = vunpack.c.l.b16 %v79
  %v289 = vunpack.c.l.b16 %v80
  %v290 = vunpack.c.l.b16 %v81
  %v291 = vunpack.c.l.b16 %v82
  %v292 = vunpack.c.l.b16 %v83
  %v293 = vunpack.c.l.b16 %v84
  %v294 = vunpack.c.l.b16 %v85
  %v295 = vunpack.c.l.b16 %v86
  %v296 = vunpack.c.l.b16 %v87
  %v297 = vunpack.c.l.b16 %v88
  %v298 = vunpack.c.l.b16 %v89
  %v299 = vunpack.c.l.b16 %v90
  %v300 = vunpack.c.l.b16 %v91
  %v301 = vunpack.c.l.b16 %v92
  %v302 = vpack.c.b16 %v239, %v238
  %v303 = vpack.c.b16 %v241, %v240
  %v304 = vpack.c.b16 %v243, %v242
  %v305 = vpack.c.b16 %v245, %v244
  %v306 = vpack.c.b16 %v247, %v246
  %v307 = vpack.c.b16 %v249, %v248
  %v308 = vpack.c.b16 %v251, %v250
  %v309 = vpack.c.b16 %v253, %v252
  %v310 = vpack.c.b16 %v255, %v254
  %v311 = vpack.c.b16 %v257, %v256
  %v312 = vpack.c.b16 %v259, %v258
  %v313 = vpack.c.b16 %v261, %v260
  %v314 = vpack.c.b16 %v263, %v262
  %v315 = vpack.c.b16 %v265, %v264
  %v316 = vpack.c.b16 %v267, %v266
  %v317 = vpack.c.b16 %v269, %v268
  %v318 = vpack.c.b16 %v271, %v270
  %v319 = vpack.c.b16 %v273, %v272
  %v320 = vpack.c.b16 %v275, %v274
  %v321 = vpack.c.b16 %v277, %v276
  %v322 = vpack.c.b16 %v279, %v278
  %v323 = vpack.c.b16 %v281, %v280
  %v324 = vpack.c.b16 %v283, %v282
  %v325 = vpack.c.b16 %v285, %v284
  %v326 = vpack.c.b16 %v287, %v286
  %v327 = vpack.c.b16 %v289, %v288
  %v328 = vpack.c.b16 %v291, %v290
  %v329 = vpack.c.b16 %v293, %v292
  %v330 = vpack.c.b16 %v295, %v294
  %v331 = vpack.c.b16 %v297, %v296
  %v332 = vpack.c.b16 %v299, %v298
  %v333 = vpack.c.b16 %v301, %v300
  %366 = vmatprep.subr.bf16.mxu0 0
  %367 = vmatpush1.bf16.msra.mxu0 %v309
  %368 = vmatprep.subr.bf16.mxu0 0
  %369 = vmatpush1.bf16.msra.mxu0 %v308
  %370 = vmatprep.subr.bf16.mxu0 0
  %371 = vmatpush1.bf16.msra.mxu0 %v307
  %372 = vmatprep.subr.bf16.mxu0 0
  %373 = vmatpush1.bf16.msra.mxu0 %v306
  %374 = vmatprep.subr.bf16.mxu0 0
  %375 = vmatpush1.bf16.msra.mxu0 %v305
  %376 = vmatprep.subr.bf16.mxu0 0
  %377 = vmatpush1.bf16.msra.mxu0 %v304
  %378 = vmatprep.subr.bf16.mxu0 0
  %379 = vmatpush1.bf16.msra.mxu0 %v303
  %380 = vmatprep.subr.bf16.mxu0 0
  %381 = vmatpush1.bf16.msra.mxu0 %v302
  %382 = vmatprep.subr.bf16.mxu0 0
  %383 = vmatpush2.bf16.msra.mxu0 %v317
  %384 = vmatprep.subr.bf16.mxu0 0
  %385 = vmatpush2.bf16.msra.mxu0 %v316
  %386 = vmatprep.subr.bf16.mxu0 0
  %387 = vmatpush2.bf16.msra.mxu0 %v315
  %388 = vmatprep.subr.bf16.mxu0 0
  %389 = vmatpush2.bf16.msra.mxu0 %v314
  %390 = vmatprep.subr.bf16.mxu0 0
  %391 = vmatpush2.bf16.msra.mxu0 %v313
  %392 = vmatprep.subr.bf16.mxu0 0
  %393 = vmatpush2.bf16.msra.mxu0 %v312
  %394 = vmatprep.subr.bf16.mxu0 0
  %395 = vmatpush2.bf16.msra.mxu0 %v311
  %396 = vmatprep.subr.bf16.mxu0 0
  %397 = vmatpush2.bf16.msra.mxu0 %v310
  %398 = vmatprep.mubr.bf16.mxu0 %v143
  %399 = vmatmul.mubr.bf16.gmra.mxu0 %v142
  %v400 = vpop.f32.mrf.mxu0
  %v401 = vadd.f32 %v98, %v400
  %v402 = vpop.f32.mrf.mxu0
  %v403 = vpop.f32.mrf.mxu0
  %v404 = vadd.f32 %v98, %v403
  %v405 = vpop.f32.mrf.mxu0
  %406 = vmatprep.mubr.bf16.mxu0 %v147
  %407 = vmatmul.mubr.bf16.gmra.mxu0 %v146
  %v408 = vpop.f32.mrf.mxu0
  %v409 = vadd.f32 %v98, %v408
  %v410 = vpop.f32.mrf.mxu0
  %v411 = vpop.f32.mrf.mxu0
  %v412 = vadd.f32 %v98, %v411
  %v413 = vpop.f32.mrf.mxu0
  %414 = vmatprep.mubr.bf16.mxu0 %v151
  %415 = vmatmul.mubr.bf16.gmra.mxu0 %v150
  %v416 = vpop.f32.mrf.mxu0
  %v417 = vadd.f32 %v98, %v416
  %v418 = vpop.f32.mrf.mxu0
  %v419 = vpop.f32.mrf.mxu0
  %v420 = vadd.f32 %v98, %v419
  %v421 = vpop.f32.mrf.mxu0
  %422 = vmatprep.mubr.bf16.mxu0 %v155
  %423 = vmatmul.mubr.bf16.gmra.mxu0 %v154
  %v424 = vpop.f32.mrf.mxu0
  %v425 = vadd.f32 %v98, %v424
  %v426 = vpop.f32.mrf.mxu0
  %v427 = vpop.f32.mrf.mxu0
  %v428 = vpop.f32.mrf.mxu0
  %429 = vdwg.mxu0
  %430 = vmatprep.subr.bf16.mxu0 0
  %431 = vmatpush1.bf16.msra.mxu0 %v325
  %432 = vmatprep.subr.bf16.mxu0 0
  %433 = vmatpush1.bf16.msra.mxu0 %v324
  %434 = vmatprep.subr.bf16.mxu0 0
  %435 = vmatpush1.bf16.msra.mxu0 %v323
  %436 = vmatprep.subr.bf16.mxu0 0
  %437 = vmatpush1.bf16.msra.mxu0 %v322
  %438 = vmatprep.subr.bf16.mxu0 0
  %439 = vmatpush1.bf16.msra.mxu0 %v321
  %440 = vmatprep.subr.bf16.mxu0 0
  %441 = vmatpush1.bf16.msra.mxu0 %v320
  %442 = vmatprep.subr.bf16.mxu0 0
  %443 = vmatpush1.bf16.msra.mxu0 %v319
  %444 = vmatprep.subr.bf16.mxu0 0
  %445 = vmatpush1.bf16.msra.mxu0 %v318
  %446 = vmatprep.subr.bf16.mxu0 0
  %447 = vmatpush2.bf16.msra.mxu0 %v333
  %448 = vmatprep.subr.bf16.mxu0 0
  %449 = vmatpush2.bf16.msra.mxu0 %v332
  %450 = vmatprep.subr.bf16.mxu0 0
  %451 = vmatpush2.bf16.msra.mxu0 %v331
  %452 = vmatprep.subr.bf16.mxu0 0
  %453 = vmatpush2.bf16.msra.mxu0 %v330
  %454 = vmatprep.subr.bf16.mxu0 0
  %455 = vmatpush2.bf16.msra.mxu0 %v329
  %456 = vmatprep.subr.bf16.mxu0 0
  %457 = vmatpush2.bf16.msra.mxu0 %v328
  %458 = vmatprep.subr.bf16.mxu0 0
  %459 = vmatpush2.bf16.msra.mxu0 %v327
  %460 = vmatprep.subr.bf16.mxu0 0
  %461 = vmatpush2.bf16.msra.mxu0 %v326
  %462 = vmatprep.mubr.bf16.mxu0 %v145
  %463 = vmatmul.mubr.bf16.gmra.mxu0 %v144
  %v464 = vpop.f32.mrf.mxu0
  %v465 = vadd.f32 %v401, %v464
  %v466 = vpop.f32.mrf.mxu0
  %v467 = vpop.f32.mrf.mxu0
  %v468 = vadd.f32 %v404, %v467
  %v469 = vpop.f32.mrf.mxu0
  %470 = vmatprep.mubr.bf16.mxu0 %v149
  %471 = vmatmul.mubr.bf16.gmra.mxu0 %v148
  %v472 = vpop.f32.mrf.mxu0
  %v473 = vadd.f32 %v409, %v472
  %v474 = vpop.f32.mrf.mxu0
  %v475 = vpop.f32.mrf.mxu0
  %v476 = vadd.f32 %v412, %v475
  %v477 = vpop.f32.mrf.mxu0
  %478 = vmatprep.mubr.bf16.mxu0 %v153
  %479 = vmatmul.mubr.bf16.gmra.mxu0 %v152
  %v480 = vpop.f32.mrf.mxu0
  %v481 = vadd.f32 %v417, %v480
  %v482 = vpop.f32.mrf.mxu0
  %v483 = vpop.f32.mrf.mxu0
  %v484 = vadd.f32 %v420, %v483
  %v485 = vpop.f32.mrf.mxu0
  %486 = vmatprep.mubr.bf16.mxu0 %v157
  %487 = vmatmul.mubr.bf16.gmra.mxu0 %v156
  %v488 = vpop.f32.mrf.mxu0
  %v489 = vadd.f32 %v425, %v488
  %v490 = vpop.f32.mrf.mxu0
  %v491 = vpop.f32.mrf.mxu0
  %v492 = vpop.f32.mrf.mxu0
  %493 = vdwg.mxu0
  %v494 = vmax.f32 %v465, 0.0
  %v495 = vmax.f32 %v468, 0.0
  %v496 = vmax.f32 %v473, 0.0
  %v497 = vmax.f32 %v476, 0.0
  %v498 = vmax.f32 %v481, 0.0
  %v499 = vmax.f32 %v484, 0.0
  %v500 = vmax.f32 %v489, 0.0
  %v501 = vpack.c.bf16 %v495, %v494
  %v502 = vpack.c.bf16 %v497, %v496
  %v503 = vpack.c.bf16 %v499, %v498
  %v504 = vpack.c.bf16 %v500, %v500
  %v509 = vunpack.c.l.b16 %v501
  %v510 = vunpack.c.h.b16 %v501
  %v511 = vunpack.c.l.b16 %v502
  %v512 = vunpack.c.h.b16 %v502
  %v513 = vunpack.c.l.b16 %v503
  %v514 = vunpack.c.h.b16 %v503
  %v515 = vunpack.c.l.b16 %v504
  %v516 = vpack.c.b16 %v509, %v509
  %v517 = vpack.c.b16 %v510, %v510
  %v518 = vpack.c.b16 %v511, %v511
  %v519 = vpack.c.b16 %v512, %v512
  %v520 = vpack.c.b16 %v513, %v513
  %v521 = vpack.c.b16 %v514, %v514
  %v522 = vpack.c.b16 %v515, %v515
  %vm530 = vcmask 519168
  %531 = vst.msk [vmem:[%s3] sm:$0xf] %vm530, %v516
  %532 = vst.msk [vmem:[%s3 + $0x4] sm:$0xf] %vm530, %v517
  %533 = vst.msk [vmem:[%s3 + $0x8] sm:$0xf] %vm530, %v518
  %534 = vst.msk [vmem:[%s3 + $0xc] sm:$0xf] %vm530, %v519
  %535 = vst.msk [vmem:[%s3 + $0x10] sm:$0xf] %vm530, %v520
  %536 = vst.msk [vmem:[%s3 + $0x14] sm:$0xf] %vm530, %v521
  %vm537 = vcmask 516096
  %538 = vst.msk [vmem:[%s3 + $0x18] sm:$0x1] %vm537, %v522
  // Predicated region
  $region14: #{_lambda_.4} parent=0 // pred_check
    _
  $region15: #{_lambda_.4} parent=0 // pred_check_branch
    %540 = sbr.rel (0) target = $region17
  $region16: #{_lambda_.4} parent=0 // pred_region
    _
  $region17: #{_lambda_.4} parent=0 // pred_fallthru
    _
  // Predicated region
  $region18: #{_lambda_.4} parent=0 // pred_check
    _
  $region19: #{_lambda_.4} parent=0 // pred_check_branch
    %542 = sbr.rel (0) target = $region21
  $region20: #{_lambda_.4} parent=0 // pred_region
    _
  $region21: #{_lambda_.4} parent=0 // pred_fallthru
    _

// kernel: _lambda_.5
$region0: #{_lambda_.5}
  #allocation0 [shape = 'u32[]', space=smem, size = 0x4, offset = 0x4, fixed_abs, tag = 'smem constant byte address 0x4 - core index']
  #allocation1 [shape = 'u32[144,128]{1,0:T(1,128)}', space=vmem, size = 0x12000, scoped, tag = 'internal scratch']
  %s0 = inlined_call_operand.vmem [shape: bf16[2,1600], index: 0, kind: input, shape index: {}]
  %s1 = inlined_call_operand.vmem [shape: bf16[1600,576], index: 1, kind: input, shape index: {}]
  %s2 = inlined_call_operand.vmem [shape: f32[1,576], index: 2, kind: input, shape index: {}]
  %s3 = inlined_call_operand.vmem [shape: bf16[576,1024], index: 3, kind: input, shape index: {}]
  %s4 = inlined_call_operand.vmem [shape: f32[1,1024], index: 4, kind: input, shape index: {}]
  %s5 = inlined_call_operand.vmem [shape: bf16[1024,512], index: 5, kind: input, shape index: {}]
  %s6 = inlined_call_operand.vmem [shape: f32[1,512], index: 6, kind: input, shape index: {}]
  %s7 = inlined_call_operand.vmem [shape: bf16[512,384], index: 7, kind: input, shape index: {}]
  %s8 = inlined_call_operand.vmem [shape: f32[1,384], index: 8, kind: input, shape index: {}]
  %s9 = inlined_call_operand.vmem [shape: f32[384,384], index: 9, kind: input, shape index: {}]
  %s10 = inlined_call_operand.vmem [shape: f32[2,384], index: 10, kind: output, shape index: {}]
  %s11 = sld [smem:[#allocation0]]
  $region50: #{_lambda_.5} parent=0
    _
  %s13 = ssub.s32 1, %s11
  %s14 = scalar_select 0, %s13, %s11
  // Predicated region
  $region2: #{_lambda_.5} parent=0 // pred_check
    _
  $region3: #{_lambda_.5} parent=0 // pred_check_branch
    %16 = sbr.rel (0) target = $region5
  $region4: #{_lambda_.5} parent=0 // pred_region
    _
  $region5: #{_lambda_.5} parent=0 // pred_fallthru
    _
  // Predicated region
  $region6: #{_lambda_.5} parent=0 // pred_check
    _
  $region7: #{_lambda_.5} parent=0 // pred_check_branch
    %18 = sbr.rel (0) target = $region9
  $region8: #{_lambda_.5} parent=0 // pred_region
    _
  $region9: #{_lambda_.5} parent=0 // pred_fallthru
    _
  // Predicated region
  $region10: #{_lambda_.5} parent=0 // pred_check
    _
  $region11: #{_lambda_.5} parent=0 // pred_check_branch
    %20 = sbr.rel (0) target = $region13
  $region12: #{_lambda_.5} parent=0 // pred_region
    _
  $region13: #{_lambda_.5} parent=0 // pred_fallthru
    _
  // Predicated region
  $region14: #{_lambda_.5} parent=0 // pred_check
    _
  $region15: #{_lambda_.5} parent=0 // pred_check_branch
    %22 = sbr.rel (0) target = $region17
  $region16: #{_lambda_.5} parent=0 // pred_region
    _
  $region17: #{_lambda_.5} parent=0 // pred_fallthru
    _
  // Predicated region
  $region18: #{_lambda_.5} parent=0 // pred_check
    _
  $region19: #{_lambda_.5} parent=0 // pred_check_branch
    %24 = sbr.rel (0) target = $region21
  $region20: #{_lambda_.5} parent=0 // pred_region
    _
  $region21: #{_lambda_.5} parent=0 // pred_fallthru
    _
  // Predicated region
  $region22: #{_lambda_.5} parent=0 // pred_check
    _
  $region23: #{_lambda_.5} parent=0 // pred_check_branch
    %26 = sbr.rel (0) target = $region25
  $region24: #{_lambda_.5} parent=0 // pred_region
    _
  $region25: #{_lambda_.5} parent=0 // pred_fallthru
    _
  // Predicated region
  $region26: #{_lambda_.5} parent=0 // pred_check
    _
  $region27: #{_lambda_.5} parent=0 // pred_check_branch
    %28 = sbr.rel (0) target = $region29
  $region28: #{_lambda_.5} parent=0 // pred_region
    _
  $region29: #{_lambda_.5} parent=0 // pred_fallthru
    _
  // Predicated region
  $region30: #{_lambda_.5} parent=0 // pred_check
    _
  $region31: #{_lambda_.5} parent=0 // pred_check_branch
    %30 = sbr.rel (0) target = $region33
  $region32: #{_lambda_.5} parent=0 // pred_region
    _
  $region33: #{_lambda_.5} parent=0 // pred_fallthru
    _
  // Predicated region
  $region34: #{_lambda_.5} parent=0 // pred_check
    _
  $region35: #{_lambda_.5} parent=0 // pred_check_branch
    %32 = sbr.rel (0) target = $region37
  $region36: #{_lambda_.5} parent=0 // pred_region
    _
  $region37: #{_lambda_.5} parent=0 // pred_fallthru
    _
  // Predicated region
  $region38: #{_lambda_.5} parent=0 // pred_check
    _
  $region39: #{_lambda_.5} parent=0 // pred_check_branch
    %34 = sbr.rel (0) target = $region41
  $region40: #{_lambda_.5} parent=0 // pred_region
    _
  $region41: #{_lambda_.5} parent=0 // pred_fallthru
    _
  %v36 = vld [vmem:[%s0] sm:$0xff]
  %v37 = vld [vmem:[%s0 + $0x8] sm:$0x1f]
  %v38 = vld [vmem:[%s1] sm:$0xff]
  %v39 = vld [vmem:[%s1 + $0x8] sm:$0xff]
  %v40 = vld [vmem:[%s1 + $0x10] sm:$0xf]
  %v41 = vld [vmem:[%s1 + $0x14] sm:$0xff]
  %v42 = vld [vmem:[%s1 + $0x1c] sm:$0xff]
  %v43 = vld [vmem:[%s1 + $0x24] sm:$0xf]
  %v44 = vld [vmem:[%s1 + $0x28] sm:$0xff]
  %v45 = vld [vmem:[%s1 + $0x30] sm:$0xff]
  %v46 = vld [vmem:[%s1 + $0x38] sm:$0xf]
  %v47 = vld [vmem:[%s1 + $0x3c] sm:$0xff]
  %v48 = vld [vmem:[%s1 + $0x44] sm:$0xff]
  %v49 = vld [vmem:[%s1 + $0x4c] sm:$0xf]
  %v50 = vld [vmem:[%s1 + $0x50] sm:$0xff]
  %v51 = vld [vmem:[%s1 + $0x58] sm:$0xff]
  %v52 = vld [vmem:[%s1 + $0x60] sm:$0xf]
  %v53 = vld [vmem:[%s1 + $0x64] sm:$0xff]
  %v54 = vld [vmem:[%s1 + $0x6c] sm:$0xff]
  %v55 = vld [vmem:[%s1 + $0x74] sm:$0xf]
  %v56 = vld [vmem:[%s1 + $0x78] sm:$0xff]
  %v57 = vld [vmem:[%s1 + $0x80] sm:$0xff]
  %v58 = vld [vmem:[%s1 + $0x88] sm:$0xf]
  %v59 = vld [vmem:[%s1 + $0x8c] sm:$0xff]
  %v60 = vld [vmem:[%s1 + $0x94] sm:$0xff]
  %v61 = vld [vmem:[%s1 + $0x9c] sm:$0xf]
  %v62 = vld [vmem:[%s1 + $0xa0] sm:$0xff]
  %v63 = vld [vmem:[%s1 + $0xa8] sm:$0xff]
  %v64 = vld [vmem:[%s1 + $0xb0] sm:$0xf]
  %v65 = vld [vmem:[%s1 + $0xb4] sm:$0xff]
  %v66 = vld [vmem:[%s1 + $0xbc] sm:$0xff]
  %v67 = vld [vmem:[%s1 + $0xc4] sm:$0xf]
  %v68 = vld [vmem:[%s1 + $0xc8] sm:$0xff]
  %v69 = vld [vmem:[%s1 + $0xd0] sm:$0xff]
  %v70 = vld [vmem:[%s1 + $0xd8] sm:$0xf]
  %v71 = vld [vmem:[%s1 + $0xdc] sm:$0xff]
  %v72 = vld [vmem:[%s1 + $0xe4] sm:$0xff]
  %v73 = vld [vmem:[%s1 + $0xec] sm:$0xf]
  %v74 = vld [vmem:[%s1 + $0xf0] sm:$0xff]
  %v75 = vld [vmem:[%s1 + $0xf8] sm:$0xff]
  %v76 = vld [vmem:[%s1 + $0x100] sm:$0xf]
  %v77 = vld [vmem:[%s1 + $0x104] sm:$0xff]
  %v78 = vld [vmem:[%s1 + $0x10c] sm:$0xff]
  %v79 = vld [vmem:[%s1 + $0x114] sm:$0xf]
  %v80 = vld [vmem:[%s1 + $0x118] sm:$0xff]
  %v81 = vld [vmem:[%s1 + $0x120] sm:$0xff]
  %v82 = vld [vmem:[%s1 + $0x128] sm:$0xf]
  %v83 = vld [vmem:[%s1 + $0x12c] sm:$0xff]
  %v84 = vld [vmem:[%s1 + $0x134] sm:$0xff]
  %v85 = vld [vmem:[%s1 + $0x13c] sm:$0xf]
  %v86 = vld [vmem:[%s1 + $0x140] sm:$0xff]
  %v87 = vld [vmem:[%s1 + $0x148] sm:$0xff]
  %v88 = vld [vmem:[%s1 + $0x150] sm:$0xf]
  %v89 = vld [vmem:[%s1 + $0x154] sm:$0xff]
  %v90 = vld [vmem:[%s1 + $0x15c] sm:$0xff]
  %v91 = vld [vmem:[%s1 + $0x164] sm:$0xf]
  %v92 = vld [vmem:[%s1 + $0x168] sm:$0xff]
  %v93 = vld [vmem:[%s1 + $0x170] sm:$0xff]
  %v94 = vld [vmem:[%s1 + $0x178] sm:$0xf]
  %v95 = vld [vmem:[%s1 + $0x17c] sm:$0xff]
  %v96 = vld [vmem:[%s1 + $0x184] sm:$0xff]
  %v97 = vld [vmem:[%s1 + $0x18c] sm:$0xf]
  %v98 = vld [vmem:[%s1 + $0x190] sm:$0xff]
  %v99 = vld [vmem:[%s1 + $0x198] sm:$0xff]
  %v100 = vld [vmem:[%s1 + $0x1a0] sm:$0xf]
  %v101 = vld [vmem:[%s1 + $0x1a4] sm:$0xff]
  %v102 = vld [vmem:[%s1 + $0x1ac] sm:$0xff]
  %v103 = vld [vmem:[%s1 + $0x1b4] sm:$0xf]
  %v104 = vld [vmem:[%s1 + $0x1b8] sm:$0xff]
  %v105 = vld [vmem:[%s1 + $0x1c0] sm:$0xff]
  %v106 = vld [vmem:[%s1 + $0x1c8] sm:$0xf]
  %v107 = vld [vmem:[%s1 + $0x1cc] sm:$0xff]
  %v108 = vld [vmem:[%s1 + $0x1d4] sm:$0xff]
  %v109 = vld [vmem:[%s1 + $0x1dc] sm:$0xf]
  %v110 = vld [vmem:[%s1 + $0x1e0] sm:$0xff]
  %v111 = vld [vmem:[%s1 + $0x1e8] sm:$0xff]
  %v112 = vld [vmem:[%s1 + $0x1f0] sm:$0xf]
  %v113 = vld [vmem:[%s1 + $0x1f4] sm:$0xff]
  %v114 = vld [vmem:[%s1 + $0x1fc] sm:$0xff]
  %v115 = vld [vmem:[%s1 + $0x204] sm:$0xf]
  %v116 = vld [vmem:[%s1 + $0x208] sm:$0xff]
  %v117 = vld [vmem:[%s1 + $0x210] sm:$0xff]
  %v118 = vld [vmem:[%s1 + $0x218] sm:$0xf]
  %v119 = vld [vmem:[%s1 + $0x21c] sm:$0xff]
  %v120 = vld [vmem:[%s1 + $0x224] sm:$0xff]
  %v121 = vld [vmem:[%s1 + $0x22c] sm:$0xf]
  %v122 = vld [vmem:[%s1 + $0x230] sm:$0xff]
  %v123 = vld [vmem:[%s1 + $0x238] sm:$0xff]
  %v124 = vld [vmem:[%s1 + $0x240] sm:$0xf]
  %v125 = vld [vmem:[%s1 + $0x244] sm:$0xff]
  %v126 = vld [vmem:[%s1 + $0x24c] sm:$0xff]
  %v127 = vld [vmem:[%s1 + $0x254] sm:$0xf]
  %v128 = vld [vmem:[%s1 + $0x258] sm:$0xff]
  %v129 = vld [vmem:[%s1 + $0x260] sm:$0xff]
  %v130 = vld [vmem:[%s1 + $0x268] sm:$0xf]
  %v131 = vld [vmem:[%s1 + $0x26c] sm:$0xff]
  %v132 = vld [vmem:[%s1 + $0x274] sm:$0xff]
  %v133 = vld [vmem:[%s1 + $0x27c] sm:$0xf]
  %v134 = vld [vmem:[%s1 + $0x280] sm:$0xff]
  %v135 = vld [vmem:[%s1 + $0x288] sm:$0xff]
  %v136 = vld [vmem:[%s1 + $0x290] sm:$0xf]
  %v137 = vld [vmem:[%s1 + $0x294] sm:$0xff]
  %v138 = vld [vmem:[%s1 + $0x29c] sm:$0xff]
  %v139 = vld [vmem:[%s1 + $0x2a4] sm:$0xf]
  %v140 = vld [vmem:[%s1 + $0x2a8] sm:$0xff]
  %v141 = vld [vmem:[%s1 + $0x2b0] sm:$0xff]
  %v142 = vld [vmem:[%s1 + $0x2b8] sm:$0xf]
  %v143 = vld [vmem:[%s1 + $0x2bc] sm:$0xff]
  %v144 = vld [vmem:[%s1 + $0x2c4] sm:$0xff]
  %v145 = vld [vmem:[%s1 + $0x2cc] sm:$0xf]
  %v146 = vld [vmem:[%s1 + $0x2d0] sm:$0xff]
  %v147 = vld [vmem:[%s1 + $0x2d8] sm:$0xff]
  %v148 = vld [vmem:[%s1 + $0x2e0] sm:$0xf]
  %v149 = vld [vmem:[%s1 + $0x2e4] sm:$0xff]
  %v150 = vld [vmem:[%s1 + $0x2ec] sm:$0xff]
  %v151 = vld [vmem:[%s1 + $0x2f4] sm:$0xf]
  %v152 = vld [vmem:[%s1 + $0x2f8] sm:$0xff]
  %v153 = vld [vmem:[%s1 + $0x300] sm:$0xff]
  %v154 = vld [vmem:[%s1 + $0x308] sm:$0xf]
  %v155 = vld [vmem:[%s1 + $0x30c] sm:$0xff]
  %v156 = vld [vmem:[%s1 + $0x314] sm:$0xff]
  %v157 = vld [vmem:[%s1 + $0x31c] sm:$0xf]
  %v158 = vld [vmem:[%s1 + $0x320] sm:$0xff]
  %v159 = vld [vmem:[%s1 + $0x328] sm:$0xff]
  %v160 = vld [vmem:[%s1 + $0x330] sm:$0xf]
  %v161 = vld [vmem:[%s1 + $0x334] sm:$0xff]
  %v162 = vld [vmem:[%s1 + $0x33c] sm:$0xff]
  %v163 = vld [vmem:[%s1 + $0x344] sm:$0xf]
  %v164 = vld [vmem:[%s1 + $0x348] sm:$0xff]
  %v165 = vld [vmem:[%s1 + $0x350] sm:$0xff]
  %v166 = vld [vmem:[%s1 + $0x358] sm:$0xf]
  %v167 = vld [vmem:[%s1 + $0x35c] sm:$0xff]
  %v168 = vld [vmem:[%s1 + $0x364] sm:$0xff]
  %v169 = vld [vmem:[%s1 + $0x36c] sm:$0xf]
  %v170 = vld [vmem:[%s1 + $0x370] sm:$0xff]
  %v171 = vld [vmem:[%s1 + $0x378] sm:$0xff]
  %v172 = vld [vmem:[%s1 + $0x380] sm:$0xf]
  %v173 = vld [vmem:[%s1 + $0x384] sm:$0xff]
  %v174 = vld [vmem:[%s1 + $0x38c] sm:$0xff]
  %v175 = vld [vmem:[%s1 + $0x394] sm:$0xf]
  %v176 = vld [vmem:[%s1 + $0x398] sm:$0xff]
  %v177 = vld [vmem:[%s1 + $0x3a0] sm:$0xff]
  %v178 = vld [vmem:[%s1 + $0x3a8] sm:$0xf]
  %v179 = vld [vmem:[%s1 + $0x3ac] sm:$0xff]
  %v180 = vld [vmem:[%s1 + $0x3b4] sm:$0xff]
  %v181 = vld [vmem:[%s1 + $0x3bc] sm:$0xf]
  %v182 = vld [vmem:[%s1 + $0x3c0] sm:$0xff]
  %v183 = vld [vmem:[%s1 + $0x3c8] sm:$0xff]
  %v184 = vld [vmem:[%s1 + $0x3d0] sm:$0xf]
  %v185 = vld [vmem:[%s1 + $0x3d4] sm:$0xff]
  %v186 = vld [vmem:[%s1 + $0x3dc] sm:$0xff]
  %v187 = vld [vmem:[%s1 + $0x3e4] sm:$0xf]
  %v188 = vld [vmem:[%s1 + $0x3e8] sm:$0xff]
  %v189 = vld [vmem:[%s1 + $0x3f0] sm:$0xff]
  %v190 = vld [vmem:[%s1 + $0x3f8] sm:$0xf]
  %v191 = vld [vmem:[%s1 + $0x3fc] sm:$0xff]
  %v192 = vld [vmem:[%s1 + $0x404] sm:$0xff]
  %v193 = vld [vmem:[%s1 + $0x40c] sm:$0xf]
  %v194 = vld [vmem:[%s1 + $0x410] sm:$0xff]
  %v195 = vld [vmem:[%s1 + $0x418] sm:$0xff]
  %v196 = vld [vmem:[%s1 + $0x420] sm:$0xf]
  %v197 = vld [vmem:[%s1 + $0x424] sm:$0xff]
  %v198 = vld [vmem:[%s1 + $0x42c] sm:$0xff]
  %v199 = vld [vmem:[%s1 + $0x434] sm:$0xf]
  %v200 = vld [vmem:[%s1 + $0x438] sm:$0xff]
  %v201 = vld [vmem:[%s1 + $0x440] sm:$0xff]
  %v202 = vld [vmem:[%s1 + $0x448] sm:$0xf]
  %v203 = vld [vmem:[%s1 + $0x44c] sm:$0xff]
  %v204 = vld [vmem:[%s1 + $0x454] sm:$0xff]
  %v205 = vld [vmem:[%s1 + $0x45c] sm:$0xf]
  %v206 = vld [vmem:[%s1 + $0x460] sm:$0xff]
  %v207 = vld [vmem:[%s1 + $0x468] sm:$0xff]
  %v208 = vld [vmem:[%s1 + $0x470] sm:$0xf]
  %v209 = vld [vmem:[%s1 + $0x474] sm:$0xff]
  %v210 = vld [vmem:[%s1 + $0x47c] sm:$0xff]
  %v211 = vld [vmem:[%s1 + $0x484] sm:$0xf]
  %v212 = vld [vmem:[%s1 + $0x488] sm:$0xff]
  %v213 = vld [vmem:[%s1 + $0x490] sm:$0xff]
  %v214 = vld [vmem:[%s1 + $0x498] sm:$0xf]
  %v215 = vld [vmem:[%s1 + $0x49c] sm:$0xff]
  %v216 = vld [vmem:[%s1 + $0x4a4] sm:$0xff]
  %v217 = vld [vmem:[%s1 + $0x4ac] sm:$0xf]
  %v218 = vld [vmem:[%s1 + $0x4b0] sm:$0xff]
  %v219 = vld [vmem:[%s1 + $0x4b8] sm:$0xff]
  %v220 = vld [vmem:[%s1 + $0x4c0] sm:$0xf]
  %v221 = vld [vmem:[%s1 + $0x4c4] sm:$0xff]
  %v222 = vld [vmem:[%s1 + $0x4cc] sm:$0xff]
  %v223 = vld [vmem:[%s1 + $0x4d4] sm:$0xf]
  %v224 = vld [vmem:[%s1 + $0x4d8] sm:$0xff]
  %v225 = vld [vmem:[%s1 + $0x4e0] sm:$0xff]
  %v226 = vld [vmem:[%s1 + $0x4e8] sm:$0xf]
  %v227 = vld [vmem:[%s1 + $0x4ec] sm:$0xff]
  %v228 = vld [vmem:[%s1 + $0x4f4] sm:$0xff]
  %v229 = vld [vmem:[%s1 + $0x4fc] sm:$0xf]
  %v230 = vld [vmem:[%s1 + $0x500] sm:$0xff]
  %v231 = vld [vmem:[%s1 + $0x508] sm:$0xff]
  %v232 = vld [vmem:[%s1 + $0x510] sm:$0xf]
  %v233 = vld [vmem:[%s1 + $0x514] sm:$0xff]
  %v234 = vld [vmem:[%s1 + $0x51c] sm:$0xff]
  %v235 = vld [vmem:[%s1 + $0x524] sm:$0xf]
  %v236 = vld [vmem:[%s1 + $0x528] sm:$0xff]
  %v237 = vld [vmem:[%s1 + $0x530] sm:$0xff]
  %v238 = vld [vmem:[%s1 + $0x538] sm:$0xf]
  %v239 = vld [vmem:[%s1 + $0x53c] sm:$0xff]
  %v240 = vld [vmem:[%s1 + $0x544] sm:$0xff]
  %v241 = vld [vmem:[%s1 + $0x54c] sm:$0xf]
  %v242 = vld [vmem:[%s1 + $0x550] sm:$0xff]
  %v243 = vld [vmem:[%s1 + $0x558] sm:$0xff]
  %v244 = vld [vmem:[%s1 + $0x560] sm:$0xf]
  %v245 = vld [vmem:[%s1 + $0x564] sm:$0xff]
  %v246 = vld [vmem:[%s1 + $0x56c] sm:$0xff]
  %v247 = vld [vmem:[%s1 + $0x574] sm:$0xf]
  %v248 = vld [vmem:[%s1 + $0x578] sm:$0xff]
  %v249 = vld [vmem:[%s1 + $0x580] sm:$0xff]
  %v250 = vld [vmem:[%s1 + $0x588] sm:$0xf]
  %v251 = vld [vmem:[%s1 + $0x58c] sm:$0xff]
  %v252 = vld [vmem:[%s1 + $0x594] sm:$0xff]
  %v253 = vld [vmem:[%s1 + $0x59c] sm:$0xf]
  %v254 = vld [vmem:[%s1 + $0x5a0] sm:$0xff]
  %v255 = vld [vmem:[%s1 + $0x5a8] sm:$0xff]
  %v256 = vld [vmem:[%s1 + $0x5b0] sm:$0xf]
  %v257 = vld [vmem:[%s1 + $0x5b4] sm:$0xff]
  %v258 = vld [vmem:[%s1 + $0x5bc] sm:$0xff]
  %v259 = vld [vmem:[%s1 + $0x5c4] sm:$0xf]
  %v260 = vld [vmem:[%s1 + $0x5c8] sm:$0xff]
  %v261 = vld [vmem:[%s1 + $0x5d0] sm:$0xff]
  %v262 = vld [vmem:[%s1 + $0x5d8] sm:$0xf]
  %v263 = vld [vmem:[%s1 + $0x5dc] sm:$0xff]
  %v264 = vld [vmem:[%s1 + $0x5e4] sm:$0xff]
  %v265 = vld [vmem:[%s1 + $0x5ec] sm:$0xf]
  %v266 = vld [vmem:[%s1 + $0x5f0] sm:$0xff]
  %v267 = vld [vmem:[%s1 + $0x5f8] sm:$0xff]
  %v268 = vld [vmem:[%s1 + $0x600] sm:$0xf]
  %v269 = vld [vmem:[%s1 + $0x604] sm:$0xff]
  %v270 = vld [vmem:[%s1 + $0x60c] sm:$0xff]
  %v271 = vld [vmem:[%s1 + $0x614] sm:$0xf]
  %v272 = vld [vmem:[%s1 + $0x618] sm:$0xff]
  %v273 = vld [vmem:[%s1 + $0x620] sm:$0xff]
  %v274 = vld [vmem:[%s1 + $0x628] sm:$0xf]
  %v275 = vld [vmem:[%s1 + $0x62c] sm:$0xff]
  %v276 = vld [vmem:[%s1 + $0x634] sm:$0xff]
  %v277 = vld [vmem:[%s1 + $0x63c] sm:$0xf]
  %v278 = vld [vmem:[%s1 + $0x640] sm:$0xff]
  %v279 = vld [vmem:[%s1 + $0x648] sm:$0xff]
  %v280 = vld [vmem:[%s1 + $0x650] sm:$0xf]
  %v281 = vld [vmem:[%s1 + $0x654] sm:$0xff]
  %v282 = vld [vmem:[%s1 + $0x65c] sm:$0xff]
  %v283 = vld [vmem:[%s1 + $0x664] sm:$0xf]
  %v284 = vld [vmem:[%s1 + $0x668] sm:$0xff]
  %v285 = vld [vmem:[%s1 + $0x670] sm:$0xff]
  %v286 = vld [vmem:[%s1 + $0x678] sm:$0xf]
  %v287 = vld [vmem:[%s1 + $0x67c] sm:$0xff]
  %v288 = vld [vmem:[%s1 + $0x684] sm:$0xff]
  %v289 = vld [vmem:[%s1 + $0x68c] sm:$0xf]
  %v290 = vld [vmem:[%s1 + $0x690] sm:$0xff]
  %v291 = vld [vmem:[%s1 + $0x698] sm:$0xff]
  %v292 = vld [vmem:[%s1 + $0x6a0] sm:$0xf]
  %v293 = vld [vmem:[%s1 + $0x6a4] sm:$0xff]
  %v294 = vld [vmem:[%s1 + $0x6ac] sm:$0xff]
  %v295 = vld [vmem:[%s1 + $0x6b4] sm:$0xf]
  %v296 = vld [vmem:[%s1 + $0x6b8] sm:$0xff]
  %v297 = vld [vmem:[%s1 + $0x6c0] sm:$0xff]
  %v298 = vld [vmem:[%s1 + $0x6c8] sm:$0xf]
  %v299 = vld [vmem:[%s1 + $0x6cc] sm:$0xff]
  %v300 = vld [vmem:[%s1 + $0x6d4] sm:$0xff]
  %v301 = vld [vmem:[%s1 + $0x6dc] sm:$0xf]
  %v302 = vld [vmem:[%s1 + $0x6e0] sm:$0xff]
  %v303 = vld [vmem:[%s1 + $0x6e8] sm:$0xff]
  %v304 = vld [vmem:[%s1 + $0x6f0] sm:$0xf]
  %v305 = vld [vmem:[%s1 + $0x6f4] sm:$0xff]
  %v306 = vld [vmem:[%s1 + $0x6fc] sm:$0xff]
  %v307 = vld [vmem:[%s1 + $0x704] sm:$0xf]
  %v308 = vld [vmem:[%s1 + $0x708] sm:$0xff]
  %v309 = vld [vmem:[%s1 + $0x710] sm:$0xff]
  %v310 = vld [vmem:[%s1 + $0x718] sm:$0xf]
  %v311 = vld [vmem:[%s1 + $0x71c] sm:$0xff]
  %v312 = vld [vmem:[%s1 + $0x724] sm:$0xff]
  %v313 = vld [vmem:[%s1 + $0x72c] sm:$0xf]
  %v314 = vld [vmem:[%s1 + $0x730] sm:$0xff]
  %v315 = vld [vmem:[%s1 + $0x738] sm:$0xff]
  %v316 = vld [vmem:[%s1 + $0x740] sm:$0xf]
  %v317 = vld [vmem:[%s1 + $0x744] sm:$0xff]
  %v318 = vld [vmem:[%s1 + $0x74c] sm:$0xff]
  %v319 = vld [vmem:[%s1 + $0x754] sm:$0xf]
  %v320 = vld [vmem:[%s1 + $0x758] sm:$0xff]
  %v321 = vld [vmem:[%s1 + $0x760] sm:$0xff]
  %v322 = vld [vmem:[%s1 + $0x768] sm:$0xf]
  %v323 = vld [vmem:[%s1 + $0x76c] sm:$0xff]
  %v324 = vld [vmem:[%s1 + $0x774] sm:$0xff]
  %v325 = vld [vmem:[%s1 + $0x77c] sm:$0xf]
  %v326 = vld [vmem:[%s1 + $0x780] sm:$0xff]
  %v327 = vld [vmem:[%s1 + $0x788] sm:$0xff]
  %v328 = vld [vmem:[%s1 + $0x790] sm:$0xf]
  %v329 = vld [vmem:[%s1 + $0x794] sm:$0xff]
  %v330 = vld [vmem:[%s1 + $0x79c] sm:$0xff]
  %v331 = vld [vmem:[%s1 + $0x7a4] sm:$0xf]
  %v332 = vld [vmem:[%s1 + $0x7a8] sm:$0xff]
  %v333 = vld [vmem:[%s1 + $0x7b0] sm:$0xff]
  %v334 = vld [vmem:[%s1 + $0x7b8] sm:$0xf]
  %v335 = vld [vmem:[%s1 + $0x7bc] sm:$0xff]
  %v336 = vld [vmem:[%s1 + $0x7c4] sm:$0xff]
  %v337 = vld [vmem:[%s1 + $0x7cc] sm:$0xf]
  %v338 = vld [vmem:[%s1 + $0x7d0] sm:$0xff]
  %v339 = vld [vmem:[%s1 + $0x7d8] sm:$0xff]
  %v340 = vld [vmem:[%s1 + $0x7e0] sm:$0xf]
  %v341 = vld [vmem:[%s1 + $0x7e4] sm:$0xff]
  %v342 = vld [vmem:[%s1 + $0x7ec] sm:$0xff]
  %v343 = vld [vmem:[%s1 + $0x7f4] sm:$0xf]
  %v344 = vld [vmem:[%s1 + $0x7f8] sm:$0xff]
  %v345 = vld [vmem:[%s1 + $0x800] sm:$0xff]
  %v346 = vld [vmem:[%s1 + $0x808] sm:$0xf]
  %v347 = vld [vmem:[%s1 + $0x80c] sm:$0xff]
  %v348 = vld [vmem:[%s1 + $0x814] sm:$0xff]
  %v349 = vld [vmem:[%s1 + $0x81c] sm:$0xf]
  %v350 = vld [vmem:[%s1 + $0x820] sm:$0xff]
  %v351 = vld [vmem:[%s1 + $0x828] sm:$0xff]
  %v352 = vld [vmem:[%s1 + $0x830] sm:$0xf]
  %v353 = vld [vmem:[%s1 + $0x834] sm:$0xff]
  %v354 = vld [vmem:[%s1 + $0x83c] sm:$0xff]
  %v355 = vld [vmem:[%s1 + $0x844] sm:$0xf]
  %v356 = vld [vmem:[%s1 + $0x848] sm:$0xff]
  %v357 = vld [vmem:[%s1 + $0x850] sm:$0xff]
  %v358 = vld [vmem:[%s1 + $0x858] sm:$0xf]
  %v359 = vld [vmem:[%s1 + $0x85c] sm:$0xff]
  %v360 = vld [vmem:[%s1 + $0x864] sm:$0xff]
  %v361 = vld [vmem:[%s1 + $0x86c] sm:$0xf]
  %v362 = vld [vmem:[%s1 + $0x870] sm:$0xff]
  %v363 = vld [vmem:[%s1 + $0x878] sm:$0xff]
  %v364 = vld [vmem:[%s1 + $0x880] sm:$0xf]
  %v365 = vld [vmem:[%s1 + $0x884] sm:$0xff]
  %v366 = vld [vmem:[%s1 + $0x88c] sm:$0xff]
  %v367 = vld [vmem:[%s1 + $0x894] sm:$0xf]
  %v368 = vld [vmem:[%s1 + $0x898] sm:$0xff]
  %v369 = vld [vmem:[%s1 + $0x8a0] sm:$0xff]
  %v370 = vld [vmem:[%s1 + $0x8a8] sm:$0xf]
  %v371 = vld [vmem:[%s1 + $0x8ac] sm:$0xff]
  %v372 = vld [vmem:[%s1 + $0x8b4] sm:$0xff]
  %v373 = vld [vmem:[%s1 + $0x8bc] sm:$0xf]
  %v374 = vld [vmem:[%s1 + $0x8c0] sm:$0xff]
  %v375 = vld [vmem:[%s1 + $0x8c8] sm:$0xff]
  %v376 = vld [vmem:[%s1 + $0x8d0] sm:$0xf]
  %v377 = vld [vmem:[%s1 + $0x8d4] sm:$0xff]
  %v378 = vld [vmem:[%s1 + $0x8dc] sm:$0xff]
  %v379 = vld [vmem:[%s1 + $0x8e4] sm:$0xf]
  %v380 = vld [vmem:[%s1 + $0x8e8] sm:$0xff]
  %v381 = vld [vmem:[%s1 + $0x8f0] sm:$0xff]
  %v382 = vld [vmem:[%s1 + $0x8f8] sm:$0xf]
  %v383 = vld [vmem:[%s1 + $0x8fc] sm:$0xff]
  %v384 = vld [vmem:[%s1 + $0x904] sm:$0xff]
  %v385 = vld [vmem:[%s1 + $0x90c] sm:$0xf]
  %v386 = vld [vmem:[%s1 + $0x910] sm:$0xff]
  %v387 = vld [vmem:[%s1 + $0x918] sm:$0xff]
  %v388 = vld [vmem:[%s1 + $0x920] sm:$0xf]
  %v389 = vld [vmem:[%s1 + $0x924] sm:$0xff]
  %v390 = vld [vmem:[%s1 + $0x92c] sm:$0xff]
  %v391 = vld [vmem:[%s1 + $0x934] sm:$0xf]
  %v392 = vld [vmem:[%s1 + $0x938] sm:$0xff]
  %v393 = vld [vmem:[%s1 + $0x940] sm:$0xff]
  %v394 = vld [vmem:[%s1 + $0x948] sm:$0xf]
  %v395 = vld [vmem:[%s1 + $0x94c] sm:$0xff]
  %v396 = vld [vmem:[%s1 + $0x954] sm:$0xff]
  %v397 = vld [vmem:[%s1 + $0x95c] sm:$0xf]
  %v398 = vld [vmem:[%s1 + $0x960] sm:$0xff]
  %v399 = vld [vmem:[%s1 + $0x968] sm:$0xff]
  %v400 = vld [vmem:[%s1 + $0x970] sm:$0xf]
  %v401 = vld [vmem:[%s1 + $0x974] sm:$0xff]
  %v402 = vld [vmem:[%s1 + $0x97c] sm:$0xff]
  %v403 = vld [vmem:[%s1 + $0x984] sm:$0xf]
  %v404 = vld [vmem:[%s1 + $0x988] sm:$0xff]
  %v405 = vld [vmem:[%s1 + $0x990] sm:$0xff]
  %v406 = vld [vmem:[%s1 + $0x998] sm:$0xf]
  %v407 = vld [vmem:[%s1 + $0x99c] sm:$0xff]
  %v408 = vld [vmem:[%s1 + $0x9a4] sm:$0xff]
  %v409 = vld [vmem:[%s1 + $0x9ac] sm:$0xf]
  %v410 = vld [vmem:[%s1 + $0x9b0] sm:$0xff]
  %v411 = vld [vmem:[%s1 + $0x9b8] sm:$0xff]
  %v412 = vld [vmem:[%s1 + $0x9c0] sm:$0xf]
  %v413 = vld [vmem:[%s1 + $0x9c4] sm:$0xff]
  %v414 = vld [vmem:[%s1 + $0x9cc] sm:$0xff]
  %v415 = vld [vmem:[%s1 + $0x9d4] sm:$0xf]
  %v416 = vld [vmem:[%s1 + $0x9d8] sm:$0xff]
  %v417 = vld [vmem:[%s1 + $0x9e0] sm:$0xff]
  %v418 = vld [vmem:[%s1 + $0x9e8] sm:$0xf]
  %v419 = vld [vmem:[%s1 + $0x9ec] sm:$0xff]
  %v420 = vld [vmem:[%s1 + $0x9f4] sm:$0xff]
  %v421 = vld [vmem:[%s1 + $0x9fc] sm:$0xf]
  %v422 = vld [vmem:[%s1 + $0xa00] sm:$0xff]
  %v423 = vld [vmem:[%s1 + $0xa08] sm:$0xff]
  %v424 = vld [vmem:[%s1 + $0xa10] sm:$0xf]
  %v425 = vld [vmem:[%s1 + $0xa14] sm:$0xff]
  %v426 = vld [vmem:[%s1 + $0xa1c] sm:$0xff]
  %v427 = vld [vmem:[%s1 + $0xa24] sm:$0xf]
  %v428 = vld [vmem:[%s1 + $0xa28] sm:$0xff]
  %v429 = vld [vmem:[%s1 + $0xa30] sm:$0xff]
  %v430 = vld [vmem:[%s1 + $0xa38] sm:$0xf]
  %v431 = vld [vmem:[%s1 + $0xa3c] sm:$0xff]
  %v432 = vld [vmem:[%s1 + $0xa44] sm:$0xff]
  %v433 = vld [vmem:[%s1 + $0xa4c] sm:$0xf]
  %v434 = vld [vmem:[%s1 + $0xa50] sm:$0xff]
  %v435 = vld [vmem:[%s1 + $0xa58] sm:$0xff]
  %v436 = vld [vmem:[%s1 + $0xa60] sm:$0xf]
  %v437 = vld [vmem:[%s1 + $0xa64] sm:$0xff]
  %v438 = vld [vmem:[%s1 + $0xa6c] sm:$0xff]
  %v439 = vld [vmem:[%s1 + $0xa74] sm:$0xf]
  %v440 = vld [vmem:[%s1 + $0xa78] sm:$0xff]
  %v441 = vld [vmem:[%s1 + $0xa80] sm:$0xff]
  %v442 = vld [vmem:[%s1 + $0xa88] sm:$0xf]
  %v443 = vld [vmem:[%s1 + $0xa8c] sm:$0xff]
  %v444 = vld [vmem:[%s1 + $0xa94] sm:$0xff]
  %v445 = vld [vmem:[%s1 + $0xa9c] sm:$0xf]
  %v446 = vld [vmem:[%s1 + $0xaa0] sm:$0xff]
  %v447 = vld [vmem:[%s1 + $0xaa8] sm:$0xff]
  %v448 = vld [vmem:[%s1 + $0xab0] sm:$0xf]
  %v449 = vld [vmem:[%s1 + $0xab4] sm:$0xff]
  %v450 = vld [vmem:[%s1 + $0xabc] sm:$0xff]
  %v451 = vld [vmem:[%s1 + $0xac4] sm:$0xf]
  %v452 = vld [vmem:[%s1 + $0xac8] sm:$0xff]
  %v453 = vld [vmem:[%s1 + $0xad0] sm:$0xff]
  %v454 = vld [vmem:[%s1 + $0xad8] sm:$0xf]
  %v455 = vld [vmem:[%s1 + $0xadc] sm:$0xff]
  %v456 = vld [vmem:[%s1 + $0xae4] sm:$0xff]
  %v457 = vld [vmem:[%s1 + $0xaec] sm:$0xf]
  %v458 = vld [vmem:[%s1 + $0xaf0] sm:$0xff]
  %v459 = vld [vmem:[%s1 + $0xaf8] sm:$0xff]
  %v460 = vld [vmem:[%s1 + $0xb00] sm:$0xf]
  %v461 = vld [vmem:[%s1 + $0xb04] sm:$0xff]
  %v462 = vld [vmem:[%s1 + $0xb0c] sm:$0xff]
  %v463 = vld [vmem:[%s1 + $0xb14] sm:$0xf]
  %v464 = vld [vmem:[%s1 + $0xb18] sm:$0xff]
  %v465 = vld [vmem:[%s1 + $0xb20] sm:$0xff]
  %v466 = vld [vmem:[%s1 + $0xb28] sm:$0xf]
  %v467 = vld [vmem:[%s1 + $0xb2c] sm:$0xff]
  %v468 = vld [vmem:[%s1 + $0xb34] sm:$0xff]
  %v469 = vld [vmem:[%s1 + $0xb3c] sm:$0xf]
  %v470 = vld [vmem:[%s1 + $0xb40] sm:$0xff]
  %v471 = vld [vmem:[%s1 + $0xb48] sm:$0xff]
  %v472 = vld [vmem:[%s1 + $0xb50] sm:$0xf]
  %v473 = vld [vmem:[%s1 + $0xb54] sm:$0xff]
  %v474 = vld [vmem:[%s1 + $0xb5c] sm:$0xff]
  %v475 = vld [vmem:[%s1 + $0xb64] sm:$0xf]
  %v476 = vld [vmem:[%s1 + $0xb68] sm:$0xff]
  %v477 = vld [vmem:[%s1 + $0xb70] sm:$0xff]
  %v478 = vld [vmem:[%s1 + $0xb78] sm:$0xf]
  %v479 = vld [vmem:[%s1 + $0xb7c] sm:$0xff]
  %v480 = vld [vmem:[%s1 + $0xb84] sm:$0xff]
  %v481 = vld [vmem:[%s1 + $0xb8c] sm:$0xf]
  %v482 = vld [vmem:[%s1 + $0xb90] sm:$0xff]
  %v483 = vld [vmem:[%s1 + $0xb98] sm:$0xff]
  %v484 = vld [vmem:[%s1 + $0xba0] sm:$0xf]
  %v485 = vld [vmem:[%s1 + $0xba4] sm:$0xff]
  %v486 = vld [vmem:[%s1 + $0xbac] sm:$0xff]
  %v487 = vld [vmem:[%s1 + $0xbb4] sm:$0xf]
  %v488 = vld [vmem:[%s1 + $0xbb8] sm:$0xff]
  %v489 = vld [vmem:[%s1 + $0xbc0] sm:$0xff]
  %v490 = vld [vmem:[%s1 + $0xbc8] sm:$0xf]
  %v491 = vld [vmem:[%s1 + $0xbcc] sm:$0xff]
  %v492 = vld [vmem:[%s1 + $0xbd4] sm:$0xff]
  %v493 = vld [vmem:[%s1 + $0xbdc] sm:$0xf]
  %v494 = vld [vmem:[%s1 + $0xbe0] sm:$0xff]
  %v495 = vld [vmem:[%s1 + $0xbe8] sm:$0xff]
  %v496 = vld [vmem:[%s1 + $0xbf0] sm:$0xf]
  %v497 = vld [vmem:[%s1 + $0xbf4] sm:$0xff]
  %v498 = vld [vmem:[%s1 + $0xbfc] sm:$0xff]
  %v499 = vld [vmem:[%s1 + $0xc04] sm:$0xf]
  %v500 = vld [vmem:[%s1 + $0xc08] sm:$0xff]
  %v501 = vld [vmem:[%s1 + $0xc10] sm:$0xff]
  %v502 = vld [vmem:[%s1 + $0xc18] sm:$0xf]
  %v503 = vld [vmem:[%s1 + $0xc1c] sm:$0xff]
  %v504 = vld [vmem:[%s1 + $0xc24] sm:$0xff]
  %v505 = vld [vmem:[%s1 + $0xc2c] sm:$0xf]
  %v506 = vld [vmem:[%s1 + $0xc30] sm:$0xff]
  %v507 = vld [vmem:[%s1 + $0xc38] sm:$0xff]
  %v508 = vld [vmem:[%s1 + $0xc40] sm:$0xf]
  %v509 = vld [vmem:[%s1 + $0xc44] sm:$0xff]
  %v510 = vld [vmem:[%s1 + $0xc4c] sm:$0xff]
  %v511 = vld [vmem:[%s1 + $0xc54] sm:$0xf]
  %v512 = vld [vmem:[%s1 + $0xc58] sm:$0xff]
  %v513 = vld [vmem:[%s1 + $0xc60] sm:$0xff]
  %v514 = vld [vmem:[%s1 + $0xc68] sm:$0xf]
  %v515 = vld [vmem:[%s1 + $0xc6c] sm:$0xff]
  %v516 = vld [vmem:[%s1 + $0xc74] sm:$0xff]
  %v517 = vld [vmem:[%s1 + $0xc7c] sm:$0xf]
  %v518 = vld [vmem:[%s1 + $0xc80] sm:$0xff]
  %v519 = vld [vmem:[%s1 + $0xc88] sm:$0xff]
  %v520 = vld [vmem:[%s1 + $0xc90] sm:$0xf]
  %v521 = vld [vmem:[%s1 + $0xc94] sm:$0xff]
  %v522 = vld [vmem:[%s1 + $0xc9c] sm:$0xff]
  %v523 = vld [vmem:[%s1 + $0xca4] sm:$0xf]
  %v524 = vld [vmem:[%s1 + $0xca8] sm:$0xff]
  %v525 = vld [vmem:[%s1 + $0xcb0] sm:$0xff]
  %v526 = vld [vmem:[%s1 + $0xcb8] sm:$0xf]
  %v527 = vld [vmem:[%s1 + $0xcbc] sm:$0xff]
  %v528 = vld [vmem:[%s1 + $0xcc4] sm:$0xff]
  %v529 = vld [vmem:[%s1 + $0xccc] sm:$0xf]
  %v530 = vld [vmem:[%s1 + $0xcd0] sm:$0xff]
  %v531 = vld [vmem:[%s1 + $0xcd8] sm:$0xff]
  %v532 = vld [vmem:[%s1 + $0xce0] sm:$0xf]
  %v533 = vld [vmem:[%s1 + $0xce4] sm:$0xff]
  %v534 = vld [vmem:[%s1 + $0xcec] sm:$0xff]
  %v535 = vld [vmem:[%s1 + $0xcf4] sm:$0xf]
  %v536 = vld [vmem:[%s1 + $0xcf8] sm:$0xff]
  %v537 = vld [vmem:[%s1 + $0xd00] sm:$0xff]
  %v538 = vld [vmem:[%s1 + $0xd08] sm:$0xf]
  %v539 = vld [vmem:[%s1 + $0xd0c] sm:$0xff]
  %v540 = vld [vmem:[%s1 + $0xd14] sm:$0xff]
  %v541 = vld [vmem:[%s1 + $0xd1c] sm:$0xf]
  %v542 = vld [vmem:[%s1 + $0xd20] sm:$0xff]
  %v543 = vld [vmem:[%s1 + $0xd28] sm:$0xff]
  %v544 = vld [vmem:[%s1 + $0xd30] sm:$0xf]
  %v545 = vld [vmem:[%s1 + $0xd34] sm:$0xff]
  %v546 = vld [vmem:[%s1 + $0xd3c] sm:$0xff]
  %v547 = vld [vmem:[%s1 + $0xd44] sm:$0xf]
  %v548 = vld [vmem:[%s1 + $0xd48] sm:$0xff]
  %v549 = vld [vmem:[%s1 + $0xd50] sm:$0xff]
  %v550 = vld [vmem:[%s1 + $0xd58] sm:$0xf]
  %v551 = vld [vmem:[%s1 + $0xd5c] sm:$0xff]
  %v552 = vld [vmem:[%s1 + $0xd64] sm:$0xff]
  %v553 = vld [vmem:[%s1 + $0xd6c] sm:$0xf]
  %v554 = vld [vmem:[%s1 + $0xd70] sm:$0xff]
  %v555 = vld [vmem:[%s1 + $0xd78] sm:$0xff]
  %v556 = vld [vmem:[%s1 + $0xd80] sm:$0xf]
  %v557 = vld [vmem:[%s1 + $0xd84] sm:$0xff]
  %v558 = vld [vmem:[%s1 + $0xd8c] sm:$0xff]
  %v559 = vld [vmem:[%s1 + $0xd94] sm:$0xf]
  %v560 = vld [vmem:[%s1 + $0xd98] sm:$0xff]
  %v561 = vld [vmem:[%s1 + $0xda0] sm:$0xff]
  %v562 = vld [vmem:[%s1 + $0xda8] sm:$0xf]
  %v563 = vld [vmem:[%s1 + $0xdac] sm:$0xff]
  %v564 = vld [vmem:[%s1 + $0xdb4] sm:$0xff]
  %v565 = vld [vmem:[%s1 + $0xdbc] sm:$0xf]
  %v566 = vld [vmem:[%s1 + $0xdc0] sm:$0xff]
  %v567 = vld [vmem:[%s1 + $0xdc8] sm:$0xff]
  %v568 = vld [vmem:[%s1 + $0xdd0] sm:$0xf]
  %v569 = vld [vmem:[%s1 + $0xdd4] sm:$0xff]
  %v570 = vld [vmem:[%s1 + $0xddc] sm:$0xff]
  %v571 = vld [vmem:[%s1 + $0xde4] sm:$0xf]
  %v572 = vld [vmem:[%s1 + $0xde8] sm:$0xff]
  %v573 = vld [vmem:[%s1 + $0xdf0] sm:$0xff]
  %v574 = vld [vmem:[%s1 + $0xdf8] sm:$0xf]
  %v575 = vld [vmem:[%s1 + $0xdfc] sm:$0xff]
  %v576 = vld [vmem:[%s1 + $0xe04] sm:$0xff]
  %v577 = vld [vmem:[%s1 + $0xe0c] sm:$0xf]
  %v578 = vld [vmem:[%s1 + $0xe10] sm:$0xff]
  %v579 = vld [vmem:[%s1 + $0xe18] sm:$0xff]
  %v580 = vld [vmem:[%s1 + $0xe20] sm:$0xf]
  %v581 = vld [vmem:[%s1 + $0xe24] sm:$0xff]
  %v582 = vld [vmem:[%s1 + $0xe2c] sm:$0xff]
  %v583 = vld [vmem:[%s1 + $0xe34] sm:$0xf]
  %v584 = vld [vmem:[%s1 + $0xe38] sm:$0xff]
  %v585 = vld [vmem:[%s1 + $0xe40] sm:$0xff]
  %v586 = vld [vmem:[%s1 + $0xe48] sm:$0xf]
  %v587 = vld [vmem:[%s1 + $0xe4c] sm:$0xff]
  %v588 = vld [vmem:[%s1 + $0xe54] sm:$0xff]
  %v589 = vld [vmem:[%s1 + $0xe5c] sm:$0xf]
  %v590 = vld [vmem:[%s1 + $0xe60] sm:$0xff]
  %v591 = vld [vmem:[%s1 + $0xe68] sm:$0xff]
  %v592 = vld [vmem:[%s1 + $0xe70] sm:$0xf]
  %v593 = vld [vmem:[%s1 + $0xe74] sm:$0xff]
  %v594 = vld [vmem:[%s1 + $0xe7c] sm:$0xff]
  %v595 = vld [vmem:[%s1 + $0xe84] sm:$0xf]
  %v596 = vld [vmem:[%s1 + $0xe88] sm:$0xff]
  %v597 = vld [vmem:[%s1 + $0xe90] sm:$0xff]
  %v598 = vld [vmem:[%s1 + $0xe98] sm:$0xf]
  %v599 = vld [vmem:[%s1 + $0xe9c] sm:$0xff]
  %v600 = vld [vmem:[%s1 + $0xea4] sm:$0xff]
  %v601 = vld [vmem:[%s1 + $0xeac] sm:$0xf]
  %v602 = vld [vmem:[%s1 + $0xeb0] sm:$0xff]
  %v603 = vld [vmem:[%s1 + $0xeb8] sm:$0xff]
  %v604 = vld [vmem:[%s1 + $0xec0] sm:$0xf]
  %v605 = vld [vmem:[%s1 + $0xec4] sm:$0xff]
  %v606 = vld [vmem:[%s1 + $0xecc] sm:$0xff]
  %v607 = vld [vmem:[%s1 + $0xed4] sm:$0xf]
  %v608 = vld [vmem:[%s1 + $0xed8] sm:$0xff]
  %v609 = vld [vmem:[%s1 + $0xee0] sm:$0xff]
  %v610 = vld [vmem:[%s1 + $0xee8] sm:$0xf]
  %v611 = vld [vmem:[%s1 + $0xeec] sm:$0xff]
  %v612 = vld [vmem:[%s1 + $0xef4] sm:$0xff]
  %v613 = vld [vmem:[%s1 + $0xefc] sm:$0xf]
  %v614 = vld [vmem:[%s1 + $0xf00] sm:$0xff]
  %v615 = vld [vmem:[%s1 + $0xf08] sm:$0xff]
  %v616 = vld [vmem:[%s1 + $0xf10] sm:$0xf]
  %v617 = vld [vmem:[%s1 + $0xf14] sm:$0xff]
  %v618 = vld [vmem:[%s1 + $0xf1c] sm:$0xff]
  %v619 = vld [vmem:[%s1 + $0xf24] sm:$0xf]
  %v620 = vld [vmem:[%s1 + $0xf28] sm:$0xff]
  %v621 = vld [vmem:[%s1 + $0xf30] sm:$0xff]
  %v622 = vld [vmem:[%s1 + $0xf38] sm:$0xf]
  %v623 = vld [vmem:[%s1 + $0xf3c] sm:$0xff]
  %v624 = vld [vmem:[%s1 + $0xf44] sm:$0xff]
  %v625 = vld [vmem:[%s1 + $0xf4c] sm:$0xf]
  %v626 = vld [vmem:[%s1 + $0xf50] sm:$0xff]
  %v627 = vld [vmem:[%s1 + $0xf58] sm:$0xff]
  %v628 = vld [vmem:[%s1 + $0xf60] sm:$0xf]
  %v629 = vld [vmem:[%s1 + $0xf64] sm:$0xff]
  %v630 = vld [vmem:[%s1 + $0xf6c] sm:$0xff]
  %v631 = vld [vmem:[%s1 + $0xf74] sm:$0xf]
  %v632 = vld [vmem:[%s1 + $0xf78] sm:$0xff]
  %v633 = vld [vmem:[%s1 + $0xf80] sm:$0xff]
  %v634 = vld [vmem:[%s1 + $0xf88] sm:$0xf]
  %v635 = vld [vmem:[%s1 + $0xf8c] sm:$0xff]
  %v636 = vld [vmem:[%s1 + $0xf94] sm:$0xff]
  %v637 = vld [vmem:[%s1 + $0xf9c] sm:$0xf]
  %v638 = vld [vmem:[%s2] sm:$0x1f]
  %v640 = vlaneseq
  %v641 = vshrl.u32 %v640, 7
  %v642 = vsub.s32 0, %v641
  %v643 = vrot.slane %v638, %v642
  %v644 = vlaneseq
  %v645 = vshrl.u32 %v644, 7
  %v646 = vsub.s32 1, %v645
  %v647 = vrot.slane %v638, %v646
  %v648 = vlaneseq
  %v649 = vshrl.u32 %v648, 7
  %v650 = vsub.s32 2, %v649
  %v651 = vrot.slane %v638, %v650
  %v652 = vlaneseq
  %v653 = vshrl.u32 %v652, 7
  %v654 = vsub.s32 3, %v653
  %v655 = vrot.slane %v638, %v654
  %v656 = vlaneseq
  %v657 = vshrl.u32 %v656, 7
  %v658 = vsub.s32 4, %v657
  %v659 = vrot.slane %v638, %v658
  %v667 = vcombine.high %v36, %v36
  %v669 = vunpack.c.l.s4 1966171168
  %v670 = vunpack.c.0.s8 %v669
  %v671 = vlaneseq
  %v672 = vshrl.u32 %v671, 7
  %v673 = vsub.s32 %v670, %v672
  %v674 = vrot.slane %v36, %v673
  %v676 = vunpack.c.l.s4 1966171168
  %v677 = vunpack.c.0.s8 %v676
  %v678 = vlaneseq
  %v679 = vshrl.u32 %v678, 7
  %v680 = vsub.s32 %v677, %v679
  %v681 = vrot.slane %v667, %v680
  %v682 = vcombine.high %v674, %v674
  %v683 = vcombine.high %v681, %v681
  %v685 = vunpack.c.l.s4 1966171168
  %v686 = vunpack.c.0.s8 %v685
  %v687 = vlaneseq
  %v688 = vshrl.u32 %v687, 7
  %v689 = vsub.s32 %v686, %v688
  %v690 = vrot.slane %v674, %v689
  %v692 = vunpack.c.l.s4 1966171168
  %v693 = vunpack.c.0.s8 %v692
  %v694 = vlaneseq
  %v695 = vshrl.u32 %v694, 7
  %v696 = vsub.s32 %v693, %v695
  %v697 = vrot.slane %v681, %v696
  %v699 = vunpack.c.l.s4 1966171168
  %v700 = vunpack.c.0.s8 %v699
  %v701 = vlaneseq
  %v702 = vshrl.u32 %v701, 7
  %v703 = vsub.s32 %v700, %v702
  %v704 = vrot.slane %v682, %v703
  %v706 = vunpack.c.l.s4 1966171168
  %v707 = vunpack.c.0.s8 %v706
  %v708 = vlaneseq
  %v709 = vshrl.u32 %v708, 7
  %v710 = vsub.s32 %v707, %v709
  %v711 = vrot.slane %v683, %v710
  %v712 = vcombine.high %v690, %v690
  %v713 = vcombine.high %v697, %v697
  %v714 = vcombine.high %v704, %v704
  %v715 = vcombine.high %v711, %v711
  %v716 = vcombine.high %v37, %v37
  %v718 = vunpack.c.l.s4 1966171168
  %v719 = vunpack.c.0.s8 %v718
  %v720 = vlaneseq
  %v721 = vshrl.u32 %v720, 7
  %v722 = vsub.s32 %v719, %v721
  %v723 = vrot.slane %v37, %v722
  %v725 = vunpack.c.l.s4 1966171168
  %v726 = vunpack.c.0.s8 %v725
  %v727 = vlaneseq
  %v728 = vshrl.u32 %v727, 7
  %v729 = vsub.s32 %v726, %v728
  %v730 = vrot.slane %v716, %v729
  %v731 = vcombine.high %v723, %v723
  %v733 = vunpack.c.l.s4 1966171168
  %v734 = vunpack.c.0.s8 %v733
  %v735 = vlaneseq
  %v736 = vshrl.u32 %v735, 7
  %v737 = vsub.s32 %v734, %v736
  %v738 = vrot.slane %v723, %v737
  %v740 = vunpack.c.l.s4 1966171168
  %v741 = vunpack.c.0.s8 %v740
  %v742 = vlaneseq
  %v743 = vshrl.u32 %v742, 7
  %v744 = vsub.s32 %v741, %v743
  %v745 = vrot.slane %v730, %v744
  %v747 = vunpack.c.l.s4 1966171168
  %v748 = vunpack.c.0.s8 %v747
  %v749 = vlaneseq
  %v750 = vshrl.u32 %v749, 7
  %v751 = vsub.s32 %v748, %v750
  %v752 = vrot.slane %v731, %v751
  %v753 = vcombine.high %v738, %v738
  %v754 = vcombine.high %v752, %v752
  %v1367 = vunpack.c.l.b16 %v38
  %v1368 = vunpack.c.h.b16 %v38
  %v1369 = vunpack.c.l.b16 %v39
  %v1370 = vunpack.c.h.b16 %v39
  %v1371 = vunpack.c.l.b16 %v40
  %v1372 = vunpack.c.l.b16 %v41
  %v1373 = vunpack.c.h.b16 %v41
  %v1374 = vunpack.c.l.b16 %v42
  %v1375 = vunpack.c.h.b16 %v42
  %v1376 = vunpack.c.l.b16 %v43
  %v1377 = vunpack.c.l.b16 %v44
  %v1378 = vunpack.c.h.b16 %v44
  %v1379 = vunpack.c.l.b16 %v45
  %v1380 = vunpack.c.h.b16 %v45
  %v1381 = vunpack.c.l.b16 %v46
  %v1382 = vunpack.c.l.b16 %v47
  %v1383 = vunpack.c.h.b16 %v47
  %v1384 = vunpack.c.l.b16 %v48
  %v1385 = vunpack.c.h.b16 %v48
  %v1386 = vunpack.c.l.b16 %v49
  %v1387 = vunpack.c.l.b16 %v50
  %v1388 = vunpack.c.h.b16 %v50
  %v1389 = vunpack.c.l.b16 %v51
  %v1390 = vunpack.c.h.b16 %v51
  %v1391 = vunpack.c.l.b16 %v52
  %v1392 = vunpack.c.l.b16 %v53
  %v1393 = vunpack.c.h.b16 %v53
  %v1394 = vunpack.c.l.b16 %v54
  %v1395 = vunpack.c.h.b16 %v54
  %v1396 = vunpack.c.l.b16 %v55
  %v1397 = vunpack.c.l.b16 %v56
  %v1398 = vunpack.c.h.b16 %v56
  %v1399 = vunpack.c.l.b16 %v57
  %v1400 = vunpack.c.h.b16 %v57
  %v1401 = vunpack.c.l.b16 %v58
  %v1402 = vunpack.c.l.b16 %v59
  %v1403 = vunpack.c.h.b16 %v59
  %v1404 = vunpack.c.l.b16 %v60
  %v1405 = vunpack.c.h.b16 %v60
  %v1406 = vunpack.c.l.b16 %v61
  %v1407 = vunpack.c.l.b16 %v62
  %v1408 = vunpack.c.h.b16 %v62
  %v1409 = vunpack.c.l.b16 %v63
  %v1410 = vunpack.c.h.b16 %v63
  %v1411 = vunpack.c.l.b16 %v64
  %v1412 = vunpack.c.l.b16 %v65
  %v1413 = vunpack.c.h.b16 %v65
  %v1414 = vunpack.c.l.b16 %v66
  %v1415 = vunpack.c.h.b16 %v66
  %v1416 = vunpack.c.l.b16 %v67
  %v1417 = vunpack.c.l.b16 %v68
  %v1418 = vunpack.c.h.b16 %v68
  %v1419 = vunpack.c.l.b16 %v69
  %v1420 = vunpack.c.h.b16 %v69
  %v1421 = vunpack.c.l.b16 %v70
  %v1422 = vunpack.c.l.b16 %v71
  %v1423 = vunpack.c.h.b16 %v71
  %v1424 = vunpack.c.l.b16 %v72
  %v1425 = vunpack.c.h.b16 %v72
  %v1426 = vunpack.c.l.b16 %v73
  %v1427 = vunpack.c.l.b16 %v74
  %v1428 = vunpack.c.h.b16 %v74
  %v1429 = vunpack.c.l.b16 %v75
  %v1430 = vunpack.c.h.b16 %v75
  %v1431 = vunpack.c.l.b16 %v76
  %v1432 = vunpack.c.l.b16 %v77
  %v1433 = vunpack.c.h.b16 %v77
  %v1434 = vunpack.c.l.b16 %v78
  %v1435 = vunpack.c.h.b16 %v78
  %v1436 = vunpack.c.l.b16 %v79
  %v1437 = vunpack.c.l.b16 %v80
  %v1438 = vunpack.c.h.b16 %v80
  %v1439 = vunpack.c.l.b16 %v81
  %v1440 = vunpack.c.h.b16 %v81
  %v1441 = vunpack.c.l.b16 %v82
  %v1442 = vunpack.c.l.b16 %v83
  %v1443 = vunpack.c.h.b16 %v83
  %v1444 = vunpack.c.l.b16 %v84
  %v1445 = vunpack.c.h.b16 %v84
  %v1446 = vunpack.c.l.b16 %v85
  %v1447 = vunpack.c.l.b16 %v86
  %v1448 = vunpack.c.h.b16 %v86
  %v1449 = vunpack.c.l.b16 %v87
  %v1450 = vunpack.c.h.b16 %v87
  %v1451 = vunpack.c.l.b16 %v88
  %v1452 = vunpack.c.l.b16 %v89
  %v1453 = vunpack.c.h.b16 %v89
  %v1454 = vunpack.c.l.b16 %v90
  %v1455 = vunpack.c.h.b16 %v90
  %v1456 = vunpack.c.l.b16 %v91
  %v1457 = vunpack.c.l.b16 %v92
  %v1458 = vunpack.c.h.b16 %v92
  %v1459 = vunpack.c.l.b16 %v93
  %v1460 = vunpack.c.h.b16 %v93
  %v1461 = vunpack.c.l.b16 %v94
  %v1462 = vunpack.c.l.b16 %v95
  %v1463 = vunpack.c.h.b16 %v95
  %v1464 = vunpack.c.l.b16 %v96
  %v1465 = vunpack.c.h.b16 %v96
  %v1466 = vunpack.c.l.b16 %v97
  %v1467 = vunpack.c.l.b16 %v98
  %v1468 = vunpack.c.h.b16 %v98
  %v1469 = vunpack.c.l.b16 %v99
  %v1470 = vunpack.c.h.b16 %v99
  %v1471 = vunpack.c.l.b16 %v100
  %v1472 = vunpack.c.l.b16 %v101
  %v1473 = vunpack.c.h.b16 %v101
  %v1474 = vunpack.c.l.b16 %v102
  %v1475 = vunpack.c.h.b16 %v102
  %v1476 = vunpack.c.l.b16 %v103
  %v1477 = vunpack.c.l.b16 %v104
  %v1478 = vunpack.c.h.b16 %v104
  %v1479 = vunpack.c.l.b16 %v105
  %v1480 = vunpack.c.h.b16 %v105
  %v1481 = vunpack.c.l.b16 %v106
  %v1482 = vunpack.c.l.b16 %v107
  %v1483 = vunpack.c.h.b16 %v107
  %v1484 = vunpack.c.l.b16 %v108
  %v1485 = vunpack.c.h.b16 %v108
  %v1486 = vunpack.c.l.b16 %v109
  %v1487 = vunpack.c.l.b16 %v110
  %v1488 = vunpack.c.h.b16 %v110
  %v1489 = vunpack.c.l.b16 %v111
  %v1490 = vunpack.c.h.b16 %v111
  %v1491 = vunpack.c.l.b16 %v112
  %v1492 = vunpack.c.l.b16 %v113
  %v1493 = vunpack.c.h.b16 %v113
  %v1494 = vunpack.c.l.b16 %v114
  %v1495 = vunpack.c.h.b16 %v114
  %v1496 = vunpack.c.l.b16 %v115
  %v1497 = vunpack.c.l.b16 %v116
  %v1498 = vunpack.c.h.b16 %v116
  %v1499 = vunpack.c.l.b16 %v117
  %v1500 = vunpack.c.h.b16 %v117
  %v1501 = vunpack.c.l.b16 %v118
  %v1502 = vunpack.c.l.b16 %v119
  %v1503 = vunpack.c.h.b16 %v119
  %v1504 = vunpack.c.l.b16 %v120
  %v1505 = vunpack.c.h.b16 %v120
  %v1506 = vunpack.c.l.b16 %v121
  %v1507 = vunpack.c.l.b16 %v122
  %v1508 = vunpack.c.h.b16 %v122
  %v1509 = vunpack.c.l.b16 %v123
  %v1510 = vunpack.c.h.b16 %v123
  %v1511 = vunpack.c.l.b16 %v124
  %v1512 = vunpack.c.l.b16 %v125
  %v1513 = vunpack.c.h.b16 %v125
  %v1514 = vunpack.c.l.b16 %v126
  %v1515 = vunpack.c.h.b16 %v126
  %v1516 = vunpack.c.l.b16 %v127
  %v1517 = vunpack.c.l.b16 %v128
  %v1518 = vunpack.c.h.b16 %v128
  %v1519 = vunpack.c.l.b16 %v129
  %v1520 = vunpack.c.h.b16 %v129
  %v1521 = vunpack.c.l.b16 %v130
  %v1522 = vunpack.c.l.b16 %v131
  %v1523 = vunpack.c.h.b16 %v131
  %v1524 = vunpack.c.l.b16 %v132
  %v1525 = vunpack.c.h.b16 %v132
  %v1526 = vunpack.c.l.b16 %v133
  %v1527 = vunpack.c.l.b16 %v134
  %v1528 = vunpack.c.h.b16 %v134
  %v1529 = vunpack.c.l.b16 %v135
  %v1530 = vunpack.c.h.b16 %v135
  %v1531 = vunpack.c.l.b16 %v136
  %v1532 = vunpack.c.l.b16 %v137
  %v1533 = vunpack.c.h.b16 %v137
  %v1534 = vunpack.c.l.b16 %v138
  %v1535 = vunpack.c.h.b16 %v138
  %v1536 = vunpack.c.l.b16 %v139
  %v1537 = vunpack.c.l.b16 %v140
  %v1538 = vunpack.c.h.b16 %v140
  %v1539 = vunpack.c.l.b16 %v141
  %v1540 = vunpack.c.h.b16 %v141
  %v1541 = vunpack.c.l.b16 %v142
  %v1542 = vunpack.c.l.b16 %v143
  %v1543 = vunpack.c.h.b16 %v143
  %v1544 = vunpack.c.l.b16 %v144
  %v1545 = vunpack.c.h.b16 %v144
  %v1546 = vunpack.c.l.b16 %v145
  %v1547 = vunpack.c.l.b16 %v146
  %v1548 = vunpack.c.h.b16 %v146
  %v1549 = vunpack.c.l.b16 %v147
  %v1550 = vunpack.c.h.b16 %v147
  %v1551 = vunpack.c.l.b16 %v148
  %v1552 = vunpack.c.l.b16 %v149
  %v1553 = vunpack.c.h.b16 %v149
  %v1554 = vunpack.c.l.b16 %v150
  %v1555 = vunpack.c.h.b16 %v150
  %v1556 = vunpack.c.l.b16 %v151
  %v1557 = vunpack.c.l.b16 %v152
  %v1558 = vunpack.c.h.b16 %v152
  %v1559 = vunpack.c.l.b16 %v153
  %v1560 = vunpack.c.h.b16 %v153
  %v1561 = vunpack.c.l.b16 %v154
  %v1562 = vunpack.c.l.b16 %v155
  %v1563 = vunpack.c.h.b16 %v155
  %v1564 = vunpack.c.l.b16 %v156
  %v1565 = vunpack.c.h.b16 %v156
  %v1566 = vunpack.c.l.b16 %v157
  %v1567 = vunpack.c.l.b16 %v158
  %v1568 = vunpack.c.h.b16 %v158
  %v1569 = vunpack.c.l.b16 %v159
  %v1570 = vunpack.c.h.b16 %v159
  %v1571 = vunpack.c.l.b16 %v160
  %v1572 = vunpack.c.l.b16 %v161
  %v1573 = vunpack.c.h.b16 %v161
  %v1574 = vunpack.c.l.b16 %v162
  %v1575 = vunpack.c.h.b16 %v162
  %v1576 = vunpack.c.l.b16 %v163
  %v1577 = vunpack.c.l.b16 %v164
  %v1578 = vunpack.c.h.b16 %v164
  %v1579 = vunpack.c.l.b16 %v165
  %v1580 = vunpack.c.h.b16 %v165
  %v1581 = vunpack.c.l.b16 %v166
  %v1582 = vunpack.c.l.b16 %v167
  %v1583 = vunpack.c.h.b16 %v167
  %v1584 = vunpack.c.l.b16 %v168
  %v1585 = vunpack.c.h.b16 %v168
  %v1586 = vunpack.c.l.b16 %v169
  %v1587 = vunpack.c.l.b16 %v170
  %v1588 = vunpack.c.h.b16 %v170
  %v1589 = vunpack.c.l.b16 %v171
  %v1590 = vunpack.c.h.b16 %v171
  %v1591 = vunpack.c.l.b16 %v172
  %v1592 = vunpack.c.l.b16 %v173
  %v1593 = vunpack.c.h.b16 %v173
  %v1594 = vunpack.c.l.b16 %v174
  %v1595 = vunpack.c.h.b16 %v174
  %v1596 = vunpack.c.l.b16 %v175
  %v1597 = vunpack.c.l.b16 %v176
  %v1598 = vunpack.c.h.b16 %v176
  %v1599 = vunpack.c.l.b16 %v177
  %v1600 = vunpack.c.h.b16 %v177
  %v1601 = vunpack.c.l.b16 %v178
  %v1602 = vunpack.c.l.b16 %v179
  %v1603 = vunpack.c.h.b16 %v179
  %v1604 = vunpack.c.l.b16 %v180
  %v1605 = vunpack.c.h.b16 %v180
  %v1606 = vunpack.c.l.b16 %v181
  %v1607 = vunpack.c.l.b16 %v182
  %v1608 = vunpack.c.h.b16 %v182
  %v1609 = vunpack.c.l.b16 %v183
  %v1610 = vunpack.c.h.b16 %v183
  %v1611 = vunpack.c.l.b16 %v184
  %v1612 = vunpack.c.l.b16 %v185
  %v1613 = vunpack.c.h.b16 %v185
  %v1614 = vunpack.c.l.b16 %v186
  %v1615 = vunpack.c.h.b16 %v186
  %v1616 = vunpack.c.l.b16 %v187
  %v1617 = vunpack.c.l.b16 %v188
  %v1618 = vunpack.c.h.b16 %v188
  %v1619 = vunpack.c.l.b16 %v189
  %v1620 = vunpack.c.h.b16 %v189
  %v1621 = vunpack.c.l.b16 %v190
  %v1622 = vunpack.c.l.b16 %v191
  %v1623 = vunpack.c.h.b16 %v191
  %v1624 = vunpack.c.l.b16 %v192
  %v1625 = vunpack.c.h.b16 %v192
  %v1626 = vunpack.c.l.b16 %v193
  %v1627 = vunpack.c.l.b16 %v194
  %v1628 = vunpack.c.h.b16 %v194
  %v1629 = vunpack.c.l.b16 %v195
  %v1630 = vunpack.c.h.b16 %v195
  %v1631 = vunpack.c.l.b16 %v196
  %v1632 = vunpack.c.l.b16 %v197
  %v1633 = vunpack.c.h.b16 %v197
  %v1634 = vunpack.c.l.b16 %v198
  %v1635 = vunpack.c.h.b16 %v198
  %v1636 = vunpack.c.l.b16 %v199
  %v1637 = vunpack.c.l.b16 %v200
  %v1638 = vunpack.c.h.b16 %v200
  %v1639 = vunpack.c.l.b16 %v201
  %v1640 = vunpack.c.h.b16 %v201
  %v1641 = vunpack.c.l.b16 %v202
  %v1642 = vunpack.c.l.b16 %v203
  %v1643 = vunpack.c.h.b16 %v203
  %v1644 = vunpack.c.l.b16 %v204
  %v1645 = vunpack.c.h.b16 %v204
  %v1646 = vunpack.c.l.b16 %v205
  %v1647 = vunpack.c.l.b16 %v206
  %v1648 = vunpack.c.h.b16 %v206
  %v1649 = vunpack.c.l.b16 %v207
  %v1650 = vunpack.c.h.b16 %v207
  %v1651 = vunpack.c.l.b16 %v208
  %v1652 = vunpack.c.l.b16 %v209
  %v1653 = vunpack.c.h.b16 %v209
  %v1654 = vunpack.c.l.b16 %v210
  %v1655 = vunpack.c.h.b16 %v210
  %v1656 = vunpack.c.l.b16 %v211
  %v1657 = vunpack.c.l.b16 %v212
  %v1658 = vunpack.c.h.b16 %v212
  %v1659 = vunpack.c.l.b16 %v213
  %v1660 = vunpack.c.h.b16 %v213
  %v1661 = vunpack.c.l.b16 %v214
  %v1662 = vunpack.c.l.b16 %v215
  %v1663 = vunpack.c.h.b16 %v215
  %v1664 = vunpack.c.l.b16 %v216
  %v1665 = vunpack.c.h.b16 %v216
  %v1666 = vunpack.c.l.b16 %v217
  %v1667 = vunpack.c.l.b16 %v218
  %v1668 = vunpack.c.h.b16 %v218
  %v1669 = vunpack.c.l.b16 %v219
  %v1670 = vunpack.c.h.b16 %v219
  %v1671 = vunpack.c.l.b16 %v220
  %v1672 = vunpack.c.l.b16 %v221
  %v1673 = vunpack.c.h.b16 %v221
  %v1674 = vunpack.c.l.b16 %v222
  %v1675 = vunpack.c.h.b16 %v222
  %v1676 = vunpack.c.l.b16 %v223
  %v1677 = vunpack.c.l.b16 %v224
  %v1678 = vunpack.c.h.b16 %v224
  %v1679 = vunpack.c.l.b16 %v225
  %v1680 = vunpack.c.h.b16 %v225
  %v1681 = vunpack.c.l.b16 %v226
  %v1682 = vunpack.c.l.b16 %v227
  %v1683 = vunpack.c.h.b16 %v227
  %v1684 = vunpack.c.l.b16 %v228
  %v1685 = vunpack.c.h.b16 %v228
  %v1686 = vunpack.c.l.b16 %v229
  %v1687 = vunpack.c.l.b16 %v230
  %v1688 = vunpack.c.h.b16 %v230
  %v1689 = vunpack.c.l.b16 %v231
  %v1690 = vunpack.c.h.b16 %v231
  %v1691 = vunpack.c.l.b16 %v232
  %v1692 = vunpack.c.l.b16 %v233
  %v1693 = vunpack.c.h.b16 %v233
  %v1694 = vunpack.c.l.b16 %v234
  %v1695 = vunpack.c.h.b16 %v234
  %v1696 = vunpack.c.l.b16 %v235
  %v1697 = vunpack.c.l.b16 %v236
  %v1698 = vunpack.c.h.b16 %v236
  %v1699 = vunpack.c.l.b16 %v237
  %v1700 = vunpack.c.h.b16 %v237
  %v1701 = vunpack.c.l.b16 %v238
  %v1702 = vunpack.c.l.b16 %v239
  %v1703 = vunpack.c.h.b16 %v239
  %v1704 = vunpack.c.l.b16 %v240
  %v1705 = vunpack.c.h.b16 %v240
  %v1706 = vunpack.c.l.b16 %v241
  %v1707 = vunpack.c.l.b16 %v242
  %v1708 = vunpack.c.h.b16 %v242
  %v1709 = vunpack.c.l.b16 %v243
  %v1710 = vunpack.c.h.b16 %v243
  %v1711 = vunpack.c.l.b16 %v244
  %v1712 = vunpack.c.l.b16 %v245
  %v1713 = vunpack.c.h.b16 %v245
  %v1714 = vunpack.c.l.b16 %v246
  %v1715 = vunpack.c.h.b16 %v246
  %v1716 = vunpack.c.l.b16 %v247
  %v1717 = vunpack.c.l.b16 %v248
  %v1718 = vunpack.c.h.b16 %v248
  %v1719 = vunpack.c.l.b16 %v249
  %v1720 = vunpack.c.h.b16 %v249
  %v1721 = vunpack.c.l.b16 %v250
  %v1722 = vunpack.c.l.b16 %v251
  %v1723 = vunpack.c.h.b16 %v251
  %v1724 = vunpack.c.l.b16 %v252
  %v1725 = vunpack.c.h.b16 %v252
  %v1726 = vunpack.c.l.b16 %v253
  %v1727 = vunpack.c.l.b16 %v254
  %v1728 = vunpack.c.h.b16 %v254
  %v1729 = vunpack.c.l.b16 %v255
  %v1730 = vunpack.c.h.b16 %v255
  %v1731 = vunpack.c.l.b16 %v256
  %v1732 = vunpack.c.l.b16 %v257
  %v1733 = vunpack.c.h.b16 %v257
  %v1734 = vunpack.c.l.b16 %v258
  %v1735 = vunpack.c.h.b16 %v258
  %v1736 = vunpack.c.l.b16 %v259
  %v1737 = vunpack.c.l.b16 %v260
  %v1738 = vunpack.c.h.b16 %v260
  %v1739 = vunpack.c.l.b16 %v261
  %v1740 = vunpack.c.h.b16 %v261
  %v1741 = vunpack.c.l.b16 %v262
  %v1742 = vunpack.c.l.b16 %v263
  %v1743 = vunpack.c.h.b16 %v263
  %v1744 = vunpack.c.l.b16 %v264
  %v1745 = vunpack.c.h.b16 %v264
  %v1746 = vunpack.c.l.b16 %v265
  %v1747 = vunpack.c.l.b16 %v266
  %v1748 = vunpack.c.h.b16 %v266
  %v1749 = vunpack.c.l.b16 %v267
  %v1750 = vunpack.c.h.b16 %v267
  %v1751 = vunpack.c.l.b16 %v268
  %v1752 = vunpack.c.l.b16 %v269
  %v1753 = vunpack.c.h.b16 %v269
  %v1754 = vunpack.c.l.b16 %v270
  %v1755 = vunpack.c.h.b16 %v270
  %v1756 = vunpack.c.l.b16 %v271
  %v1757 = vunpack.c.l.b16 %v272
  %v1758 = vunpack.c.h.b16 %v272
  %v1759 = vunpack.c.l.b16 %v273
  %v1760 = vunpack.c.h.b16 %v273
  %v1761 = vunpack.c.l.b16 %v274
  %v1762 = vunpack.c.l.b16 %v275
  %v1763 = vunpack.c.h.b16 %v275
  %v1764 = vunpack.c.l.b16 %v276
  %v1765 = vunpack.c.h.b16 %v276
  %v1766 = vunpack.c.l.b16 %v277
  %v1767 = vunpack.c.l.b16 %v278
  %v1768 = vunpack.c.h.b16 %v278
  %v1769 = vunpack.c.l.b16 %v279
  %v1770 = vunpack.c.h.b16 %v279
  %v1771 = vunpack.c.l.b16 %v280
  %v1772 = vunpack.c.l.b16 %v281
  %v1773 = vunpack.c.h.b16 %v281
  %v1774 = vunpack.c.l.b16 %v282
  %v1775 = vunpack.c.h.b16 %v282
  %v1776 = vunpack.c.l.b16 %v283
  %v1777 = vunpack.c.l.b16 %v284
  %v1778 = vunpack.c.h.b16 %v284
  %v1779 = vunpack.c.l.b16 %v285
  %v1780 = vunpack.c.h.b16 %v285
  %v1781 = vunpack.c.l.b16 %v286
  %v1782 = vunpack.c.l.b16 %v287
  %v1783 = vunpack.c.h.b16 %v287
  %v1784 = vunpack.c.l.b16 %v288
  %v1785 = vunpack.c.h.b16 %v288
  %v1786 = vunpack.c.l.b16 %v289
  %v1787 = vunpack.c.l.b16 %v290
  %v1788 = vunpack.c.h.b16 %v290
  %v1789 = vunpack.c.l.b16 %v291
  %v1790 = vunpack.c.h.b16 %v291
  %v1791 = vunpack.c.l.b16 %v292
  %v1792 = vunpack.c.l.b16 %v293
  %v1793 = vunpack.c.h.b16 %v293
  %v1794 = vunpack.c.l.b16 %v294
  %v1795 = vunpack.c.h.b16 %v294
  %v1796 = vunpack.c.l.b16 %v295
  %v1797 = vunpack.c.l.b16 %v296
  %v1798 = vunpack.c.h.b16 %v296
  %v1799 = vunpack.c.l.b16 %v297
  %v1800 = vunpack.c.h.b16 %v297
  %v1801 = vunpack.c.l.b16 %v298
  %v1802 = vunpack.c.l.b16 %v299
  %v1803 = vunpack.c.h.b16 %v299
  %v1804 = vunpack.c.l.b16 %v300
  %v1805 = vunpack.c.h.b16 %v300
  %v1806 = vunpack.c.l.b16 %v301
  %v1807 = vunpack.c.l.b16 %v302
  %v1808 = vunpack.c.h.b16 %v302
  %v1809 = vunpack.c.l.b16 %v303
  %v1810 = vunpack.c.h.b16 %v303
  %v1811 = vunpack.c.l.b16 %v304
  %v1812 = vunpack.c.l.b16 %v305
  %v1813 = vunpack.c.h.b16 %v305
  %v1814 = vunpack.c.l.b16 %v306
  %v1815 = vunpack.c.h.b16 %v306
  %v1816 = vunpack.c.l.b16 %v307
  %v1817 = vunpack.c.l.b16 %v308
  %v1818 = vunpack.c.h.b16 %v308
  %v1819 = vunpack.c.l.b16 %v309
  %v1820 = vunpack.c.h.b16 %v309
  %v1821 = vunpack.c.l.b16 %v310
  %v1822 = vunpack.c.l.b16 %v311
  %v1823 = vunpack.c.h.b16 %v311
  %v1824 = vunpack.c.l.b16 %v312
  %v1825 = vunpack.c.h.b16 %v312
  %v1826 = vunpack.c.l.b16 %v313
  %v1827 = vunpack.c.l.b16 %v314
  %v1828 = vunpack.c.h.b16 %v314
  %v1829 = vunpack.c.l.b16 %v315
  %v1830 = vunpack.c.h.b16 %v315
  %v1831 = vunpack.c.l.b16 %v316
  %v1832 = vunpack.c.l.b16 %v317
  %v1833 = vunpack.c.h.b16 %v317
  %v1834 = vunpack.c.l.b16 %v318
  %v1835 = vunpack.c.h.b16 %v318
  %v1836 = vunpack.c.l.b16 %v319
  %v1837 = vunpack.c.l.b16 %v320
  %v1838 = vunpack.c.h.b16 %v320
  %v1839 = vunpack.c.l.b16 %v321
  %v1840 = vunpack.c.h.b16 %v321
  %v1841 = vunpack.c.l.b16 %v322
  %v1842 = vunpack.c.l.b16 %v323
  %v1843 = vunpack.c.h.b16 %v323
  %v1844 = vunpack.c.l.b16 %v324
  %v1845 = vunpack.c.h.b16 %v324
  %v1846 = vunpack.c.l.b16 %v325
  %v1847 = vunpack.c.l.b16 %v326
  %v1848 = vunpack.c.h.b16 %v326
  %v1849 = vunpack.c.l.b16 %v327
  %v1850 = vunpack.c.h.b16 %v327
  %v1851 = vunpack.c.l.b16 %v328
  %v1852 = vunpack.c.l.b16 %v329
  %v1853 = vunpack.c.h.b16 %v329
  %v1854 = vunpack.c.l.b16 %v330
  %v1855 = vunpack.c.h.b16 %v330
  %v1856 = vunpack.c.l.b16 %v331
  %v1857 = vunpack.c.l.b16 %v332
  %v1858 = vunpack.c.h.b16 %v332
  %v1859 = vunpack.c.l.b16 %v333
  %v1860 = vunpack.c.h.b16 %v333
  %v1861 = vunpack.c.l.b16 %v334
  %v1862 = vunpack.c.l.b16 %v335
  %v1863 = vunpack.c.h.b16 %v335
  %v1864 = vunpack.c.l.b16 %v336
  %v1865 = vunpack.c.h.b16 %v336
  %v1866 = vunpack.c.l.b16 %v337
  %v1867 = vunpack.c.l.b16 %v338
  %v1868 = vunpack.c.h.b16 %v338
  %v1869 = vunpack.c.l.b16 %v339
  %v1870 = vunpack.c.h.b16 %v339
  %v1871 = vunpack.c.l.b16 %v340
  %v1872 = vunpack.c.l.b16 %v341
  %v1873 = vunpack.c.h.b16 %v341
  %v1874 = vunpack.c.l.b16 %v342
  %v1875 = vunpack.c.h.b16 %v342
  %v1876 = vunpack.c.l.b16 %v343
  %v1877 = vunpack.c.l.b16 %v344
  %v1878 = vunpack.c.h.b16 %v344
  %v1879 = vunpack.c.l.b16 %v345
  %v1880 = vunpack.c.h.b16 %v345
  %v1881 = vunpack.c.l.b16 %v346
  %v1882 = vunpack.c.l.b16 %v347
  %v1883 = vunpack.c.h.b16 %v347
  %v1884 = vunpack.c.l.b16 %v348
  %v1885 = vunpack.c.h.b16 %v348
  %v1886 = vunpack.c.l.b16 %v349
  %v1887 = vunpack.c.l.b16 %v350
  %v1888 = vunpack.c.h.b16 %v350
  %v1889 = vunpack.c.l.b16 %v351
  %v1890 = vunpack.c.h.b16 %v351
  %v1891 = vunpack.c.l.b16 %v352
  %v1892 = vunpack.c.l.b16 %v353
  %v1893 = vunpack.c.h.b16 %v353
  %v1894 = vunpack.c.l.b16 %v354
  %v1895 = vunpack.c.h.b16 %v354
  %v1896 = vunpack.c.l.b16 %v355
  %v1897 = vunpack.c.l.b16 %v356
  %v1898 = vunpack.c.h.b16 %v356
  %v1899 = vunpack.c.l.b16 %v357
  %v1900 = vunpack.c.h.b16 %v357
  %v1901 = vunpack.c.l.b16 %v358
  %v1902 = vunpack.c.l.b16 %v359
  %v1903 = vunpack.c.h.b16 %v359
  %v1904 = vunpack.c.l.b16 %v360
  %v1905 = vunpack.c.h.b16 %v360
  %v1906 = vunpack.c.l.b16 %v361
  %v1907 = vunpack.c.l.b16 %v362
  %v1908 = vunpack.c.h.b16 %v362
  %v1909 = vunpack.c.l.b16 %v363
  %v1910 = vunpack.c.h.b16 %v363
  %v1911 = vunpack.c.l.b16 %v364
  %v1912 = vunpack.c.l.b16 %v365
  %v1913 = vunpack.c.h.b16 %v365
  %v1914 = vunpack.c.l.b16 %v366
  %v1915 = vunpack.c.h.b16 %v366
  %v1916 = vunpack.c.l.b16 %v367
  %v1917 = vunpack.c.l.b16 %v368
  %v1918 = vunpack.c.h.b16 %v368
  %v1919 = vunpack.c.l.b16 %v369
  %v1920 = vunpack.c.h.b16 %v369
  %v1921 = vunpack.c.l.b16 %v370
  %v1922 = vunpack.c.l.b16 %v371
  %v1923 = vunpack.c.h.b16 %v371
  %v1924 = vunpack.c.l.b16 %v372
  %v1925 = vunpack.c.h.b16 %v372
  %v1926 = vunpack.c.l.b16 %v373
  %v1927 = vunpack.c.l.b16 %v374
  %v1928 = vunpack.c.h.b16 %v374
  %v1929 = vunpack.c.l.b16 %v375
  %v1930 = vunpack.c.h.b16 %v375
  %v1931 = vunpack.c.l.b16 %v376
  %v1932 = vunpack.c.l.b16 %v377
  %v1933 = vunpack.c.h.b16 %v377
  %v1934 = vunpack.c.l.b16 %v378
  %v1935 = vunpack.c.h.b16 %v378
  %v1936 = vunpack.c.l.b16 %v379
  %v1937 = vunpack.c.l.b16 %v380
  %v1938 = vunpack.c.h.b16 %v380
  %v1939 = vunpack.c.l.b16 %v381
  %v1940 = vunpack.c.h.b16 %v381
  %v1941 = vunpack.c.l.b16 %v382
  %v1942 = vunpack.c.l.b16 %v383
  %v1943 = vunpack.c.h.b16 %v383
  %v1944 = vunpack.c.l.b16 %v384
  %v1945 = vunpack.c.h.b16 %v384
  %v1946 = vunpack.c.l.b16 %v385
  %v1947 = vunpack.c.l.b16 %v386
  %v1948 = vunpack.c.h.b16 %v386
  %v1949 = vunpack.c.l.b16 %v387
  %v1950 = vunpack.c.h.b16 %v387
  %v1951 = vunpack.c.l.b16 %v388
  %v1952 = vunpack.c.l.b16 %v389
  %v1953 = vunpack.c.h.b16 %v389
  %v1954 = vunpack.c.l.b16 %v390
  %v1955 = vunpack.c.h.b16 %v390
  %v1956 = vunpack.c.l.b16 %v391
  %v1957 = vunpack.c.l.b16 %v392
  %v1958 = vunpack.c.h.b16 %v392
  %v1959 = vunpack.c.l.b16 %v393
  %v1960 = vunpack.c.h.b16 %v393
  %v1961 = vunpack.c.l.b16 %v394
  %v1962 = vunpack.c.l.b16 %v395
  %v1963 = vunpack.c.h.b16 %v395
  %v1964 = vunpack.c.l.b16 %v396
  %v1965 = vunpack.c.h.b16 %v396
  %v1966 = vunpack.c.l.b16 %v397
  %v1967 = vunpack.c.l.b16 %v398
  %v1968 = vunpack.c.h.b16 %v398
  %v1969 = vunpack.c.l.b16 %v399
  %v1970 = vunpack.c.h.b16 %v399
  %v1971 = vunpack.c.l.b16 %v400
  %v1972 = vunpack.c.l.b16 %v401
  %v1973 = vunpack.c.h.b16 %v401
  %v1974 = vunpack.c.l.b16 %v402
  %v1975 = vunpack.c.h.b16 %v402
  %v1976 = vunpack.c.l.b16 %v403
  %v1977 = vunpack.c.l.b16 %v404
  %v1978 = vunpack.c.h.b16 %v404
  %v1979 = vunpack.c.l.b16 %v405
  %v1980 = vunpack.c.h.b16 %v405
  %v1981 = vunpack.c.l.b16 %v406
  %v1982 = vunpack.c.l.b16 %v407
  %v1983 = vunpack.c.h.b16 %v407
  %v1984 = vunpack.c.l.b16 %v408
  %v1985 = vunpack.c.h.b16 %v408
  %v1986 = vunpack.c.l.b16 %v409
  %v1987 = vunpack.c.l.b16 %v410
  %v1988 = vunpack.c.h.b16 %v410
  %v1989 = vunpack.c.l.b16 %v411
  %v1990 = vunpack.c.h.b16 %v411
  %v1991 = vunpack.c.l.b16 %v412
  %v1992 = vunpack.c.l.b16 %v413
  %v1993 = vunpack.c.h.b16 %v413
  %v1994 = vunpack.c.l.b16 %v414
  %v1995 = vunpack.c.h.b16 %v414
  %v1996 = vunpack.c.l.b16 %v415
  %v1997 = vunpack.c.l.b16 %v416
  %v1998 = vunpack.c.h.b16 %v416
  %v1999 = vunpack.c.l.b16 %v417
  %v2000 = vunpack.c.h.b16 %v417
  %v2001 = vunpack.c.l.b16 %v418
  %v2002 = vunpack.c.l.b16 %v419
  %v2003 = vunpack.c.h.b16 %v419
  %v2004 = vunpack.c.l.b16 %v420
  %v2005 = vunpack.c.h.b16 %v420
  %v2006 = vunpack.c.l.b16 %v421
  %v2007 = vunpack.c.l.b16 %v422
  %v2008 = vunpack.c.h.b16 %v422
  %v2009 = vunpack.c.l.b16 %v423
  %v2010 = vunpack.c.h.b16 %v423
  %v2011 = vunpack.c.l.b16 %v424
  %v2012 = vunpack.c.l.b16 %v425
  %v2013 = vunpack.c.h.b16 %v425
  %v2014 = vunpack.c.l.b16 %v426
  %v2015 = vunpack.c.h.b16 %v426
  %v2016 = vunpack.c.l.b16 %v427
  %v2017 = vunpack.c.l.b16 %v428
  %v2018 = vunpack.c.h.b16 %v428
  %v2019 = vunpack.c.l.b16 %v429
  %v2020 = vunpack.c.h.b16 %v429
  %v2021 = vunpack.c.l.b16 %v430
  %v2022 = vunpack.c.l.b16 %v431
  %v2023 = vunpack.c.h.b16 %v431
  %v2024 = vunpack.c.l.b16 %v432
  %v2025 = vunpack.c.h.b16 %v432
  %v2026 = vunpack.c.l.b16 %v433
  %v2027 = vunpack.c.l.b16 %v434
  %v2028 = vunpack.c.h.b16 %v434
  %v2029 = vunpack.c.l.b16 %v435
  %v2030 = vunpack.c.h.b16 %v435
  %v2031 = vunpack.c.l.b16 %v436
  %v2032 = vunpack.c.l.b16 %v437
  %v2033 = vunpack.c.h.b16 %v437
  %v2034 = vunpack.c.l.b16 %v438
  %v2035 = vunpack.c.h.b16 %v438
  %v2036 = vunpack.c.l.b16 %v439
  %v2037 = vunpack.c.l.b16 %v440
  %v2038 = vunpack.c.h.b16 %v440
  %v2039 = vunpack.c.l.b16 %v441
  %v2040 = vunpack.c.h.b16 %v441
  %v2041 = vunpack.c.l.b16 %v442
  %v2042 = vunpack.c.l.b16 %v443
  %v2043 = vunpack.c.h.b16 %v443
  %v2044 = vunpack.c.l.b16 %v444
  %v2045 = vunpack.c.h.b16 %v444
  %v2046 = vunpack.c.l.b16 %v445
  %v2047 = vunpack.c.l.b16 %v446
  %v2048 = vunpack.c.h.b16 %v446
  %v2049 = vunpack.c.l.b16 %v447
  %v2050 = vunpack.c.h.b16 %v447
  %v2051 = vunpack.c.l.b16 %v448
  %v2052 = vunpack.c.l.b16 %v449
  %v2053 = vunpack.c.h.b16 %v449
  %v2054 = vunpack.c.l.b16 %v450
  %v2055 = vunpack.c.h.b16 %v450
  %v2056 = vunpack.c.l.b16 %v451
  %v2057 = vunpack.c.l.b16 %v452
  %v2058 = vunpack.c.h.b16 %v452
  %v2059 = vunpack.c.l.b16 %v453
  %v2060 = vunpack.c.h.b16 %v453
  %v2061 = vunpack.c.l.b16 %v454
  %v2062 = vunpack.c.l.b16 %v455
  %v2063 = vunpack.c.h.b16 %v455
  %v2064 = vunpack.c.l.b16 %v456
  %v2065 = vunpack.c.h.b16 %v456
  %v2066 = vunpack.c.l.b16 %v457
  %v2067 = vunpack.c.l.b16 %v458
  %v2068 = vunpack.c.h.b16 %v458
  %v2069 = vunpack.c.l.b16 %v459
  %v2070 = vunpack.c.h.b16 %v459
  %v2071 = vunpack.c.l.b16 %v460
  %v2072 = vunpack.c.l.b16 %v461
  %v2073 = vunpack.c.h.b16 %v461
  %v2074 = vunpack.c.l.b16 %v462
  %v2075 = vunpack.c.h.b16 %v462
  %v2076 = vunpack.c.l.b16 %v463
  %v2077 = vunpack.c.l.b16 %v464
  %v2078 = vunpack.c.h.b16 %v464
  %v2079 = vunpack.c.l.b16 %v465
  %v2080 = vunpack.c.h.b16 %v465
  %v2081 = vunpack.c.l.b16 %v466
  %v2082 = vunpack.c.l.b16 %v467
  %v2083 = vunpack.c.h.b16 %v467
  %v2084 = vunpack.c.l.b16 %v468
  %v2085 = vunpack.c.h.b16 %v468
  %v2086 = vunpack.c.l.b16 %v469
  %v2087 = vunpack.c.l.b16 %v470
  %v2088 = vunpack.c.h.b16 %v470
  %v2089 = vunpack.c.l.b16 %v471
  %v2090 = vunpack.c.h.b16 %v471
  %v2091 = vunpack.c.l.b16 %v472
  %v2092 = vunpack.c.l.b16 %v473
  %v2093 = vunpack.c.h.b16 %v473
  %v2094 = vunpack.c.l.b16 %v474
  %v2095 = vunpack.c.h.b16 %v474
  %v2096 = vunpack.c.l.b16 %v475
  %v2097 = vunpack.c.l.b16 %v476
  %v2098 = vunpack.c.h.b16 %v476
  %v2099 = vunpack.c.l.b16 %v477
  %v2100 = vunpack.c.h.b16 %v477
  %v2101 = vunpack.c.l.b16 %v478
  %v2102 = vunpack.c.l.b16 %v479
  %v2103 = vunpack.c.h.b16 %v479
  %v2104 = vunpack.c.l.b16 %v480
  %v2105 = vunpack.c.h.b16 %v480
  %v2106 = vunpack.c.l.b16 %v481
  %v2107 = vunpack.c.l.b16 %v482
  %v2108 = vunpack.c.h.b16 %v482
  %v2109 = vunpack.c.l.b16 %v483
  %v2110 = vunpack.c.h.b16 %v483
  %v2111 = vunpack.c.l.b16 %v484
  %v2112 = vunpack.c.l.b16 %v485
  %v2113 = vunpack.c.h.b16 %v485
  %v2114 = vunpack.c.l.b16 %v486
  %v2115 = vunpack.c.h.b16 %v486
  %v2116 = vunpack.c.l.b16 %v487
  %v2117 = vunpack.c.l.b16 %v488
  %v2118 = vunpack.c.h.b16 %v488
  %v2119 = vunpack.c.l.b16 %v489
  %v2120 = vunpack.c.h.b16 %v489
  %v2121 = vunpack.c.l.b16 %v490
  %v2122 = vunpack.c.l.b16 %v491
  %v2123 = vunpack.c.h.b16 %v491
  %v2124 = vunpack.c.l.b16 %v492
  %v2125 = vunpack.c.h.b16 %v492
  %v2126 = vunpack.c.l.b16 %v493
  %v2127 = vunpack.c.l.b16 %v494
  %v2128 = vunpack.c.h.b16 %v494
  %v2129 = vunpack.c.l.b16 %v495
  %v2130 = vunpack.c.h.b16 %v495
  %v2131 = vunpack.c.l.b16 %v496
  %v2132 = vunpack.c.l.b16 %v497
  %v2133 = vunpack.c.h.b16 %v497
  %v2134 = vunpack.c.l.b16 %v498
  %v2135 = vunpack.c.h.b16 %v498
  %v2136 = vunpack.c.l.b16 %v499
  %v2137 = vunpack.c.l.b16 %v500
  %v2138 = vunpack.c.h.b16 %v500
  %v2139 = vunpack.c.l.b16 %v501
  %v2140 = vunpack.c.h.b16 %v501
  %v2141 = vunpack.c.l.b16 %v502
  %v2142 = vunpack.c.l.b16 %v503
  %v2143 = vunpack.c.h.b16 %v503
  %v2144 = vunpack.c.l.b16 %v504
  %v2145 = vunpack.c.h.b16 %v504
  %v2146 = vunpack.c.l.b16 %v505
  %v2147 = vunpack.c.l.b16 %v506
  %v2148 = vunpack.c.h.b16 %v506
  %v2149 = vunpack.c.l.b16 %v507
  %v2150 = vunpack.c.h.b16 %v507
  %v2151 = vunpack.c.l.b16 %v508
  %v2152 = vunpack.c.l.b16 %v509
  %v2153 = vunpack.c.h.b16 %v509
  %v2154 = vunpack.c.l.b16 %v510
  %v2155 = vunpack.c.h.b16 %v510
  %v2156 = vunpack.c.l.b16 %v511
  %v2157 = vunpack.c.l.b16 %v512
  %v2158 = vunpack.c.h.b16 %v512
  %v2159 = vunpack.c.l.b16 %v513
  %v2160 = vunpack.c.h.b16 %v513
  %v2161 = vunpack.c.l.b16 %v514
  %v2162 = vunpack.c.l.b16 %v515
  %v2163 = vunpack.c.h.b16 %v515
  %v2164 = vunpack.c.l.b16 %v516
  %v2165 = vunpack.c.h.b16 %v516
  %v2166 = vunpack.c.l.b16 %v517
  %v2167 = vunpack.c.l.b16 %v518
  %v2168 = vunpack.c.h.b16 %v518
  %v2169 = vunpack.c.l.b16 %v519
  %v2170 = vunpack.c.h.b16 %v519
  %v2171 = vunpack.c.l.b16 %v520
  %v2172 = vunpack.c.l.b16 %v521
  %v2173 = vunpack.c.h.b16 %v521
  %v2174 = vunpack.c.l.b16 %v522
  %v2175 = vunpack.c.h.b16 %v522
  %v2176 = vunpack.c.l.b16 %v523
  %v2177 = vunpack.c.l.b16 %v524
  %v2178 = vunpack.c.h.b16 %v524
  %v2179 = vunpack.c.l.b16 %v525
  %v2180 = vunpack.c.h.b16 %v525
  %v2181 = vunpack.c.l.b16 %v526
  %v2182 = vunpack.c.l.b16 %v527
  %v2183 = vunpack.c.h.b16 %v527
  %v2184 = vunpack.c.l.b16 %v528
  %v2185 = vunpack.c.h.b16 %v528
  %v2186 = vunpack.c.l.b16 %v529
  %v2187 = vunpack.c.l.b16 %v530
  %v2188 = vunpack.c.h.b16 %v530
  %v2189 = vunpack.c.l.b16 %v531
  %v2190 = vunpack.c.h.b16 %v531
  %v2191 = vunpack.c.l.b16 %v532
  %v2192 = vunpack.c.l.b16 %v533
  %v2193 = vunpack.c.h.b16 %v533
  %v2194 = vunpack.c.l.b16 %v534
  %v2195 = vunpack.c.h.b16 %v534
  %v2196 = vunpack.c.l.b16 %v535
  %v2197 = vunpack.c.l.b16 %v536
  %v2198 = vunpack.c.h.b16 %v536
  %v2199 = vunpack.c.l.b16 %v537
  %v2200 = vunpack.c.h.b16 %v537
  %v2201 = vunpack.c.l.b16 %v538
  %v2202 = vunpack.c.l.b16 %v539
  %v2203 = vunpack.c.h.b16 %v539
  %v2204 = vunpack.c.l.b16 %v540
  %v2205 = vunpack.c.h.b16 %v540
  %v2206 = vunpack.c.l.b16 %v541
  %v2207 = vunpack.c.l.b16 %v542
  %v2208 = vunpack.c.h.b16 %v542
  %v2209 = vunpack.c.l.b16 %v543
  %v2210 = vunpack.c.h.b16 %v543
  %v2211 = vunpack.c.l.b16 %v544
  %v2212 = vunpack.c.l.b16 %v545
  %v2213 = vunpack.c.h.b16 %v545
  %v2214 = vunpack.c.l.b16 %v546
  %v2215 = vunpack.c.h.b16 %v546
  %v2216 = vunpack.c.l.b16 %v547
  %v2217 = vunpack.c.l.b16 %v548
  %v2218 = vunpack.c.h.b16 %v548
  %v2219 = vunpack.c.l.b16 %v549
  %v2220 = vunpack.c.h.b16 %v549
  %v2221 = vunpack.c.l.b16 %v550
  %v2222 = vunpack.c.l.b16 %v551
  %v2223 = vunpack.c.h.b16 %v551
  %v2224 = vunpack.c.l.b16 %v552
  %v2225 = vunpack.c.h.b16 %v552
  %v2226 = vunpack.c.l.b16 %v553
  %v2227 = vunpack.c.l.b16 %v554
  %v2228 = vunpack.c.h.b16 %v554
  %v2229 = vunpack.c.l.b16 %v555
  %v2230 = vunpack.c.h.b16 %v555
  %v2231 = vunpack.c.l.b16 %v556
  %v2232 = vunpack.c.l.b16 %v557
  %v2233 = vunpack.c.h.b16 %v557
  %v2234 = vunpack.c.l.b16 %v558
  %v2235 = vunpack.c.h.b16 %v558
  %v2236 = vunpack.c.l.b16 %v559
  %v2237 = vunpack.c.l.b16 %v560
  %v2238 = vunpack.c.h.b16 %v560
  %v2239 = vunpack.c.l.b16 %v561
  %v2240 = vunpack.c.h.b16 %v561
  %v2241 = vunpack.c.l.b16 %v562
  %v2242 = vunpack.c.l.b16 %v563
  %v2243 = vunpack.c.h.b16 %v563
  %v2244 = vunpack.c.l.b16 %v564
  %v2245 = vunpack.c.h.b16 %v564
  %v2246 = vunpack.c.l.b16 %v565
  %v2247 = vunpack.c.l.b16 %v566
  %v2248 = vunpack.c.h.b16 %v566
  %v2249 = vunpack.c.l.b16 %v567
  %v2250 = vunpack.c.h.b16 %v567
  %v2251 = vunpack.c.l.b16 %v568
  %v2252 = vunpack.c.l.b16 %v569
  %v2253 = vunpack.c.h.b16 %v569
  %v2254 = vunpack.c.l.b16 %v570
  %v2255 = vunpack.c.h.b16 %v570
  %v2256 = vunpack.c.l.b16 %v571
  %v2257 = vunpack.c.l.b16 %v572
  %v2258 = vunpack.c.h.b16 %v572
  %v2259 = vunpack.c.l.b16 %v573
  %v2260 = vunpack.c.h.b16 %v573
  %v2261 = vunpack.c.l.b16 %v574
  %v2262 = vunpack.c.l.b16 %v575
  %v2263 = vunpack.c.h.b16 %v575
  %v2264 = vunpack.c.l.b16 %v576
  %v2265 = vunpack.c.h.b16 %v576
  %v2266 = vunpack.c.l.b16 %v577
  %v2267 = vunpack.c.l.b16 %v578
  %v2268 = vunpack.c.h.b16 %v578
  %v2269 = vunpack.c.l.b16 %v579
  %v2270 = vunpack.c.h.b16 %v579
  %v2271 = vunpack.c.l.b16 %v580
  %v2272 = vunpack.c.l.b16 %v581
  %v2273 = vunpack.c.h.b16 %v581
  %v2274 = vunpack.c.l.b16 %v582
  %v2275 = vunpack.c.h.b16 %v582
  %v2276 = vunpack.c.l.b16 %v583
  %v2277 = vunpack.c.l.b16 %v584
  %v2278 = vunpack.c.h.b16 %v584
  %v2279 = vunpack.c.l.b16 %v585
  %v2280 = vunpack.c.h.b16 %v585
  %v2281 = vunpack.c.l.b16 %v586
  %v2282 = vunpack.c.l.b16 %v587
  %v2283 = vunpack.c.h.b16 %v587
  %v2284 = vunpack.c.l.b16 %v588
  %v2285 = vunpack.c.h.b16 %v588
  %v2286 = vunpack.c.l.b16 %v589
  %v2287 = vunpack.c.l.b16 %v590
  %v2288 = vunpack.c.h.b16 %v590
  %v2289 = vunpack.c.l.b16 %v591
  %v2290 = vunpack.c.h.b16 %v591
  %v2291 = vunpack.c.l.b16 %v592
  %v2292 = vunpack.c.l.b16 %v593
  %v2293 = vunpack.c.h.b16 %v593
  %v2294 = vunpack.c.l.b16 %v594
  %v2295 = vunpack.c.h.b16 %v594
  %v2296 = vunpack.c.l.b16 %v595
  %v2297 = vunpack.c.l.b16 %v596
  %v2298 = vunpack.c.h.b16 %v596
  %v2299 = vunpack.c.l.b16 %v597
  %v2300 = vunpack.c.h.b16 %v597
  %v2301 = vunpack.c.l.b16 %v598
  %v2302 = vunpack.c.l.b16 %v599
  %v2303 = vunpack.c.h.b16 %v599
  %v2304 = vunpack.c.l.b16 %v600
  %v2305 = vunpack.c.h.b16 %v600
  %v2306 = vunpack.c.l.b16 %v601
  %v2307 = vunpack.c.l.b16 %v602
  %v2308 = vunpack.c.h.b16 %v602
  %v2309 = vunpack.c.l.b16 %v603
  %v2310 = vunpack.c.h.b16 %v603
  %v2311 = vunpack.c.l.b16 %v604
  %v2312 = vunpack.c.l.b16 %v605
  %v2313 = vunpack.c.h.b16 %v605
  %v2314 = vunpack.c.l.b16 %v606
  %v2315 = vunpack.c.h.b16 %v606
  %v2316 = vunpack.c.l.b16 %v607
  %v2317 = vunpack.c.l.b16 %v608
  %v2318 = vunpack.c.h.b16 %v608
  %v2319 = vunpack.c.l.b16 %v609
  %v2320 = vunpack.c.h.b16 %v609
  %v2321 = vunpack.c.l.b16 %v610
  %v2322 = vunpack.c.l.b16 %v611
  %v2323 = vunpack.c.h.b16 %v611
  %v2324 = vunpack.c.l.b16 %v612
  %v2325 = vunpack.c.h.b16 %v612
  %v2326 = vunpack.c.l.b16 %v613
  %v2327 = vunpack.c.l.b16 %v614
  %v2328 = vunpack.c.h.b16 %v614
  %v2329 = vunpack.c.l.b16 %v615
  %v2330 = vunpack.c.h.b16 %v615
  %v2331 = vunpack.c.l.b16 %v616
  %v2332 = vunpack.c.l.b16 %v617
  %v2333 = vunpack.c.h.b16 %v617
  %v2334 = vunpack.c.l.b16 %v618
  %v2335 = vunpack.c.h.b16 %v618
  %v2336 = vunpack.c.l.b16 %v619
  %v2337 = vunpack.c.l.b16 %v620
  %v2338 = vunpack.c.h.b16 %v620
  %v2339 = vunpack.c.l.b16 %v621
  %v2340 = vunpack.c.h.b16 %v621
  %v2341 = vunpack.c.l.b16 %v622
  %v2342 = vunpack.c.l.b16 %v623
  %v2343 = vunpack.c.h.b16 %v623
  %v2344 = vunpack.c.l.b16 %v624
  %v2345 = vunpack.c.h.b16 %v624
  %v2346 = vunpack.c.l.b16 %v625
  %v2347 = vunpack.c.l.b16 %v626
  %v2348 = vunpack.c.h.b16 %v626
  %v2349 = vunpack.c.l.b16 %v627
  %v2350 = vunpack.c.h.b16 %v627
  %v2351 = vunpack.c.l.b16 %v628
  %v2352 = vunpack.c.l.b16 %v629
  %v2353 = vunpack.c.h.b16 %v629
  %v2354 = vunpack.c.l.b16 %v630
  %v2355 = vunpack.c.h.b16 %v630
  %v2356 = vunpack.c.l.b16 %v631
  %v2357 = vunpack.c.l.b16 %v632
  %v2358 = vunpack.c.h.b16 %v632
  %v2359 = vunpack.c.l.b16 %v633
  %v2360 = vunpack.c.h.b16 %v633
  %v2361 = vunpack.c.l.b16 %v634
  %v2362 = vunpack.c.l.b16 %v635
  %v2363 = vunpack.c.h.b16 %v635
  %v2364 = vunpack.c.l.b16 %v636
  %v2365 = vunpack.c.h.b16 %v636
  %v2366 = vunpack.c.l.b16 %v637
  %v2367 = vpack.c.b16 %v1372, %v1367
  %v2368 = vpack.c.b16 %v1373, %v1368
  %v2369 = vpack.c.b16 %v1374, %v1369
  %v2370 = vpack.c.b16 %v1375, %v1370
  %v2371 = vpack.c.b16 %v1376, %v1371
  %v2372 = vpack.c.b16 %v1382, %v1377
  %v2373 = vpack.c.b16 %v1383, %v1378
  %v2374 = vpack.c.b16 %v1384, %v1379
  %v2375 = vpack.c.b16 %v1385, %v1380
  %v2376 = vpack.c.b16 %v1386, %v1381
  %v2377 = vpack.c.b16 %v1392, %v1387
  %v2378 = vpack.c.b16 %v1393, %v1388
  %v2379 = vpack.c.b16 %v1394, %v1389
  %v2380 = vpack.c.b16 %v1395, %v1390
  %v2381 = vpack.c.b16 %v1396, %v1391
  %v2382 = vpack.c.b16 %v1402, %v1397
  %v2383 = vpack.c.b16 %v1403, %v1398
  %v2384 = vpack.c.b16 %v1404, %v1399
  %v2385 = vpack.c.b16 %v1405, %v1400
  %v2386 = vpack.c.b16 %v1406, %v1401
  %v2387 = vpack.c.b16 %v1412, %v1407
  %v2388 = vpack.c.b16 %v1413, %v1408
  %v2389 = vpack.c.b16 %v1414, %v1409
  %v2390 = vpack.c.b16 %v1415, %v1410
  %v2391 = vpack.c.b16 %v1416, %v1411
  %v2392 = vpack.c.b16 %v1422, %v1417
  %v2393 = vpack.c.b16 %v1423, %v1418
  %v2394 = vpack.c.b16 %v1424, %v1419
  %v2395 = vpack.c.b16 %v1425, %v1420
  %v2396 = vpack.c.b16 %v1426, %v1421
  %v2397 = vpack.c.b16 %v1432, %v1427
  %v2398 = vpack.c.b16 %v1433, %v1428
  %v2399 = vpack.c.b16 %v1434, %v1429
  %v2400 = vpack.c.b16 %v1435, %v1430
  %v2401 = vpack.c.b16 %v1436, %v1431
  %v2402 = vpack.c.b16 %v1442, %v1437
  %v2403 = vpack.c.b16 %v1443, %v1438
  %v2404 = vpack.c.b16 %v1444, %v1439
  %v2405 = vpack.c.b16 %v1445, %v1440
  %v2406 = vpack.c.b16 %v1446, %v1441
  %v2407 = vpack.c.b16 %v1452, %v1447
  %v2408 = vpack.c.b16 %v1453, %v1448
  %v2409 = vpack.c.b16 %v1454, %v1449
  %v2410 = vpack.c.b16 %v1455, %v1450
  %v2411 = vpack.c.b16 %v1456, %v1451
  %v2412 = vpack.c.b16 %v1462, %v1457
  %v2413 = vpack.c.b16 %v1463, %v1458
  %v2414 = vpack.c.b16 %v1464, %v1459
  %v2415 = vpack.c.b16 %v1465, %v1460
  %v2416 = vpack.c.b16 %v1466, %v1461
  %v2417 = vpack.c.b16 %v1472, %v1467
  %v2418 = vpack.c.b16 %v1473, %v1468
  %v2419 = vpack.c.b16 %v1474, %v1469
  %v2420 = vpack.c.b16 %v1475, %v1470
  %v2421 = vpack.c.b16 %v1476, %v1471
  %v2422 = vpack.c.b16 %v1482, %v1477
  %v2423 = vpack.c.b16 %v1483, %v1478
  %v2424 = vpack.c.b16 %v1484, %v1479
  %v2425 = vpack.c.b16 %v1485, %v1480
  %v2426 = vpack.c.b16 %v1486, %v1481
  %v2427 = vpack.c.b16 %v1492, %v1487
  %v2428 = vpack.c.b16 %v1493, %v1488
  %v2429 = vpack.c.b16 %v1494, %v1489
  %v2430 = vpack.c.b16 %v1495, %v1490
  %v2431 = vpack.c.b16 %v1496, %v1491
  %v2432 = vpack.c.b16 %v1502, %v1497
  %v2433 = vpack.c.b16 %v1503, %v1498
  %v2434 = vpack.c.b16 %v1504, %v1499
  %v2435 = vpack.c.b16 %v1505, %v1500
  %v2436 = vpack.c.b16 %v1506, %v1501
  %v2437 = vpack.c.b16 %v1512, %v1507
  %v2438 = vpack.c.b16 %v1513, %v1508
  %v2439 = vpack.c.b16 %v1514, %v1509
  %v2440 = vpack.c.b16 %v1515, %v1510
  %v2441 = vpack.c.b16 %v1516, %v1511
  %v2442 = vpack.c.b16 %v1522, %v1517
  %v2443 = vpack.c.b16 %v1523, %v1518
  %v2444 = vpack.c.b16 %v1524, %v1519
  %v2445 = vpack.c.b16 %v1525, %v1520
  %v2446 = vpack.c.b16 %v1526, %v1521
  %v2447 = vpack.c.b16 %v1532, %v1527
  %v2448 = vpack.c.b16 %v1533, %v1528
  %v2449 = vpack.c.b16 %v1534, %v1529
  %v2450 = vpack.c.b16 %v1535, %v1530
  %v2451 = vpack.c.b16 %v1536, %v1531
  %v2452 = vpack.c.b16 %v1542, %v1537
  %v2453 = vpack.c.b16 %v1543, %v1538
  %v2454 = vpack.c.b16 %v1544, %v1539
  %v2455 = vpack.c.b16 %v1545, %v1540
  %v2456 = vpack.c.b16 %v1546, %v1541
  %v2457 = vpack.c.b16 %v1552, %v1547
  %v2458 = vpack.c.b16 %v1553, %v1548
  %v2459 = vpack.c.b16 %v1554, %v1549
  %v2460 = vpack.c.b16 %v1555, %v1550
  %v2461 = vpack.c.b16 %v1556, %v1551
  %v2462 = vpack.c.b16 %v1562, %v1557
  %v2463 = vpack.c.b16 %v1563, %v1558
  %v2464 = vpack.c.b16 %v1564, %v1559
  %v2465 = vpack.c.b16 %v1565, %v1560
  %v2466 = vpack.c.b16 %v1566, %v1561
  %v2467 = vpack.c.b16 %v1572, %v1567
  %v2468 = vpack.c.b16 %v1573, %v1568
  %v2469 = vpack.c.b16 %v1574, %v1569
  %v2470 = vpack.c.b16 %v1575, %v1570
  %v2471 = vpack.c.b16 %v1576, %v1571
  %v2472 = vpack.c.b16 %v1582, %v1577
  %v2473 = vpack.c.b16 %v1583, %v1578
  %v2474 = vpack.c.b16 %v1584, %v1579
  %v2475 = vpack.c.b16 %v1585, %v1580
  %v2476 = vpack.c.b16 %v1586, %v1581
  %v2477 = vpack.c.b16 %v1592, %v1587
  %v2478 = vpack.c.b16 %v1593, %v1588
  %v2479 = vpack.c.b16 %v1594, %v1589
  %v2480 = vpack.c.b16 %v1595, %v1590
  %v2481 = vpack.c.b16 %v1596, %v1591
  %v2482 = vpack.c.b16 %v1602, %v1597
  %v2483 = vpack.c.b16 %v1603, %v1598
  %v2484 = vpack.c.b16 %v1604, %v1599
  %v2485 = vpack.c.b16 %v1605, %v1600
  %v2486 = vpack.c.b16 %v1606, %v1601
  %v2487 = vpack.c.b16 %v1612, %v1607
  %v2488 = vpack.c.b16 %v1613, %v1608
  %v2489 = vpack.c.b16 %v1614, %v1609
  %v2490 = vpack.c.b16 %v1615, %v1610
  %v2491 = vpack.c.b16 %v1616, %v1611
  %v2492 = vpack.c.b16 %v1622, %v1617
  %v2493 = vpack.c.b16 %v1623, %v1618
  %v2494 = vpack.c.b16 %v1624, %v1619
  %v2495 = vpack.c.b16 %v1625, %v1620
  %v2496 = vpack.c.b16 %v1626, %v1621
  %v2497 = vpack.c.b16 %v1632, %v1627
  %v2498 = vpack.c.b16 %v1633, %v1628
  %v2499 = vpack.c.b16 %v1634, %v1629
  %v2500 = vpack.c.b16 %v1635, %v1630
  %v2501 = vpack.c.b16 %v1636, %v1631
  %v2502 = vpack.c.b16 %v1642, %v1637
  %v2503 = vpack.c.b16 %v1643, %v1638
  %v2504 = vpack.c.b16 %v1644, %v1639
  %v2505 = vpack.c.b16 %v1645, %v1640
  %v2506 = vpack.c.b16 %v1646, %v1641
  %v2507 = vpack.c.b16 %v1652, %v1647
  %v2508 = vpack.c.b16 %v1653, %v1648
  %v2509 = vpack.c.b16 %v1654, %v1649
  %v2510 = vpack.c.b16 %v1655, %v1650
  %v2511 = vpack.c.b16 %v1656, %v1651
  %v2512 = vpack.c.b16 %v1662, %v1657
  %v2513 = vpack.c.b16 %v1663, %v1658
  %v2514 = vpack.c.b16 %v1664, %v1659
  %v2515 = vpack.c.b16 %v1665, %v1660
  %v2516 = vpack.c.b16 %v1666, %v1661
  %v2517 = vpack.c.b16 %v1672, %v1667
  %v2518 = vpack.c.b16 %v1673, %v1668
  %v2519 = vpack.c.b16 %v1674, %v1669
  %v2520 = vpack.c.b16 %v1675, %v1670
  %v2521 = vpack.c.b16 %v1676, %v1671
  %v2522 = vpack.c.b16 %v1682, %v1677
  %v2523 = vpack.c.b16 %v1683, %v1678
  %v2524 = vpack.c.b16 %v1684, %v1679
  %v2525 = vpack.c.b16 %v1685, %v1680
  %v2526 = vpack.c.b16 %v1686, %v1681
  %v2527 = vpack.c.b16 %v1692, %v1687
  %v2528 = vpack.c.b16 %v1693, %v1688
  %v2529 = vpack.c.b16 %v1694, %v1689
  %v2530 = vpack.c.b16 %v1695, %v1690
  %v2531 = vpack.c.b16 %v1696, %v1691
  %v2532 = vpack.c.b16 %v1702, %v1697
  %v2533 = vpack.c.b16 %v1703, %v1698
  %v2534 = vpack.c.b16 %v1704, %v1699
  %v2535 = vpack.c.b16 %v1705, %v1700
  %v2536 = vpack.c.b16 %v1706, %v1701
  %v2537 = vpack.c.b16 %v1712, %v1707
  %v2538 = vpack.c.b16 %v1713, %v1708
  %v2539 = vpack.c.b16 %v1714, %v1709
  %v2540 = vpack.c.b16 %v1715, %v1710
  %v2541 = vpack.c.b16 %v1716, %v1711
  %v2542 = vpack.c.b16 %v1722, %v1717
  %v2543 = vpack.c.b16 %v1723, %v1718
  %v2544 = vpack.c.b16 %v1724, %v1719
  %v2545 = vpack.c.b16 %v1725, %v1720
  %v2546 = vpack.c.b16 %v1726, %v1721
  %v2547 = vpack.c.b16 %v1732, %v1727
  %v2548 = vpack.c.b16 %v1733, %v1728
  %v2549 = vpack.c.b16 %v1734, %v1729
  %v2550 = vpack.c.b16 %v1735, %v1730
  %v2551 = vpack.c.b16 %v1736, %v1731
  %v2552 = vpack.c.b16 %v1742, %v1737
  %v2553 = vpack.c.b16 %v1743, %v1738
  %v2554 = vpack.c.b16 %v1744, %v1739
  %v2555 = vpack.c.b16 %v1745, %v1740
  %v2556 = vpack.c.b16 %v1746, %v1741
  %v2557 = vpack.c.b16 %v1752, %v1747
  %v2558 = vpack.c.b16 %v1753, %v1748
  %v2559 = vpack.c.b16 %v1754, %v1749
  %v2560 = vpack.c.b16 %v1755, %v1750
  %v2561 = vpack.c.b16 %v1756, %v1751
  %v2562 = vpack.c.b16 %v1762, %v1757
  %v2563 = vpack.c.b16 %v1763, %v1758
  %v2564 = vpack.c.b16 %v1764, %v1759
  %v2565 = vpack.c.b16 %v1765, %v1760
  %v2566 = vpack.c.b16 %v1766, %v1761
  %v2567 = vpack.c.b16 %v1772, %v1767
  %v2568 = vpack.c.b16 %v1773, %v1768
  %v2569 = vpack.c.b16 %v1774, %v1769
  %v2570 = vpack.c.b16 %v1775, %v1770
  %v2571 = vpack.c.b16 %v1776, %v1771
  %v2572 = vpack.c.b16 %v1782, %v1777
  %v2573 = vpack.c.b16 %v1783, %v1778
  %v2574 = vpack.c.b16 %v1784, %v1779
  %v2575 = vpack.c.b16 %v1785, %v1780
  %v2576 = vpack.c.b16 %v1786, %v1781
  %v2577 = vpack.c.b16 %v1792, %v1787
  %v2578 = vpack.c.b16 %v1793, %v1788
  %v2579 = vpack.c.b16 %v1794, %v1789
  %v2580 = vpack.c.b16 %v1795, %v1790
  %v2581 = vpack.c.b16 %v1796, %v1791
  %v2582 = vpack.c.b16 %v1802, %v1797
  %v2583 = vpack.c.b16 %v1803, %v1798
  %v2584 = vpack.c.b16 %v1804, %v1799
  %v2585 = vpack.c.b16 %v1805, %v1800
  %v2586 = vpack.c.b16 %v1806, %v1801
  %v2587 = vpack.c.b16 %v1812, %v1807
  %v2588 = vpack.c.b16 %v1813, %v1808
  %v2589 = vpack.c.b16 %v1814, %v1809
  %v2590 = vpack.c.b16 %v1815, %v1810
  %v2591 = vpack.c.b16 %v1816, %v1811
  %v2592 = vpack.c.b16 %v1822, %v1817
  %v2593 = vpack.c.b16 %v1823, %v1818
  %v2594 = vpack.c.b16 %v1824, %v1819
  %v2595 = vpack.c.b16 %v1825, %v1820
  %v2596 = vpack.c.b16 %v1826, %v1821
  %v2597 = vpack.c.b16 %v1832, %v1827
  %v2598 = vpack.c.b16 %v1833, %v1828
  %v2599 = vpack.c.b16 %v1834, %v1829
  %v2600 = vpack.c.b16 %v1835, %v1830
  %v2601 = vpack.c.b16 %v1836, %v1831
  %v2602 = vpack.c.b16 %v1842, %v1837
  %v2603 = vpack.c.b16 %v1843, %v1838
  %v2604 = vpack.c.b16 %v1844, %v1839
  %v2605 = vpack.c.b16 %v1845, %v1840
  %v2606 = vpack.c.b16 %v1846, %v1841
  %v2607 = vpack.c.b16 %v1852, %v1847
  %v2608 = vpack.c.b16 %v1853, %v1848
  %v2609 = vpack.c.b16 %v1854, %v1849
  %v2610 = vpack.c.b16 %v1855, %v1850
  %v2611 = vpack.c.b16 %v1856, %v1851
  %v2612 = vpack.c.b16 %v1862, %v1857
  %v2613 = vpack.c.b16 %v1863, %v1858
  %v2614 = vpack.c.b16 %v1864, %v1859
  %v2615 = vpack.c.b16 %v1865, %v1860
  %v2616 = vpack.c.b16 %v1866, %v1861
  %v2617 = vpack.c.b16 %v1872, %v1867
  %v2618 = vpack.c.b16 %v1873, %v1868
  %v2619 = vpack.c.b16 %v1874, %v1869
  %v2620 = vpack.c.b16 %v1875, %v1870
  %v2621 = vpack.c.b16 %v1876, %v1871
  %v2622 = vpack.c.b16 %v1882, %v1877
  %v2623 = vpack.c.b16 %v1883, %v1878
  %v2624 = vpack.c.b16 %v1884, %v1879
  %v2625 = vpack.c.b16 %v1885, %v1880
  %v2626 = vpack.c.b16 %v1886, %v1881
  %v2627 = vpack.c.b16 %v1892, %v1887
  %v2628 = vpack.c.b16 %v1893, %v1888
  %v2629 = vpack.c.b16 %v1894, %v1889
  %v2630 = vpack.c.b16 %v1895, %v1890
  %v2631 = vpack.c.b16 %v1896, %v1891
  %v2632 = vpack.c.b16 %v1902, %v1897
  %v2633 = vpack.c.b16 %v1903, %v1898
  %v2634 = vpack.c.b16 %v1904, %v1899
  %v2635 = vpack.c.b16 %v1905, %v1900
  %v2636 = vpack.c.b16 %v1906, %v1901
  %v2637 = vpack.c.b16 %v1912, %v1907
  %v2638 = vpack.c.b16 %v1913, %v1908
  %v2639 = vpack.c.b16 %v1914, %v1909
  %v2640 = vpack.c.b16 %v1915, %v1910
  %v2641 = vpack.c.b16 %v1916, %v1911
  %v2642 = vpack.c.b16 %v1922, %v1917
  %v2643 = vpack.c.b16 %v1923, %v1918
  %v2644 = vpack.c.b16 %v1924, %v1919
  %v2645 = vpack.c.b16 %v1925, %v1920
  %v2646 = vpack.c.b16 %v1926, %v1921
  %v2647 = vpack.c.b16 %v1932, %v1927
  %v2648 = vpack.c.b16 %v1933, %v1928
  %v2649 = vpack.c.b16 %v1934, %v1929
  %v2650 = vpack.c.b16 %v1935, %v1930
  %v2651 = vpack.c.b16 %v1936, %v1931
  %v2652 = vpack.c.b16 %v1942, %v1937
  %v2653 = vpack.c.b16 %v1943, %v1938
  %v2654 = vpack.c.b16 %v1944, %v1939
  %v2655 = vpack.c.b16 %v1945, %v1940
  %v2656 = vpack.c.b16 %v1946, %v1941
  %v2657 = vpack.c.b16 %v1952, %v1947
  %v2658 = vpack.c.b16 %v1953, %v1948
  %v2659 = vpack.c.b16 %v1954, %v1949
  %v2660 = vpack.c.b16 %v1955, %v1950
  %v2661 = vpack.c.b16 %v1956, %v1951
  %v2662 = vpack.c.b16 %v1962, %v1957
  %v2663 = vpack.c.b16 %v1963, %v1958
  %v2664 = vpack.c.b16 %v1964, %v1959
  %v2665 = vpack.c.b16 %v1965, %v1960
  %v2666 = vpack.c.b16 %v1966, %v1961
  %v2667 = vpack.c.b16 %v1972, %v1967
  %v2668 = vpack.c.b16 %v1973, %v1968
  %v2669 = vpack.c.b16 %v1974, %v1969
  %v2670 = vpack.c.b16 %v1975, %v1970
  %v2671 = vpack.c.b16 %v1976, %v1971
  %v2672 = vpack.c.b16 %v1982, %v1977
  %v2673 = vpack.c.b16 %v1983, %v1978
  %v2674 = vpack.c.b16 %v1984, %v1979
  %v2675 = vpack.c.b16 %v1985, %v1980
  %v2676 = vpack.c.b16 %v1986, %v1981
  %v2677 = vpack.c.b16 %v1992, %v1987
  %v2678 = vpack.c.b16 %v1993, %v1988
  %v2679 = vpack.c.b16 %v1994, %v1989
  %v2680 = vpack.c.b16 %v1995, %v1990
  %v2681 = vpack.c.b16 %v1996, %v1991
  %v2682 = vpack.c.b16 %v2002, %v1997
  %v2683 = vpack.c.b16 %v2003, %v1998
  %v2684 = vpack.c.b16 %v2004, %v1999
  %v2685 = vpack.c.b16 %v2005, %v2000
  %v2686 = vpack.c.b16 %v2006, %v2001
  %v2687 = vpack.c.b16 %v2012, %v2007
  %v2688 = vpack.c.b16 %v2013, %v2008
  %v2689 = vpack.c.b16 %v2014, %v2009
  %v2690 = vpack.c.b16 %v2015, %v2010
  %v2691 = vpack.c.b16 %v2016, %v2011
  %v2692 = vpack.c.b16 %v2022, %v2017
  %v2693 = vpack.c.b16 %v2023, %v2018
  %v2694 = vpack.c.b16 %v2024, %v2019
  %v2695 = vpack.c.b16 %v2025, %v2020
  %v2696 = vpack.c.b16 %v2026, %v2021
  %v2697 = vpack.c.b16 %v2032, %v2027
  %v2698 = vpack.c.b16 %v2033, %v2028
  %v2699 = vpack.c.b16 %v2034, %v2029
  %v2700 = vpack.c.b16 %v2035, %v2030
  %v2701 = vpack.c.b16 %v2036, %v2031
  %v2702 = vpack.c.b16 %v2042, %v2037
  %v2703 = vpack.c.b16 %v2043, %v2038
  %v2704 = vpack.c.b16 %v2044, %v2039
  %v2705 = vpack.c.b16 %v2045, %v2040
  %v2706 = vpack.c.b16 %v2046, %v2041
  %v2707 = vpack.c.b16 %v2052, %v2047
  %v2708 = vpack.c.b16 %v2053, %v2048
  %v2709 = vpack.c.b16 %v2054, %v2049
  %v2710 = vpack.c.b16 %v2055, %v2050
  %v2711 = vpack.c.b16 %v2056, %v2051
  %v2712 = vpack.c.b16 %v2062, %v2057
  %v2713 = vpack.c.b16 %v2063, %v2058
  %v2714 = vpack.c.b16 %v2064, %v2059
  %v2715 = vpack.c.b16 %v2065, %v2060
  %v2716 = vpack.c.b16 %v2066, %v2061
  %v2717 = vpack.c.b16 %v2072, %v2067
  %v2718 = vpack.c.b16 %v2073, %v2068
  %v2719 = vpack.c.b16 %v2074, %v2069
  %v2720 = vpack.c.b16 %v2075, %v2070
  %v2721 = vpack.c.b16 %v2076, %v2071
  %v2722 = vpack.c.b16 %v2082, %v2077
  %v2723 = vpack.c.b16 %v2083, %v2078
  %v2724 = vpack.c.b16 %v2084, %v2079
  %v2725 = vpack.c.b16 %v2085, %v2080
  %v2726 = vpack.c.b16 %v2086, %v2081
  %v2727 = vpack.c.b16 %v2092, %v2087
  %v2728 = vpack.c.b16 %v2093, %v2088
  %v2729 = vpack.c.b16 %v2094, %v2089
  %v2730 = vpack.c.b16 %v2095, %v2090
  %v2731 = vpack.c.b16 %v2096, %v2091
  %v2732 = vpack.c.b16 %v2102, %v2097
  %v2733 = vpack.c.b16 %v2103, %v2098
  %v2734 = vpack.c.b16 %v2104, %v2099
  %v2735 = vpack.c.b16 %v2105, %v2100
  %v2736 = vpack.c.b16 %v2106, %v2101
  %v2737 = vpack.c.b16 %v2112, %v2107
  %v2738 = vpack.c.b16 %v2113, %v2108
  %v2739 = vpack.c.b16 %v2114, %v2109
  %v2740 = vpack.c.b16 %v2115, %v2110
  %v2741 = vpack.c.b16 %v2116, %v2111
  %v2742 = vpack.c.b16 %v2122, %v2117
  %v2743 = vpack.c.b16 %v2123, %v2118
  %v2744 = vpack.c.b16 %v2124, %v2119
  %v2745 = vpack.c.b16 %v2125, %v2120
  %v2746 = vpack.c.b16 %v2126, %v2121
  %v2747 = vpack.c.b16 %v2132, %v2127
  %v2748 = vpack.c.b16 %v2133, %v2128
  %v2749 = vpack.c.b16 %v2134, %v2129
  %v2750 = vpack.c.b16 %v2135, %v2130
  %v2751 = vpack.c.b16 %v2136, %v2131
  %v2752 = vpack.c.b16 %v2142, %v2137
  %v2753 = vpack.c.b16 %v2143, %v2138
  %v2754 = vpack.c.b16 %v2144, %v2139
  %v2755 = vpack.c.b16 %v2145, %v2140
  %v2756 = vpack.c.b16 %v2146, %v2141
  %v2757 = vpack.c.b16 %v2152, %v2147
  %v2758 = vpack.c.b16 %v2153, %v2148
  %v2759 = vpack.c.b16 %v2154, %v2149
  %v2760 = vpack.c.b16 %v2155, %v2150
  %v2761 = vpack.c.b16 %v2156, %v2151
  %v2762 = vpack.c.b16 %v2162, %v2157
  %v2763 = vpack.c.b16 %v2163, %v2158
  %v2764 = vpack.c.b16 %v2164, %v2159
  %v2765 = vpack.c.b16 %v2165, %v2160
  %v2766 = vpack.c.b16 %v2166, %v2161
  %v2767 = vpack.c.b16 %v2172, %v2167
  %v2768 = vpack.c.b16 %v2173, %v2168
  %v2769 = vpack.c.b16 %v2174, %v2169
  %v2770 = vpack.c.b16 %v2175, %v2170
  %v2771 = vpack.c.b16 %v2176, %v2171
  %v2772 = vpack.c.b16 %v2182, %v2177
  %v2773 = vpack.c.b16 %v2183, %v2178
  %v2774 = vpack.c.b16 %v2184, %v2179
  %v2775 = vpack.c.b16 %v2185, %v2180
  %v2776 = vpack.c.b16 %v2186, %v2181
  %v2777 = vpack.c.b16 %v2192, %v2187
  %v2778 = vpack.c.b16 %v2193, %v2188
  %v2779 = vpack.c.b16 %v2194, %v2189
  %v2780 = vpack.c.b16 %v2195, %v2190
  %v2781 = vpack.c.b16 %v2196, %v2191
  %v2782 = vpack.c.b16 %v2202, %v2197
  %v2783 = vpack.c.b16 %v2203, %v2198
  %v2784 = vpack.c.b16 %v2204, %v2199
  %v2785 = vpack.c.b16 %v2205, %v2200
  %v2786 = vpack.c.b16 %v2206, %v2201
  %v2787 = vpack.c.b16 %v2212, %v2207
  %v2788 = vpack.c.b16 %v2213, %v2208
  %v2789 = vpack.c.b16 %v2214, %v2209
  %v2790 = vpack.c.b16 %v2215, %v2210
  %v2791 = vpack.c.b16 %v2216, %v2211
  %v2792 = vpack.c.b16 %v2222, %v2217
  %v2793 = vpack.c.b16 %v2223, %v2218
  %v2794 = vpack.c.b16 %v2224, %v2219
  %v2795 = vpack.c.b16 %v2225, %v2220
  %v2796 = vpack.c.b16 %v2226, %v2221
  %v2797 = vpack.c.b16 %v2232, %v2227
  %v2798 = vpack.c.b16 %v2233, %v2228
  %v2799 = vpack.c.b16 %v2234, %v2229
  %v2800 = vpack.c.b16 %v2235, %v2230
  %v2801 = vpack.c.b16 %v2236, %v2231
  %v2802 = vpack.c.b16 %v2242, %v2237
  %v2803 = vpack.c.b16 %v2243, %v2238
  %v2804 = vpack.c.b16 %v2244, %v2239
  %v2805 = vpack.c.b16 %v2245, %v2240
  %v2806 = vpack.c.b16 %v2246, %v2241
  %v2807 = vpack.c.b16 %v2252, %v2247
  %v2808 = vpack.c.b16 %v2253, %v2248
  %v2809 = vpack.c.b16 %v2254, %v2249
  %v2810 = vpack.c.b16 %v2255, %v2250
  %v2811 = vpack.c.b16 %v2256, %v2251
  %v2812 = vpack.c.b16 %v2262, %v2257
  %v2813 = vpack.c.b16 %v2263, %v2258
  %v2814 = vpack.c.b16 %v2264, %v2259
  %v2815 = vpack.c.b16 %v2265, %v2260
  %v2816 = vpack.c.b16 %v2266, %v2261
  %v2817 = vpack.c.b16 %v2272, %v2267
  %v2818 = vpack.c.b16 %v2273, %v2268
  %v2819 = vpack.c.b16 %v2274, %v2269
  %v2820 = vpack.c.b16 %v2275, %v2270
  %v2821 = vpack.c.b16 %v2276, %v2271
  %v2822 = vpack.c.b16 %v2282, %v2277
  %v2823 = vpack.c.b16 %v2283, %v2278
  %v2824 = vpack.c.b16 %v2284, %v2279
  %v2825 = vpack.c.b16 %v2285, %v2280
  %v2826 = vpack.c.b16 %v2286, %v2281
  %v2827 = vpack.c.b16 %v2292, %v2287
  %v2828 = vpack.c.b16 %v2293, %v2288
  %v2829 = vpack.c.b16 %v2294, %v2289
  %v2830 = vpack.c.b16 %v2295, %v2290
  %v2831 = vpack.c.b16 %v2296, %v2291
  %v2832 = vpack.c.b16 %v2302, %v2297
  %v2833 = vpack.c.b16 %v2303, %v2298
  %v2834 = vpack.c.b16 %v2304, %v2299
  %v2835 = vpack.c.b16 %v2305, %v2300
  %v2836 = vpack.c.b16 %v2306, %v2301
  %v2837 = vpack.c.b16 %v2312, %v2307
  %v2838 = vpack.c.b16 %v2313, %v2308
  %v2839 = vpack.c.b16 %v2314, %v2309
  %v2840 = vpack.c.b16 %v2315, %v2310
  %v2841 = vpack.c.b16 %v2316, %v2311
  %v2842 = vpack.c.b16 %v2322, %v2317
  %v2843 = vpack.c.b16 %v2323, %v2318
  %v2844 = vpack.c.b16 %v2324, %v2319
  %v2845 = vpack.c.b16 %v2325, %v2320
  %v2846 = vpack.c.b16 %v2326, %v2321
  %v2847 = vpack.c.b16 %v2332, %v2327
  %v2848 = vpack.c.b16 %v2333, %v2328
  %v2849 = vpack.c.b16 %v2334, %v2329
  %v2850 = vpack.c.b16 %v2335, %v2330
  %v2851 = vpack.c.b16 %v2336, %v2331
  %v2852 = vpack.c.b16 %v2342, %v2337
  %v2853 = vpack.c.b16 %v2343, %v2338
  %v2854 = vpack.c.b16 %v2344, %v2339
  %v2855 = vpack.c.b16 %v2345, %v2340
  %v2856 = vpack.c.b16 %v2346, %v2341
  %v2857 = vpack.c.b16 %v2352, %v2347
  %v2858 = vpack.c.b16 %v2353, %v2348
  %v2859 = vpack.c.b16 %v2354, %v2349
  %v2860 = vpack.c.b16 %v2355, %v2350
  %v2861 = vpack.c.b16 %v2356, %v2351
  %v2862 = vpack.c.b16 %v2362, %v2357
  %v2863 = vpack.c.b16 %v2363, %v2358
  %v2864 = vpack.c.b16 %v2364, %v2359
  %v2865 = vpack.c.b16 %v2365, %v2360
  %v2866 = vpack.c.b16 %v2366, %v2361
  %vm3367 = vcmask 523264
  %v3369 = vsel %vm3367, %v745, 0
  %3371 = vmatprep.subr.bf16.mxu0 %v2403
  %3372 = vmatpush1.bf16.msra.mxu0 %v2402
  %3373 = vmatprep.subr.bf16.mxu0 %v2398
  %3374 = vmatpush1.bf16.msra.mxu0 %v2397
  %3375 = vmatprep.subr.bf16.mxu0 %v2393
  %3376 = vmatpush1.bf16.msra.mxu0 %v2392
  %3377 = vmatprep.subr.bf16.mxu0 %v2388
  %3378 = vmatpush1.bf16.msra.mxu0 %v2387
  %3379 = vmatprep.subr.bf16.mxu0 %v2383
  %3380 = vmatpush1.bf16.msra.mxu0 %v2382
  %3381 = vmatprep.subr.bf16.mxu0 %v2378
  %3382 = vmatpush1.bf16.msra.mxu0 %v2377
  %3383 = vmatprep.subr.bf16.mxu0 %v2373
  %3384 = vmatpush1.bf16.msra.mxu0 %v2372
  %3385 = vmatprep.subr.bf16.mxu0 %v2368
  %3386 = vmatpush1.bf16.msra.mxu0 %v2367
  %3387 = vmatprep.subr.bf16.mxu0 %v2443
  %3388 = vmatpush2.bf16.msra.mxu0 %v2442
  %3389 = vmatprep.subr.bf16.mxu0 %v2438
  %3390 = vmatpush2.bf16.msra.mxu0 %v2437
  %3391 = vmatprep.subr.bf16.mxu0 %v2433
  %3392 = vmatpush2.bf16.msra.mxu0 %v2432
  %3393 = vmatprep.subr.bf16.mxu0 %v2428
  %3394 = vmatpush2.bf16.msra.mxu0 %v2427
  %3395 = vmatprep.subr.bf16.mxu0 %v2423
  %3396 = vmatpush2.bf16.msra.mxu0 %v2422
  %3397 = vmatprep.subr.bf16.mxu0 %v2418
  %3398 = vmatpush2.bf16.msra.mxu0 %v2417
  %3399 = vmatprep.subr.bf16.mxu0 %v2413
  %3400 = vmatpush2.bf16.msra.mxu0 %v2412
  %3401 = vmatprep.subr.bf16.mxu0 %v2408
  %3402 = vmatpush2.bf16.msra.mxu0 %v2407
  %3403 = vmatprep.mubr.bf16.mxu0 %v704
  %3404 = vmatmul.mubr.bf16.gmra.mxu0 %v690
  %v3405 = vpop.f32.mrf.mxu0
  %v3406 = vadd.f32 %v643, %v3405
  %v3407 = vpop.f32.mrf.mxu0
  %v3408 = vadd.f32 %v647, %v3407
  %v3409 = vpop.f32.mrf.mxu0
  %v3410 = vpop.f32.mrf.mxu0
  %3411 = vdwg.mxu0
  %3412 = vmatprep.subr.bf16.mxu0 %v2483
  %3413 = vmatpush1.bf16.msra.mxu0 %v2482
  %3414 = vmatprep.subr.bf16.mxu0 %v2478
  %3415 = vmatpush1.bf16.msra.mxu0 %v2477
  %3416 = vmatprep.subr.bf16.mxu0 %v2473
  %3417 = vmatpush1.bf16.msra.mxu0 %v2472
  %3418 = vmatprep.subr.bf16.mxu0 %v2468
  %3419 = vmatpush1.bf16.msra.mxu0 %v2467
  %3420 = vmatprep.subr.bf16.mxu0 %v2463
  %3421 = vmatpush1.bf16.msra.mxu0 %v2462
  %3422 = vmatprep.subr.bf16.mxu0 %v2458
  %3423 = vmatpush1.bf16.msra.mxu0 %v2457
  %3424 = vmatprep.subr.bf16.mxu0 %v2453
  %3425 = vmatpush1.bf16.msra.mxu0 %v2452
  %3426 = vmatprep.subr.bf16.mxu0 %v2448
  %3427 = vmatpush1.bf16.msra.mxu0 %v2447
  %3428 = vmatprep.subr.bf16.mxu0 %v2523
  %3429 = vmatpush2.bf16.msra.mxu0 %v2522
  %3430 = vmatprep.subr.bf16.mxu0 %v2518
  %3431 = vmatpush2.bf16.msra.mxu0 %v2517
  %3432 = vmatprep.subr.bf16.mxu0 %v2513
  %3433 = vmatpush2.bf16.msra.mxu0 %v2512
  %3434 = vmatprep.subr.bf16.mxu0 %v2508
  %3435 = vmatpush2.bf16.msra.mxu0 %v2507
  %3436 = vmatprep.subr.bf16.mxu0 %v2503
  %3437 = vmatpush2.bf16.msra.mxu0 %v2502
  %3438 = vmatprep.subr.bf16.mxu0 %v2498
  %3439 = vmatpush2.bf16.msra.mxu0 %v2497
  %3440 = vmatprep.subr.bf16.mxu0 %v2493
  %3441 = vmatpush2.bf16.msra.mxu0 %v2492
  %3442 = vmatprep.subr.bf16.mxu0 %v2488
  %3443 = vmatpush2.bf16.msra.mxu0 %v2487
  %3444 = vmatprep.mubr.bf16.mxu0 %v714
  %3445 = vmatmul.mubr.bf16.gmra.mxu0 %v712
  %v3446 = vpop.f32.mrf.mxu0
  %v3447 = vadd.f32 %v3406, %v3446
  %v3448 = vpop.f32.mrf.mxu0
  %v3449 = vadd.f32 %v3408, %v3448
  %v3450 = vpop.f32.mrf.mxu0
  %v3451 = vpop.f32.mrf.mxu0
  %3452 = vdwg.mxu0
  %3453 = vmatprep.subr.bf16.mxu0 %v2563
  %3454 = vmatpush1.bf16.msra.mxu0 %v2562
  %3455 = vmatprep.subr.bf16.mxu0 %v2558
  %3456 = vmatpush1.bf16.msra.mxu0 %v2557
  %3457 = vmatprep.subr.bf16.mxu0 %v2553
  %3458 = vmatpush1.bf16.msra.mxu0 %v2552
  %3459 = vmatprep.subr.bf16.mxu0 %v2548
  %3460 = vmatpush1.bf16.msra.mxu0 %v2547
  %3461 = vmatprep.subr.bf16.mxu0 %v2543
  %3462 = vmatpush1.bf16.msra.mxu0 %v2542
  %3463 = vmatprep.subr.bf16.mxu0 %v2538
  %3464 = vmatpush1.bf16.msra.mxu0 %v2537
  %3465 = vmatprep.subr.bf16.mxu0 %v2533
  %3466 = vmatpush1.bf16.msra.mxu0 %v2532
  %3467 = vmatprep.subr.bf16.mxu0 %v2528
  %3468 = vmatpush1.bf16.msra.mxu0 %v2527
  %3469 = vmatprep.subr.bf16.mxu0 %v2603
  %3470 = vmatpush2.bf16.msra.mxu0 %v2602
  %3471 = vmatprep.subr.bf16.mxu0 %v2598
  %3472 = vmatpush2.bf16.msra.mxu0 %v2597
  %3473 = vmatprep.subr.bf16.mxu0 %v2593
  %3474 = vmatpush2.bf16.msra.mxu0 %v2592
  %3475 = vmatprep.subr.bf16.mxu0 %v2588
  %3476 = vmatpush2.bf16.msra.mxu0 %v2587
  %3477 = vmatprep.subr.bf16.mxu0 %v2583
  %3478 = vmatpush2.bf16.msra.mxu0 %v2582
  %3479 = vmatprep.subr.bf16.mxu0 %v2578
  %3480 = vmatpush2.bf16.msra.mxu0 %v2577
  %3481 = vmatprep.subr.bf16.mxu0 %v2573
  %3482 = vmatpush2.bf16.msra.mxu0 %v2572
  %3483 = vmatprep.subr.bf16.mxu0 %v2568
  %3484 = vmatpush2.bf16.msra.mxu0 %v2567
  %3485 = vmatprep.mubr.bf16.mxu0 %v711
  %3486 = vmatmul.mubr.bf16.gmra.mxu0 %v697
  %v3487 = vpop.f32.mrf.mxu0
  %v3488 = vadd.f32 %v3447, %v3487
  %v3489 = vpop.f32.mrf.mxu0
  %v3490 = vadd.f32 %v3449, %v3489
  %v3491 = vpop.f32.mrf.mxu0
  %v3492 = vpop.f32.mrf.mxu0
  %3493 = vdwg.mxu0
  %3494 = vmatprep.subr.bf16.mxu0 %v2643
  %3495 = vmatpush1.bf16.msra.mxu0 %v2642
  %3496 = vmatprep.subr.bf16.mxu0 %v2638
  %3497 = vmatpush1.bf16.msra.mxu0 %v2637
  %3498 = vmatprep.subr.bf16.mxu0 %v2633
  %3499 = vmatpush1.bf16.msra.mxu0 %v2632
  %3500 = vmatprep.subr.bf16.mxu0 %v2628
  %3501 = vmatpush1.bf16.msra.mxu0 %v2627
  %3502 = vmatprep.subr.bf16.mxu0 %v2623
  %3503 = vmatpush1.bf16.msra.mxu0 %v2622
  %3504 = vmatprep.subr.bf16.mxu0 %v2618
  %3505 = vmatpush1.bf16.msra.mxu0 %v2617
  %3506 = vmatprep.subr.bf16.mxu0 %v2613
  %3507 = vmatpush1.bf16.msra.mxu0 %v2612
  %3508 = vmatprep.subr.bf16.mxu0 %v2608
  %3509 = vmatpush1.bf16.msra.mxu0 %v2607
  %3510 = vmatprep.subr.bf16.mxu0 %v2683
  %3511 = vmatpush2.bf16.msra.mxu0 %v2682
  %3512 = vmatprep.subr.bf16.mxu0 %v2678
  %3513 = vmatpush2.bf16.msra.mxu0 %v2677
  %3514 = vmatprep.subr.bf16.mxu0 %v2673
  %3515 = vmatpush2.bf16.msra.mxu0 %v2672
  %3516 = vmatprep.subr.bf16.mxu0 %v2668
  %3517 = vmatpush2.bf16.msra.mxu0 %v2667
  %3518 = vmatprep.subr.bf16.mxu0 %v2663
  %3519 = vmatpush2.bf16.msra.mxu0 %v2662
  %3520 = vmatprep.subr.bf16.mxu0 %v2658
  %3521 = vmatpush2.bf16.msra.mxu0 %v2657
  %3522 = vmatprep.subr.bf16.mxu0 %v2653
  %3523 = vmatpush2.bf16.msra.mxu0 %v2652
  %3524 = vmatprep.subr.bf16.mxu0 %v2648
  %3525 = vmatpush2.bf16.msra.mxu0 %v2647
  %3526 = vmatprep.mubr.bf16.mxu0 %v715
  %3527 = vmatmul.mubr.bf16.gmra.mxu0 %v713
  %v3528 = vpop.f32.mrf.mxu0
  %v3529 = vadd.f32 %v3488, %v3528
  %v3530 = vpop.f32.mrf.mxu0
  %v3531 = vadd.f32 %v3490, %v3530
  %v3532 = vpop.f32.mrf.mxu0
  %v3533 = vpop.f32.mrf.mxu0
  %3534 = vdwg.mxu0
  %3535 = vmatprep.subr.bf16.mxu0 %v2723
  %3536 = vmatpush1.bf16.msra.mxu0 %v2722
  %3537 = vmatprep.subr.bf16.mxu0 %v2718
  %3538 = vmatpush1.bf16.msra.mxu0 %v2717
  %3539 = vmatprep.subr.bf16.mxu0 %v2713
  %3540 = vmatpush1.bf16.msra.mxu0 %v2712
  %3541 = vmatprep.subr.bf16.mxu0 %v2708
  %3542 = vmatpush1.bf16.msra.mxu0 %v2707
  %3543 = vmatprep.subr.bf16.mxu0 %v2703
  %3544 = vmatpush1.bf16.msra.mxu0 %v2702
  %3545 = vmatprep.subr.bf16.mxu0 %v2698
  %3546 = vmatpush1.bf16.msra.mxu0 %v2697
  %3547 = vmatprep.subr.bf16.mxu0 %v2693
  %3548 = vmatpush1.bf16.msra.mxu0 %v2692
  %3549 = vmatprep.subr.bf16.mxu0 %v2688
  %3550 = vmatpush1.bf16.msra.mxu0 %v2687
  %3551 = vmatprep.subr.bf16.mxu0 %v2763
  %3552 = vmatpush2.bf16.msra.mxu0 %v2762
  %3553 = vmatprep.subr.bf16.mxu0 %v2758
  %3554 = vmatpush2.bf16.msra.mxu0 %v2757
  %3555 = vmatprep.subr.bf16.mxu0 %v2753
  %3556 = vmatpush2.bf16.msra.mxu0 %v2752
  %3557 = vmatprep.subr.bf16.mxu0 %v2748
  %3558 = vmatpush2.bf16.msra.mxu0 %v2747
  %3559 = vmatprep.subr.bf16.mxu0 %v2743
  %3560 = vmatpush2.bf16.msra.mxu0 %v2742
  %3561 = vmatprep.subr.bf16.mxu0 %v2738
  %3562 = vmatpush2.bf16.msra.mxu0 %v2737
  %3563 = vmatprep.subr.bf16.mxu0 %v2733
  %3564 = vmatpush2.bf16.msra.mxu0 %v2732
  %3565 = vmatprep.subr.bf16.mxu0 %v2728
  %3566 = vmatpush2.bf16.msra.mxu0 %v2727
  %3567 = vmatprep.mubr.bf16.mxu0 %v752
  %3568 = vmatmul.mubr.bf16.gmra.mxu0 %v738
  %v3569 = vpop.f32.mrf.mxu0
  %v3570 = vadd.f32 %v3529, %v3569
  %v3571 = vpop.f32.mrf.mxu0
  %v3572 = vadd.f32 %v3531, %v3571
  %v3573 = vpop.f32.mrf.mxu0
  %v3574 = vpop.f32.mrf.mxu0
  %3575 = vdwg.mxu0
  %3576 = vmatprep.subr.bf16.mxu0 %v2803
  %3577 = vmatpush1.bf16.msra.mxu0 %v2802
  %3578 = vmatprep.subr.bf16.mxu0 %v2798
  %3579 = vmatpush1.bf16.msra.mxu0 %v2797
  %3580 = vmatprep.subr.bf16.mxu0 %v2793
  %3581 = vmatpush1.bf16.msra.mxu0 %v2792
  %3582 = vmatprep.subr.bf16.mxu0 %v2788
  %3583 = vmatpush1.bf16.msra.mxu0 %v2787
  %3584 = vmatprep.subr.bf16.mxu0 %v2783
  %3585 = vmatpush1.bf16.msra.mxu0 %v2782
  %3586 = vmatprep.subr.bf16.mxu0 %v2778
  %3587 = vmatpush1.bf16.msra.mxu0 %v2777
  %3588 = vmatprep.subr.bf16.mxu0 %v2773
  %3589 = vmatpush1.bf16.msra.mxu0 %v2772
  %3590 = vmatprep.subr.bf16.mxu0 %v2768
  %3591 = vmatpush1.bf16.msra.mxu0 %v2767
  %3592 = vmatprep.subr.bf16.mxu0 %v2843
  %3593 = vmatpush2.bf16.msra.mxu0 %v2842
  %3594 = vmatprep.subr.bf16.mxu0 %v2838
  %3595 = vmatpush2.bf16.msra.mxu0 %v2837
  %3596 = vmatprep.subr.bf16.mxu0 %v2833
  %3597 = vmatpush2.bf16.msra.mxu0 %v2832
  %3598 = vmatprep.subr.bf16.mxu0 %v2828
  %3599 = vmatpush2.bf16.msra.mxu0 %v2827
  %3600 = vmatprep.subr.bf16.mxu0 %v2823
  %3601 = vmatpush2.bf16.msra.mxu0 %v2822
  %3602 = vmatprep.subr.bf16.mxu0 %v2818
  %3603 = vmatpush2.bf16.msra.mxu0 %v2817
  %3604 = vmatprep.subr.bf16.mxu0 %v2813
  %3605 = vmatpush2.bf16.msra.mxu0 %v2812
  %3606 = vmatprep.subr.bf16.mxu0 %v2808
  %3607 = vmatpush2.bf16.msra.mxu0 %v2807
  %3608 = vmatprep.mubr.bf16.mxu0 %v754
  %3609 = vmatmul.mubr.bf16.gmra.mxu0 %v753
  %v3610 = vpop.f32.mrf.mxu0
  %v3611 = vadd.f32 %v3570, %v3610
  %v3612 = vpop.f32.mrf.mxu0
  %v3613 = vadd.f32 %v3572, %v3612
  %v3614 = vpop.f32.mrf.mxu0
  %v3615 = vpop.f32.mrf.mxu0
  %3616 = vdwg.mxu0
  %3617 = vmatprep.subr.bf16.mxu0 0
  %3618 = vmatpush1.bf16.msra.mxu0 0
  %3619 = vmatprep.subr.bf16.mxu0 0
  %3620 = vmatpush1.bf16.msra.mxu0 0
  %3621 = vmatprep.subr.bf16.mxu0 0
  %3622 = vmatpush1.bf16.msra.mxu0 0
  %3623 = vmatprep.subr.bf16.mxu0 0
  %3624 = vmatpush1.bf16.msra.mxu0 0
  %3625 = vmatprep.subr.bf16.mxu0 %v2863
  %3626 = vmatpush1.bf16.msra.mxu0 %v2862
  %3627 = vmatprep.subr.bf16.mxu0 %v2858
  %3628 = vmatpush1.bf16.msra.mxu0 %v2857
  %3629 = vmatprep.subr.bf16.mxu0 %v2853
  %3630 = vmatpush1.bf16.msra.mxu0 %v2852
  %3631 = vmatprep.subr.bf16.mxu0 %v2848
  %3632 = vmatpush1.bf16.msra.mxu0 %v2847
  %3633 = vmatprep.subr.bf16.mxu0 0
  %3634 = vmatpush2.bf16.msra.mxu0 0
  %3635 = vmatprep.subr.bf16.mxu0 0
  %3636 = vmatpush2.bf16.msra.mxu0 0
  %3637 = vmatprep.subr.bf16.mxu0 0
  %3638 = vmatpush2.bf16.msra.mxu0 0
  %3639 = vmatprep.subr.bf16.mxu0 0
  %3640 = vmatpush2.bf16.msra.mxu0 0
  %3641 = vmatprep.subr.bf16.mxu0 0
  %3642 = vmatpush2.bf16.msra.mxu0 0
  %3643 = vmatprep.subr.bf16.mxu0 0
  %3644 = vmatpush2.bf16.msra.mxu0 0
  %3645 = vmatprep.subr.bf16.mxu0 0
  %3646 = vmatpush2.bf16.msra.mxu0 0
  %3647 = vmatprep.subr.bf16.mxu0 0
  %3648 = vmatpush2.bf16.msra.mxu0 0
  %3649 = vmatprep.mubr.bf16.mxu0 0
  %3650 = vmatmul.mubr.bf16.gmra.mxu0 %v3369
  %v3651 = vpop.f32.mrf.mxu0
  %v3652 = vadd.f32 %v3611, %v3651
  %v3653 = vpop.f32.mrf.mxu0
  %v3654 = vadd.f32 %v3613, %v3653
  %v3655 = vpop.f32.mrf.mxu0
  %v3656 = vpop.f32.mrf.mxu0
  %3657 = vdwg.mxu0
  %3658 = vmatprep.subr.bf16.mxu0 %v2405
  %3659 = vmatpush1.bf16.msra.mxu0 %v2404
  %3660 = vmatprep.subr.bf16.mxu0 %v2400
  %3661 = vmatpush1.bf16.msra.mxu0 %v2399
  %3662 = vmatprep.subr.bf16.mxu0 %v2395
  %3663 = vmatpush1.bf16.msra.mxu0 %v2394
  %3664 = vmatprep.subr.bf16.mxu0 %v2390
  %3665 = vmatpush1.bf16.msra.mxu0 %v2389
  %3666 = vmatprep.subr.bf16.mxu0 %v2385
  %3667 = vmatpush1.bf16.msra.mxu0 %v2384
  %3668 = vmatprep.subr.bf16.mxu0 %v2380
  %3669 = vmatpush1.bf16.msra.mxu0 %v2379
  %3670 = vmatprep.subr.bf16.mxu0 %v2375
  %3671 = vmatpush1.bf16.msra.mxu0 %v2374
  %3672 = vmatprep.subr.bf16.mxu0 %v2370
  %3673 = vmatpush1.bf16.msra.mxu0 %v2369
  %3674 = vmatprep.subr.bf16.mxu0 %v2445
  %3675 = vmatpush2.bf16.msra.mxu0 %v2444
  %3676 = vmatprep.subr.bf16.mxu0 %v2440
  %3677 = vmatpush2.bf16.msra.mxu0 %v2439
  %3678 = vmatprep.subr.bf16.mxu0 %v2435
  %3679 = vmatpush2.bf16.msra.mxu0 %v2434
  %3680 = vmatprep.subr.bf16.mxu0 %v2430
  %3681 = vmatpush2.bf16.msra.mxu0 %v2429
  %3682 = vmatprep.subr.bf16.mxu0 %v2425
  %3683 = vmatpush2.bf16.msra.mxu0 %v2424
  %3684 = vmatprep.subr.bf16.mxu0 %v2420
  %3685 = vmatpush2.bf16.msra.mxu0 %v2419
  %3686 = vmatprep.subr.bf16.mxu0 %v2415
  %3687 = vmatpush2.bf16.msra.mxu0 %v2414
  %3688 = vmatprep.subr.bf16.mxu0 %v2410
  %3689 = vmatpush2.bf16.msra.mxu0 %v2409
  %3690 = vmatprep.mubr.bf16.mxu0 %v704
  %3691 = vmatmul.mubr.bf16.gmra.mxu0 %v690
  %v3692 = vpop.f32.mrf.mxu0
  %v3693 = vadd.f32 %v651, %v3692
  %v3694 = vpop.f32.mrf.mxu0
  %v3695 = vadd.f32 %v655, %v3694
  %v3696 = vpop.f32.mrf.mxu0
  %v3697 = vpop.f32.mrf.mxu0
  %3698 = vdwg.mxu0
  %3699 = vmatprep.subr.bf16.mxu0 %v2485
  %3700 = vmatpush1.bf16.msra.mxu0 %v2484
  %3701 = vmatprep.subr.bf16.mxu0 %v2480
  %3702 = vmatpush1.bf16.msra.mxu0 %v2479
  %3703 = vmatprep.subr.bf16.mxu0 %v2475
  %3704 = vmatpush1.bf16.msra.mxu0 %v2474
  %3705 = vmatprep.subr.bf16.mxu0 %v2470
  %3706 = vmatpush1.bf16.msra.mxu0 %v2469
  %3707 = vmatprep.subr.bf16.mxu0 %v2465
  %3708 = vmatpush1.bf16.msra.mxu0 %v2464
  %3709 = vmatprep.subr.bf16.mxu0 %v2460
  %3710 = vmatpush1.bf16.msra.mxu0 %v2459
  %3711 = vmatprep.subr.bf16.mxu0 %v2455
  %3712 = vmatpush1.bf16.msra.mxu0 %v2454
  %3713 = vmatprep.subr.bf16.mxu0 %v2450
  %3714 = vmatpush1.bf16.msra.mxu0 %v2449
  %3715 = vmatprep.subr.bf16.mxu0 %v2525
  %3716 = vmatpush2.bf16.msra.mxu0 %v2524
  %3717 = vmatprep.subr.bf16.mxu0 %v2520
  %3718 = vmatpush2.bf16.msra.mxu0 %v2519
  %3719 = vmatprep.subr.bf16.mxu0 %v2515
  %3720 = vmatpush2.bf16.msra.mxu0 %v2514
  %3721 = vmatprep.subr.bf16.mxu0 %v2510
  %3722 = vmatpush2.bf16.msra.mxu0 %v2509
  %3723 = vmatprep.subr.bf16.mxu0 %v2505
  %3724 = vmatpush2.bf16.msra.mxu0 %v2504
  %3725 = vmatprep.subr.bf16.mxu0 %v2500
  %3726 = vmatpush2.bf16.msra.mxu0 %v2499
  %3727 = vmatprep.subr.bf16.mxu0 %v2495
  %3728 = vmatpush2.bf16.msra.mxu0 %v2494
  %3729 = vmatprep.subr.bf16.mxu0 %v2490
  %3730 = vmatpush2.bf16.msra.mxu0 %v2489
  %3731 = vmatprep.mubr.bf16.mxu0 %v714
  %3732 = vmatmul.mubr.bf16.gmra.mxu0 %v712
  %v3733 = vpop.f32.mrf.mxu0
  %v3734 = vadd.f32 %v3693, %v3733
  %v3735 = vpop.f32.mrf.mxu0
  %v3736 = vadd.f32 %v3695, %v3735
  %v3737 = vpop.f32.mrf.mxu0
  %v3738 = vpop.f32.mrf.mxu0
  %3739 = vdwg.mxu0
  %3740 = vmatprep.subr.bf16.mxu0 %v2565
  %3741 = vmatpush1.bf16.msra.mxu0 %v2564
  %3742 = vmatprep.subr.bf16.mxu0 %v2560
  %3743 = vmatpush1.bf16.msra.mxu0 %v2559
  %3744 = vmatprep.subr.bf16.mxu0 %v2555
  %3745 = vmatpush1.bf16.msra.mxu0 %v2554
  %3746 = vmatprep.subr.bf16.mxu0 %v2550
  %3747 = vmatpush1.bf16.msra.mxu0 %v2549
  %3748 = vmatprep.subr.bf16.mxu0 %v2545
  %3749 = vmatpush1.bf16.msra.mxu0 %v2544
  %3750 = vmatprep.subr.bf16.mxu0 %v2540
  %3751 = vmatpush1.bf16.msra.mxu0 %v2539
  %3752 = vmatprep.subr.bf16.mxu0 %v2535
  %3753 = vmatpush1.bf16.msra.mxu0 %v2534
  %3754 = vmatprep.subr.bf16.mxu0 %v2530
  %3755 = vmatpush1.bf16.msra.mxu0 %v2529
  %3756 = vmatprep.subr.bf16.mxu0 %v2605
  %3757 = vmatpush2.bf16.msra.mxu0 %v2604
  %3758 = vmatprep.subr.bf16.mxu0 %v2600
  %3759 = vmatpush2.bf16.msra.mxu0 %v2599
  %3760 = vmatprep.subr.bf16.mxu0 %v2595
  %3761 = vmatpush2.bf16.msra.mxu0 %v2594
  %3762 = vmatprep.subr.bf16.mxu0 %v2590
  %3763 = vmatpush2.bf16.msra.mxu0 %v2589
  %3764 = vmatprep.subr.bf16.mxu0 %v2585
  %3765 = vmatpush2.bf16.msra.mxu0 %v2584
  %3766 = vmatprep.subr.bf16.mxu0 %v2580
  %3767 = vmatpush2.bf16.msra.mxu0 %v2579
  %3768 = vmatprep.subr.bf16.mxu0 %v2575
  %3769 = vmatpush2.bf16.msra.mxu0 %v2574
  %3770 = vmatprep.subr.bf16.mxu0 %v2570
  %3771 = vmatpush2.bf16.msra.mxu0 %v2569
  %3772 = vmatprep.mubr.bf16.mxu0 %v711
  %3773 = vmatmul.mubr.bf16.gmra.mxu0 %v697
  %v3774 = vpop.f32.mrf.mxu0
  %v3775 = vadd.f32 %v3734, %v3774
  %v3776 = vpop.f32.mrf.mxu0
  %v3777 = vadd.f32 %v3736, %v3776
  %v3778 = vpop.f32.mrf.mxu0
  %v3779 = vpop.f32.mrf.mxu0
  %3780 = vdwg.mxu0
  %3781 = vmatprep.subr.bf16.mxu0 %v2645
  %3782 = vmatpush1.bf16.msra.mxu0 %v2644
  %3783 = vmatprep.subr.bf16.mxu0 %v2640
  %3784 = vmatpush1.bf16.msra.mxu0 %v2639
  %3785 = vmatprep.subr.bf16.mxu0 %v2635
  %3786 = vmatpush1.bf16.msra.mxu0 %v2634
  %3787 = vmatprep.subr.bf16.mxu0 %v2630
  %3788 = vmatpush1.bf16.msra.mxu0 %v2629
  %3789 = vmatprep.subr.bf16.mxu0 %v2625
  %3790 = vmatpush1.bf16.msra.mxu0 %v2624
  %3791 = vmatprep.subr.bf16.mxu0 %v2620
  %3792 = vmatpush1.bf16.msra.mxu0 %v2619
  %3793 = vmatprep.subr.bf16.mxu0 %v2615
  %3794 = vmatpush1.bf16.msra.mxu0 %v2614
  %3795 = vmatprep.subr.bf16.mxu0 %v2610
  %3796 = vmatpush1.bf16.msra.mxu0 %v2609
  %3797 = vmatprep.subr.bf16.mxu0 %v2685
  %3798 = vmatpush2.bf16.msra.mxu0 %v2684
  %3799 = vmatprep.subr.bf16.mxu0 %v2680
  %3800 = vmatpush2.bf16.msra.mxu0 %v2679
  %3801 = vmatprep.subr.bf16.mxu0 %v2675
  %3802 = vmatpush2.bf16.msra.mxu0 %v2674
  %3803 = vmatprep.subr.bf16.mxu0 %v2670
  %3804 = vmatpush2.bf16.msra.mxu0 %v2669
  %3805 = vmatprep.subr.bf16.mxu0 %v2665
  %3806 = vmatpush2.bf16.msra.mxu0 %v2664
  %3807 = vmatprep.subr.bf16.mxu0 %v2660
  %3808 = vmatpush2.bf16.msra.mxu0 %v2659
  %3809 = vmatprep.subr.bf16.mxu0 %v2655
  %3810 = vmatpush2.bf16.msra.mxu0 %v2654
  %3811 = vmatprep.subr.bf16.mxu0 %v2650
  %3812 = vmatpush2.bf16.msra.mxu0 %v2649
  %3813 = vmatprep.mubr.bf16.mxu0 %v715
  %3814 = vmatmul.mubr.bf16.gmra.mxu0 %v713
  %v3815 = vpop.f32.mrf.mxu0
  %v3816 = vadd.f32 %v3775, %v3815
  %v3817 = vpop.f32.mrf.mxu0
  %v3818 = vadd.f32 %v3777, %v3817
  %v3819 = vpop.f32.mrf.mxu0
  %v3820 = vpop.f32.mrf.mxu0
  %3821 = vdwg.mxu0
  %3822 = vmatprep.subr.bf16.mxu0 %v2725
  %3823 = vmatpush1.bf16.msra.mxu0 %v2724
  %3824 = vmatprep.subr.bf16.mxu0 %v2720
  %3825 = vmatpush1.bf16.msra.mxu0 %v2719
  %3826 = vmatprep.subr.bf16.mxu0 %v2715
  %3827 = vmatpush1.bf16.msra.mxu0 %v2714
  %3828 = vmatprep.subr.bf16.mxu0 %v2710
  %3829 = vmatpush1.bf16.msra.mxu0 %v2709
  %3830 = vmatprep.subr.bf16.mxu0 %v2705
  %3831 = vmatpush1.bf16.msra.mxu0 %v2704
  %3832 = vmatprep.subr.bf16.mxu0 %v2700
  %3833 = vmatpush1.bf16.msra.mxu0 %v2699
  %3834 = vmatprep.subr.bf16.mxu0 %v2695
  %3835 = vmatpush1.bf16.msra.mxu0 %v2694
  %3836 = vmatprep.subr.bf16.mxu0 %v2690
  %3837 = vmatpush1.bf16.msra.mxu0 %v2689
  %3838 = vmatprep.subr.bf16.mxu0 %v2765
  %3839 = vmatpush2.bf16.msra.mxu0 %v2764
  %3840 = vmatprep.subr.bf16.mxu0 %v2760
  %3841 = vmatpush2.bf16.msra.mxu0 %v2759
  %3842 = vmatprep.subr.bf16.mxu0 %v2755
  %3843 = vmatpush2.bf16.msra.mxu0 %v2754
  %3844 = vmatprep.subr.bf16.mxu0 %v2750
  %3845 = vmatpush2.bf16.msra.mxu0 %v2749
  %3846 = vmatprep.subr.bf16.mxu0 %v2745
  %3847 = vmatpush2.bf16.msra.mxu0 %v2744
  %3848 = vmatprep.subr.bf16.mxu0 %v2740
  %3849 = vmatpush2.bf16.msra.mxu0 %v2739
  %3850 = vmatprep.subr.bf16.mxu0 %v2735
  %3851 = vmatpush2.bf16.msra.mxu0 %v2734
  %3852 = vmatprep.subr.bf16.mxu0 %v2730
  %3853 = vmatpush2.bf16.msra.mxu0 %v2729
  %3854 = vmatprep.mubr.bf16.mxu0 %v752
  %3855 = vmatmul.mubr.bf16.gmra.mxu0 %v738
  %v3856 = vpop.f32.mrf.mxu0
  %v3857 = vadd.f32 %v3816, %v3856
  %v3858 = vpop.f32.mrf.mxu0
  %v3859 = vadd.f32 %v3818, %v3858
  %v3860 = vpop.f32.mrf.mxu0
  %v3861 = vpop.f32.mrf.mxu0
  %3862 = vdwg.mxu0
  %3863 = vmatprep.subr.bf16.mxu0 %v2805
  %3864 = vmatpush1.bf16.msra.mxu0 %v2804
  %3865 = vmatprep.subr.bf16.mxu0 %v2800
  %3866 = vmatpush1.bf16.msra.mxu0 %v2799
  %3867 = vmatprep.subr.bf16.mxu0 %v2795
  %3868 = vmatpush1.bf16.msra.mxu0 %v2794
  %3869 = vmatprep.subr.bf16.mxu0 %v2790
  %3870 = vmatpush1.bf16.msra.mxu0 %v2789
  %3871 = vmatprep.subr.bf16.mxu0 %v2785
  %3872 = vmatpush1.bf16.msra.mxu0 %v2784
  %3873 = vmatprep.subr.bf16.mxu0 %v2780
  %3874 = vmatpush1.bf16.msra.mxu0 %v2779
  %3875 = vmatprep.subr.bf16.mxu0 %v2775
  %3876 = vmatpush1.bf16.msra.mxu0 %v2774
  %3877 = vmatprep.subr.bf16.mxu0 %v2770
  %3878 = vmatpush1.bf16.msra.mxu0 %v2769
  %3879 = vmatprep.subr.bf16.mxu0 %v2845
  %3880 = vmatpush2.bf16.msra.mxu0 %v2844
  %3881 = vmatprep.subr.bf16.mxu0 %v2840
  %3882 = vmatpush2.bf16.msra.mxu0 %v2839
  %3883 = vmatprep.subr.bf16.mxu0 %v2835
  %3884 = vmatpush2.bf16.msra.mxu0 %v2834
  %3885 = vmatprep.subr.bf16.mxu0 %v2830
  %3886 = vmatpush2.bf16.msra.mxu0 %v2829
  %3887 = vmatprep.subr.bf16.mxu0 %v2825
  %3888 = vmatpush2.bf16.msra.mxu0 %v2824
  %3889 = vmatprep.subr.bf16.mxu0 %v2820
  %3890 = vmatpush2.bf16.msra.mxu0 %v2819
  %3891 = vmatprep.subr.bf16.mxu0 %v2815
  %3892 = vmatpush2.bf16.msra.mxu0 %v2814
  %3893 = vmatprep.subr.bf16.mxu0 %v2810
  %3894 = vmatpush2.bf16.msra.mxu0 %v2809
  %3895 = vmatprep.mubr.bf16.mxu0 %v754
  %3896 = vmatmul.mubr.bf16.gmra.mxu0 %v753
  %v3897 = vpop.f32.mrf.mxu0
  %v3898 = vadd.f32 %v3857, %v3897
  %v3899 = vpop.f32.mrf.mxu0
  %v3900 = vadd.f32 %v3859, %v3899
  %v3901 = vpop.f32.mrf.mxu0
  %v3902 = vpop.f32.mrf.mxu0
  %3903 = vdwg.mxu0
  %3904 = vmatprep.subr.bf16.mxu0 0
  %3905 = vmatpush1.bf16.msra.mxu0 0
  %3906 = vmatprep.subr.bf16.mxu0 0
  %3907 = vmatpush1.bf16.msra.mxu0 0
  %3908 = vmatprep.subr.bf16.mxu0 0
  %3909 = vmatpush1.bf16.msra.mxu0 0
  %3910 = vmatprep.subr.bf16.mxu0 0
  %3911 = vmatpush1.bf16.msra.mxu0 0
  %3912 = vmatprep.subr.bf16.mxu0 %v2865
  %3913 = vmatpush1.bf16.msra.mxu0 %v2864
  %3914 = vmatprep.subr.bf16.mxu0 %v2860
  %3915 = vmatpush1.bf16.msra.mxu0 %v2859
  %3916 = vmatprep.subr.bf16.mxu0 %v2855
  %3917 = vmatpush1.bf16.msra.mxu0 %v2854
  %3918 = vmatprep.subr.bf16.mxu0 %v2850
  %3919 = vmatpush1.bf16.msra.mxu0 %v2849
  %3920 = vmatprep.subr.bf16.mxu0 0
  %3921 = vmatpush2.bf16.msra.mxu0 0
  %3922 = vmatprep.subr.bf16.mxu0 0
  %3923 = vmatpush2.bf16.msra.mxu0 0
  %3924 = vmatprep.subr.bf16.mxu0 0
  %3925 = vmatpush2.bf16.msra.mxu0 0
  %3926 = vmatprep.subr.bf16.mxu0 0
  %3927 = vmatpush2.bf16.msra.mxu0 0
  %3928 = vmatprep.subr.bf16.mxu0 0
  %3929 = vmatpush2.bf16.msra.mxu0 0
  %3930 = vmatprep.subr.bf16.mxu0 0
  %3931 = vmatpush2.bf16.msra.mxu0 0
  %3932 = vmatprep.subr.bf16.mxu0 0
  %3933 = vmatpush2.bf16.msra.mxu0 0
  %3934 = vmatprep.subr.bf16.mxu0 0
  %3935 = vmatpush2.bf16.msra.mxu0 0
  %3936 = vmatprep.mubr.bf16.mxu0 0
  %3937 = vmatmul.mubr.bf16.gmra.mxu0 %v3369
  %v3938 = vpop.f32.mrf.mxu0
  %v3939 = vadd.f32 %v3898, %v3938
  %v3940 = vpop.f32.mrf.mxu0
  %v3941 = vadd.f32 %v3900, %v3940
  %v3942 = vpop.f32.mrf.mxu0
  %v3943 = vpop.f32.mrf.mxu0
  %3944 = vdwg.mxu0
  %3945 = vmatprep.subr.bf16.mxu0 0
  %3946 = vmatpush1.bf16.msra.mxu0 %v2406
  %3947 = vmatprep.subr.bf16.mxu0 0
  %3948 = vmatpush1.bf16.msra.mxu0 %v2401
  %3949 = vmatprep.subr.bf16.mxu0 0
  %3950 = vmatpush1.bf16.msra.mxu0 %v2396
  %3951 = vmatprep.subr.bf16.mxu0 0
  %3952 = vmatpush1.bf16.msra.mxu0 %v2391
  %3953 = vmatprep.subr.bf16.mxu0 0
  %3954 = vmatpush1.bf16.msra.mxu0 %v2386
  %3955 = vmatprep.subr.bf16.mxu0 0
  %3956 = vmatpush1.bf16.msra.mxu0 %v2381
  %3957 = vmatprep.subr.bf16.mxu0 0
  %3958 = vmatpush1.bf16.msra.mxu0 %v2376
  %3959 = vmatprep.subr.bf16.mxu0 0
  %3960 = vmatpush1.bf16.msra.mxu0 %v2371
  %3961 = vmatprep.subr.bf16.mxu0 0
  %3962 = vmatpush2.bf16.msra.mxu0 %v2446
  %3963 = vmatprep.subr.bf16.mxu0 0
  %3964 = vmatpush2.bf16.msra.mxu0 %v2441
  %3965 = vmatprep.subr.bf16.mxu0 0
  %3966 = vmatpush2.bf16.msra.mxu0 %v2436
  %3967 = vmatprep.subr.bf16.mxu0 0
  %3968 = vmatpush2.bf16.msra.mxu0 %v2431
  %3969 = vmatprep.subr.bf16.mxu0 0
  %3970 = vmatpush2.bf16.msra.mxu0 %v2426
  %3971 = vmatprep.subr.bf16.mxu0 0
  %3972 = vmatpush2.bf16.msra.mxu0 %v2421
  %3973 = vmatprep.subr.bf16.mxu0 0
  %3974 = vmatpush2.bf16.msra.mxu0 %v2416
  %3975 = vmatprep.subr.bf16.mxu0 0
  %3976 = vmatpush2.bf16.msra.mxu0 %v2411
  %3977 = vmatprep.mubr.bf16.mxu0 %v704
  %3978 = vmatmul.mubr.bf16.gmra.mxu0 %v690
  %v3979 = vpop.f32.mrf.mxu0
  %v3980 = vadd.f32 %v659, %v3979
  %v3981 = vpop.f32.mrf.mxu0
  %v3982 = vpop.f32.mrf.mxu0
  %v3983 = vpop.f32.mrf.mxu0
  %3984 = vdwg.mxu0
  %3985 = vmatprep.subr.bf16.mxu0 0
  %3986 = vmatpush1.bf16.msra.mxu0 %v2486
  %3987 = vmatprep.subr.bf16.mxu0 0
  %3988 = vmatpush1.bf16.msra.mxu0 %v2481
  %3989 = vmatprep.subr.bf16.mxu0 0
  %3990 = vmatpush1.bf16.msra.mxu0 %v2476
  %3991 = vmatprep.subr.bf16.mxu0 0
  %3992 = vmatpush1.bf16.msra.mxu0 %v2471
  %3993 = vmatprep.subr.bf16.mxu0 0
  %3994 = vmatpush1.bf16.msra.mxu0 %v2466
  %3995 = vmatprep.subr.bf16.mxu0 0
  %3996 = vmatpush1.bf16.msra.mxu0 %v2461
  %3997 = vmatprep.subr.bf16.mxu0 0
  %3998 = vmatpush1.bf16.msra.mxu0 %v2456
  %3999 = vmatprep.subr.bf16.mxu0 0
  %4000 = vmatpush1.bf16.msra.mxu0 %v2451
  %4001 = vmatprep.subr.bf16.mxu0 0
  %4002 = vmatpush2.bf16.msra.mxu0 %v2526
  %4003 = vmatprep.subr.bf16.mxu0 0
  %4004 = vmatpush2.bf16.msra.mxu0 %v2521
  %4005 = vmatprep.subr.bf16.mxu0 0
  %4006 = vmatpush2.bf16.msra.mxu0 %v2516
  %4007 = vmatprep.subr.bf16.mxu0 0
  %4008 = vmatpush2.bf16.msra.mxu0 %v2511
  %4009 = vmatprep.subr.bf16.mxu0 0
  %4010 = vmatpush2.bf16.msra.mxu0 %v2506
  %4011 = vmatprep.subr.bf16.mxu0 0
  %4012 = vmatpush2.bf16.msra.mxu0 %v2501
  %4013 = vmatprep.subr.bf16.mxu0 0
  %4014 = vmatpush2.bf16.msra.mxu0 %v2496
  %4015 = vmatprep.subr.bf16.mxu0 0
  %4016 = vmatpush2.bf16.msra.mxu0 %v2491
  %4017 = vmatprep.mubr.bf16.mxu0 %v714
  %4018 = vmatmul.mubr.bf16.gmra.mxu0 %v712
  %v4019 = vpop.f32.mrf.mxu0
  %v4020 = vadd.f32 %v3980, %v4019
  %v4021 = vpop.f32.mrf.mxu0
  %v4022 = vpop.f32.mrf.mxu0
  %v4023 = vpop.f32.mrf.mxu0
  %4024 = vdwg.mxu0
  %4025 = vmatprep.subr.bf16.mxu0 0
  %4026 = vmatpush1.bf16.msra.mxu0 %v2566
  %4027 = vmatprep.subr.bf16.mxu0 0
  %4028 = vmatpush1.bf16.msra.mxu0 %v2561
  %4029 = vmatprep.subr.bf16.mxu0 0
  %4030 = vmatpush1.bf16.msra.mxu0 %v2556
  %4031 = vmatprep.subr.bf16.mxu0 0
  %4032 = vmatpush1.bf16.msra.mxu0 %v2551
  %4033 = vmatprep.subr.bf16.mxu0 0
  %4034 = vmatpush1.bf16.msra.mxu0 %v2546
  %4035 = vmatprep.subr.bf16.mxu0 0
  %4036 = vmatpush1.bf16.msra.mxu0 %v2541
  %4037 = vmatprep.subr.bf16.mxu0 0
  %4038 = vmatpush1.bf16.msra.mxu0 %v2536
  %4039 = vmatprep.subr.bf16.mxu0 0
  %4040 = vmatpush1.bf16.msra.mxu0 %v2531
  %4041 = vmatprep.subr.bf16.mxu0 0
  %4042 = vmatpush2.bf16.msra.mxu0 %v2606
  %4043 = vmatprep.subr.bf16.mxu0 0
  %4044 = vmatpush2.bf16.msra.mxu0 %v2601
  %4045 = vmatprep.subr.bf16.mxu0 0
  %4046 = vmatpush2.bf16.msra.mxu0 %v2596
  %4047 = vmatprep.subr.bf16.mxu0 0
  %4048 = vmatpush2.bf16.msra.mxu0 %v2591
  %4049 = vmatprep.subr.bf16.mxu0 0
  %4050 = vmatpush2.bf16.msra.mxu0 %v2586
  %4051 = vmatprep.subr.bf16.mxu0 0
  %4052 = vmatpush2.bf16.msra.mxu0 %v2581
  %4053 = vmatprep.subr.bf16.mxu0 0
  %4054 = vmatpush2.bf16.msra.mxu0 %v2576
  %4055 = vmatprep.subr.bf16.mxu0 0
  %4056 = vmatpush2.bf16.msra.mxu0 %v2571
  %4057 = vmatprep.mubr.bf16.mxu0 %v711
  %4058 = vmatmul.mubr.bf16.gmra.mxu0 %v697
  %v4059 = vpop.f32.mrf.mxu0
  %v4060 = vadd.f32 %v4020, %v4059
  %v4061 = vpop.f32.mrf.mxu0
  %v4062 = vpop.f32.mrf.mxu0
  %v4063 = vpop.f32.mrf.mxu0
  %4064 = vdwg.mxu0
  %4065 = vmatprep.subr.bf16.mxu0 0
  %4066 = vmatpush1.bf16.msra.mxu0 %v2646
  %4067 = vmatprep.subr.bf16.mxu0 0
  %4068 = vmatpush1.bf16.msra.mxu0 %v2641
  %4069 = vmatprep.subr.bf16.mxu0 0
  %4070 = vmatpush1.bf16.msra.mxu0 %v2636
  %4071 = vmatprep.subr.bf16.mxu0 0
  %4072 = vmatpush1.bf16.msra.mxu0 %v2631
  %4073 = vmatprep.subr.bf16.mxu0 0
  %4074 = vmatpush1.bf16.msra.mxu0 %v2626
  %4075 = vmatprep.subr.bf16.mxu0 0
  %4076 = vmatpush1.bf16.msra.mxu0 %v2621
  %4077 = vmatprep.subr.bf16.mxu0 0
  %4078 = vmatpush1.bf16.msra.mxu0 %v2616
  %4079 = vmatprep.subr.bf16.mxu0 0
  %4080 = vmatpush1.bf16.msra.mxu0 %v2611
  %4081 = vmatprep.subr.bf16.mxu0 0
  %4082 = vmatpush2.bf16.msra.mxu0 %v2686
  %4083 = vmatprep.subr.bf16.mxu0 0
  %4084 = vmatpush2.bf16.msra.mxu0 %v2681
  %4085 = vmatprep.subr.bf16.mxu0 0
  %4086 = vmatpush2.bf16.msra.mxu0 %v2676
  %4087 = vmatprep.subr.bf16.mxu0 0
  %4088 = vmatpush2.bf16.msra.mxu0 %v2671
  %4089 = vmatprep.subr.bf16.mxu0 0
  %4090 = vmatpush2.bf16.msra.mxu0 %v2666
  %4091 = vmatprep.subr.bf16.mxu0 0
  %4092 = vmatpush2.bf16.msra.mxu0 %v2661
  %4093 = vmatprep.subr.bf16.mxu0 0
  %4094 = vmatpush2.bf16.msra.mxu0 %v2656
  %4095 = vmatprep.subr.bf16.mxu0 0
  %4096 = vmatpush2.bf16.msra.mxu0 %v2651
  %4097 = vmatprep.mubr.bf16.mxu0 %v715
  %4098 = vmatmul.mubr.bf16.gmra.mxu0 %v713
  %v4099 = vpop.f32.mrf.mxu0
  %v4100 = vadd.f32 %v4060, %v4099
  %v4101 = vpop.f32.mrf.mxu0
  %v4102 = vpop.f32.mrf.mxu0
  %v4103 = vpop.f32.mrf.mxu0
  %4104 = vdwg.mxu0
  %4105 = vmatprep.subr.bf16.mxu0 0
  %4106 = vmatpush1.bf16.msra.mxu0 %v2726
  %4107 = vmatprep.subr.bf16.mxu0 0
  %4108 = vmatpush1.bf16.msra.mxu0 %v2721
  %4109 = vmatprep.subr.bf16.mxu0 0
  %4110 = vmatpush1.bf16.msra.mxu0 %v2716
  %4111 = vmatprep.subr.bf16.mxu0 0
  %4112 = vmatpush1.bf16.msra.mxu0 %v2711
  %4113 = vmatprep.subr.bf16.mxu0 0
  %4114 = vmatpush1.bf16.msra.mxu0 %v2706
  %4115 = vmatprep.subr.bf16.mxu0 0
  %4116 = vmatpush1.bf16.msra.mxu0 %v2701
  %4117 = vmatprep.subr.bf16.mxu0 0
  %4118 = vmatpush1.bf16.msra.mxu0 %v2696
  %4119 = vmatprep.subr.bf16.mxu0 0
  %4120 = vmatpush1.bf16.msra.mxu0 %v2691
  %4121 = vmatprep.subr.bf16.mxu0 0
  %4122 = vmatpush2.bf16.msra.mxu0 %v2766
  %4123 = vmatprep.subr.bf16.mxu0 0
  %4124 = vmatpush2.bf16.msra.mxu0 %v2761
  %4125 = vmatprep.subr.bf16.mxu0 0
  %4126 = vmatpush2.bf16.msra.mxu0 %v2756
  %4127 = vmatprep.subr.bf16.mxu0 0
  %4128 = vmatpush2.bf16.msra.mxu0 %v2751
  %4129 = vmatprep.subr.bf16.mxu0 0
  %4130 = vmatpush2.bf16.msra.mxu0 %v2746
  %4131 = vmatprep.subr.bf16.mxu0 0
  %4132 = vmatpush2.bf16.msra.mxu0 %v2741
  %4133 = vmatprep.subr.bf16.mxu0 0
  %4134 = vmatpush2.bf16.msra.mxu0 %v2736
  %4135 = vmatprep.subr.bf16.mxu0 0
  %4136 = vmatpush2.bf16.msra.mxu0 %v2731
  %4137 = vmatprep.mubr.bf16.mxu0 %v752
  %4138 = vmatmul.mubr.bf16.gmra.mxu0 %v738
  %v4139 = vpop.f32.mrf.mxu0
  %v4140 = vadd.f32 %v4100, %v4139
  %v4141 = vpop.f32.mrf.mxu0
  %v4142 = vpop.f32.mrf.mxu0
  %v4143 = vpop.f32.mrf.mxu0
  %4144 = vdwg.mxu0
  %4145 = vmatprep.subr.bf16.mxu0 0
  %4146 = vmatpush1.bf16.msra.mxu0 %v2806
  %4147 = vmatprep.subr.bf16.mxu0 0
  %4148 = vmatpush1.bf16.msra.mxu0 %v2801
  %4149 = vmatprep.subr.bf16.mxu0 0
  %4150 = vmatpush1.bf16.msra.mxu0 %v2796
  %4151 = vmatprep.subr.bf16.mxu0 0
  %4152 = vmatpush1.bf16.msra.mxu0 %v2791
  %4153 = vmatprep.subr.bf16.mxu0 0
  %4154 = vmatpush1.bf16.msra.mxu0 %v2786
  %4155 = vmatprep.subr.bf16.mxu0 0
  %4156 = vmatpush1.bf16.msra.mxu0 %v2781
  %4157 = vmatprep.subr.bf16.mxu0 0
  %4158 = vmatpush1.bf16.msra.mxu0 %v2776
  %4159 = vmatprep.subr.bf16.mxu0 0
  %4160 = vmatpush1.bf16.msra.mxu0 %v2771
  %4161 = vmatprep.subr.bf16.mxu0 0
  %4162 = vmatpush2.bf16.msra.mxu0 %v2846
  %4163 = vmatprep.subr.bf16.mxu0 0
  %4164 = vmatpush2.bf16.msra.mxu0 %v2841
  %4165 = vmatprep.subr.bf16.mxu0 0
  %4166 = vmatpush2.bf16.msra.mxu0 %v2836
  %4167 = vmatprep.subr.bf16.mxu0 0
  %4168 = vmatpush2.bf16.msra.mxu0 %v2831
  %4169 = vmatprep.subr.bf16.mxu0 0
  %4170 = vmatpush2.bf16.msra.mxu0 %v2826
  %4171 = vmatprep.subr.bf16.mxu0 0
  %4172 = vmatpush2.bf16.msra.mxu0 %v2821
  %4173 = vmatprep.subr.bf16.mxu0 0
  %4174 = vmatpush2.bf16.msra.mxu0 %v2816
  %4175 = vmatprep.subr.bf16.mxu0 0
  %4176 = vmatpush2.bf16.msra.mxu0 %v2811
  %4177 = vmatprep.mubr.bf16.mxu0 %v754
  %4178 = vmatmul.mubr.bf16.gmra.mxu0 %v753
  %v4179 = vpop.f32.mrf.mxu0
  %v4180 = vadd.f32 %v4140, %v4179
  %v4181 = vpop.f32.mrf.mxu0
  %v4182 = vpop.f32.mrf.mxu0
  %v4183 = vpop.f32.mrf.mxu0
  %4184 = vdwg.mxu0
  %4185 = vmatprep.subr.bf16.mxu0 0
  %4186 = vmatpush1.bf16.msra.mxu0 0
  %4187 = vmatprep.subr.bf16.mxu0 0
  %4188 = vmatpush1.bf16.msra.mxu0 0
  %4189 = vmatprep.subr.bf16.mxu0 0
  %4190 = vmatpush1.bf16.msra.mxu0 0
  %4191 = vmatprep.subr.bf16.mxu0 0
  %4192 = vmatpush1.bf16.msra.mxu0 0
  %4193 = vmatprep.subr.bf16.mxu0 0
  %4194 = vmatpush1.bf16.msra.mxu0 %v2866
  %4195 = vmatprep.subr.bf16.mxu0 0
  %4196 = vmatpush1.bf16.msra.mxu0 %v2861
  %4197 = vmatprep.subr.bf16.mxu0 0
  %4198 = vmatpush1.bf16.msra.mxu0 %v2856
  %4199 = vmatprep.subr.bf16.mxu0 0
  %4200 = vmatpush1.bf16.msra.mxu0 %v2851
  %4201 = vmatprep.subr.bf16.mxu0 0
  %4202 = vmatpush2.bf16.msra.mxu0 0
  %4203 = vmatprep.subr.bf16.mxu0 0
  %4204 = vmatpush2.bf16.msra.mxu0 0
  %4205 = vmatprep.subr.bf16.mxu0 0
  %4206 = vmatpush2.bf16.msra.mxu0 0
  %4207 = vmatprep.subr.bf16.mxu0 0
  %4208 = vmatpush2.bf16.msra.mxu0 0
  %4209 = vmatprep.subr.bf16.mxu0 0
  %4210 = vmatpush2.bf16.msra.mxu0 0
  %4211 = vmatprep.subr.bf16.mxu0 0
  %4212 = vmatpush2.bf16.msra.mxu0 0
  %4213 = vmatprep.subr.bf16.mxu0 0
  %4214 = vmatpush2.bf16.msra.mxu0 0
  %4215 = vmatprep.subr.bf16.mxu0 0
  %4216 = vmatpush2.bf16.msra.mxu0 0
  %4217 = vmatprep.mubr.bf16.mxu0 0
  %4218 = vmatmul.mubr.bf16.gmra.mxu0 %v3369
  %v4219 = vpop.f32.mrf.mxu0
  %v4220 = vadd.f32 %v4180, %v4219
  %v4221 = vpop.f32.mrf.mxu0
  %v4222 = vpop.f32.mrf.mxu0
  %v4223 = vpop.f32.mrf.mxu0
  %4224 = vdwg.mxu0
  %v4225 = vmax.f32 %v3652, 0.0
  %v4226 = vmax.f32 %v3654, 0.0
  %v4227 = vmax.f32 %v3939, 0.0
  %v4228 = vmax.f32 %v3941, 0.0
  %v4229 = vmax.f32 %v4220, 0.0
  %v4230 = vpack.c.bf16 %v4225, %v4225
  %v4231 = vpack.c.bf16 %v4226, %v4226
  %v4232 = vpack.c.bf16 %v4227, %v4227
  %v4233 = vpack.c.bf16 %v4228, %v4228
  %v4234 = vpack.c.bf16 %v4229, %v4229
  %v4235 = vld [vmem:[%s3] sm:$0xff]
  %v4236 = vld [vmem:[%s3 + $0x8] sm:$0xff]
  %v4237 = vld [vmem:[%s3 + $0x10] sm:$0xff]
  %v4238 = vld [vmem:[%s3 + $0x18] sm:$0xff]
  %v4239 = vld [vmem:[%s3 + $0x20] sm:$0xff]
  %v4240 = vld [vmem:[%s3 + $0x28] sm:$0xff]
  %v4241 = vld [vmem:[%s3 + $0x30] sm:$0xff]
  %v4242 = vld [vmem:[%s3 + $0x38] sm:$0xff]
  %v4243 = vld [vmem:[%s3 + $0x40] sm:$0xff]
  %v4244 = vld [vmem:[%s3 + $0x48] sm:$0xff]
  %v4245 = vld [vmem:[%s3 + $0x50] sm:$0xff]
  %v4246 = vld [vmem:[%s3 + $0x58] sm:$0xff]
  %v4247 = vld [vmem:[%s3 + $0x60] sm:$0xff]
  %v4248 = vld [vmem:[%s3 + $0x68] sm:$0xff]
  %v4249 = vld [vmem:[%s3 + $0x70] sm:$0xff]
  %v4250 = vld [vmem:[%s3 + $0x78] sm:$0xff]
  %v4251 = vld [vmem:[%s3 + $0x80] sm:$0xff]
  %v4252 = vld [vmem:[%s3 + $0x88] sm:$0xff]
  %v4253 = vld [vmem:[%s3 + $0x90] sm:$0xff]
  %v4254 = vld [vmem:[%s3 + $0x98] sm:$0xff]
  %v4255 = vld [vmem:[%s3 + $0xa0] sm:$0xff]
  %v4256 = vld [vmem:[%s3 + $0xa8] sm:$0xff]
  %v4257 = vld [vmem:[%s3 + $0xb0] sm:$0xff]
  %v4258 = vld [vmem:[%s3 + $0xb8] sm:$0xff]
  %v4259 = vld [vmem:[%s3 + $0xc0] sm:$0xff]
  %v4260 = vld [vmem:[%s3 + $0xc8] sm:$0xff]
  %v4261 = vld [vmem:[%s3 + $0xd0] sm:$0xff]
  %v4262 = vld [vmem:[%s3 + $0xd8] sm:$0xff]
  %v4263 = vld [vmem:[%s3 + $0xe0] sm:$0xff]
  %v4264 = vld [vmem:[%s3 + $0xe8] sm:$0xff]
  %v4265 = vld [vmem:[%s3 + $0xf0] sm:$0xff]
  %v4266 = vld [vmem:[%s3 + $0xf8] sm:$0xff]
  %v4267 = vld [vmem:[%s3 + $0x100] sm:$0xff]
  %v4268 = vld [vmem:[%s3 + $0x108] sm:$0xff]
  %v4269 = vld [vmem:[%s3 + $0x110] sm:$0xff]
  %v4270 = vld [vmem:[%s3 + $0x118] sm:$0xff]
  %v4271 = vld [vmem:[%s3 + $0x120] sm:$0xff]
  %v4272 = vld [vmem:[%s3 + $0x128] sm:$0xff]
  %v4273 = vld [vmem:[%s3 + $0x130] sm:$0xff]
  %v4274 = vld [vmem:[%s3 + $0x138] sm:$0xff]
  %v4275 = vld [vmem:[%s3 + $0x140] sm:$0xff]
  %v4276 = vld [vmem:[%s3 + $0x148] sm:$0xff]
  %v4277 = vld [vmem:[%s3 + $0x150] sm:$0xff]
  %v4278 = vld [vmem:[%s3 + $0x158] sm:$0xff]
  %v4279 = vld [vmem:[%s3 + $0x160] sm:$0xff]
  %v4280 = vld [vmem:[%s3 + $0x168] sm:$0xff]
  %v4281 = vld [vmem:[%s3 + $0x170] sm:$0xff]
  %v4282 = vld [vmem:[%s3 + $0x178] sm:$0xff]
  %v4283 = vld [vmem:[%s3 + $0x180] sm:$0xff]
  %v4284 = vld [vmem:[%s3 + $0x188] sm:$0xff]
  %v4285 = vld [vmem:[%s3 + $0x190] sm:$0xff]
  %v4286 = vld [vmem:[%s3 + $0x198] sm:$0xff]
  %v4287 = vld [vmem:[%s3 + $0x1a0] sm:$0xff]
  %v4288 = vld [vmem:[%s3 + $0x1a8] sm:$0xff]
  %v4289 = vld [vmem:[%s3 + $0x1b0] sm:$0xff]
  %v4290 = vld [vmem:[%s3 + $0x1b8] sm:$0xff]
  %v4291 = vld [vmem:[%s3 + $0x1c0] sm:$0xff]
  %v4292 = vld [vmem:[%s3 + $0x1c8] sm:$0xff]
  %v4293 = vld [vmem:[%s3 + $0x1d0] sm:$0xff]
  %v4294 = vld [vmem:[%s3 + $0x1d8] sm:$0xff]
  %v4295 = vld [vmem:[%s3 + $0x1e0] sm:$0xff]
  %v4296 = vld [vmem:[%s3 + $0x1e8] sm:$0xff]
  %v4297 = vld [vmem:[%s3 + $0x1f0] sm:$0xff]
  %v4298 = vld [vmem:[%s3 + $0x1f8] sm:$0xff]
  %v4299 = vld [vmem:[%s3 + $0x200] sm:$0xff]
  %v4300 = vld [vmem:[%s3 + $0x208] sm:$0xff]
  %v4301 = vld [vmem:[%s3 + $0x210] sm:$0xff]
  %v4302 = vld [vmem:[%s3 + $0x218] sm:$0xff]
  %v4303 = vld [vmem:[%s3 + $0x220] sm:$0xff]
  %v4304 = vld [vmem:[%s3 + $0x228] sm:$0xff]
  %v4305 = vld [vmem:[%s3 + $0x230] sm:$0xff]
  %v4306 = vld [vmem:[%s3 + $0x238] sm:$0xff]
  %v4307 = vld [vmem:[%s3 + $0x240] sm:$0xff]
  %v4308 = vld [vmem:[%s3 + $0x248] sm:$0xff]
  %v4309 = vld [vmem:[%s3 + $0x250] sm:$0xff]
  %v4310 = vld [vmem:[%s3 + $0x258] sm:$0xff]
  %v4311 = vld [vmem:[%s3 + $0x260] sm:$0xff]
  %v4312 = vld [vmem:[%s3 + $0x268] sm:$0xff]
  %v4313 = vld [vmem:[%s3 + $0x270] sm:$0xff]
  %v4314 = vld [vmem:[%s3 + $0x278] sm:$0xff]
  %v4315 = vld [vmem:[%s3 + $0x280] sm:$0xff]
  %v4316 = vld [vmem:[%s3 + $0x288] sm:$0xff]
  %v4317 = vld [vmem:[%s3 + $0x290] sm:$0xff]
  %v4318 = vld [vmem:[%s3 + $0x298] sm:$0xff]
  %v4319 = vld [vmem:[%s3 + $0x2a0] sm:$0xff]
  %v4320 = vld [vmem:[%s3 + $0x2a8] sm:$0xff]
  %v4321 = vld [vmem:[%s3 + $0x2b0] sm:$0xff]
  %v4322 = vld [vmem:[%s3 + $0x2b8] sm:$0xff]
  %v4323 = vld [vmem:[%s3 + $0x2c0] sm:$0xff]
  %v4324 = vld [vmem:[%s3 + $0x2c8] sm:$0xff]
  %v4325 = vld [vmem:[%s3 + $0x2d0] sm:$0xff]
  %v4326 = vld [vmem:[%s3 + $0x2d8] sm:$0xff]
  %v4327 = vld [vmem:[%s3 + $0x2e0] sm:$0xff]
  %v4328 = vld [vmem:[%s3 + $0x2e8] sm:$0xff]
  %v4329 = vld [vmem:[%s3 + $0x2f0] sm:$0xff]
  %v4330 = vld [vmem:[%s3 + $0x2f8] sm:$0xff]
  %v4331 = vld [vmem:[%s3 + $0x300] sm:$0xff]
  %v4332 = vld [vmem:[%s3 + $0x308] sm:$0xff]
  %v4333 = vld [vmem:[%s3 + $0x310] sm:$0xff]
  %v4334 = vld [vmem:[%s3 + $0x318] sm:$0xff]
  %v4335 = vld [vmem:[%s3 + $0x320] sm:$0xff]
  %v4336 = vld [vmem:[%s3 + $0x328] sm:$0xff]
  %v4337 = vld [vmem:[%s3 + $0x330] sm:$0xff]
  %v4338 = vld [vmem:[%s3 + $0x338] sm:$0xff]
  %v4339 = vld [vmem:[%s3 + $0x340] sm:$0xff]
  %v4340 = vld [vmem:[%s3 + $0x348] sm:$0xff]
  %v4341 = vld [vmem:[%s3 + $0x350] sm:$0xff]
  %v4342 = vld [vmem:[%s3 + $0x358] sm:$0xff]
  %v4343 = vld [vmem:[%s3 + $0x360] sm:$0xff]
  %v4344 = vld [vmem:[%s3 + $0x368] sm:$0xff]
  %v4345 = vld [vmem:[%s3 + $0x370] sm:$0xff]
  %v4346 = vld [vmem:[%s3 + $0x378] sm:$0xff]
  %v4347 = vld [vmem:[%s3 + $0x380] sm:$0xff]
  %v4348 = vld [vmem:[%s3 + $0x388] sm:$0xff]
  %v4349 = vld [vmem:[%s3 + $0x390] sm:$0xff]
  %v4350 = vld [vmem:[%s3 + $0x398] sm:$0xff]
  %v4351 = vld [vmem:[%s3 + $0x3a0] sm:$0xff]
  %v4352 = vld [vmem:[%s3 + $0x3a8] sm:$0xff]
  %v4353 = vld [vmem:[%s3 + $0x3b0] sm:$0xff]
  %v4354 = vld [vmem:[%s3 + $0x3b8] sm:$0xff]
  %v4355 = vld [vmem:[%s3 + $0x3c0] sm:$0xff]
  %v4356 = vld [vmem:[%s3 + $0x3c8] sm:$0xff]
  %v4357 = vld [vmem:[%s3 + $0x3d0] sm:$0xff]
  %v4358 = vld [vmem:[%s3 + $0x3d8] sm:$0xff]
  %v4359 = vld [vmem:[%s3 + $0x3e0] sm:$0xff]
  %v4360 = vld [vmem:[%s3 + $0x3e8] sm:$0xff]
  %v4361 = vld [vmem:[%s3 + $0x3f0] sm:$0xff]
  %v4362 = vld [vmem:[%s3 + $0x3f8] sm:$0xff]
  %v4363 = vld [vmem:[%s3 + $0x400] sm:$0xff]
  %v4364 = vld [vmem:[%s3 + $0x408] sm:$0xff]
  %v4365 = vld [vmem:[%s3 + $0x410] sm:$0xff]
  %v4366 = vld [vmem:[%s3 + $0x418] sm:$0xff]
  %v4367 = vld [vmem:[%s3 + $0x420] sm:$0xff]
  %v4368 = vld [vmem:[%s3 + $0x428] sm:$0xff]
  %v4369 = vld [vmem:[%s3 + $0x430] sm:$0xff]
  %v4370 = vld [vmem:[%s3 + $0x438] sm:$0xff]
  %v4371 = vld [vmem:[%s3 + $0x440] sm:$0xff]
  %v4372 = vld [vmem:[%s3 + $0x448] sm:$0xff]
  %v4373 = vld [vmem:[%s3 + $0x450] sm:$0xff]
  %v4374 = vld [vmem:[%s3 + $0x458] sm:$0xff]
  %v4375 = vld [vmem:[%s3 + $0x460] sm:$0xff]
  %v4376 = vld [vmem:[%s3 + $0x468] sm:$0xff]
  %v4377 = vld [vmem:[%s3 + $0x470] sm:$0xff]
  %v4378 = vld [vmem:[%s3 + $0x478] sm:$0xff]
  %v4379 = vld [vmem:[%s3 + $0x480] sm:$0xff]
  %v4380 = vld [vmem:[%s3 + $0x488] sm:$0xff]
  %v4381 = vld [vmem:[%s3 + $0x490] sm:$0xff]
  %v4382 = vld [vmem:[%s3 + $0x498] sm:$0xff]
  %v4383 = vld [vmem:[%s3 + $0x4a0] sm:$0xff]
  %v4384 = vld [vmem:[%s3 + $0x4a8] sm:$0xff]
  %v4385 = vld [vmem:[%s3 + $0x4b0] sm:$0xff]
  %v4386 = vld [vmem:[%s3 + $0x4b8] sm:$0xff]
  %v4387 = vld [vmem:[%s3 + $0x4c0] sm:$0xff]
  %v4388 = vld [vmem:[%s3 + $0x4c8] sm:$0xff]
  %v4389 = vld [vmem:[%s3 + $0x4d0] sm:$0xff]
  %v4390 = vld [vmem:[%s3 + $0x4d8] sm:$0xff]
  %v4391 = vld [vmem:[%s3 + $0x4e0] sm:$0xff]
  %v4392 = vld [vmem:[%s3 + $0x4e8] sm:$0xff]
  %v4393 = vld [vmem:[%s3 + $0x4f0] sm:$0xff]
  %v4394 = vld [vmem:[%s3 + $0x4f8] sm:$0xff]
  %v4395 = vld [vmem:[%s3 + $0x500] sm:$0xff]
  %v4396 = vld [vmem:[%s3 + $0x508] sm:$0xff]
  %v4397 = vld [vmem:[%s3 + $0x510] sm:$0xff]
  %v4398 = vld [vmem:[%s3 + $0x518] sm:$0xff]
  %v4399 = vld [vmem:[%s3 + $0x520] sm:$0xff]
  %v4400 = vld [vmem:[%s3 + $0x528] sm:$0xff]
  %v4401 = vld [vmem:[%s3 + $0x530] sm:$0xff]
  %v4402 = vld [vmem:[%s3 + $0x538] sm:$0xff]
  %v4403 = vld [vmem:[%s3 + $0x540] sm:$0xff]
  %v4404 = vld [vmem:[%s3 + $0x548] sm:$0xff]
  %v4405 = vld [vmem:[%s3 + $0x550] sm:$0xff]
  %v4406 = vld [vmem:[%s3 + $0x558] sm:$0xff]
  %v4407 = vld [vmem:[%s3 + $0x560] sm:$0xff]
  %v4408 = vld [vmem:[%s3 + $0x568] sm:$0xff]
  %v4409 = vld [vmem:[%s3 + $0x570] sm:$0xff]
  %v4410 = vld [vmem:[%s3 + $0x578] sm:$0xff]
  %v4411 = vld [vmem:[%s3 + $0x580] sm:$0xff]
  %v4412 = vld [vmem:[%s3 + $0x588] sm:$0xff]
  %v4413 = vld [vmem:[%s3 + $0x590] sm:$0xff]
  %v4414 = vld [vmem:[%s3 + $0x598] sm:$0xff]
  %v4415 = vld [vmem:[%s3 + $0x5a0] sm:$0xff]
  %v4416 = vld [vmem:[%s3 + $0x5a8] sm:$0xff]
  %v4417 = vld [vmem:[%s3 + $0x5b0] sm:$0xff]
  %v4418 = vld [vmem:[%s3 + $0x5b8] sm:$0xff]
  %v4419 = vld [vmem:[%s3 + $0x5c0] sm:$0xff]
  %v4420 = vld [vmem:[%s3 + $0x5c8] sm:$0xff]
  %v4421 = vld [vmem:[%s3 + $0x5d0] sm:$0xff]
  %v4422 = vld [vmem:[%s3 + $0x5d8] sm:$0xff]
  %v4423 = vld [vmem:[%s3 + $0x5e0] sm:$0xff]
  %v4424 = vld [vmem:[%s3 + $0x5e8] sm:$0xff]
  %v4425 = vld [vmem:[%s3 + $0x5f0] sm:$0xff]
  %v4426 = vld [vmem:[%s3 + $0x5f8] sm:$0xff]
  %v4427 = vld [vmem:[%s3 + $0x600] sm:$0xff]
  %v4428 = vld [vmem:[%s3 + $0x608] sm:$0xff]
  %v4429 = vld [vmem:[%s3 + $0x610] sm:$0xff]
  %v4430 = vld [vmem:[%s3 + $0x618] sm:$0xff]
  %v4431 = vld [vmem:[%s3 + $0x620] sm:$0xff]
  %v4432 = vld [vmem:[%s3 + $0x628] sm:$0xff]
  %v4433 = vld [vmem:[%s3 + $0x630] sm:$0xff]
  %v4434 = vld [vmem:[%s3 + $0x638] sm:$0xff]
  %v4435 = vld [vmem:[%s3 + $0x640] sm:$0xff]
  %v4436 = vld [vmem:[%s3 + $0x648] sm:$0xff]
  %v4437 = vld [vmem:[%s3 + $0x650] sm:$0xff]
  %v4438 = vld [vmem:[%s3 + $0x658] sm:$0xff]
  %v4439 = vld [vmem:[%s3 + $0x660] sm:$0xff]
  %v4440 = vld [vmem:[%s3 + $0x668] sm:$0xff]
  %v4441 = vld [vmem:[%s3 + $0x670] sm:$0xff]
  %v4442 = vld [vmem:[%s3 + $0x678] sm:$0xff]
  %v4443 = vld [vmem:[%s3 + $0x680] sm:$0xff]
  %v4444 = vld [vmem:[%s3 + $0x688] sm:$0xff]
  %v4445 = vld [vmem:[%s3 + $0x690] sm:$0xff]
  %v4446 = vld [vmem:[%s3 + $0x698] sm:$0xff]
  %v4447 = vld [vmem:[%s3 + $0x6a0] sm:$0xff]
  %v4448 = vld [vmem:[%s3 + $0x6a8] sm:$0xff]
  %v4449 = vld [vmem:[%s3 + $0x6b0] sm:$0xff]
  %v4450 = vld [vmem:[%s3 + $0x6b8] sm:$0xff]
  %v4451 = vld [vmem:[%s3 + $0x6c0] sm:$0xff]
  %v4452 = vld [vmem:[%s3 + $0x6c8] sm:$0xff]
  %v4453 = vld [vmem:[%s3 + $0x6d0] sm:$0xff]
  %v4454 = vld [vmem:[%s3 + $0x6d8] sm:$0xff]
  %v4455 = vld [vmem:[%s3 + $0x6e0] sm:$0xff]
  %v4456 = vld [vmem:[%s3 + $0x6e8] sm:$0xff]
  %v4457 = vld [vmem:[%s3 + $0x6f0] sm:$0xff]
  %v4458 = vld [vmem:[%s3 + $0x6f8] sm:$0xff]
  %v4459 = vld [vmem:[%s3 + $0x700] sm:$0xff]
  %v4460 = vld [vmem:[%s3 + $0x708] sm:$0xff]
  %v4461 = vld [vmem:[%s3 + $0x710] sm:$0xff]
  %v4462 = vld [vmem:[%s3 + $0x718] sm:$0xff]
  %v4463 = vld [vmem:[%s3 + $0x720] sm:$0xff]
  %v4464 = vld [vmem:[%s3 + $0x728] sm:$0xff]
  %v4465 = vld [vmem:[%s3 + $0x730] sm:$0xff]
  %v4466 = vld [vmem:[%s3 + $0x738] sm:$0xff]
  %v4467 = vld [vmem:[%s3 + $0x740] sm:$0xff]
  %v4468 = vld [vmem:[%s3 + $0x748] sm:$0xff]
  %v4469 = vld [vmem:[%s3 + $0x750] sm:$0xff]
  %v4470 = vld [vmem:[%s3 + $0x758] sm:$0xff]
  %v4471 = vld [vmem:[%s3 + $0x760] sm:$0xff]
  %v4472 = vld [vmem:[%s3 + $0x768] sm:$0xff]
  %v4473 = vld [vmem:[%s3 + $0x770] sm:$0xff]
  %v4474 = vld [vmem:[%s3 + $0x778] sm:$0xff]
  %v4475 = vld [vmem:[%s3 + $0x780] sm:$0xff]
  %v4476 = vld [vmem:[%s3 + $0x788] sm:$0xff]
  %v4477 = vld [vmem:[%s3 + $0x790] sm:$0xff]
  %v4478 = vld [vmem:[%s3 + $0x798] sm:$0xff]
  %v4479 = vld [vmem:[%s3 + $0x7a0] sm:$0xff]
  %v4480 = vld [vmem:[%s3 + $0x7a8] sm:$0xff]
  %v4481 = vld [vmem:[%s3 + $0x7b0] sm:$0xff]
  %v4482 = vld [vmem:[%s3 + $0x7b8] sm:$0xff]
  %v4483 = vld [vmem:[%s3 + $0x7c0] sm:$0xff]
  %v4484 = vld [vmem:[%s3 + $0x7c8] sm:$0xff]
  %v4485 = vld [vmem:[%s3 + $0x7d0] sm:$0xff]
  %v4486 = vld [vmem:[%s3 + $0x7d8] sm:$0xff]
  %v4487 = vld [vmem:[%s3 + $0x7e0] sm:$0xff]
  %v4488 = vld [vmem:[%s3 + $0x7e8] sm:$0xff]
  %v4489 = vld [vmem:[%s3 + $0x7f0] sm:$0xff]
  %v4490 = vld [vmem:[%s3 + $0x7f8] sm:$0xff]
  %v4491 = vld [vmem:[%s3 + $0x800] sm:$0xff]
  %v4492 = vld [vmem:[%s3 + $0x808] sm:$0xff]
  %v4493 = vld [vmem:[%s3 + $0x810] sm:$0xff]
  %v4494 = vld [vmem:[%s3 + $0x818] sm:$0xff]
  %v4495 = vld [vmem:[%s3 + $0x820] sm:$0xff]
  %v4496 = vld [vmem:[%s3 + $0x828] sm:$0xff]
  %v4497 = vld [vmem:[%s3 + $0x830] sm:$0xff]
  %v4498 = vld [vmem:[%s3 + $0x838] sm:$0xff]
  %v4499 = vld [vmem:[%s3 + $0x840] sm:$0xff]
  %v4500 = vld [vmem:[%s3 + $0x848] sm:$0xff]
  %v4501 = vld [vmem:[%s3 + $0x850] sm:$0xff]
  %v4502 = vld [vmem:[%s3 + $0x858] sm:$0xff]
  %v4503 = vld [vmem:[%s3 + $0x860] sm:$0xff]
  %v4504 = vld [vmem:[%s3 + $0x868] sm:$0xff]
  %v4505 = vld [vmem:[%s3 + $0x870] sm:$0xff]
  %v4506 = vld [vmem:[%s3 + $0x878] sm:$0xff]
  %v4507 = vld [vmem:[%s3 + $0x880] sm:$0xff]
  %v4508 = vld [vmem:[%s3 + $0x888] sm:$0xff]
  %v4509 = vld [vmem:[%s3 + $0x890] sm:$0xff]
  %v4510 = vld [vmem:[%s3 + $0x898] sm:$0xff]
  %v4511 = vld [vmem:[%s3 + $0x8a0] sm:$0xff]
  %v4512 = vld [vmem:[%s3 + $0x8a8] sm:$0xff]
  %v4513 = vld [vmem:[%s3 + $0x8b0] sm:$0xff]
  %v4514 = vld [vmem:[%s3 + $0x8b8] sm:$0xff]
  %v4515 = vld [vmem:[%s3 + $0x8c0] sm:$0xff]
  %v4516 = vld [vmem:[%s3 + $0x8c8] sm:$0xff]
  %v4517 = vld [vmem:[%s3 + $0x8d0] sm:$0xff]
  %v4518 = vld [vmem:[%s3 + $0x8d8] sm:$0xff]
  %v4519 = vld [vmem:[%s3 + $0x8e0] sm:$0xff]
  %v4520 = vld [vmem:[%s3 + $0x8e8] sm:$0xff]
  %v4521 = vld [vmem:[%s3 + $0x8f0] sm:$0xff]
  %v4522 = vld [vmem:[%s3 + $0x8f8] sm:$0xff]
  %v4523 = vld [vmem:[%s4] sm:$0xff]
  %v4525 = vlaneseq
  %v4526 = vshrl.u32 %v4525, 7
  %v4527 = vsub.s32 0, %v4526
  %v4528 = vrot.slane %v4523, %v4527
  %v4529 = vlaneseq
  %v4530 = vshrl.u32 %v4529, 7
  %v4531 = vsub.s32 1, %v4530
  %v4532 = vrot.slane %v4523, %v4531
  %v4533 = vlaneseq
  %v4534 = vshrl.u32 %v4533, 7
  %v4535 = vsub.s32 2, %v4534
  %v4536 = vrot.slane %v4523, %v4535
  %v4537 = vlaneseq
  %v4538 = vshrl.u32 %v4537, 7
  %v4539 = vsub.s32 3, %v4538
  %v4540 = vrot.slane %v4523, %v4539
  %v4541 = vlaneseq
  %v4542 = vshrl.u32 %v4541, 7
  %v4543 = vsub.s32 4, %v4542
  %v4544 = vrot.slane %v4523, %v4543
  %v4545 = vlaneseq
  %v4546 = vshrl.u32 %v4545, 7
  %v4547 = vsub.s32 5, %v4546
  %v4548 = vrot.slane %v4523, %v4547
  %v4549 = vlaneseq
  %v4550 = vshrl.u32 %v4549, 7
  %v4551 = vsub.s32 6, %v4550
  %v4552 = vrot.slane %v4523, %v4551
  %v4553 = vlaneseq
  %v4554 = vshrl.u32 %v4553, 7
  %v4555 = vsub.s32 7, %v4554
  %v4556 = vrot.slane %v4523, %v4555
  %v4853 = vunpack.c.l.b16 %v4235
  %v4854 = vunpack.c.h.b16 %v4235
  %v4855 = vunpack.c.l.b16 %v4236
  %v4856 = vunpack.c.h.b16 %v4236
  %v4857 = vunpack.c.l.b16 %v4237
  %v4858 = vunpack.c.h.b16 %v4237
  %v4859 = vunpack.c.l.b16 %v4238
  %v4860 = vunpack.c.h.b16 %v4238
  %v4861 = vunpack.c.l.b16 %v4239
  %v4862 = vunpack.c.h.b16 %v4239
  %v4863 = vunpack.c.l.b16 %v4240
  %v4864 = vunpack.c.h.b16 %v4240
  %v4865 = vunpack.c.l.b16 %v4241
  %v4866 = vunpack.c.h.b16 %v4241
  %v4867 = vunpack.c.l.b16 %v4242
  %v4868 = vunpack.c.h.b16 %v4242
  %v4869 = vunpack.c.l.b16 %v4243
  %v4870 = vunpack.c.h.b16 %v4243
  %v4871 = vunpack.c.l.b16 %v4244
  %v4872 = vunpack.c.h.b16 %v4244
  %v4873 = vunpack.c.l.b16 %v4245
  %v4874 = vunpack.c.h.b16 %v4245
  %v4875 = vunpack.c.l.b16 %v4246
  %v4876 = vunpack.c.h.b16 %v4246
  %v4877 = vunpack.c.l.b16 %v4247
  %v4878 = vunpack.c.h.b16 %v4247
  %v4879 = vunpack.c.l.b16 %v4248
  %v4880 = vunpack.c.h.b16 %v4248
  %v4881 = vunpack.c.l.b16 %v4249
  %v4882 = vunpack.c.h.b16 %v4249
  %v4883 = vunpack.c.l.b16 %v4250
  %v4884 = vunpack.c.h.b16 %v4250
  %v4885 = vunpack.c.l.b16 %v4251
  %v4886 = vunpack.c.h.b16 %v4251
  %v4887 = vunpack.c.l.b16 %v4252
  %v4888 = vunpack.c.h.b16 %v4252
  %v4889 = vunpack.c.l.b16 %v4253
  %v4890 = vunpack.c.h.b16 %v4253
  %v4891 = vunpack.c.l.b16 %v4254
  %v4892 = vunpack.c.h.b16 %v4254
  %v4893 = vunpack.c.l.b16 %v4255
  %v4894 = vunpack.c.h.b16 %v4255
  %v4895 = vunpack.c.l.b16 %v4256
  %v4896 = vunpack.c.h.b16 %v4256
  %v4897 = vunpack.c.l.b16 %v4257
  %v4898 = vunpack.c.h.b16 %v4257
  %v4899 = vunpack.c.l.b16 %v4258
  %v4900 = vunpack.c.h.b16 %v4258
  %v4901 = vunpack.c.l.b16 %v4259
  %v4902 = vunpack.c.h.b16 %v4259
  %v4903 = vunpack.c.l.b16 %v4260
  %v4904 = vunpack.c.h.b16 %v4260
  %v4905 = vunpack.c.l.b16 %v4261
  %v4906 = vunpack.c.h.b16 %v4261
  %v4907 = vunpack.c.l.b16 %v4262
  %v4908 = vunpack.c.h.b16 %v4262
  %v4909 = vunpack.c.l.b16 %v4263
  %v4910 = vunpack.c.h.b16 %v4263
  %v4911 = vunpack.c.l.b16 %v4264
  %v4912 = vunpack.c.h.b16 %v4264
  %v4913 = vunpack.c.l.b16 %v4265
  %v4914 = vunpack.c.h.b16 %v4265
  %v4915 = vunpack.c.l.b16 %v4266
  %v4916 = vunpack.c.h.b16 %v4266
  %v4917 = vunpack.c.l.b16 %v4267
  %v4918 = vunpack.c.h.b16 %v4267
  %v4919 = vunpack.c.l.b16 %v4268
  %v4920 = vunpack.c.h.b16 %v4268
  %v4921 = vunpack.c.l.b16 %v4269
  %v4922 = vunpack.c.h.b16 %v4269
  %v4923 = vunpack.c.l.b16 %v4270
  %v4924 = vunpack.c.h.b16 %v4270
  %v4925 = vunpack.c.l.b16 %v4271
  %v4926 = vunpack.c.h.b16 %v4271
  %v4927 = vunpack.c.l.b16 %v4272
  %v4928 = vunpack.c.h.b16 %v4272
  %v4929 = vunpack.c.l.b16 %v4273
  %v4930 = vunpack.c.h.b16 %v4273
  %v4931 = vunpack.c.l.b16 %v4274
  %v4932 = vunpack.c.h.b16 %v4274
  %v4933 = vunpack.c.l.b16 %v4275
  %v4934 = vunpack.c.h.b16 %v4275
  %v4935 = vunpack.c.l.b16 %v4276
  %v4936 = vunpack.c.h.b16 %v4276
  %v4937 = vunpack.c.l.b16 %v4277
  %v4938 = vunpack.c.h.b16 %v4277
  %v4939 = vunpack.c.l.b16 %v4278
  %v4940 = vunpack.c.h.b16 %v4278
  %v4941 = vunpack.c.l.b16 %v4279
  %v4942 = vunpack.c.h.b16 %v4279
  %v4943 = vunpack.c.l.b16 %v4280
  %v4944 = vunpack.c.h.b16 %v4280
  %v4945 = vunpack.c.l.b16 %v4281
  %v4946 = vunpack.c.h.b16 %v4281
  %v4947 = vunpack.c.l.b16 %v4282
  %v4948 = vunpack.c.h.b16 %v4282
  %v4949 = vunpack.c.l.b16 %v4283
  %v4950 = vunpack.c.h.b16 %v4283
  %v4951 = vunpack.c.l.b16 %v4284
  %v4952 = vunpack.c.h.b16 %v4284
  %v4953 = vunpack.c.l.b16 %v4285
  %v4954 = vunpack.c.h.b16 %v4285
  %v4955 = vunpack.c.l.b16 %v4286
  %v4956 = vunpack.c.h.b16 %v4286
  %v4957 = vunpack.c.l.b16 %v4287
  %v4958 = vunpack.c.h.b16 %v4287
  %v4959 = vunpack.c.l.b16 %v4288
  %v4960 = vunpack.c.h.b16 %v4288
  %v4961 = vunpack.c.l.b16 %v4289
  %v4962 = vunpack.c.h.b16 %v4289
  %v4963 = vunpack.c.l.b16 %v4290
  %v4964 = vunpack.c.h.b16 %v4290
  %v4965 = vunpack.c.l.b16 %v4291
  %v4966 = vunpack.c.h.b16 %v4291
  %v4967 = vunpack.c.l.b16 %v4292
  %v4968 = vunpack.c.h.b16 %v4292
  %v4969 = vunpack.c.l.b16 %v4293
  %v4970 = vunpack.c.h.b16 %v4293
  %v4971 = vunpack.c.l.b16 %v4294
  %v4972 = vunpack.c.h.b16 %v4294
  %v4973 = vunpack.c.l.b16 %v4295
  %v4974 = vunpack.c.h.b16 %v4295
  %v4975 = vunpack.c.l.b16 %v4296
  %v4976 = vunpack.c.h.b16 %v4296
  %v4977 = vunpack.c.l.b16 %v4297
  %v4978 = vunpack.c.h.b16 %v4297
  %v4979 = vunpack.c.l.b16 %v4298
  %v4980 = vunpack.c.h.b16 %v4298
  %v4981 = vunpack.c.l.b16 %v4299
  %v4982 = vunpack.c.h.b16 %v4299
  %v4983 = vunpack.c.l.b16 %v4300
  %v4984 = vunpack.c.h.b16 %v4300
  %v4985 = vunpack.c.l.b16 %v4301
  %v4986 = vunpack.c.h.b16 %v4301
  %v4987 = vunpack.c.l.b16 %v4302
  %v4988 = vunpack.c.h.b16 %v4302
  %v4989 = vunpack.c.l.b16 %v4303
  %v4990 = vunpack.c.h.b16 %v4303
  %v4991 = vunpack.c.l.b16 %v4304
  %v4992 = vunpack.c.h.b16 %v4304
  %v4993 = vunpack.c.l.b16 %v4305
  %v4994 = vunpack.c.h.b16 %v4305
  %v4995 = vunpack.c.l.b16 %v4306
  %v4996 = vunpack.c.h.b16 %v4306
  %v4997 = vunpack.c.l.b16 %v4307
  %v4998 = vunpack.c.h.b16 %v4307
  %v4999 = vunpack.c.l.b16 %v4308
  %v5000 = vunpack.c.h.b16 %v4308
  %v5001 = vunpack.c.l.b16 %v4309
  %v5002 = vunpack.c.h.b16 %v4309
  %v5003 = vunpack.c.l.b16 %v4310
  %v5004 = vunpack.c.h.b16 %v4310
  %v5005 = vunpack.c.l.b16 %v4311
  %v5006 = vunpack.c.h.b16 %v4311
  %v5007 = vunpack.c.l.b16 %v4312
  %v5008 = vunpack.c.h.b16 %v4312
  %v5009 = vunpack.c.l.b16 %v4313
  %v5010 = vunpack.c.h.b16 %v4313
  %v5011 = vunpack.c.l.b16 %v4314
  %v5012 = vunpack.c.h.b16 %v4314
  %v5013 = vunpack.c.l.b16 %v4315
  %v5014 = vunpack.c.h.b16 %v4315
  %v5015 = vunpack.c.l.b16 %v4316
  %v5016 = vunpack.c.h.b16 %v4316
  %v5017 = vunpack.c.l.b16 %v4317
  %v5018 = vunpack.c.h.b16 %v4317
  %v5019 = vunpack.c.l.b16 %v4318
  %v5020 = vunpack.c.h.b16 %v4318
  %v5021 = vunpack.c.l.b16 %v4319
  %v5022 = vunpack.c.h.b16 %v4319
  %v5023 = vunpack.c.l.b16 %v4320
  %v5024 = vunpack.c.h.b16 %v4320
  %v5025 = vunpack.c.l.b16 %v4321
  %v5026 = vunpack.c.h.b16 %v4321
  %v5027 = vunpack.c.l.b16 %v4322
  %v5028 = vunpack.c.h.b16 %v4322
  %v5029 = vunpack.c.l.b16 %v4323
  %v5030 = vunpack.c.h.b16 %v4323
  %v5031 = vunpack.c.l.b16 %v4324
  %v5032 = vunpack.c.h.b16 %v4324
  %v5033 = vunpack.c.l.b16 %v4325
  %v5034 = vunpack.c.h.b16 %v4325
  %v5035 = vunpack.c.l.b16 %v4326
  %v5036 = vunpack.c.h.b16 %v4326
  %v5037 = vunpack.c.l.b16 %v4327
  %v5038 = vunpack.c.h.b16 %v4327
  %v5039 = vunpack.c.l.b16 %v4328
  %v5040 = vunpack.c.h.b16 %v4328
  %v5041 = vunpack.c.l.b16 %v4329
  %v5042 = vunpack.c.h.b16 %v4329
  %v5043 = vunpack.c.l.b16 %v4330
  %v5044 = vunpack.c.h.b16 %v4330
  %v5045 = vunpack.c.l.b16 %v4331
  %v5046 = vunpack.c.h.b16 %v4331
  %v5047 = vunpack.c.l.b16 %v4332
  %v5048 = vunpack.c.h.b16 %v4332
  %v5049 = vunpack.c.l.b16 %v4333
  %v5050 = vunpack.c.h.b16 %v4333
  %v5051 = vunpack.c.l.b16 %v4334
  %v5052 = vunpack.c.h.b16 %v4334
  %v5053 = vunpack.c.l.b16 %v4335
  %v5054 = vunpack.c.h.b16 %v4335
  %v5055 = vunpack.c.l.b16 %v4336
  %v5056 = vunpack.c.h.b16 %v4336
  %v5057 = vunpack.c.l.b16 %v4337
  %v5058 = vunpack.c.h.b16 %v4337
  %v5059 = vunpack.c.l.b16 %v4338
  %v5060 = vunpack.c.h.b16 %v4338
  %v5061 = vunpack.c.l.b16 %v4339
  %v5062 = vunpack.c.h.b16 %v4339
  %v5063 = vunpack.c.l.b16 %v4340
  %v5064 = vunpack.c.h.b16 %v4340
  %v5065 = vunpack.c.l.b16 %v4341
  %v5066 = vunpack.c.h.b16 %v4341
  %v5067 = vunpack.c.l.b16 %v4342
  %v5068 = vunpack.c.h.b16 %v4342
  %v5069 = vunpack.c.l.b16 %v4343
  %v5070 = vunpack.c.h.b16 %v4343
  %v5071 = vunpack.c.l.b16 %v4344
  %v5072 = vunpack.c.h.b16 %v4344
  %v5073 = vunpack.c.l.b16 %v4345
  %v5074 = vunpack.c.h.b16 %v4345
  %v5075 = vunpack.c.l.b16 %v4346
  %v5076 = vunpack.c.h.b16 %v4346
  %v5077 = vunpack.c.l.b16 %v4347
  %v5078 = vunpack.c.h.b16 %v4347
  %v5079 = vunpack.c.l.b16 %v4348
  %v5080 = vunpack.c.h.b16 %v4348
  %v5081 = vunpack.c.l.b16 %v4349
  %v5082 = vunpack.c.h.b16 %v4349
  %v5083 = vunpack.c.l.b16 %v4350
  %v5084 = vunpack.c.h.b16 %v4350
  %v5085 = vunpack.c.l.b16 %v4351
  %v5086 = vunpack.c.h.b16 %v4351
  %v5087 = vunpack.c.l.b16 %v4352
  %v5088 = vunpack.c.h.b16 %v4352
  %v5089 = vunpack.c.l.b16 %v4353
  %v5090 = vunpack.c.h.b16 %v4353
  %v5091 = vunpack.c.l.b16 %v4354
  %v5092 = vunpack.c.h.b16 %v4354
  %v5093 = vunpack.c.l.b16 %v4355
  %v5094 = vunpack.c.h.b16 %v4355
  %v5095 = vunpack.c.l.b16 %v4356
  %v5096 = vunpack.c.h.b16 %v4356
  %v5097 = vunpack.c.l.b16 %v4357
  %v5098 = vunpack.c.h.b16 %v4357
  %v5099 = vunpack.c.l.b16 %v4358
  %v5100 = vunpack.c.h.b16 %v4358
  %v5101 = vunpack.c.l.b16 %v4359
  %v5102 = vunpack.c.h.b16 %v4359
  %v5103 = vunpack.c.l.b16 %v4360
  %v5104 = vunpack.c.h.b16 %v4360
  %v5105 = vunpack.c.l.b16 %v4361
  %v5106 = vunpack.c.h.b16 %v4361
  %v5107 = vunpack.c.l.b16 %v4362
  %v5108 = vunpack.c.h.b16 %v4362
  %v5109 = vunpack.c.l.b16 %v4363
  %v5110 = vunpack.c.h.b16 %v4363
  %v5111 = vunpack.c.l.b16 %v4364
  %v5112 = vunpack.c.h.b16 %v4364
  %v5113 = vunpack.c.l.b16 %v4365
  %v5114 = vunpack.c.h.b16 %v4365
  %v5115 = vunpack.c.l.b16 %v4366
  %v5116 = vunpack.c.h.b16 %v4366
  %v5117 = vunpack.c.l.b16 %v4367
  %v5118 = vunpack.c.h.b16 %v4367
  %v5119 = vunpack.c.l.b16 %v4368
  %v5120 = vunpack.c.h.b16 %v4368
  %v5121 = vunpack.c.l.b16 %v4369
  %v5122 = vunpack.c.h.b16 %v4369
  %v5123 = vunpack.c.l.b16 %v4370
  %v5124 = vunpack.c.h.b16 %v4370
  %v5125 = vunpack.c.l.b16 %v4371
  %v5126 = vunpack.c.h.b16 %v4371
  %v5127 = vunpack.c.l.b16 %v4372
  %v5128 = vunpack.c.h.b16 %v4372
  %v5129 = vunpack.c.l.b16 %v4373
  %v5130 = vunpack.c.h.b16 %v4373
  %v5131 = vunpack.c.l.b16 %v4374
  %v5132 = vunpack.c.h.b16 %v4374
  %v5133 = vunpack.c.l.b16 %v4375
  %v5134 = vunpack.c.h.b16 %v4375
  %v5135 = vunpack.c.l.b16 %v4376
  %v5136 = vunpack.c.h.b16 %v4376
  %v5137 = vunpack.c.l.b16 %v4377
  %v5138 = vunpack.c.h.b16 %v4377
  %v5139 = vunpack.c.l.b16 %v4378
  %v5140 = vunpack.c.h.b16 %v4378
  %v5141 = vunpack.c.l.b16 %v4379
  %v5142 = vunpack.c.h.b16 %v4379
  %v5143 = vunpack.c.l.b16 %v4380
  %v5144 = vunpack.c.h.b16 %v4380
  %v5145 = vunpack.c.l.b16 %v4381
  %v5146 = vunpack.c.h.b16 %v4381
  %v5147 = vunpack.c.l.b16 %v4382
  %v5148 = vunpack.c.h.b16 %v4382
  %v5149 = vunpack.c.l.b16 %v4383
  %v5150 = vunpack.c.h.b16 %v4383
  %v5151 = vunpack.c.l.b16 %v4384
  %v5152 = vunpack.c.h.b16 %v4384
  %v5153 = vunpack.c.l.b16 %v4385
  %v5154 = vunpack.c.h.b16 %v4385
  %v5155 = vunpack.c.l.b16 %v4386
  %v5156 = vunpack.c.h.b16 %v4386
  %v5157 = vunpack.c.l.b16 %v4387
  %v5158 = vunpack.c.h.b16 %v4387
  %v5159 = vunpack.c.l.b16 %v4388
  %v5160 = vunpack.c.h.b16 %v4388
  %v5161 = vunpack.c.l.b16 %v4389
  %v5162 = vunpack.c.h.b16 %v4389
  %v5163 = vunpack.c.l.b16 %v4390
  %v5164 = vunpack.c.h.b16 %v4390
  %v5165 = vunpack.c.l.b16 %v4391
  %v5166 = vunpack.c.h.b16 %v4391
  %v5167 = vunpack.c.l.b16 %v4392
  %v5168 = vunpack.c.h.b16 %v4392
  %v5169 = vunpack.c.l.b16 %v4393
  %v5170 = vunpack.c.h.b16 %v4393
  %v5171 = vunpack.c.l.b16 %v4394
  %v5172 = vunpack.c.h.b16 %v4394
  %v5173 = vunpack.c.l.b16 %v4395
  %v5174 = vunpack.c.h.b16 %v4395
  %v5175 = vunpack.c.l.b16 %v4396
  %v5176 = vunpack.c.h.b16 %v4396
  %v5177 = vunpack.c.l.b16 %v4397
  %v5178 = vunpack.c.h.b16 %v4397
  %v5179 = vunpack.c.l.b16 %v4398
  %v5180 = vunpack.c.h.b16 %v4398
  %v5181 = vunpack.c.l.b16 %v4399
  %v5182 = vunpack.c.h.b16 %v4399
  %v5183 = vunpack.c.l.b16 %v4400
  %v5184 = vunpack.c.h.b16 %v4400
  %v5185 = vunpack.c.l.b16 %v4401
  %v5186 = vunpack.c.h.b16 %v4401
  %v5187 = vunpack.c.l.b16 %v4402
  %v5188 = vunpack.c.h.b16 %v4402
  %v5189 = vunpack.c.l.b16 %v4403
  %v5190 = vunpack.c.h.b16 %v4403
  %v5191 = vunpack.c.l.b16 %v4404
  %v5192 = vunpack.c.h.b16 %v4404
  %v5193 = vunpack.c.l.b16 %v4405
  %v5194 = vunpack.c.h.b16 %v4405
  %v5195 = vunpack.c.l.b16 %v4406
  %v5196 = vunpack.c.h.b16 %v4406
  %v5197 = vunpack.c.l.b16 %v4407
  %v5198 = vunpack.c.h.b16 %v4407
  %v5199 = vunpack.c.l.b16 %v4408
  %v5200 = vunpack.c.h.b16 %v4408
  %v5201 = vunpack.c.l.b16 %v4409
  %v5202 = vunpack.c.h.b16 %v4409
  %v5203 = vunpack.c.l.b16 %v4410
  %v5204 = vunpack.c.h.b16 %v4410
  %v5205 = vunpack.c.l.b16 %v4411
  %v5206 = vunpack.c.h.b16 %v4411
  %v5207 = vunpack.c.l.b16 %v4412
  %v5208 = vunpack.c.h.b16 %v4412
  %v5209 = vunpack.c.l.b16 %v4413
  %v5210 = vunpack.c.h.b16 %v4413
  %v5211 = vunpack.c.l.b16 %v4414
  %v5212 = vunpack.c.h.b16 %v4414
  %v5213 = vunpack.c.l.b16 %v4415
  %v5214 = vunpack.c.h.b16 %v4415
  %v5215 = vunpack.c.l.b16 %v4416
  %v5216 = vunpack.c.h.b16 %v4416
  %v5217 = vunpack.c.l.b16 %v4417
  %v5218 = vunpack.c.h.b16 %v4417
  %v5219 = vunpack.c.l.b16 %v4418
  %v5220 = vunpack.c.h.b16 %v4418
  %v5221 = vunpack.c.l.b16 %v4419
  %v5222 = vunpack.c.h.b16 %v4419
  %v5223 = vunpack.c.l.b16 %v4420
  %v5224 = vunpack.c.h.b16 %v4420
  %v5225 = vunpack.c.l.b16 %v4421
  %v5226 = vunpack.c.h.b16 %v4421
  %v5227 = vunpack.c.l.b16 %v4422
  %v5228 = vunpack.c.h.b16 %v4422
  %v5229 = vunpack.c.l.b16 %v4423
  %v5230 = vunpack.c.h.b16 %v4423
  %v5231 = vunpack.c.l.b16 %v4424
  %v5232 = vunpack.c.h.b16 %v4424
  %v5233 = vunpack.c.l.b16 %v4425
  %v5234 = vunpack.c.h.b16 %v4425
  %v5235 = vunpack.c.l.b16 %v4426
  %v5236 = vunpack.c.h.b16 %v4426
  %v5237 = vunpack.c.l.b16 %v4427
  %v5238 = vunpack.c.h.b16 %v4427
  %v5239 = vunpack.c.l.b16 %v4428
  %v5240 = vunpack.c.h.b16 %v4428
  %v5241 = vunpack.c.l.b16 %v4429
  %v5242 = vunpack.c.h.b16 %v4429
  %v5243 = vunpack.c.l.b16 %v4430
  %v5244 = vunpack.c.h.b16 %v4430
  %v5245 = vunpack.c.l.b16 %v4431
  %v5246 = vunpack.c.h.b16 %v4431
  %v5247 = vunpack.c.l.b16 %v4432
  %v5248 = vunpack.c.h.b16 %v4432
  %v5249 = vunpack.c.l.b16 %v4433
  %v5250 = vunpack.c.h.b16 %v4433
  %v5251 = vunpack.c.l.b16 %v4434
  %v5252 = vunpack.c.h.b16 %v4434
  %v5253 = vunpack.c.l.b16 %v4435
  %v5254 = vunpack.c.h.b16 %v4435
  %v5255 = vunpack.c.l.b16 %v4436
  %v5256 = vunpack.c.h.b16 %v4436
  %v5257 = vunpack.c.l.b16 %v4437
  %v5258 = vunpack.c.h.b16 %v4437
  %v5259 = vunpack.c.l.b16 %v4438
  %v5260 = vunpack.c.h.b16 %v4438
  %v5261 = vunpack.c.l.b16 %v4439
  %v5262 = vunpack.c.h.b16 %v4439
  %v5263 = vunpack.c.l.b16 %v4440
  %v5264 = vunpack.c.h.b16 %v4440
  %v5265 = vunpack.c.l.b16 %v4441
  %v5266 = vunpack.c.h.b16 %v4441
  %v5267 = vunpack.c.l.b16 %v4442
  %v5268 = vunpack.c.h.b16 %v4442
  %v5269 = vunpack.c.l.b16 %v4443
  %v5270 = vunpack.c.h.b16 %v4443
  %v5271 = vunpack.c.l.b16 %v4444
  %v5272 = vunpack.c.h.b16 %v4444
  %v5273 = vunpack.c.l.b16 %v4445
  %v5274 = vunpack.c.h.b16 %v4445
  %v5275 = vunpack.c.l.b16 %v4446
  %v5276 = vunpack.c.h.b16 %v4446
  %v5277 = vunpack.c.l.b16 %v4447
  %v5278 = vunpack.c.h.b16 %v4447
  %v5279 = vunpack.c.l.b16 %v4448
  %v5280 = vunpack.c.h.b16 %v4448
  %v5281 = vunpack.c.l.b16 %v4449
  %v5282 = vunpack.c.h.b16 %v4449
  %v5283 = vunpack.c.l.b16 %v4450
  %v5284 = vunpack.c.h.b16 %v4450
  %v5285 = vunpack.c.l.b16 %v4451
  %v5286 = vunpack.c.h.b16 %v4451
  %v5287 = vunpack.c.l.b16 %v4452
  %v5288 = vunpack.c.h.b16 %v4452
  %v5289 = vunpack.c.l.b16 %v4453
  %v5290 = vunpack.c.h.b16 %v4453
  %v5291 = vunpack.c.l.b16 %v4454
  %v5292 = vunpack.c.h.b16 %v4454
  %v5293 = vunpack.c.l.b16 %v4455
  %v5294 = vunpack.c.h.b16 %v4455
  %v5295 = vunpack.c.l.b16 %v4456
  %v5296 = vunpack.c.h.b16 %v4456
  %v5297 = vunpack.c.l.b16 %v4457
  %v5298 = vunpack.c.h.b16 %v4457
  %v5299 = vunpack.c.l.b16 %v4458
  %v5300 = vunpack.c.h.b16 %v4458
  %v5301 = vunpack.c.l.b16 %v4459
  %v5302 = vunpack.c.h.b16 %v4459
  %v5303 = vunpack.c.l.b16 %v4460
  %v5304 = vunpack.c.h.b16 %v4460
  %v5305 = vunpack.c.l.b16 %v4461
  %v5306 = vunpack.c.h.b16 %v4461
  %v5307 = vunpack.c.l.b16 %v4462
  %v5308 = vunpack.c.h.b16 %v4462
  %v5309 = vunpack.c.l.b16 %v4463
  %v5310 = vunpack.c.h.b16 %v4463
  %v5311 = vunpack.c.l.b16 %v4464
  %v5312 = vunpack.c.h.b16 %v4464
  %v5313 = vunpack.c.l.b16 %v4465
  %v5314 = vunpack.c.h.b16 %v4465
  %v5315 = vunpack.c.l.b16 %v4466
  %v5316 = vunpack.c.h.b16 %v4466
  %v5317 = vunpack.c.l.b16 %v4467
  %v5318 = vunpack.c.h.b16 %v4467
  %v5319 = vunpack.c.l.b16 %v4468
  %v5320 = vunpack.c.h.b16 %v4468
  %v5321 = vunpack.c.l.b16 %v4469
  %v5322 = vunpack.c.h.b16 %v4469
  %v5323 = vunpack.c.l.b16 %v4470
  %v5324 = vunpack.c.h.b16 %v4470
  %v5325 = vunpack.c.l.b16 %v4471
  %v5326 = vunpack.c.h.b16 %v4471
  %v5327 = vunpack.c.l.b16 %v4472
  %v5328 = vunpack.c.h.b16 %v4472
  %v5329 = vunpack.c.l.b16 %v4473
  %v5330 = vunpack.c.h.b16 %v4473
  %v5331 = vunpack.c.l.b16 %v4474
  %v5332 = vunpack.c.h.b16 %v4474
  %v5333 = vunpack.c.l.b16 %v4475
  %v5334 = vunpack.c.h.b16 %v4475
  %v5335 = vunpack.c.l.b16 %v4476
  %v5336 = vunpack.c.h.b16 %v4476
  %v5337 = vunpack.c.l.b16 %v4477
  %v5338 = vunpack.c.h.b16 %v4477
  %v5339 = vunpack.c.l.b16 %v4478
  %v5340 = vunpack.c.h.b16 %v4478
  %v5341 = vunpack.c.l.b16 %v4479
  %v5342 = vunpack.c.h.b16 %v4479
  %v5343 = vunpack.c.l.b16 %v4480
  %v5344 = vunpack.c.h.b16 %v4480
  %v5345 = vunpack.c.l.b16 %v4481
  %v5346 = vunpack.c.h.b16 %v4481
  %v5347 = vunpack.c.l.b16 %v4482
  %v5348 = vunpack.c.h.b16 %v4482
  %v5349 = vunpack.c.l.b16 %v4483
  %v5350 = vunpack.c.h.b16 %v4483
  %v5351 = vunpack.c.l.b16 %v4484
  %v5352 = vunpack.c.h.b16 %v4484
  %v5353 = vunpack.c.l.b16 %v4485
  %v5354 = vunpack.c.h.b16 %v4485
  %v5355 = vunpack.c.l.b16 %v4486
  %v5356 = vunpack.c.h.b16 %v4486
  %v5357 = vunpack.c.l.b16 %v4487
  %v5358 = vunpack.c.h.b16 %v4487
  %v5359 = vunpack.c.l.b16 %v4488
  %v5360 = vunpack.c.h.b16 %v4488
  %v5361 = vunpack.c.l.b16 %v4489
  %v5362 = vunpack.c.h.b16 %v4489
  %v5363 = vunpack.c.l.b16 %v4490
  %v5364 = vunpack.c.h.b16 %v4490
  %v5365 = vunpack.c.l.b16 %v4491
  %v5366 = vunpack.c.h.b16 %v4491
  %v5367 = vunpack.c.l.b16 %v4492
  %v5368 = vunpack.c.h.b16 %v4492
  %v5369 = vunpack.c.l.b16 %v4493
  %v5370 = vunpack.c.h.b16 %v4493
  %v5371 = vunpack.c.l.b16 %v4494
  %v5372 = vunpack.c.h.b16 %v4494
  %v5373 = vunpack.c.l.b16 %v4495
  %v5374 = vunpack.c.h.b16 %v4495
  %v5375 = vunpack.c.l.b16 %v4496
  %v5376 = vunpack.c.h.b16 %v4496
  %v5377 = vunpack.c.l.b16 %v4497
  %v5378 = vunpack.c.h.b16 %v4497
  %v5379 = vunpack.c.l.b16 %v4498
  %v5380 = vunpack.c.h.b16 %v4498
  %v5381 = vunpack.c.l.b16 %v4499
  %v5382 = vunpack.c.h.b16 %v4499
  %v5383 = vunpack.c.l.b16 %v4500
  %v5384 = vunpack.c.h.b16 %v4500
  %v5385 = vunpack.c.l.b16 %v4501
  %v5386 = vunpack.c.h.b16 %v4501
  %v5387 = vunpack.c.l.b16 %v4502
  %v5388 = vunpack.c.h.b16 %v4502
  %v5389 = vunpack.c.l.b16 %v4503
  %v5390 = vunpack.c.h.b16 %v4503
  %v5391 = vunpack.c.l.b16 %v4504
  %v5392 = vunpack.c.h.b16 %v4504
  %v5393 = vunpack.c.l.b16 %v4505
  %v5394 = vunpack.c.h.b16 %v4505
  %v5395 = vunpack.c.l.b16 %v4506
  %v5396 = vunpack.c.h.b16 %v4506
  %v5397 = vunpack.c.l.b16 %v4507
  %v5398 = vunpack.c.h.b16 %v4507
  %v5399 = vunpack.c.l.b16 %v4508
  %v5400 = vunpack.c.h.b16 %v4508
  %v5401 = vunpack.c.l.b16 %v4509
  %v5402 = vunpack.c.h.b16 %v4509
  %v5403 = vunpack.c.l.b16 %v4510
  %v5404 = vunpack.c.h.b16 %v4510
  %v5405 = vunpack.c.l.b16 %v4511
  %v5406 = vunpack.c.h.b16 %v4511
  %v5407 = vunpack.c.l.b16 %v4512
  %v5408 = vunpack.c.h.b16 %v4512
  %v5409 = vunpack.c.l.b16 %v4513
  %v5410 = vunpack.c.h.b16 %v4513
  %v5411 = vunpack.c.l.b16 %v4514
  %v5412 = vunpack.c.h.b16 %v4514
  %v5413 = vunpack.c.l.b16 %v4515
  %v5414 = vunpack.c.h.b16 %v4515
  %v5415 = vunpack.c.l.b16 %v4516
  %v5416 = vunpack.c.h.b16 %v4516
  %v5417 = vunpack.c.l.b16 %v4517
  %v5418 = vunpack.c.h.b16 %v4517
  %v5419 = vunpack.c.l.b16 %v4518
  %v5420 = vunpack.c.h.b16 %v4518
  %v5421 = vunpack.c.l.b16 %v4519
  %v5422 = vunpack.c.h.b16 %v4519
  %v5423 = vunpack.c.l.b16 %v4520
  %v5424 = vunpack.c.h.b16 %v4520
  %v5425 = vunpack.c.l.b16 %v4521
  %v5426 = vunpack.c.h.b16 %v4521
  %v5427 = vunpack.c.l.b16 %v4522
  %v5428 = vunpack.c.h.b16 %v4522
  %v5429 = vpack.c.b16 %v4861, %v4853
  %v5430 = vpack.c.b16 %v4862, %v4854
  %v5431 = vpack.c.b16 %v4863, %v4855
  %v5432 = vpack.c.b16 %v4864, %v4856
  %v5433 = vpack.c.b16 %v4865, %v4857
  %v5434 = vpack.c.b16 %v4866, %v4858
  %v5435 = vpack.c.b16 %v4867, %v4859
  %v5436 = vpack.c.b16 %v4868, %v4860
  %v5437 = vpack.c.b16 %v4877, %v4869
  %v5438 = vpack.c.b16 %v4878, %v4870
  %v5439 = vpack.c.b16 %v4879, %v4871
  %v5440 = vpack.c.b16 %v4880, %v4872
  %v5441 = vpack.c.b16 %v4881, %v4873
  %v5442 = vpack.c.b16 %v4882, %v4874
  %v5443 = vpack.c.b16 %v4883, %v4875
  %v5444 = vpack.c.b16 %v4884, %v4876
  %v5445 = vpack.c.b16 %v4893, %v4885
  %v5446 = vpack.c.b16 %v4894, %v4886
  %v5447 = vpack.c.b16 %v4895, %v4887
  %v5448 = vpack.c.b16 %v4896, %v4888
  %v5449 = vpack.c.b16 %v4897, %v4889
  %v5450 = vpack.c.b16 %v4898, %v4890
  %v5451 = vpack.c.b16 %v4899, %v4891
  %v5452 = vpack.c.b16 %v4900, %v4892
  %v5453 = vpack.c.b16 %v4909, %v4901
  %v5454 = vpack.c.b16 %v4910, %v4902
  %v5455 = vpack.c.b16 %v4911, %v4903
  %v5456 = vpack.c.b16 %v4912, %v4904
  %v5457 = vpack.c.b16 %v4913, %v4905
  %v5458 = vpack.c.b16 %v4914, %v4906
  %v5459 = vpack.c.b16 %v4915, %v4907
  %v5460 = vpack.c.b16 %v4916, %v4908
  %v5461 = vpack.c.b16 %v4925, %v4917
  %v5462 = vpack.c.b16 %v4926, %v4918
  %v5463 = vpack.c.b16 %v4927, %v4919
  %v5464 = vpack.c.b16 %v4928, %v4920
  %v5465 = vpack.c.b16 %v4929, %v4921
  %v5466 = vpack.c.b16 %v4930, %v4922
  %v5467 = vpack.c.b16 %v4931, %v4923
  %v5468 = vpack.c.b16 %v4932, %v4924
  %v5469 = vpack.c.b16 %v4941, %v4933
  %v5470 = vpack.c.b16 %v4942, %v4934
  %v5471 = vpack.c.b16 %v4943, %v4935
  %v5472 = vpack.c.b16 %v4944, %v4936
  %v5473 = vpack.c.b16 %v4945, %v4937
  %v5474 = vpack.c.b16 %v4946, %v4938
  %v5475 = vpack.c.b16 %v4947, %v4939
  %v5476 = vpack.c.b16 %v4948, %v4940
  %v5477 = vpack.c.b16 %v4957, %v4949
  %v5478 = vpack.c.b16 %v4958, %v4950
  %v5479 = vpack.c.b16 %v4959, %v4951
  %v5480 = vpack.c.b16 %v4960, %v4952
  %v5481 = vpack.c.b16 %v4961, %v4953
  %v5482 = vpack.c.b16 %v4962, %v4954
  %v5483 = vpack.c.b16 %v4963, %v4955
  %v5484 = vpack.c.b16 %v4964, %v4956
  %v5485 = vpack.c.b16 %v4973, %v4965
  %v5486 = vpack.c.b16 %v4974, %v4966
  %v5487 = vpack.c.b16 %v4975, %v4967
  %v5488 = vpack.c.b16 %v4976, %v4968
  %v5489 = vpack.c.b16 %v4977, %v4969
  %v5490 = vpack.c.b16 %v4978, %v4970
  %v5491 = vpack.c.b16 %v4979, %v4971
  %v5492 = vpack.c.b16 %v4980, %v4972
  %v5493 = vpack.c.b16 %v4989, %v4981
  %v5494 = vpack.c.b16 %v4990, %v4982
  %v5495 = vpack.c.b16 %v4991, %v4983
  %v5496 = vpack.c.b16 %v4992, %v4984
  %v5497 = vpack.c.b16 %v4993, %v4985
  %v5498 = vpack.c.b16 %v4994, %v4986
  %v5499 = vpack.c.b16 %v4995, %v4987
  %v5500 = vpack.c.b16 %v4996, %v4988
  %v5501 = vpack.c.b16 %v5005, %v4997
  %v5502 = vpack.c.b16 %v5006, %v4998
  %v5503 = vpack.c.b16 %v5007, %v4999
  %v5504 = vpack.c.b16 %v5008, %v5000
  %v5505 = vpack.c.b16 %v5009, %v5001
  %v5506 = vpack.c.b16 %v5010, %v5002
  %v5507 = vpack.c.b16 %v5011, %v5003
  %v5508 = vpack.c.b16 %v5012, %v5004
  %v5509 = vpack.c.b16 %v5021, %v5013
  %v5510 = vpack.c.b16 %v5022, %v5014
  %v5511 = vpack.c.b16 %v5023, %v5015
  %v5512 = vpack.c.b16 %v5024, %v5016
  %v5513 = vpack.c.b16 %v5025, %v5017
  %v5514 = vpack.c.b16 %v5026, %v5018
  %v5515 = vpack.c.b16 %v5027, %v5019
  %v5516 = vpack.c.b16 %v5028, %v5020
  %v5517 = vpack.c.b16 %v5037, %v5029
  %v5518 = vpack.c.b16 %v5038, %v5030
  %v5519 = vpack.c.b16 %v5039, %v5031
  %v5520 = vpack.c.b16 %v5040, %v5032
  %v5521 = vpack.c.b16 %v5041, %v5033
  %v5522 = vpack.c.b16 %v5042, %v5034
  %v5523 = vpack.c.b16 %v5043, %v5035
  %v5524 = vpack.c.b16 %v5044, %v5036
  %v5525 = vpack.c.b16 %v5053, %v5045
  %v5526 = vpack.c.b16 %v5054, %v5046
  %v5527 = vpack.c.b16 %v5055, %v5047
  %v5528 = vpack.c.b16 %v5056, %v5048
  %v5529 = vpack.c.b16 %v5057, %v5049
  %v5530 = vpack.c.b16 %v5058, %v5050
  %v5531 = vpack.c.b16 %v5059, %v5051
  %v5532 = vpack.c.b16 %v5060, %v5052
  %v5533 = vpack.c.b16 %v5069, %v5061
  %v5534 = vpack.c.b16 %v5070, %v5062
  %v5535 = vpack.c.b16 %v5071, %v5063
  %v5536 = vpack.c.b16 %v5072, %v5064
  %v5537 = vpack.c.b16 %v5073, %v5065
  %v5538 = vpack.c.b16 %v5074, %v5066
  %v5539 = vpack.c.b16 %v5075, %v5067
  %v5540 = vpack.c.b16 %v5076, %v5068
  %v5541 = vpack.c.b16 %v5085, %v5077
  %v5542 = vpack.c.b16 %v5086, %v5078
  %v5543 = vpack.c.b16 %v5087, %v5079
  %v5544 = vpack.c.b16 %v5088, %v5080
  %v5545 = vpack.c.b16 %v5089, %v5081
  %v5546 = vpack.c.b16 %v5090, %v5082
  %v5547 = vpack.c.b16 %v5091, %v5083
  %v5548 = vpack.c.b16 %v5092, %v5084
  %v5549 = vpack.c.b16 %v5101, %v5093
  %v5550 = vpack.c.b16 %v5102, %v5094
  %v5551 = vpack.c.b16 %v5103, %v5095
  %v5552 = vpack.c.b16 %v5104, %v5096
  %v5553 = vpack.c.b16 %v5105, %v5097
  %v5554 = vpack.c.b16 %v5106, %v5098
  %v5555 = vpack.c.b16 %v5107, %v5099
  %v5556 = vpack.c.b16 %v5108, %v5100
  %v5557 = vpack.c.b16 %v5117, %v5109
  %v5558 = vpack.c.b16 %v5118, %v5110
  %v5559 = vpack.c.b16 %v5119, %v5111
  %v5560 = vpack.c.b16 %v5120, %v5112
  %v5561 = vpack.c.b16 %v5121, %v5113
  %v5562 = vpack.c.b16 %v5122, %v5114
  %v5563 = vpack.c.b16 %v5123, %v5115
  %v5564 = vpack.c.b16 %v5124, %v5116
  %v5565 = vpack.c.b16 %v5133, %v5125
  %v5566 = vpack.c.b16 %v5134, %v5126
  %v5567 = vpack.c.b16 %v5135, %v5127
  %v5568 = vpack.c.b16 %v5136, %v5128
  %v5569 = vpack.c.b16 %v5137, %v5129
  %v5570 = vpack.c.b16 %v5138, %v5130
  %v5571 = vpack.c.b16 %v5139, %v5131
  %v5572 = vpack.c.b16 %v5140, %v5132
  %v5573 = vpack.c.b16 %v5149, %v5141
  %v5574 = vpack.c.b16 %v5150, %v5142
  %v5575 = vpack.c.b16 %v5151, %v5143
  %v5576 = vpack.c.b16 %v5152, %v5144
  %v5577 = vpack.c.b16 %v5153, %v5145
  %v5578 = vpack.c.b16 %v5154, %v5146
  %v5579 = vpack.c.b16 %v5155, %v5147
  %v5580 = vpack.c.b16 %v5156, %v5148
  %v5581 = vpack.c.b16 %v5165, %v5157
  %v5582 = vpack.c.b16 %v5166, %v5158
  %v5583 = vpack.c.b16 %v5167, %v5159
  %v5584 = vpack.c.b16 %v5168, %v5160
  %v5585 = vpack.c.b16 %v5169, %v5161
  %v5586 = vpack.c.b16 %v5170, %v5162
  %v5587 = vpack.c.b16 %v5171, %v5163
  %v5588 = vpack.c.b16 %v5172, %v5164
  %v5589 = vpack.c.b16 %v5181, %v5173
  %v5590 = vpack.c.b16 %v5182, %v5174
  %v5591 = vpack.c.b16 %v5183, %v5175
  %v5592 = vpack.c.b16 %v5184, %v5176
  %v5593 = vpack.c.b16 %v5185, %v5177
  %v5594 = vpack.c.b16 %v5186, %v5178
  %v5595 = vpack.c.b16 %v5187, %v5179
  %v5596 = vpack.c.b16 %v5188, %v5180
  %v5597 = vpack.c.b16 %v5197, %v5189
  %v5598 = vpack.c.b16 %v5198, %v5190
  %v5599 = vpack.c.b16 %v5199, %v5191
  %v5600 = vpack.c.b16 %v5200, %v5192
  %v5601 = vpack.c.b16 %v5201, %v5193
  %v5602 = vpack.c.b16 %v5202, %v5194
  %v5603 = vpack.c.b16 %v5203, %v5195
  %v5604 = vpack.c.b16 %v5204, %v5196
  %v5605 = vpack.c.b16 %v5213, %v5205
  %v5606 = vpack.c.b16 %v5214, %v5206
  %v5607 = vpack.c.b16 %v5215, %v5207
  %v5608 = vpack.c.b16 %v5216, %v5208
  %v5609 = vpack.c.b16 %v5217, %v5209
  %v5610 = vpack.c.b16 %v5218, %v5210
  %v5611 = vpack.c.b16 %v5219, %v5211
  %v5612 = vpack.c.b16 %v5220, %v5212
  %v5613 = vpack.c.b16 %v5229, %v5221
  %v5614 = vpack.c.b16 %v5230, %v5222
  %v5615 = vpack.c.b16 %v5231, %v5223
  %v5616 = vpack.c.b16 %v5232, %v5224
  %v5617 = vpack.c.b16 %v5233, %v5225
  %v5618 = vpack.c.b16 %v5234, %v5226
  %v5619 = vpack.c.b16 %v5235, %v5227
  %v5620 = vpack.c.b16 %v5236, %v5228
  %v5621 = vpack.c.b16 %v5245, %v5237
  %v5622 = vpack.c.b16 %v5246, %v5238
  %v5623 = vpack.c.b16 %v5247, %v5239
  %v5624 = vpack.c.b16 %v5248, %v5240
  %v5625 = vpack.c.b16 %v5249, %v5241
  %v5626 = vpack.c.b16 %v5250, %v5242
  %v5627 = vpack.c.b16 %v5251, %v5243
  %v5628 = vpack.c.b16 %v5252, %v5244
  %v5629 = vpack.c.b16 %v5261, %v5253
  %v5630 = vpack.c.b16 %v5262, %v5254
  %v5631 = vpack.c.b16 %v5263, %v5255
  %v5632 = vpack.c.b16 %v5264, %v5256
  %v5633 = vpack.c.b16 %v5265, %v5257
  %v5634 = vpack.c.b16 %v5266, %v5258
  %v5635 = vpack.c.b16 %v5267, %v5259
  %v5636 = vpack.c.b16 %v5268, %v5260
  %v5637 = vpack.c.b16 %v5277, %v5269
  %v5638 = vpack.c.b16 %v5278, %v5270
  %v5639 = vpack.c.b16 %v5279, %v5271
  %v5640 = vpack.c.b16 %v5280, %v5272
  %v5641 = vpack.c.b16 %v5281, %v5273
  %v5642 = vpack.c.b16 %v5282, %v5274
  %v5643 = vpack.c.b16 %v5283, %v5275
  %v5644 = vpack.c.b16 %v5284, %v5276
  %v5645 = vpack.c.b16 %v5293, %v5285
  %v5646 = vpack.c.b16 %v5294, %v5286
  %v5647 = vpack.c.b16 %v5295, %v5287
  %v5648 = vpack.c.b16 %v5296, %v5288
  %v5649 = vpack.c.b16 %v5297, %v5289
  %v5650 = vpack.c.b16 %v5298, %v5290
  %v5651 = vpack.c.b16 %v5299, %v5291
  %v5652 = vpack.c.b16 %v5300, %v5292
  %v5653 = vpack.c.b16 %v5309, %v5301
  %v5654 = vpack.c.b16 %v5310, %v5302
  %v5655 = vpack.c.b16 %v5311, %v5303
  %v5656 = vpack.c.b16 %v5312, %v5304
  %v5657 = vpack.c.b16 %v5313, %v5305
  %v5658 = vpack.c.b16 %v5314, %v5306
  %v5659 = vpack.c.b16 %v5315, %v5307
  %v5660 = vpack.c.b16 %v5316, %v5308
  %v5661 = vpack.c.b16 %v5325, %v5317
  %v5662 = vpack.c.b16 %v5326, %v5318
  %v5663 = vpack.c.b16 %v5327, %v5319
  %v5664 = vpack.c.b16 %v5328, %v5320
  %v5665 = vpack.c.b16 %v5329, %v5321
  %v5666 = vpack.c.b16 %v5330, %v5322
  %v5667 = vpack.c.b16 %v5331, %v5323
  %v5668 = vpack.c.b16 %v5332, %v5324
  %v5669 = vpack.c.b16 %v5341, %v5333
  %v5670 = vpack.c.b16 %v5342, %v5334
  %v5671 = vpack.c.b16 %v5343, %v5335
  %v5672 = vpack.c.b16 %v5344, %v5336
  %v5673 = vpack.c.b16 %v5345, %v5337
  %v5674 = vpack.c.b16 %v5346, %v5338
  %v5675 = vpack.c.b16 %v5347, %v5339
  %v5676 = vpack.c.b16 %v5348, %v5340
  %v5677 = vpack.c.b16 %v5357, %v5349
  %v5678 = vpack.c.b16 %v5358, %v5350
  %v5679 = vpack.c.b16 %v5359, %v5351
  %v5680 = vpack.c.b16 %v5360, %v5352
  %v5681 = vpack.c.b16 %v5361, %v5353
  %v5682 = vpack.c.b16 %v5362, %v5354
  %v5683 = vpack.c.b16 %v5363, %v5355
  %v5684 = vpack.c.b16 %v5364, %v5356
  %v5685 = vpack.c.b16 %v5373, %v5365
  %v5686 = vpack.c.b16 %v5374, %v5366
  %v5687 = vpack.c.b16 %v5375, %v5367
  %v5688 = vpack.c.b16 %v5376, %v5368
  %v5689 = vpack.c.b16 %v5377, %v5369
  %v5690 = vpack.c.b16 %v5378, %v5370
  %v5691 = vpack.c.b16 %v5379, %v5371
  %v5692 = vpack.c.b16 %v5380, %v5372
  %v5693 = vpack.c.b16 %v5389, %v5381
  %v5694 = vpack.c.b16 %v5390, %v5382
  %v5695 = vpack.c.b16 %v5391, %v5383
  %v5696 = vpack.c.b16 %v5392, %v5384
  %v5697 = vpack.c.b16 %v5393, %v5385
  %v5698 = vpack.c.b16 %v5394, %v5386
  %v5699 = vpack.c.b16 %v5395, %v5387
  %v5700 = vpack.c.b16 %v5396, %v5388
  %v5701 = vpack.c.b16 %v5405, %v5397
  %v5702 = vpack.c.b16 %v5406, %v5398
  %v5703 = vpack.c.b16 %v5407, %v5399
  %v5704 = vpack.c.b16 %v5408, %v5400
  %v5705 = vpack.c.b16 %v5409, %v5401
  %v5706 = vpack.c.b16 %v5410, %v5402
  %v5707 = vpack.c.b16 %v5411, %v5403
  %v5708 = vpack.c.b16 %v5412, %v5404
  %v5709 = vpack.c.b16 %v5421, %v5413
  %v5710 = vpack.c.b16 %v5422, %v5414
  %v5711 = vpack.c.b16 %v5423, %v5415
  %v5712 = vpack.c.b16 %v5424, %v5416
  %v5713 = vpack.c.b16 %v5425, %v5417
  %v5714 = vpack.c.b16 %v5426, %v5418
  %v5715 = vpack.c.b16 %v5427, %v5419
  %v5716 = vpack.c.b16 %v5428, %v5420
  %v6006 = vsel %vm3367, %v4234, 0
  %6008 = vmatprep.subr.bf16.mxu0 %v5486
  %6009 = vmatpush1.bf16.msra.mxu0 %v5485
  %6010 = vmatprep.subr.bf16.mxu0 %v5478
  %6011 = vmatpush1.bf16.msra.mxu0 %v5477
  %6012 = vmatprep.subr.bf16.mxu0 %v5470
  %6013 = vmatpush1.bf16.msra.mxu0 %v5469
  %6014 = vmatprep.subr.bf16.mxu0 %v5462
  %6015 = vmatpush1.bf16.msra.mxu0 %v5461
  %6016 = vmatprep.subr.bf16.mxu0 %v5454
  %6017 = vmatpush1.bf16.msra.mxu0 %v5453
  %6018 = vmatprep.subr.bf16.mxu0 %v5446
  %6019 = vmatpush1.bf16.msra.mxu0 %v5445
  %6020 = vmatprep.subr.bf16.mxu0 %v5438
  %6021 = vmatpush1.bf16.msra.mxu0 %v5437
  %6022 = vmatprep.subr.bf16.mxu0 %v5430
  %6023 = vmatpush1.bf16.msra.mxu0 %v5429
  %6024 = vmatprep.subr.bf16.mxu0 %v5550
  %6025 = vmatpush2.bf16.msra.mxu0 %v5549
  %6026 = vmatprep.subr.bf16.mxu0 %v5542
  %6027 = vmatpush2.bf16.msra.mxu0 %v5541
  %6028 = vmatprep.subr.bf16.mxu0 %v5534
  %6029 = vmatpush2.bf16.msra.mxu0 %v5533
  %6030 = vmatprep.subr.bf16.mxu0 %v5526
  %6031 = vmatpush2.bf16.msra.mxu0 %v5525
  %6032 = vmatprep.subr.bf16.mxu0 %v5518
  %6033 = vmatpush2.bf16.msra.mxu0 %v5517
  %6034 = vmatprep.subr.bf16.mxu0 %v5510
  %6035 = vmatpush2.bf16.msra.mxu0 %v5509
  %6036 = vmatprep.subr.bf16.mxu0 %v5502
  %6037 = vmatpush2.bf16.msra.mxu0 %v5501
  %6038 = vmatprep.subr.bf16.mxu0 %v5494
  %6039 = vmatpush2.bf16.msra.mxu0 %v5493
  %6040 = vmatprep.mubr.bf16.mxu0 %v4231
  %6041 = vmatmul.mubr.bf16.gmra.mxu0 %v4230
  %v6042 = vpop.f32.mrf.mxu0
  %v6043 = vadd.f32 %v4528, %v6042
  %v6044 = vpop.f32.mrf.mxu0
  %v6045 = vadd.f32 %v4532, %v6044
  %v6046 = vpop.f32.mrf.mxu0
  %v6047 = vpop.f32.mrf.mxu0
  %6048 = vdwg.mxu0
  %6049 = vmatprep.subr.bf16.mxu0 %v5614
  %6050 = vmatpush1.bf16.msra.mxu0 %v5613
  %6051 = vmatprep.subr.bf16.mxu0 %v5606
  %6052 = vmatpush1.bf16.msra.mxu0 %v5605
  %6053 = vmatprep.subr.bf16.mxu0 %v5598
  %6054 = vmatpush1.bf16.msra.mxu0 %v5597
  %6055 = vmatprep.subr.bf16.mxu0 %v5590
  %6056 = vmatpush1.bf16.msra.mxu0 %v5589
  %6057 = vmatprep.subr.bf16.mxu0 %v5582
  %6058 = vmatpush1.bf16.msra.mxu0 %v5581
  %6059 = vmatprep.subr.bf16.mxu0 %v5574
  %6060 = vmatpush1.bf16.msra.mxu0 %v5573
  %6061 = vmatprep.subr.bf16.mxu0 %v5566
  %6062 = vmatpush1.bf16.msra.mxu0 %v5565
  %6063 = vmatprep.subr.bf16.mxu0 %v5558
  %6064 = vmatpush1.bf16.msra.mxu0 %v5557
  %6065 = vmatprep.subr.bf16.mxu0 %v5678
  %6066 = vmatpush2.bf16.msra.mxu0 %v5677
  %6067 = vmatprep.subr.bf16.mxu0 %v5670
  %6068 = vmatpush2.bf16.msra.mxu0 %v5669
  %6069 = vmatprep.subr.bf16.mxu0 %v5662
  %6070 = vmatpush2.bf16.msra.mxu0 %v5661
  %6071 = vmatprep.subr.bf16.mxu0 %v5654
  %6072 = vmatpush2.bf16.msra.mxu0 %v5653
  %6073 = vmatprep.subr.bf16.mxu0 %v5646
  %6074 = vmatpush2.bf16.msra.mxu0 %v5645
  %6075 = vmatprep.subr.bf16.mxu0 %v5638
  %6076 = vmatpush2.bf16.msra.mxu0 %v5637
  %6077 = vmatprep.subr.bf16.mxu0 %v5630
  %6078 = vmatpush2.bf16.msra.mxu0 %v5629
  %6079 = vmatprep.subr.bf16.mxu0 %v5622
  %6080 = vmatpush2.bf16.msra.mxu0 %v5621
  %6081 = vmatprep.mubr.bf16.mxu0 %v4233
  %6082 = vmatmul.mubr.bf16.gmra.mxu0 %v4232
  %v6083 = vpop.f32.mrf.mxu0
  %v6084 = vadd.f32 %v6043, %v6083
  %v6085 = vpop.f32.mrf.mxu0
  %v6086 = vadd.f32 %v6045, %v6085
  %v6087 = vpop.f32.mrf.mxu0
  %v6088 = vpop.f32.mrf.mxu0
  %6089 = vdwg.mxu0
  %6090 = vmatprep.subr.bf16.mxu0 0
  %6091 = vmatpush1.bf16.msra.mxu0 0
  %6092 = vmatprep.subr.bf16.mxu0 0
  %6093 = vmatpush1.bf16.msra.mxu0 0
  %6094 = vmatprep.subr.bf16.mxu0 0
  %6095 = vmatpush1.bf16.msra.mxu0 0
  %6096 = vmatprep.subr.bf16.mxu0 0
  %6097 = vmatpush1.bf16.msra.mxu0 0
  %6098 = vmatprep.subr.bf16.mxu0 %v5710
  %6099 = vmatpush1.bf16.msra.mxu0 %v5709
  %6100 = vmatprep.subr.bf16.mxu0 %v5702
  %6101 = vmatpush1.bf16.msra.mxu0 %v5701
  %6102 = vmatprep.subr.bf16.mxu0 %v5694
  %6103 = vmatpush1.bf16.msra.mxu0 %v5693
  %6104 = vmatprep.subr.bf16.mxu0 %v5686
  %6105 = vmatpush1.bf16.msra.mxu0 %v5685
  %6106 = vmatprep.subr.bf16.mxu0 0
  %6107 = vmatpush2.bf16.msra.mxu0 0
  %6108 = vmatprep.subr.bf16.mxu0 0
  %6109 = vmatpush2.bf16.msra.mxu0 0
  %6110 = vmatprep.subr.bf16.mxu0 0
  %6111 = vmatpush2.bf16.msra.mxu0 0
  %6112 = vmatprep.subr.bf16.mxu0 0
  %6113 = vmatpush2.bf16.msra.mxu0 0
  %6114 = vmatprep.subr.bf16.mxu0 0
  %6115 = vmatpush2.bf16.msra.mxu0 0
  %6116 = vmatprep.subr.bf16.mxu0 0
  %6117 = vmatpush2.bf16.msra.mxu0 0
  %6118 = vmatprep.subr.bf16.mxu0 0
  %6119 = vmatpush2.bf16.msra.mxu0 0
  %6120 = vmatprep.subr.bf16.mxu0 0
  %6121 = vmatpush2.bf16.msra.mxu0 0
  %6122 = vmatprep.mubr.bf16.mxu0 0
  %6123 = vmatmul.mubr.bf16.gmra.mxu0 %v6006
  %v6124 = vpop.f32.mrf.mxu0
  %v6125 = vadd.f32 %v6084, %v6124
  %v6126 = vpop.f32.mrf.mxu0
  %v6127 = vadd.f32 %v6086, %v6126
  %v6128 = vpop.f32.mrf.mxu0
  %v6129 = vpop.f32.mrf.mxu0
  %6130 = vdwg.mxu0
  %6131 = vmatprep.subr.bf16.mxu0 %v5488
  %6132 = vmatpush1.bf16.msra.mxu0 %v5487
  %6133 = vmatprep.subr.bf16.mxu0 %v5480
  %6134 = vmatpush1.bf16.msra.mxu0 %v5479
  %6135 = vmatprep.subr.bf16.mxu0 %v5472
  %6136 = vmatpush1.bf16.msra.mxu0 %v5471
  %6137 = vmatprep.subr.bf16.mxu0 %v5464
  %6138 = vmatpush1.bf16.msra.mxu0 %v5463
  %6139 = vmatprep.subr.bf16.mxu0 %v5456
  %6140 = vmatpush1.bf16.msra.mxu0 %v5455
  %6141 = vmatprep.subr.bf16.mxu0 %v5448
  %6142 = vmatpush1.bf16.msra.mxu0 %v5447
  %6143 = vmatprep.subr.bf16.mxu0 %v5440
  %6144 = vmatpush1.bf16.msra.mxu0 %v5439
  %6145 = vmatprep.subr.bf16.mxu0 %v5432
  %6146 = vmatpush1.bf16.msra.mxu0 %v5431
  %6147 = vmatprep.subr.bf16.mxu0 %v5552
  %6148 = vmatpush2.bf16.msra.mxu0 %v5551
  %6149 = vmatprep.subr.bf16.mxu0 %v5544
  %6150 = vmatpush2.bf16.msra.mxu0 %v5543
  %6151 = vmatprep.subr.bf16.mxu0 %v5536
  %6152 = vmatpush2.bf16.msra.mxu0 %v5535
  %6153 = vmatprep.subr.bf16.mxu0 %v5528
  %6154 = vmatpush2.bf16.msra.mxu0 %v5527
  %6155 = vmatprep.subr.bf16.mxu0 %v5520
  %6156 = vmatpush2.bf16.msra.mxu0 %v5519
  %6157 = vmatprep.subr.bf16.mxu0 %v5512
  %6158 = vmatpush2.bf16.msra.mxu0 %v5511
  %6159 = vmatprep.subr.bf16.mxu0 %v5504
  %6160 = vmatpush2.bf16.msra.mxu0 %v5503
  %6161 = vmatprep.subr.bf16.mxu0 %v5496
  %6162 = vmatpush2.bf16.msra.mxu0 %v5495
  %6163 = vmatprep.mubr.bf16.mxu0 %v4231
  %6164 = vmatmul.mubr.bf16.gmra.mxu0 %v4230
  %v6165 = vpop.f32.mrf.mxu0
  %v6166 = vadd.f32 %v4536, %v6165
  %v6167 = vpop.f32.mrf.mxu0
  %v6168 = vadd.f32 %v4540, %v6167
  %v6169 = vpop.f32.mrf.mxu0
  %v6170 = vpop.f32.mrf.mxu0
  %6171 = vdwg.mxu0
  %6172 = vmatprep.subr.bf16.mxu0 %v5616
  %6173 = vmatpush1.bf16.msra.mxu0 %v5615
  %6174 = vmatprep.subr.bf16.mxu0 %v5608
  %6175 = vmatpush1.bf16.msra.mxu0 %v5607
  %6176 = vmatprep.subr.bf16.mxu0 %v5600
  %6177 = vmatpush1.bf16.msra.mxu0 %v5599
  %6178 = vmatprep.subr.bf16.mxu0 %v5592
  %6179 = vmatpush1.bf16.msra.mxu0 %v5591
  %6180 = vmatprep.subr.bf16.mxu0 %v5584
  %6181 = vmatpush1.bf16.msra.mxu0 %v5583
  %6182 = vmatprep.subr.bf16.mxu0 %v5576
  %6183 = vmatpush1.bf16.msra.mxu0 %v5575
  %6184 = vmatprep.subr.bf16.mxu0 %v5568
  %6185 = vmatpush1.bf16.msra.mxu0 %v5567
  %6186 = vmatprep.subr.bf16.mxu0 %v5560
  %6187 = vmatpush1.bf16.msra.mxu0 %v5559
  %6188 = vmatprep.subr.bf16.mxu0 %v5680
  %6189 = vmatpush2.bf16.msra.mxu0 %v5679
  %6190 = vmatprep.subr.bf16.mxu0 %v5672
  %6191 = vmatpush2.bf16.msra.mxu0 %v5671
  %6192 = vmatprep.subr.bf16.mxu0 %v5664
  %6193 = vmatpush2.bf16.msra.mxu0 %v5663
  %6194 = vmatprep.subr.bf16.mxu0 %v5656
  %6195 = vmatpush2.bf16.msra.mxu0 %v5655
  %6196 = vmatprep.subr.bf16.mxu0 %v5648
  %6197 = vmatpush2.bf16.msra.mxu0 %v5647
  %6198 = vmatprep.subr.bf16.mxu0 %v5640
  %6199 = vmatpush2.bf16.msra.mxu0 %v5639
  %6200 = vmatprep.subr.bf16.mxu0 %v5632
  %6201 = vmatpush2.bf16.msra.mxu0 %v5631
  %6202 = vmatprep.subr.bf16.mxu0 %v5624
  %6203 = vmatpush2.bf16.msra.mxu0 %v5623
  %6204 = vmatprep.mubr.bf16.mxu0 %v4233
  %6205 = vmatmul.mubr.bf16.gmra.mxu0 %v4232
  %v6206 = vpop.f32.mrf.mxu0
  %v6207 = vadd.f32 %v6166, %v6206
  %v6208 = vpop.f32.mrf.mxu0
  %v6209 = vadd.f32 %v6168, %v6208
  %v6210 = vpop.f32.mrf.mxu0
  %v6211 = vpop.f32.mrf.mxu0
  %6212 = vdwg.mxu0
  %6213 = vmatprep.subr.bf16.mxu0 0
  %6214 = vmatpush1.bf16.msra.mxu0 0
  %6215 = vmatprep.subr.bf16.mxu0 0
  %6216 = vmatpush1.bf16.msra.mxu0 0
  %6217 = vmatprep.subr.bf16.mxu0 0
  %6218 = vmatpush1.bf16.msra.mxu0 0
  %6219 = vmatprep.subr.bf16.mxu0 0
  %6220 = vmatpush1.bf16.msra.mxu0 0
  %6221 = vmatprep.subr.bf16.mxu0 %v5712
  %6222 = vmatpush1.bf16.msra.mxu0 %v5711
  %6223 = vmatprep.subr.bf16.mxu0 %v5704
  %6224 = vmatpush1.bf16.msra.mxu0 %v5703
  %6225 = vmatprep.subr.bf16.mxu0 %v5696
  %6226 = vmatpush1.bf16.msra.mxu0 %v5695
  %6227 = vmatprep.subr.bf16.mxu0 %v5688
  %6228 = vmatpush1.bf16.msra.mxu0 %v5687
  %6229 = vmatprep.subr.bf16.mxu0 0
  %6230 = vmatpush2.bf16.msra.mxu0 0
  %6231 = vmatprep.subr.bf16.mxu0 0
  %6232 = vmatpush2.bf16.msra.mxu0 0
  %6233 = vmatprep.subr.bf16.mxu0 0
  %6234 = vmatpush2.bf16.msra.mxu0 0
  %6235 = vmatprep.subr.bf16.mxu0 0
  %6236 = vmatpush2.bf16.msra.mxu0 0
  %6237 = vmatprep.subr.bf16.mxu0 0
  %6238 = vmatpush2.bf16.msra.mxu0 0
  %6239 = vmatprep.subr.bf16.mxu0 0
  %6240 = vmatpush2.bf16.msra.mxu0 0
  %6241 = vmatprep.subr.bf16.mxu0 0
  %6242 = vmatpush2.bf16.msra.mxu0 0
  %6243 = vmatprep.subr.bf16.mxu0 0
  %6244 = vmatpush2.bf16.msra.mxu0 0
  %6245 = vmatprep.mubr.bf16.mxu0 0
  %6246 = vmatmul.mubr.bf16.gmra.mxu0 %v6006
  %v6247 = vpop.f32.mrf.mxu0
  %v6248 = vadd.f32 %v6207, %v6247
  %v6249 = vpop.f32.mrf.mxu0
  %v6250 = vadd.f32 %v6209, %v6249
  %v6251 = vpop.f32.mrf.mxu0
  %v6252 = vpop.f32.mrf.mxu0
  %6253 = vdwg.mxu0
  %6254 = vmatprep.subr.bf16.mxu0 %v5490
  %6255 = vmatpush1.bf16.msra.mxu0 %v5489
  %6256 = vmatprep.subr.bf16.mxu0 %v5482
  %6257 = vmatpush1.bf16.msra.mxu0 %v5481
  %6258 = vmatprep.subr.bf16.mxu0 %v5474
  %6259 = vmatpush1.bf16.msra.mxu0 %v5473
  %6260 = vmatprep.subr.bf16.mxu0 %v5466
  %6261 = vmatpush1.bf16.msra.mxu0 %v5465
  %6262 = vmatprep.subr.bf16.mxu0 %v5458
  %6263 = vmatpush1.bf16.msra.mxu0 %v5457
  %6264 = vmatprep.subr.bf16.mxu0 %v5450
  %6265 = vmatpush1.bf16.msra.mxu0 %v5449
  %6266 = vmatprep.subr.bf16.mxu0 %v5442
  %6267 = vmatpush1.bf16.msra.mxu0 %v5441
  %6268 = vmatprep.subr.bf16.mxu0 %v5434
  %6269 = vmatpush1.bf16.msra.mxu0 %v5433
  %6270 = vmatprep.subr.bf16.mxu0 %v5554
  %6271 = vmatpush2.bf16.msra.mxu0 %v5553
  %6272 = vmatprep.subr.bf16.mxu0 %v5546
  %6273 = vmatpush2.bf16.msra.mxu0 %v5545
  %6274 = vmatprep.subr.bf16.mxu0 %v5538
  %6275 = vmatpush2.bf16.msra.mxu0 %v5537
  %6276 = vmatprep.subr.bf16.mxu0 %v5530
  %6277 = vmatpush2.bf16.msra.mxu0 %v5529
  %6278 = vmatprep.subr.bf16.mxu0 %v5522
  %6279 = vmatpush2.bf16.msra.mxu0 %v5521
  %6280 = vmatprep.subr.bf16.mxu0 %v5514
  %6281 = vmatpush2.bf16.msra.mxu0 %v5513
  %6282 = vmatprep.subr.bf16.mxu0 %v5506
  %6283 = vmatpush2.bf16.msra.mxu0 %v5505
  %6284 = vmatprep.subr.bf16.mxu0 %v5498
  %6285 = vmatpush2.bf16.msra.mxu0 %v5497
  %6286 = vmatprep.mubr.bf16.mxu0 %v4231
  %6287 = vmatmul.mubr.bf16.gmra.mxu0 %v4230
  %v6288 = vpop.f32.mrf.mxu0
  %v6289 = vadd.f32 %v4544, %v6288
  %v6290 = vpop.f32.mrf.mxu0
  %v6291 = vadd.f32 %v4548, %v6290
  %v6292 = vpop.f32.mrf.mxu0
  %v6293 = vpop.f32.mrf.mxu0
  %6294 = vdwg.mxu0
  %6295 = vmatprep.subr.bf16.mxu0 %v5618
  %6296 = vmatpush1.bf16.msra.mxu0 %v5617
  %6297 = vmatprep.subr.bf16.mxu0 %v5610
  %6298 = vmatpush1.bf16.msra.mxu0 %v5609
  %6299 = vmatprep.subr.bf16.mxu0 %v5602
  %6300 = vmatpush1.bf16.msra.mxu0 %v5601
  %6301 = vmatprep.subr.bf16.mxu0 %v5594
  %6302 = vmatpush1.bf16.msra.mxu0 %v5593
  %6303 = vmatprep.subr.bf16.mxu0 %v5586
  %6304 = vmatpush1.bf16.msra.mxu0 %v5585
  %6305 = vmatprep.subr.bf16.mxu0 %v5578
  %6306 = vmatpush1.bf16.msra.mxu0 %v5577
  %6307 = vmatprep.subr.bf16.mxu0 %v5570
  %6308 = vmatpush1.bf16.msra.mxu0 %v5569
  %6309 = vmatprep.subr.bf16.mxu0 %v5562
  %6310 = vmatpush1.bf16.msra.mxu0 %v5561
  %6311 = vmatprep.subr.bf16.mxu0 %v5682
  %6312 = vmatpush2.bf16.msra.mxu0 %v5681
  %6313 = vmatprep.subr.bf16.mxu0 %v5674
  %6314 = vmatpush2.bf16.msra.mxu0 %v5673
  %6315 = vmatprep.subr.bf16.mxu0 %v5666
  %6316 = vmatpush2.bf16.msra.mxu0 %v5665
  %6317 = vmatprep.subr.bf16.mxu0 %v5658
  %6318 = vmatpush2.bf16.msra.mxu0 %v5657
  %6319 = vmatprep.subr.bf16.mxu0 %v5650
  %6320 = vmatpush2.bf16.msra.mxu0 %v5649
  %6321 = vmatprep.subr.bf16.mxu0 %v5642
  %6322 = vmatpush2.bf16.msra.mxu0 %v5641
  %6323 = vmatprep.subr.bf16.mxu0 %v5634
  %6324 = vmatpush2.bf16.msra.mxu0 %v5633
  %6325 = vmatprep.subr.bf16.mxu0 %v5626
  %6326 = vmatpush2.bf16.msra.mxu0 %v5625
  %6327 = vmatprep.mubr.bf16.mxu0 %v4233
  %6328 = vmatmul.mubr.bf16.gmra.mxu0 %v4232
  %v6329 = vpop.f32.mrf.mxu0
  %v6330 = vadd.f32 %v6289, %v6329
  %v6331 = vpop.f32.mrf.mxu0
  %v6332 = vadd.f32 %v6291, %v6331
  %v6333 = vpop.f32.mrf.mxu0
  %v6334 = vpop.f32.mrf.mxu0
  %6335 = vdwg.mxu0
  %6336 = vmatprep.subr.bf16.mxu0 0
  %6337 = vmatpush1.bf16.msra.mxu0 0
  %6338 = vmatprep.subr.bf16.mxu0 0
  %6339 = vmatpush1.bf16.msra.mxu0 0
  %6340 = vmatprep.subr.bf16.mxu0 0
  %6341 = vmatpush1.bf16.msra.mxu0 0
  %6342 = vmatprep.subr.bf16.mxu0 0
  %6343 = vmatpush1.bf16.msra.mxu0 0
  %6344 = vmatprep.subr.bf16.mxu0 %v5714
  %6345 = vmatpush1.bf16.msra.mxu0 %v5713
  %6346 = vmatprep.subr.bf16.mxu0 %v5706
  %6347 = vmatpush1.bf16.msra.mxu0 %v5705
  %6348 = vmatprep.subr.bf16.mxu0 %v5698
  %6349 = vmatpush1.bf16.msra.mxu0 %v5697
  %6350 = vmatprep.subr.bf16.mxu0 %v5690
  %6351 = vmatpush1.bf16.msra.mxu0 %v5689
  %6352 = vmatprep.subr.bf16.mxu0 0
  %6353 = vmatpush2.bf16.msra.mxu0 0
  %6354 = vmatprep.subr.bf16.mxu0 0
  %6355 = vmatpush2.bf16.msra.mxu0 0
  %6356 = vmatprep.subr.bf16.mxu0 0
  %6357 = vmatpush2.bf16.msra.mxu0 0
  %6358 = vmatprep.subr.bf16.mxu0 0
  %6359 = vmatpush2.bf16.msra.mxu0 0
  %6360 = vmatprep.subr.bf16.mxu0 0
  %6361 = vmatpush2.bf16.msra.mxu0 0
  %6362 = vmatprep.subr.bf16.mxu0 0
  %6363 = vmatpush2.bf16.msra.mxu0 0
  %6364 = vmatprep.subr.bf16.mxu0 0
  %6365 = vmatpush2.bf16.msra.mxu0 0
  %6366 = vmatprep.subr.bf16.mxu0 0
  %6367 = vmatpush2.bf16.msra.mxu0 0
  %6368 = vmatprep.mubr.bf16.mxu0 0
  %6369 = vmatmul.mubr.bf16.gmra.mxu0 %v6006
  %v6370 = vpop.f32.mrf.mxu0
  %v6371 = vadd.f32 %v6330, %v6370
  %v6372 = vpop.f32.mrf.mxu0
  %v6373 = vadd.f32 %v6332, %v6372
  %v6374 = vpop.f32.mrf.mxu0
  %v6375 = vpop.f32.mrf.mxu0
  %6376 = vdwg.mxu0
  %6377 = vmatprep.subr.bf16.mxu0 %v5492
  %6378 = vmatpush1.bf16.msra.mxu0 %v5491
  %6379 = vmatprep.subr.bf16.mxu0 %v5484
  %6380 = vmatpush1.bf16.msra.mxu0 %v5483
  %6381 = vmatprep.subr.bf16.mxu0 %v5476
  %6382 = vmatpush1.bf16.msra.mxu0 %v5475
  %6383 = vmatprep.subr.bf16.mxu0 %v5468
  %6384 = vmatpush1.bf16.msra.mxu0 %v5467
  %6385 = vmatprep.subr.bf16.mxu0 %v5460
  %6386 = vmatpush1.bf16.msra.mxu0 %v5459
  %6387 = vmatprep.subr.bf16.mxu0 %v5452
  %6388 = vmatpush1.bf16.msra.mxu0 %v5451
  %6389 = vmatprep.subr.bf16.mxu0 %v5444
  %6390 = vmatpush1.bf16.msra.mxu0 %v5443
  %6391 = vmatprep.subr.bf16.mxu0 %v5436
  %6392 = vmatpush1.bf16.msra.mxu0 %v5435
  %6393 = vmatprep.subr.bf16.mxu0 %v5556
  %6394 = vmatpush2.bf16.msra.mxu0 %v5555
  %6395 = vmatprep.subr.bf16.mxu0 %v5548
  %6396 = vmatpush2.bf16.msra.mxu0 %v5547
  %6397 = vmatprep.subr.bf16.mxu0 %v5540
  %6398 = vmatpush2.bf16.msra.mxu0 %v5539
  %6399 = vmatprep.subr.bf16.mxu0 %v5532
  %6400 = vmatpush2.bf16.msra.mxu0 %v5531
  %6401 = vmatprep.subr.bf16.mxu0 %v5524
  %6402 = vmatpush2.bf16.msra.mxu0 %v5523
  %6403 = vmatprep.subr.bf16.mxu0 %v5516
  %6404 = vmatpush2.bf16.msra.mxu0 %v5515
  %6405 = vmatprep.subr.bf16.mxu0 %v5508
  %6406 = vmatpush2.bf16.msra.mxu0 %v5507
  %6407 = vmatprep.subr.bf16.mxu0 %v5500
  %6408 = vmatpush2.bf16.msra.mxu0 %v5499
  %6409 = vmatprep.mubr.bf16.mxu0 %v4231
  %6410 = vmatmul.mubr.bf16.gmra.mxu0 %v4230
  %v6411 = vpop.f32.mrf.mxu0
  %v6412 = vadd.f32 %v4552, %v6411
  %v6413 = vpop.f32.mrf.mxu0
  %v6414 = vadd.f32 %v4556, %v6413
  %v6415 = vpop.f32.mrf.mxu0
  %v6416 = vpop.f32.mrf.mxu0
  %6417 = vdwg.mxu0
  %6418 = vmatprep.subr.bf16.mxu0 %v5620
  %6419 = vmatpush1.bf16.msra.mxu0 %v5619
  %6420 = vmatprep.subr.bf16.mxu0 %v5612
  %6421 = vmatpush1.bf16.msra.mxu0 %v5611
  %6422 = vmatprep.subr.bf16.mxu0 %v5604
  %6423 = vmatpush1.bf16.msra.mxu0 %v5603
  %6424 = vmatprep.subr.bf16.mxu0 %v5596
  %6425 = vmatpush1.bf16.msra.mxu0 %v5595
  %6426 = vmatprep.subr.bf16.mxu0 %v5588
  %6427 = vmatpush1.bf16.msra.mxu0 %v5587
  %6428 = vmatprep.subr.bf16.mxu0 %v5580
  %6429 = vmatpush1.bf16.msra.mxu0 %v5579
  %6430 = vmatprep.subr.bf16.mxu0 %v5572
  %6431 = vmatpush1.bf16.msra.mxu0 %v5571
  %6432 = vmatprep.subr.bf16.mxu0 %v5564
  %6433 = vmatpush1.bf16.msra.mxu0 %v5563
  %6434 = vmatprep.subr.bf16.mxu0 %v5684
  %6435 = vmatpush2.bf16.msra.mxu0 %v5683
  %6436 = vmatprep.subr.bf16.mxu0 %v5676
  %6437 = vmatpush2.bf16.msra.mxu0 %v5675
  %6438 = vmatprep.subr.bf16.mxu0 %v5668
  %6439 = vmatpush2.bf16.msra.mxu0 %v5667
  %6440 = vmatprep.subr.bf16.mxu0 %v5660
  %6441 = vmatpush2.bf16.msra.mxu0 %v5659
  %6442 = vmatprep.subr.bf16.mxu0 %v5652
  %6443 = vmatpush2.bf16.msra.mxu0 %v5651
  %6444 = vmatprep.subr.bf16.mxu0 %v5644
  %6445 = vmatpush2.bf16.msra.mxu0 %v5643
  %6446 = vmatprep.subr.bf16.mxu0 %v5636
  %6447 = vmatpush2.bf16.msra.mxu0 %v5635
  %6448 = vmatprep.subr.bf16.mxu0 %v5628
  %6449 = vmatpush2.bf16.msra.mxu0 %v5627
  %6450 = vmatprep.mubr.bf16.mxu0 %v4233
  %6451 = vmatmul.mubr.bf16.gmra.mxu0 %v4232
  %v6452 = vpop.f32.mrf.mxu0
  %v6453 = vadd.f32 %v6412, %v6452
  %v6454 = vpop.f32.mrf.mxu0
  %v6455 = vadd.f32 %v6414, %v6454
  %v6456 = vpop.f32.mrf.mxu0
  %v6457 = vpop.f32.mrf.mxu0
  %6458 = vdwg.mxu0
  %6459 = vmatprep.subr.bf16.mxu0 0
  %6460 = vmatpush1.bf16.msra.mxu0 0
  %6461 = vmatprep.subr.bf16.mxu0 0
  %6462 = vmatpush1.bf16.msra.mxu0 0
  %6463 = vmatprep.subr.bf16.mxu0 0
  %6464 = vmatpush1.bf16.msra.mxu0 0
  %6465 = vmatprep.subr.bf16.mxu0 0
  %6466 = vmatpush1.bf16.msra.mxu0 0
  %6467 = vmatprep.subr.bf16.mxu0 %v5716
  %6468 = vmatpush1.bf16.msra.mxu0 %v5715
  %6469 = vmatprep.subr.bf16.mxu0 %v5708
  %6470 = vmatpush1.bf16.msra.mxu0 %v5707
  %6471 = vmatprep.subr.bf16.mxu0 %v5700
  %6472 = vmatpush1.bf16.msra.mxu0 %v5699
  %6473 = vmatprep.subr.bf16.mxu0 %v5692
  %6474 = vmatpush1.bf16.msra.mxu0 %v5691
  %6475 = vmatprep.subr.bf16.mxu0 0
  %6476 = vmatpush2.bf16.msra.mxu0 0
  %6477 = vmatprep.subr.bf16.mxu0 0
  %6478 = vmatpush2.bf16.msra.mxu0 0
  %6479 = vmatprep.subr.bf16.mxu0 0
  %6480 = vmatpush2.bf16.msra.mxu0 0
  %6481 = vmatprep.subr.bf16.mxu0 0
  %6482 = vmatpush2.bf16.msra.mxu0 0
  %6483 = vmatprep.subr.bf16.mxu0 0
  %6484 = vmatpush2.bf16.msra.mxu0 0
  %6485 = vmatprep.subr.bf16.mxu0 0
  %6486 = vmatpush2.bf16.msra.mxu0 0
  %6487 = vmatprep.subr.bf16.mxu0 0
  %6488 = vmatpush2.bf16.msra.mxu0 0
  %6489 = vmatprep.subr.bf16.mxu0 0
  %6490 = vmatpush2.bf16.msra.mxu0 0
  %6491 = vmatprep.mubr.bf16.mxu0 0
  %6492 = vmatmul.mubr.bf16.gmra.mxu0 %v6006
  %v6493 = vpop.f32.mrf.mxu0
  %v6494 = vadd.f32 %v6453, %v6493
  %v6495 = vpop.f32.mrf.mxu0
  %v6496 = vadd.f32 %v6455, %v6495
  %v6497 = vpop.f32.mrf.mxu0
  %v6498 = vpop.f32.mrf.mxu0
  %6499 = vdwg.mxu0
  %v6500 = vmax.f32 %v6125, 0.0
  %v6501 = vmax.f32 %v6127, 0.0
  %v6502 = vmax.f32 %v6248, 0.0
  %v6503 = vmax.f32 %v6250, 0.0
  %v6504 = vmax.f32 %v6371, 0.0
  %v6505 = vmax.f32 %v6373, 0.0
  %v6506 = vmax.f32 %v6494, 0.0
  %v6507 = vmax.f32 %v6496, 0.0
  %v6508 = vpack.c.bf16 %v6500, %v6500
  %v6509 = vpack.c.bf16 %v6501, %v6501
  %v6510 = vpack.c.bf16 %v6502, %v6502
  %v6511 = vpack.c.bf16 %v6503, %v6503
  %v6512 = vpack.c.bf16 %v6504, %v6504
  %v6513 = vpack.c.bf16 %v6505, %v6505
  %v6514 = vpack.c.bf16 %v6506, %v6506
  %v6515 = vpack.c.bf16 %v6507, %v6507
  %v6516 = vld [vmem:[%s5] sm:$0xff]
  %v6517 = vld [vmem:[%s5 + $0x8] sm:$0xff]
  %v6518 = vld [vmem:[%s5 + $0x10] sm:$0xff]
  %v6519 = vld [vmem:[%s5 + $0x18] sm:$0xff]
  %v6520 = vld [vmem:[%s5 + $0x20] sm:$0xff]
  %v6521 = vld [vmem:[%s5 + $0x28] sm:$0xff]
  %v6522 = vld [vmem:[%s5 + $0x30] sm:$0xff]
  %v6523 = vld [vmem:[%s5 + $0x38] sm:$0xff]
  %v6524 = vld [vmem:[%s5 + $0x40] sm:$0xff]
  %v6525 = vld [vmem:[%s5 + $0x48] sm:$0xff]
  %v6526 = vld [vmem:[%s5 + $0x50] sm:$0xff]
  %v6527 = vld [vmem:[%s5 + $0x58] sm:$0xff]
  %v6528 = vld [vmem:[%s5 + $0x60] sm:$0xff]
  %v6529 = vld [vmem:[%s5 + $0x68] sm:$0xff]
  %v6530 = vld [vmem:[%s5 + $0x70] sm:$0xff]
  %v6531 = vld [vmem:[%s5 + $0x78] sm:$0xff]
  %v6532 = vld [vmem:[%s5 + $0x80] sm:$0xff]
  %v6533 = vld [vmem:[%s5 + $0x88] sm:$0xff]
  %v6534 = vld [vmem:[%s5 + $0x90] sm:$0xff]
  %v6535 = vld [vmem:[%s5 + $0x98] sm:$0xff]
  %v6536 = vld [vmem:[%s5 + $0xa0] sm:$0xff]
  %v6537 = vld [vmem:[%s5 + $0xa8] sm:$0xff]
  %v6538 = vld [vmem:[%s5 + $0xb0] sm:$0xff]
  %v6539 = vld [vmem:[%s5 + $0xb8] sm:$0xff]
  %v6540 = vld [vmem:[%s5 + $0xc0] sm:$0xff]
  %v6541 = vld [vmem:[%s5 + $0xc8] sm:$0xff]
  %v6542 = vld [vmem:[%s5 + $0xd0] sm:$0xff]
  %v6543 = vld [vmem:[%s5 + $0xd8] sm:$0xff]
  %v6544 = vld [vmem:[%s5 + $0xe0] sm:$0xff]
  %v6545 = vld [vmem:[%s5 + $0xe8] sm:$0xff]
  %v6546 = vld [vmem:[%s5 + $0xf0] sm:$0xff]
  %v6547 = vld [vmem:[%s5 + $0xf8] sm:$0xff]
  %v6548 = vld [vmem:[%s5 + $0x100] sm:$0xff]
  %v6549 = vld [vmem:[%s5 + $0x108] sm:$0xff]
  %v6550 = vld [vmem:[%s5 + $0x110] sm:$0xff]
  %v6551 = vld [vmem:[%s5 + $0x118] sm:$0xff]
  %v6552 = vld [vmem:[%s5 + $0x120] sm:$0xff]
  %v6553 = vld [vmem:[%s5 + $0x128] sm:$0xff]
  %v6554 = vld [vmem:[%s5 + $0x130] sm:$0xff]
  %v6555 = vld [vmem:[%s5 + $0x138] sm:$0xff]
  %v6556 = vld [vmem:[%s5 + $0x140] sm:$0xff]
  %v6557 = vld [vmem:[%s5 + $0x148] sm:$0xff]
  %v6558 = vld [vmem:[%s5 + $0x150] sm:$0xff]
  %v6559 = vld [vmem:[%s5 + $0x158] sm:$0xff]
  %v6560 = vld [vmem:[%s5 + $0x160] sm:$0xff]
  %v6561 = vld [vmem:[%s5 + $0x168] sm:$0xff]
  %v6562 = vld [vmem:[%s5 + $0x170] sm:$0xff]
  %v6563 = vld [vmem:[%s5 + $0x178] sm:$0xff]
  %v6564 = vld [vmem:[%s5 + $0x180] sm:$0xff]
  %v6565 = vld [vmem:[%s5 + $0x188] sm:$0xff]
  %v6566 = vld [vmem:[%s5 + $0x190] sm:$0xff]
  %v6567 = vld [vmem:[%s5 + $0x198] sm:$0xff]
  %v6568 = vld [vmem:[%s5 + $0x1a0] sm:$0xff]
  %v6569 = vld [vmem:[%s5 + $0x1a8] sm:$0xff]
  %v6570 = vld [vmem:[%s5 + $0x1b0] sm:$0xff]
  %v6571 = vld [vmem:[%s5 + $0x1b8] sm:$0xff]
  %v6572 = vld [vmem:[%s5 + $0x1c0] sm:$0xff]
  %v6573 = vld [vmem:[%s5 + $0x1c8] sm:$0xff]
  %v6574 = vld [vmem:[%s5 + $0x1d0] sm:$0xff]
  %v6575 = vld [vmem:[%s5 + $0x1d8] sm:$0xff]
  %v6576 = vld [vmem:[%s5 + $0x1e0] sm:$0xff]
  %v6577 = vld [vmem:[%s5 + $0x1e8] sm:$0xff]
  %v6578 = vld [vmem:[%s5 + $0x1f0] sm:$0xff]
  %v6579 = vld [vmem:[%s5 + $0x1f8] sm:$0xff]
  %v6580 = vld [vmem:[%s5 + $0x200] sm:$0xff]
  %v6581 = vld [vmem:[%s5 + $0x208] sm:$0xff]
  %v6582 = vld [vmem:[%s5 + $0x210] sm:$0xff]
  %v6583 = vld [vmem:[%s5 + $0x218] sm:$0xff]
  %v6584 = vld [vmem:[%s5 + $0x220] sm:$0xff]
  %v6585 = vld [vmem:[%s5 + $0x228] sm:$0xff]
  %v6586 = vld [vmem:[%s5 + $0x230] sm:$0xff]
  %v6587 = vld [vmem:[%s5 + $0x238] sm:$0xff]
  %v6588 = vld [vmem:[%s5 + $0x240] sm:$0xff]
  %v6589 = vld [vmem:[%s5 + $0x248] sm:$0xff]
  %v6590 = vld [vmem:[%s5 + $0x250] sm:$0xff]
  %v6591 = vld [vmem:[%s5 + $0x258] sm:$0xff]
  %v6592 = vld [vmem:[%s5 + $0x260] sm:$0xff]
  %v6593 = vld [vmem:[%s5 + $0x268] sm:$0xff]
  %v6594 = vld [vmem:[%s5 + $0x270] sm:$0xff]
  %v6595 = vld [vmem:[%s5 + $0x278] sm:$0xff]
  %v6596 = vld [vmem:[%s5 + $0x280] sm:$0xff]
  %v6597 = vld [vmem:[%s5 + $0x288] sm:$0xff]
  %v6598 = vld [vmem:[%s5 + $0x290] sm:$0xff]
  %v6599 = vld [vmem:[%s5 + $0x298] sm:$0xff]
  %v6600 = vld [vmem:[%s5 + $0x2a0] sm:$0xff]
  %v6601 = vld [vmem:[%s5 + $0x2a8] sm:$0xff]
  %v6602 = vld [vmem:[%s5 + $0x2b0] sm:$0xff]
  %v6603 = vld [vmem:[%s5 + $0x2b8] sm:$0xff]
  %v6604 = vld [vmem:[%s5 + $0x2c0] sm:$0xff]
  %v6605 = vld [vmem:[%s5 + $0x2c8] sm:$0xff]
  %v6606 = vld [vmem:[%s5 + $0x2d0] sm:$0xff]
  %v6607 = vld [vmem:[%s5 + $0x2d8] sm:$0xff]
  %v6608 = vld [vmem:[%s5 + $0x2e0] sm:$0xff]
  %v6609 = vld [vmem:[%s5 + $0x2e8] sm:$0xff]
  %v6610 = vld [vmem:[%s5 + $0x2f0] sm:$0xff]
  %v6611 = vld [vmem:[%s5 + $0x2f8] sm:$0xff]
  %v6612 = vld [vmem:[%s5 + $0x300] sm:$0xff]
  %v6613 = vld [vmem:[%s5 + $0x308] sm:$0xff]
  %v6614 = vld [vmem:[%s5 + $0x310] sm:$0xff]
  %v6615 = vld [vmem:[%s5 + $0x318] sm:$0xff]
  %v6616 = vld [vmem:[%s5 + $0x320] sm:$0xff]
  %v6617 = vld [vmem:[%s5 + $0x328] sm:$0xff]
  %v6618 = vld [vmem:[%s5 + $0x330] sm:$0xff]
  %v6619 = vld [vmem:[%s5 + $0x338] sm:$0xff]
  %v6620 = vld [vmem:[%s5 + $0x340] sm:$0xff]
  %v6621 = vld [vmem:[%s5 + $0x348] sm:$0xff]
  %v6622 = vld [vmem:[%s5 + $0x350] sm:$0xff]
  %v6623 = vld [vmem:[%s5 + $0x358] sm:$0xff]
  %v6624 = vld [vmem:[%s5 + $0x360] sm:$0xff]
  %v6625 = vld [vmem:[%s5 + $0x368] sm:$0xff]
  %v6626 = vld [vmem:[%s5 + $0x370] sm:$0xff]
  %v6627 = vld [vmem:[%s5 + $0x378] sm:$0xff]
  %v6628 = vld [vmem:[%s5 + $0x380] sm:$0xff]
  %v6629 = vld [vmem:[%s5 + $0x388] sm:$0xff]
  %v6630 = vld [vmem:[%s5 + $0x390] sm:$0xff]
  %v6631 = vld [vmem:[%s5 + $0x398] sm:$0xff]
  %v6632 = vld [vmem:[%s5 + $0x3a0] sm:$0xff]
  %v6633 = vld [vmem:[%s5 + $0x3a8] sm:$0xff]
  %v6634 = vld [vmem:[%s5 + $0x3b0] sm:$0xff]
  %v6635 = vld [vmem:[%s5 + $0x3b8] sm:$0xff]
  %v6636 = vld [vmem:[%s5 + $0x3c0] sm:$0xff]
  %v6637 = vld [vmem:[%s5 + $0x3c8] sm:$0xff]
  %v6638 = vld [vmem:[%s5 + $0x3d0] sm:$0xff]
  %v6639 = vld [vmem:[%s5 + $0x3d8] sm:$0xff]
  %v6640 = vld [vmem:[%s5 + $0x3e0] sm:$0xff]
  %v6641 = vld [vmem:[%s5 + $0x3e8] sm:$0xff]
  %v6642 = vld [vmem:[%s5 + $0x3f0] sm:$0xff]
  %v6643 = vld [vmem:[%s5 + $0x3f8] sm:$0xff]
  %v6644 = vld [vmem:[%s5 + $0x400] sm:$0xff]
  %v6645 = vld [vmem:[%s5 + $0x408] sm:$0xff]
  %v6646 = vld [vmem:[%s5 + $0x410] sm:$0xff]
  %v6647 = vld [vmem:[%s5 + $0x418] sm:$0xff]
  %v6648 = vld [vmem:[%s5 + $0x420] sm:$0xff]
  %v6649 = vld [vmem:[%s5 + $0x428] sm:$0xff]
  %v6650 = vld [vmem:[%s5 + $0x430] sm:$0xff]
  %v6651 = vld [vmem:[%s5 + $0x438] sm:$0xff]
  %v6652 = vld [vmem:[%s5 + $0x440] sm:$0xff]
  %v6653 = vld [vmem:[%s5 + $0x448] sm:$0xff]
  %v6654 = vld [vmem:[%s5 + $0x450] sm:$0xff]
  %v6655 = vld [vmem:[%s5 + $0x458] sm:$0xff]
  %v6656 = vld [vmem:[%s5 + $0x460] sm:$0xff]
  %v6657 = vld [vmem:[%s5 + $0x468] sm:$0xff]
  %v6658 = vld [vmem:[%s5 + $0x470] sm:$0xff]
  %v6659 = vld [vmem:[%s5 + $0x478] sm:$0xff]
  %v6660 = vld [vmem:[%s5 + $0x480] sm:$0xff]
  %v6661 = vld [vmem:[%s5 + $0x488] sm:$0xff]
  %v6662 = vld [vmem:[%s5 + $0x490] sm:$0xff]
  %v6663 = vld [vmem:[%s5 + $0x498] sm:$0xff]
  %v6664 = vld [vmem:[%s5 + $0x4a0] sm:$0xff]
  %v6665 = vld [vmem:[%s5 + $0x4a8] sm:$0xff]
  %v6666 = vld [vmem:[%s5 + $0x4b0] sm:$0xff]
  %v6667 = vld [vmem:[%s5 + $0x4b8] sm:$0xff]
  %v6668 = vld [vmem:[%s5 + $0x4c0] sm:$0xff]
  %v6669 = vld [vmem:[%s5 + $0x4c8] sm:$0xff]
  %v6670 = vld [vmem:[%s5 + $0x4d0] sm:$0xff]
  %v6671 = vld [vmem:[%s5 + $0x4d8] sm:$0xff]
  %v6672 = vld [vmem:[%s5 + $0x4e0] sm:$0xff]
  %v6673 = vld [vmem:[%s5 + $0x4e8] sm:$0xff]
  %v6674 = vld [vmem:[%s5 + $0x4f0] sm:$0xff]
  %v6675 = vld [vmem:[%s5 + $0x4f8] sm:$0xff]
  %v6676 = vld [vmem:[%s5 + $0x500] sm:$0xff]
  %v6677 = vld [vmem:[%s5 + $0x508] sm:$0xff]
  %v6678 = vld [vmem:[%s5 + $0x510] sm:$0xff]
  %v6679 = vld [vmem:[%s5 + $0x518] sm:$0xff]
  %v6680 = vld [vmem:[%s5 + $0x520] sm:$0xff]
  %v6681 = vld [vmem:[%s5 + $0x528] sm:$0xff]
  %v6682 = vld [vmem:[%s5 + $0x530] sm:$0xff]
  %v6683 = vld [vmem:[%s5 + $0x538] sm:$0xff]
  %v6684 = vld [vmem:[%s5 + $0x540] sm:$0xff]
  %v6685 = vld [vmem:[%s5 + $0x548] sm:$0xff]
  %v6686 = vld [vmem:[%s5 + $0x550] sm:$0xff]
  %v6687 = vld [vmem:[%s5 + $0x558] sm:$0xff]
  %v6688 = vld [vmem:[%s5 + $0x560] sm:$0xff]
  %v6689 = vld [vmem:[%s5 + $0x568] sm:$0xff]
  %v6690 = vld [vmem:[%s5 + $0x570] sm:$0xff]
  %v6691 = vld [vmem:[%s5 + $0x578] sm:$0xff]
  %v6692 = vld [vmem:[%s5 + $0x580] sm:$0xff]
  %v6693 = vld [vmem:[%s5 + $0x588] sm:$0xff]
  %v6694 = vld [vmem:[%s5 + $0x590] sm:$0xff]
  %v6695 = vld [vmem:[%s5 + $0x598] sm:$0xff]
  %v6696 = vld [vmem:[%s5 + $0x5a0] sm:$0xff]
  %v6697 = vld [vmem:[%s5 + $0x5a8] sm:$0xff]
  %v6698 = vld [vmem:[%s5 + $0x5b0] sm:$0xff]
  %v6699 = vld [vmem:[%s5 + $0x5b8] sm:$0xff]
  %v6700 = vld [vmem:[%s5 + $0x5c0] sm:$0xff]
  %v6701 = vld [vmem:[%s5 + $0x5c8] sm:$0xff]
  %v6702 = vld [vmem:[%s5 + $0x5d0] sm:$0xff]
  %v6703 = vld [vmem:[%s5 + $0x5d8] sm:$0xff]
  %v6704 = vld [vmem:[%s5 + $0x5e0] sm:$0xff]
  %v6705 = vld [vmem:[%s5 + $0x5e8] sm:$0xff]
  %v6706 = vld [vmem:[%s5 + $0x5f0] sm:$0xff]
  %v6707 = vld [vmem:[%s5 + $0x5f8] sm:$0xff]
  %v6708 = vld [vmem:[%s5 + $0x600] sm:$0xff]
  %v6709 = vld [vmem:[%s5 + $0x608] sm:$0xff]
  %v6710 = vld [vmem:[%s5 + $0x610] sm:$0xff]
  %v6711 = vld [vmem:[%s5 + $0x618] sm:$0xff]
  %v6712 = vld [vmem:[%s5 + $0x620] sm:$0xff]
  %v6713 = vld [vmem:[%s5 + $0x628] sm:$0xff]
  %v6714 = vld [vmem:[%s5 + $0x630] sm:$0xff]
  %v6715 = vld [vmem:[%s5 + $0x638] sm:$0xff]
  %v6716 = vld [vmem:[%s5 + $0x640] sm:$0xff]
  %v6717 = vld [vmem:[%s5 + $0x648] sm:$0xff]
  %v6718 = vld [vmem:[%s5 + $0x650] sm:$0xff]
  %v6719 = vld [vmem:[%s5 + $0x658] sm:$0xff]
  %v6720 = vld [vmem:[%s5 + $0x660] sm:$0xff]
  %v6721 = vld [vmem:[%s5 + $0x668] sm:$0xff]
  %v6722 = vld [vmem:[%s5 + $0x670] sm:$0xff]
  %v6723 = vld [vmem:[%s5 + $0x678] sm:$0xff]
  %v6724 = vld [vmem:[%s5 + $0x680] sm:$0xff]
  %v6725 = vld [vmem:[%s5 + $0x688] sm:$0xff]
  %v6726 = vld [vmem:[%s5 + $0x690] sm:$0xff]
  %v6727 = vld [vmem:[%s5 + $0x698] sm:$0xff]
  %v6728 = vld [vmem:[%s5 + $0x6a0] sm:$0xff]
  %v6729 = vld [vmem:[%s5 + $0x6a8] sm:$0xff]
  %v6730 = vld [vmem:[%s5 + $0x6b0] sm:$0xff]
  %v6731 = vld [vmem:[%s5 + $0x6b8] sm:$0xff]
  %v6732 = vld [vmem:[%s5 + $0x6c0] sm:$0xff]
  %v6733 = vld [vmem:[%s5 + $0x6c8] sm:$0xff]
  %v6734 = vld [vmem:[%s5 + $0x6d0] sm:$0xff]
  %v6735 = vld [vmem:[%s5 + $0x6d8] sm:$0xff]
  %v6736 = vld [vmem:[%s5 + $0x6e0] sm:$0xff]
  %v6737 = vld [vmem:[%s5 + $0x6e8] sm:$0xff]
  %v6738 = vld [vmem:[%s5 + $0x6f0] sm:$0xff]
  %v6739 = vld [vmem:[%s5 + $0x6f8] sm:$0xff]
  %v6740 = vld [vmem:[%s5 + $0x700] sm:$0xff]
  %v6741 = vld [vmem:[%s5 + $0x708] sm:$0xff]
  %v6742 = vld [vmem:[%s5 + $0x710] sm:$0xff]
  %v6743 = vld [vmem:[%s5 + $0x718] sm:$0xff]
  %v6744 = vld [vmem:[%s5 + $0x720] sm:$0xff]
  %v6745 = vld [vmem:[%s5 + $0x728] sm:$0xff]
  %v6746 = vld [vmem:[%s5 + $0x730] sm:$0xff]
  %v6747 = vld [vmem:[%s5 + $0x738] sm:$0xff]
  %v6748 = vld [vmem:[%s5 + $0x740] sm:$0xff]
  %v6749 = vld [vmem:[%s5 + $0x748] sm:$0xff]
  %v6750 = vld [vmem:[%s5 + $0x750] sm:$0xff]
  %v6751 = vld [vmem:[%s5 + $0x758] sm:$0xff]
  %v6752 = vld [vmem:[%s5 + $0x760] sm:$0xff]
  %v6753 = vld [vmem:[%s5 + $0x768] sm:$0xff]
  %v6754 = vld [vmem:[%s5 + $0x770] sm:$0xff]
  %v6755 = vld [vmem:[%s5 + $0x778] sm:$0xff]
  %v6756 = vld [vmem:[%s5 + $0x780] sm:$0xff]
  %v6757 = vld [vmem:[%s5 + $0x788] sm:$0xff]
  %v6758 = vld [vmem:[%s5 + $0x790] sm:$0xff]
  %v6759 = vld [vmem:[%s5 + $0x798] sm:$0xff]
  %v6760 = vld [vmem:[%s5 + $0x7a0] sm:$0xff]
  %v6761 = vld [vmem:[%s5 + $0x7a8] sm:$0xff]
  %v6762 = vld [vmem:[%s5 + $0x7b0] sm:$0xff]
  %v6763 = vld [vmem:[%s5 + $0x7b8] sm:$0xff]
  %v6764 = vld [vmem:[%s5 + $0x7c0] sm:$0xff]
  %v6765 = vld [vmem:[%s5 + $0x7c8] sm:$0xff]
  %v6766 = vld [vmem:[%s5 + $0x7d0] sm:$0xff]
  %v6767 = vld [vmem:[%s5 + $0x7d8] sm:$0xff]
  %v6768 = vld [vmem:[%s5 + $0x7e0] sm:$0xff]
  %v6769 = vld [vmem:[%s5 + $0x7e8] sm:$0xff]
  %v6770 = vld [vmem:[%s5 + $0x7f0] sm:$0xff]
  %v6771 = vld [vmem:[%s5 + $0x7f8] sm:$0xff]
  %v6772 = vld [vmem:[%s6] sm:$0xf]
  %v6774 = vlaneseq
  %v6775 = vshrl.u32 %v6774, 7
  %v6776 = vsub.s32 0, %v6775
  %v6777 = vrot.slane %v6772, %v6776
  %v6778 = vlaneseq
  %v6779 = vshrl.u32 %v6778, 7
  %v6780 = vsub.s32 1, %v6779
  %v6781 = vrot.slane %v6772, %v6780
  %v6782 = vlaneseq
  %v6783 = vshrl.u32 %v6782, 7
  %v6784 = vsub.s32 2, %v6783
  %v6785 = vrot.slane %v6772, %v6784
  %v6786 = vlaneseq
  %v6787 = vshrl.u32 %v6786, 7
  %v6788 = vsub.s32 3, %v6787
  %v6789 = vrot.slane %v6772, %v6788
  %v7050 = vunpack.c.l.b16 %v6516
  %v7051 = vunpack.c.h.b16 %v6516
  %v7052 = vunpack.c.l.b16 %v6517
  %v7053 = vunpack.c.h.b16 %v6517
  %v7054 = vunpack.c.l.b16 %v6518
  %v7055 = vunpack.c.h.b16 %v6518
  %v7056 = vunpack.c.l.b16 %v6519
  %v7057 = vunpack.c.h.b16 %v6519
  %v7058 = vunpack.c.l.b16 %v6520
  %v7059 = vunpack.c.h.b16 %v6520
  %v7060 = vunpack.c.l.b16 %v6521
  %v7061 = vunpack.c.h.b16 %v6521
  %v7062 = vunpack.c.l.b16 %v6522
  %v7063 = vunpack.c.h.b16 %v6522
  %v7064 = vunpack.c.l.b16 %v6523
  %v7065 = vunpack.c.h.b16 %v6523
  %v7066 = vunpack.c.l.b16 %v6524
  %v7067 = vunpack.c.h.b16 %v6524
  %v7068 = vunpack.c.l.b16 %v6525
  %v7069 = vunpack.c.h.b16 %v6525
  %v7070 = vunpack.c.l.b16 %v6526
  %v7071 = vunpack.c.h.b16 %v6526
  %v7072 = vunpack.c.l.b16 %v6527
  %v7073 = vunpack.c.h.b16 %v6527
  %v7074 = vunpack.c.l.b16 %v6528
  %v7075 = vunpack.c.h.b16 %v6528
  %v7076 = vunpack.c.l.b16 %v6529
  %v7077 = vunpack.c.h.b16 %v6529
  %v7078 = vunpack.c.l.b16 %v6530
  %v7079 = vunpack.c.h.b16 %v6530
  %v7080 = vunpack.c.l.b16 %v6531
  %v7081 = vunpack.c.h.b16 %v6531
  %v7082 = vunpack.c.l.b16 %v6532
  %v7083 = vunpack.c.h.b16 %v6532
  %v7084 = vunpack.c.l.b16 %v6533
  %v7085 = vunpack.c.h.b16 %v6533
  %v7086 = vunpack.c.l.b16 %v6534
  %v7087 = vunpack.c.h.b16 %v6534
  %v7088 = vunpack.c.l.b16 %v6535
  %v7089 = vunpack.c.h.b16 %v6535
  %v7090 = vunpack.c.l.b16 %v6536
  %v7091 = vunpack.c.h.b16 %v6536
  %v7092 = vunpack.c.l.b16 %v6537
  %v7093 = vunpack.c.h.b16 %v6537
  %v7094 = vunpack.c.l.b16 %v6538
  %v7095 = vunpack.c.h.b16 %v6538
  %v7096 = vunpack.c.l.b16 %v6539
  %v7097 = vunpack.c.h.b16 %v6539
  %v7098 = vunpack.c.l.b16 %v6540
  %v7099 = vunpack.c.h.b16 %v6540
  %v7100 = vunpack.c.l.b16 %v6541
  %v7101 = vunpack.c.h.b16 %v6541
  %v7102 = vunpack.c.l.b16 %v6542
  %v7103 = vunpack.c.h.b16 %v6542
  %v7104 = vunpack.c.l.b16 %v6543
  %v7105 = vunpack.c.h.b16 %v6543
  %v7106 = vunpack.c.l.b16 %v6544
  %v7107 = vunpack.c.h.b16 %v6544
  %v7108 = vunpack.c.l.b16 %v6545
  %v7109 = vunpack.c.h.b16 %v6545
  %v7110 = vunpack.c.l.b16 %v6546
  %v7111 = vunpack.c.h.b16 %v6546
  %v7112 = vunpack.c.l.b16 %v6547
  %v7113 = vunpack.c.h.b16 %v6547
  %v7114 = vunpack.c.l.b16 %v6548
  %v7115 = vunpack.c.h.b16 %v6548
  %v7116 = vunpack.c.l.b16 %v6549
  %v7117 = vunpack.c.h.b16 %v6549
  %v7118 = vunpack.c.l.b16 %v6550
  %v7119 = vunpack.c.h.b16 %v6550
  %v7120 = vunpack.c.l.b16 %v6551
  %v7121 = vunpack.c.h.b16 %v6551
  %v7122 = vunpack.c.l.b16 %v6552
  %v7123 = vunpack.c.h.b16 %v6552
  %v7124 = vunpack.c.l.b16 %v6553
  %v7125 = vunpack.c.h.b16 %v6553
  %v7126 = vunpack.c.l.b16 %v6554
  %v7127 = vunpack.c.h.b16 %v6554
  %v7128 = vunpack.c.l.b16 %v6555
  %v7129 = vunpack.c.h.b16 %v6555
  %v7130 = vunpack.c.l.b16 %v6556
  %v7131 = vunpack.c.h.b16 %v6556
  %v7132 = vunpack.c.l.b16 %v6557
  %v7133 = vunpack.c.h.b16 %v6557
  %v7134 = vunpack.c.l.b16 %v6558
  %v7135 = vunpack.c.h.b16 %v6558
  %v7136 = vunpack.c.l.b16 %v6559
  %v7137 = vunpack.c.h.b16 %v6559
  %v7138 = vunpack.c.l.b16 %v6560
  %v7139 = vunpack.c.h.b16 %v6560
  %v7140 = vunpack.c.l.b16 %v6561
  %v7141 = vunpack.c.h.b16 %v6561
  %v7142 = vunpack.c.l.b16 %v6562
  %v7143 = vunpack.c.h.b16 %v6562
  %v7144 = vunpack.c.l.b16 %v6563
  %v7145 = vunpack.c.h.b16 %v6563
  %v7146 = vunpack.c.l.b16 %v6564
  %v7147 = vunpack.c.h.b16 %v6564
  %v7148 = vunpack.c.l.b16 %v6565
  %v7149 = vunpack.c.h.b16 %v6565
  %v7150 = vunpack.c.l.b16 %v6566
  %v7151 = vunpack.c.h.b16 %v6566
  %v7152 = vunpack.c.l.b16 %v6567
  %v7153 = vunpack.c.h.b16 %v6567
  %v7154 = vunpack.c.l.b16 %v6568
  %v7155 = vunpack.c.h.b16 %v6568
  %v7156 = vunpack.c.l.b16 %v6569
  %v7157 = vunpack.c.h.b16 %v6569
  %v7158 = vunpack.c.l.b16 %v6570
  %v7159 = vunpack.c.h.b16 %v6570
  %v7160 = vunpack.c.l.b16 %v6571
  %v7161 = vunpack.c.h.b16 %v6571
  %v7162 = vunpack.c.l.b16 %v6572
  %v7163 = vunpack.c.h.b16 %v6572
  %v7164 = vunpack.c.l.b16 %v6573
  %v7165 = vunpack.c.h.b16 %v6573
  %v7166 = vunpack.c.l.b16 %v6574
  %v7167 = vunpack.c.h.b16 %v6574
  %v7168 = vunpack.c.l.b16 %v6575
  %v7169 = vunpack.c.h.b16 %v6575
  %v7170 = vunpack.c.l.b16 %v6576
  %v7171 = vunpack.c.h.b16 %v6576
  %v7172 = vunpack.c.l.b16 %v6577
  %v7173 = vunpack.c.h.b16 %v6577
  %v7174 = vunpack.c.l.b16 %v6578
  %v7175 = vunpack.c.h.b16 %v6578
  %v7176 = vunpack.c.l.b16 %v6579
  %v7177 = vunpack.c.h.b16 %v6579
  %v7178 = vunpack.c.l.b16 %v6580
  %v7179 = vunpack.c.h.b16 %v6580
  %v7180 = vunpack.c.l.b16 %v6581
  %v7181 = vunpack.c.h.b16 %v6581
  %v7182 = vunpack.c.l.b16 %v6582
  %v7183 = vunpack.c.h.b16 %v6582
  %v7184 = vunpack.c.l.b16 %v6583
  %v7185 = vunpack.c.h.b16 %v6583
  %v7186 = vunpack.c.l.b16 %v6584
  %v7187 = vunpack.c.h.b16 %v6584
  %v7188 = vunpack.c.l.b16 %v6585
  %v7189 = vunpack.c.h.b16 %v6585
  %v7190 = vunpack.c.l.b16 %v6586
  %v7191 = vunpack.c.h.b16 %v6586
  %v7192 = vunpack.c.l.b16 %v6587
  %v7193 = vunpack.c.h.b16 %v6587
  %v7194 = vunpack.c.l.b16 %v6588
  %v7195 = vunpack.c.h.b16 %v6588
  %v7196 = vunpack.c.l.b16 %v6589
  %v7197 = vunpack.c.h.b16 %v6589
  %v7198 = vunpack.c.l.b16 %v6590
  %v7199 = vunpack.c.h.b16 %v6590
  %v7200 = vunpack.c.l.b16 %v6591
  %v7201 = vunpack.c.h.b16 %v6591
  %v7202 = vunpack.c.l.b16 %v6592
  %v7203 = vunpack.c.h.b16 %v6592
  %v7204 = vunpack.c.l.b16 %v6593
  %v7205 = vunpack.c.h.b16 %v6593
  %v7206 = vunpack.c.l.b16 %v6594
  %v7207 = vunpack.c.h.b16 %v6594
  %v7208 = vunpack.c.l.b16 %v6595
  %v7209 = vunpack.c.h.b16 %v6595
  %v7210 = vunpack.c.l.b16 %v6596
  %v7211 = vunpack.c.h.b16 %v6596
  %v7212 = vunpack.c.l.b16 %v6597
  %v7213 = vunpack.c.h.b16 %v6597
  %v7214 = vunpack.c.l.b16 %v6598
  %v7215 = vunpack.c.h.b16 %v6598
  %v7216 = vunpack.c.l.b16 %v6599
  %v7217 = vunpack.c.h.b16 %v6599
  %v7218 = vunpack.c.l.b16 %v6600
  %v7219 = vunpack.c.h.b16 %v6600
  %v7220 = vunpack.c.l.b16 %v6601
  %v7221 = vunpack.c.h.b16 %v6601
  %v7222 = vunpack.c.l.b16 %v6602
  %v7223 = vunpack.c.h.b16 %v6602
  %v7224 = vunpack.c.l.b16 %v6603
  %v7225 = vunpack.c.h.b16 %v6603
  %v7226 = vunpack.c.l.b16 %v6604
  %v7227 = vunpack.c.h.b16 %v6604
  %v7228 = vunpack.c.l.b16 %v6605
  %v7229 = vunpack.c.h.b16 %v6605
  %v7230 = vunpack.c.l.b16 %v6606
  %v7231 = vunpack.c.h.b16 %v6606
  %v7232 = vunpack.c.l.b16 %v6607
  %v7233 = vunpack.c.h.b16 %v6607
  %v7234 = vunpack.c.l.b16 %v6608
  %v7235 = vunpack.c.h.b16 %v6608
  %v7236 = vunpack.c.l.b16 %v6609
  %v7237 = vunpack.c.h.b16 %v6609
  %v7238 = vunpack.c.l.b16 %v6610
  %v7239 = vunpack.c.h.b16 %v6610
  %v7240 = vunpack.c.l.b16 %v6611
  %v7241 = vunpack.c.h.b16 %v6611
  %v7242 = vunpack.c.l.b16 %v6612
  %v7243 = vunpack.c.h.b16 %v6612
  %v7244 = vunpack.c.l.b16 %v6613
  %v7245 = vunpack.c.h.b16 %v6613
  %v7246 = vunpack.c.l.b16 %v6614
  %v7247 = vunpack.c.h.b16 %v6614
  %v7248 = vunpack.c.l.b16 %v6615
  %v7249 = vunpack.c.h.b16 %v6615
  %v7250 = vunpack.c.l.b16 %v6616
  %v7251 = vunpack.c.h.b16 %v6616
  %v7252 = vunpack.c.l.b16 %v6617
  %v7253 = vunpack.c.h.b16 %v6617
  %v7254 = vunpack.c.l.b16 %v6618
  %v7255 = vunpack.c.h.b16 %v6618
  %v7256 = vunpack.c.l.b16 %v6619
  %v7257 = vunpack.c.h.b16 %v6619
  %v7258 = vunpack.c.l.b16 %v6620
  %v7259 = vunpack.c.h.b16 %v6620
  %v7260 = vunpack.c.l.b16 %v6621
  %v7261 = vunpack.c.h.b16 %v6621
  %v7262 = vunpack.c.l.b16 %v6622
  %v7263 = vunpack.c.h.b16 %v6622
  %v7264 = vunpack.c.l.b16 %v6623
  %v7265 = vunpack.c.h.b16 %v6623
  %v7266 = vunpack.c.l.b16 %v6624
  %v7267 = vunpack.c.h.b16 %v6624
  %v7268 = vunpack.c.l.b16 %v6625
  %v7269 = vunpack.c.h.b16 %v6625
  %v7270 = vunpack.c.l.b16 %v6626
  %v7271 = vunpack.c.h.b16 %v6626
  %v7272 = vunpack.c.l.b16 %v6627
  %v7273 = vunpack.c.h.b16 %v6627
  %v7274 = vunpack.c.l.b16 %v6628
  %v7275 = vunpack.c.h.b16 %v6628
  %v7276 = vunpack.c.l.b16 %v6629
  %v7277 = vunpack.c.h.b16 %v6629
  %v7278 = vunpack.c.l.b16 %v6630
  %v7279 = vunpack.c.h.b16 %v6630
  %v7280 = vunpack.c.l.b16 %v6631
  %v7281 = vunpack.c.h.b16 %v6631
  %v7282 = vunpack.c.l.b16 %v6632
  %v7283 = vunpack.c.h.b16 %v6632
  %v7284 = vunpack.c.l.b16 %v6633
  %v7285 = vunpack.c.h.b16 %v6633
  %v7286 = vunpack.c.l.b16 %v6634
  %v7287 = vunpack.c.h.b16 %v6634
  %v7288 = vunpack.c.l.b16 %v6635
  %v7289 = vunpack.c.h.b16 %v6635
  %v7290 = vunpack.c.l.b16 %v6636
  %v7291 = vunpack.c.h.b16 %v6636
  %v7292 = vunpack.c.l.b16 %v6637
  %v7293 = vunpack.c.h.b16 %v6637
  %v7294 = vunpack.c.l.b16 %v6638
  %v7295 = vunpack.c.h.b16 %v6638
  %v7296 = vunpack.c.l.b16 %v6639
  %v7297 = vunpack.c.h.b16 %v6639
  %v7298 = vunpack.c.l.b16 %v6640
  %v7299 = vunpack.c.h.b16 %v6640
  %v7300 = vunpack.c.l.b16 %v6641
  %v7301 = vunpack.c.h.b16 %v6641
  %v7302 = vunpack.c.l.b16 %v6642
  %v7303 = vunpack.c.h.b16 %v6642
  %v7304 = vunpack.c.l.b16 %v6643
  %v7305 = vunpack.c.h.b16 %v6643
  %v7306 = vunpack.c.l.b16 %v6644
  %v7307 = vunpack.c.h.b16 %v6644
  %v7308 = vunpack.c.l.b16 %v6645
  %v7309 = vunpack.c.h.b16 %v6645
  %v7310 = vunpack.c.l.b16 %v6646
  %v7311 = vunpack.c.h.b16 %v6646
  %v7312 = vunpack.c.l.b16 %v6647
  %v7313 = vunpack.c.h.b16 %v6647
  %v7314 = vunpack.c.l.b16 %v6648
  %v7315 = vunpack.c.h.b16 %v6648
  %v7316 = vunpack.c.l.b16 %v6649
  %v7317 = vunpack.c.h.b16 %v6649
  %v7318 = vunpack.c.l.b16 %v6650
  %v7319 = vunpack.c.h.b16 %v6650
  %v7320 = vunpack.c.l.b16 %v6651
  %v7321 = vunpack.c.h.b16 %v6651
  %v7322 = vunpack.c.l.b16 %v6652
  %v7323 = vunpack.c.h.b16 %v6652
  %v7324 = vunpack.c.l.b16 %v6653
  %v7325 = vunpack.c.h.b16 %v6653
  %v7326 = vunpack.c.l.b16 %v6654
  %v7327 = vunpack.c.h.b16 %v6654
  %v7328 = vunpack.c.l.b16 %v6655
  %v7329 = vunpack.c.h.b16 %v6655
  %v7330 = vunpack.c.l.b16 %v6656
  %v7331 = vunpack.c.h.b16 %v6656
  %v7332 = vunpack.c.l.b16 %v6657
  %v7333 = vunpack.c.h.b16 %v6657
  %v7334 = vunpack.c.l.b16 %v6658
  %v7335 = vunpack.c.h.b16 %v6658
  %v7336 = vunpack.c.l.b16 %v6659
  %v7337 = vunpack.c.h.b16 %v6659
  %v7338 = vunpack.c.l.b16 %v6660
  %v7339 = vunpack.c.h.b16 %v6660
  %v7340 = vunpack.c.l.b16 %v6661
  %v7341 = vunpack.c.h.b16 %v6661
  %v7342 = vunpack.c.l.b16 %v6662
  %v7343 = vunpack.c.h.b16 %v6662
  %v7344 = vunpack.c.l.b16 %v6663
  %v7345 = vunpack.c.h.b16 %v6663
  %v7346 = vunpack.c.l.b16 %v6664
  %v7347 = vunpack.c.h.b16 %v6664
  %v7348 = vunpack.c.l.b16 %v6665
  %v7349 = vunpack.c.h.b16 %v6665
  %v7350 = vunpack.c.l.b16 %v6666
  %v7351 = vunpack.c.h.b16 %v6666
  %v7352 = vunpack.c.l.b16 %v6667
  %v7353 = vunpack.c.h.b16 %v6667
  %v7354 = vunpack.c.l.b16 %v6668
  %v7355 = vunpack.c.h.b16 %v6668
  %v7356 = vunpack.c.l.b16 %v6669
  %v7357 = vunpack.c.h.b16 %v6669
  %v7358 = vunpack.c.l.b16 %v6670
  %v7359 = vunpack.c.h.b16 %v6670
  %v7360 = vunpack.c.l.b16 %v6671
  %v7361 = vunpack.c.h.b16 %v6671
  %v7362 = vunpack.c.l.b16 %v6672
  %v7363 = vunpack.c.h.b16 %v6672
  %v7364 = vunpack.c.l.b16 %v6673
  %v7365 = vunpack.c.h.b16 %v6673
  %v7366 = vunpack.c.l.b16 %v6674
  %v7367 = vunpack.c.h.b16 %v6674
  %v7368 = vunpack.c.l.b16 %v6675
  %v7369 = vunpack.c.h.b16 %v6675
  %v7370 = vunpack.c.l.b16 %v6676
  %v7371 = vunpack.c.h.b16 %v6676
  %v7372 = vunpack.c.l.b16 %v6677
  %v7373 = vunpack.c.h.b16 %v6677
  %v7374 = vunpack.c.l.b16 %v6678
  %v7375 = vunpack.c.h.b16 %v6678
  %v7376 = vunpack.c.l.b16 %v6679
  %v7377 = vunpack.c.h.b16 %v6679
  %v7378 = vunpack.c.l.b16 %v6680
  %v7379 = vunpack.c.h.b16 %v6680
  %v7380 = vunpack.c.l.b16 %v6681
  %v7381 = vunpack.c.h.b16 %v6681
  %v7382 = vunpack.c.l.b16 %v6682
  %v7383 = vunpack.c.h.b16 %v6682
  %v7384 = vunpack.c.l.b16 %v6683
  %v7385 = vunpack.c.h.b16 %v6683
  %v7386 = vunpack.c.l.b16 %v6684
  %v7387 = vunpack.c.h.b16 %v6684
  %v7388 = vunpack.c.l.b16 %v6685
  %v7389 = vunpack.c.h.b16 %v6685
  %v7390 = vunpack.c.l.b16 %v6686
  %v7391 = vunpack.c.h.b16 %v6686
  %v7392 = vunpack.c.l.b16 %v6687
  %v7393 = vunpack.c.h.b16 %v6687
  %v7394 = vunpack.c.l.b16 %v6688
  %v7395 = vunpack.c.h.b16 %v6688
  %v7396 = vunpack.c.l.b16 %v6689
  %v7397 = vunpack.c.h.b16 %v6689
  %v7398 = vunpack.c.l.b16 %v6690
  %v7399 = vunpack.c.h.b16 %v6690
  %v7400 = vunpack.c.l.b16 %v6691
  %v7401 = vunpack.c.h.b16 %v6691
  %v7402 = vunpack.c.l.b16 %v6692
  %v7403 = vunpack.c.h.b16 %v6692
  %v7404 = vunpack.c.l.b16 %v6693
  %v7405 = vunpack.c.h.b16 %v6693
  %v7406 = vunpack.c.l.b16 %v6694
  %v7407 = vunpack.c.h.b16 %v6694
  %v7408 = vunpack.c.l.b16 %v6695
  %v7409 = vunpack.c.h.b16 %v6695
  %v7410 = vunpack.c.l.b16 %v6696
  %v7411 = vunpack.c.h.b16 %v6696
  %v7412 = vunpack.c.l.b16 %v6697
  %v7413 = vunpack.c.h.b16 %v6697
  %v7414 = vunpack.c.l.b16 %v6698
  %v7415 = vunpack.c.h.b16 %v6698
  %v7416 = vunpack.c.l.b16 %v6699
  %v7417 = vunpack.c.h.b16 %v6699
  %v7418 = vunpack.c.l.b16 %v6700
  %v7419 = vunpack.c.h.b16 %v6700
  %v7420 = vunpack.c.l.b16 %v6701
  %v7421 = vunpack.c.h.b16 %v6701
  %v7422 = vunpack.c.l.b16 %v6702
  %v7423 = vunpack.c.h.b16 %v6702
  %v7424 = vunpack.c.l.b16 %v6703
  %v7425 = vunpack.c.h.b16 %v6703
  %v7426 = vunpack.c.l.b16 %v6704
  %v7427 = vunpack.c.h.b16 %v6704
  %v7428 = vunpack.c.l.b16 %v6705
  %v7429 = vunpack.c.h.b16 %v6705
  %v7430 = vunpack.c.l.b16 %v6706
  %v7431 = vunpack.c.h.b16 %v6706
  %v7432 = vunpack.c.l.b16 %v6707
  %v7433 = vunpack.c.h.b16 %v6707
  %v7434 = vunpack.c.l.b16 %v6708
  %v7435 = vunpack.c.h.b16 %v6708
  %v7436 = vunpack.c.l.b16 %v6709
  %v7437 = vunpack.c.h.b16 %v6709
  %v7438 = vunpack.c.l.b16 %v6710
  %v7439 = vunpack.c.h.b16 %v6710
  %v7440 = vunpack.c.l.b16 %v6711
  %v7441 = vunpack.c.h.b16 %v6711
  %v7442 = vunpack.c.l.b16 %v6712
  %v7443 = vunpack.c.h.b16 %v6712
  %v7444 = vunpack.c.l.b16 %v6713
  %v7445 = vunpack.c.h.b16 %v6713
  %v7446 = vunpack.c.l.b16 %v6714
  %v7447 = vunpack.c.h.b16 %v6714
  %v7448 = vunpack.c.l.b16 %v6715
  %v7449 = vunpack.c.h.b16 %v6715
  %v7450 = vunpack.c.l.b16 %v6716
  %v7451 = vunpack.c.h.b16 %v6716
  %v7452 = vunpack.c.l.b16 %v6717
  %v7453 = vunpack.c.h.b16 %v6717
  %v7454 = vunpack.c.l.b16 %v6718
  %v7455 = vunpack.c.h.b16 %v6718
  %v7456 = vunpack.c.l.b16 %v6719
  %v7457 = vunpack.c.h.b16 %v6719
  %v7458 = vunpack.c.l.b16 %v6720
  %v7459 = vunpack.c.h.b16 %v6720
  %v7460 = vunpack.c.l.b16 %v6721
  %v7461 = vunpack.c.h.b16 %v6721
  %v7462 = vunpack.c.l.b16 %v6722
  %v7463 = vunpack.c.h.b16 %v6722
  %v7464 = vunpack.c.l.b16 %v6723
  %v7465 = vunpack.c.h.b16 %v6723
  %v7466 = vunpack.c.l.b16 %v6724
  %v7467 = vunpack.c.h.b16 %v6724
  %v7468 = vunpack.c.l.b16 %v6725
  %v7469 = vunpack.c.h.b16 %v6725
  %v7470 = vunpack.c.l.b16 %v6726
  %v7471 = vunpack.c.h.b16 %v6726
  %v7472 = vunpack.c.l.b16 %v6727
  %v7473 = vunpack.c.h.b16 %v6727
  %v7474 = vunpack.c.l.b16 %v6728
  %v7475 = vunpack.c.h.b16 %v6728
  %v7476 = vunpack.c.l.b16 %v6729
  %v7477 = vunpack.c.h.b16 %v6729
  %v7478 = vunpack.c.l.b16 %v6730
  %v7479 = vunpack.c.h.b16 %v6730
  %v7480 = vunpack.c.l.b16 %v6731
  %v7481 = vunpack.c.h.b16 %v6731
  %v7482 = vunpack.c.l.b16 %v6732
  %v7483 = vunpack.c.h.b16 %v6732
  %v7484 = vunpack.c.l.b16 %v6733
  %v7485 = vunpack.c.h.b16 %v6733
  %v7486 = vunpack.c.l.b16 %v6734
  %v7487 = vunpack.c.h.b16 %v6734
  %v7488 = vunpack.c.l.b16 %v6735
  %v7489 = vunpack.c.h.b16 %v6735
  %v7490 = vunpack.c.l.b16 %v6736
  %v7491 = vunpack.c.h.b16 %v6736
  %v7492 = vunpack.c.l.b16 %v6737
  %v7493 = vunpack.c.h.b16 %v6737
  %v7494 = vunpack.c.l.b16 %v6738
  %v7495 = vunpack.c.h.b16 %v6738
  %v7496 = vunpack.c.l.b16 %v6739
  %v7497 = vunpack.c.h.b16 %v6739
  %v7498 = vunpack.c.l.b16 %v6740
  %v7499 = vunpack.c.h.b16 %v6740
  %v7500 = vunpack.c.l.b16 %v6741
  %v7501 = vunpack.c.h.b16 %v6741
  %v7502 = vunpack.c.l.b16 %v6742
  %v7503 = vunpack.c.h.b16 %v6742
  %v7504 = vunpack.c.l.b16 %v6743
  %v7505 = vunpack.c.h.b16 %v6743
  %v7506 = vunpack.c.l.b16 %v6744
  %v7507 = vunpack.c.h.b16 %v6744
  %v7508 = vunpack.c.l.b16 %v6745
  %v7509 = vunpack.c.h.b16 %v6745
  %v7510 = vunpack.c.l.b16 %v6746
  %v7511 = vunpack.c.h.b16 %v6746
  %v7512 = vunpack.c.l.b16 %v6747
  %v7513 = vunpack.c.h.b16 %v6747
  %v7514 = vunpack.c.l.b16 %v6748
  %v7515 = vunpack.c.h.b16 %v6748
  %v7516 = vunpack.c.l.b16 %v6749
  %v7517 = vunpack.c.h.b16 %v6749
  %v7518 = vunpack.c.l.b16 %v6750
  %v7519 = vunpack.c.h.b16 %v6750
  %v7520 = vunpack.c.l.b16 %v6751
  %v7521 = vunpack.c.h.b16 %v6751
  %v7522 = vunpack.c.l.b16 %v6752
  %v7523 = vunpack.c.h.b16 %v6752
  %v7524 = vunpack.c.l.b16 %v6753
  %v7525 = vunpack.c.h.b16 %v6753
  %v7526 = vunpack.c.l.b16 %v6754
  %v7527 = vunpack.c.h.b16 %v6754
  %v7528 = vunpack.c.l.b16 %v6755
  %v7529 = vunpack.c.h.b16 %v6755
  %v7530 = vunpack.c.l.b16 %v6756
  %v7531 = vunpack.c.h.b16 %v6756
  %v7532 = vunpack.c.l.b16 %v6757
  %v7533 = vunpack.c.h.b16 %v6757
  %v7534 = vunpack.c.l.b16 %v6758
  %v7535 = vunpack.c.h.b16 %v6758
  %v7536 = vunpack.c.l.b16 %v6759
  %v7537 = vunpack.c.h.b16 %v6759
  %v7538 = vunpack.c.l.b16 %v6760
  %v7539 = vunpack.c.h.b16 %v6760
  %v7540 = vunpack.c.l.b16 %v6761
  %v7541 = vunpack.c.h.b16 %v6761
  %v7542 = vunpack.c.l.b16 %v6762
  %v7543 = vunpack.c.h.b16 %v6762
  %v7544 = vunpack.c.l.b16 %v6763
  %v7545 = vunpack.c.h.b16 %v6763
  %v7546 = vunpack.c.l.b16 %v6764
  %v7547 = vunpack.c.h.b16 %v6764
  %v7548 = vunpack.c.l.b16 %v6765
  %v7549 = vunpack.c.h.b16 %v6765
  %v7550 = vunpack.c.l.b16 %v6766
  %v7551 = vunpack.c.h.b16 %v6766
  %v7552 = vunpack.c.l.b16 %v6767
  %v7553 = vunpack.c.h.b16 %v6767
  %v7554 = vunpack.c.l.b16 %v6768
  %v7555 = vunpack.c.h.b16 %v6768
  %v7556 = vunpack.c.l.b16 %v6769
  %v7557 = vunpack.c.h.b16 %v6769
  %v7558 = vunpack.c.l.b16 %v6770
  %v7559 = vunpack.c.h.b16 %v6770
  %v7560 = vunpack.c.l.b16 %v6771
  %v7561 = vunpack.c.h.b16 %v6771
  %v7562 = vpack.c.b16 %v7054, %v7050
  %v7563 = vpack.c.b16 %v7055, %v7051
  %v7564 = vpack.c.b16 %v7056, %v7052
  %v7565 = vpack.c.b16 %v7057, %v7053
  %v7566 = vpack.c.b16 %v7062, %v7058
  %v7567 = vpack.c.b16 %v7063, %v7059
  %v7568 = vpack.c.b16 %v7064, %v7060
  %v7569 = vpack.c.b16 %v7065, %v7061
  %v7570 = vpack.c.b16 %v7070, %v7066
  %v7571 = vpack.c.b16 %v7071, %v7067
  %v7572 = vpack.c.b16 %v7072, %v7068
  %v7573 = vpack.c.b16 %v7073, %v7069
  %v7574 = vpack.c.b16 %v7078, %v7074
  %v7575 = vpack.c.b16 %v7079, %v7075
  %v7576 = vpack.c.b16 %v7080, %v7076
  %v7577 = vpack.c.b16 %v7081, %v7077
  %v7578 = vpack.c.b16 %v7086, %v7082
  %v7579 = vpack.c.b16 %v7087, %v7083
  %v7580 = vpack.c.b16 %v7088, %v7084
  %v7581 = vpack.c.b16 %v7089, %v7085
  %v7582 = vpack.c.b16 %v7094, %v7090
  %v7583 = vpack.c.b16 %v7095, %v7091
  %v7584 = vpack.c.b16 %v7096, %v7092
  %v7585 = vpack.c.b16 %v7097, %v7093
  %v7586 = vpack.c.b16 %v7102, %v7098
  %v7587 = vpack.c.b16 %v7103, %v7099
  %v7588 = vpack.c.b16 %v7104, %v7100
  %v7589 = vpack.c.b16 %v7105, %v7101
  %v7590 = vpack.c.b16 %v7110, %v7106
  %v7591 = vpack.c.b16 %v7111, %v7107
  %v7592 = vpack.c.b16 %v7112, %v7108
  %v7593 = vpack.c.b16 %v7113, %v7109
  %v7594 = vpack.c.b16 %v7118, %v7114
  %v7595 = vpack.c.b16 %v7119, %v7115
  %v7596 = vpack.c.b16 %v7120, %v7116
  %v7597 = vpack.c.b16 %v7121, %v7117
  %v7598 = vpack.c.b16 %v7126, %v7122
  %v7599 = vpack.c.b16 %v7127, %v7123
  %v7600 = vpack.c.b16 %v7128, %v7124
  %v7601 = vpack.c.b16 %v7129, %v7125
  %v7602 = vpack.c.b16 %v7134, %v7130
  %v7603 = vpack.c.b16 %v7135, %v7131
  %v7604 = vpack.c.b16 %v7136, %v7132
  %v7605 = vpack.c.b16 %v7137, %v7133
  %v7606 = vpack.c.b16 %v7142, %v7138
  %v7607 = vpack.c.b16 %v7143, %v7139
  %v7608 = vpack.c.b16 %v7144, %v7140
  %v7609 = vpack.c.b16 %v7145, %v7141
  %v7610 = vpack.c.b16 %v7150, %v7146
  %v7611 = vpack.c.b16 %v7151, %v7147
  %v7612 = vpack.c.b16 %v7152, %v7148
  %v7613 = vpack.c.b16 %v7153, %v7149
  %v7614 = vpack.c.b16 %v7158, %v7154
  %v7615 = vpack.c.b16 %v7159, %v7155
  %v7616 = vpack.c.b16 %v7160, %v7156
  %v7617 = vpack.c.b16 %v7161, %v7157
  %v7618 = vpack.c.b16 %v7166, %v7162
  %v7619 = vpack.c.b16 %v7167, %v7163
  %v7620 = vpack.c.b16 %v7168, %v7164
  %v7621 = vpack.c.b16 %v7169, %v7165
  %v7622 = vpack.c.b16 %v7174, %v7170
  %v7623 = vpack.c.b16 %v7175, %v7171
  %v7624 = vpack.c.b16 %v7176, %v7172
  %v7625 = vpack.c.b16 %v7177, %v7173
  %v7626 = vpack.c.b16 %v7182, %v7178
  %v7627 = vpack.c.b16 %v7183, %v7179
  %v7628 = vpack.c.b16 %v7184, %v7180
  %v7629 = vpack.c.b16 %v7185, %v7181
  %v7630 = vpack.c.b16 %v7190, %v7186
  %v7631 = vpack.c.b16 %v7191, %v7187
  %v7632 = vpack.c.b16 %v7192, %v7188
  %v7633 = vpack.c.b16 %v7193, %v7189
  %v7634 = vpack.c.b16 %v7198, %v7194
  %v7635 = vpack.c.b16 %v7199, %v7195
  %v7636 = vpack.c.b16 %v7200, %v7196
  %v7637 = vpack.c.b16 %v7201, %v7197
  %v7638 = vpack.c.b16 %v7206, %v7202
  %v7639 = vpack.c.b16 %v7207, %v7203
  %v7640 = vpack.c.b16 %v7208, %v7204
  %v7641 = vpack.c.b16 %v7209, %v7205
  %v7642 = vpack.c.b16 %v7214, %v7210
  %v7643 = vpack.c.b16 %v7215, %v7211
  %v7644 = vpack.c.b16 %v7216, %v7212
  %v7645 = vpack.c.b16 %v7217, %v7213
  %v7646 = vpack.c.b16 %v7222, %v7218
  %v7647 = vpack.c.b16 %v7223, %v7219
  %v7648 = vpack.c.b16 %v7224, %v7220
  %v7649 = vpack.c.b16 %v7225, %v7221
  %v7650 = vpack.c.b16 %v7230, %v7226
  %v7651 = vpack.c.b16 %v7231, %v7227
  %v7652 = vpack.c.b16 %v7232, %v7228
  %v7653 = vpack.c.b16 %v7233, %v7229
  %v7654 = vpack.c.b16 %v7238, %v7234
  %v7655 = vpack.c.b16 %v7239, %v7235
  %v7656 = vpack.c.b16 %v7240, %v7236
  %v7657 = vpack.c.b16 %v7241, %v7237
  %v7658 = vpack.c.b16 %v7246, %v7242
  %v7659 = vpack.c.b16 %v7247, %v7243
  %v7660 = vpack.c.b16 %v7248, %v7244
  %v7661 = vpack.c.b16 %v7249, %v7245
  %v7662 = vpack.c.b16 %v7254, %v7250
  %v7663 = vpack.c.b16 %v7255, %v7251
  %v7664 = vpack.c.b16 %v7256, %v7252
  %v7665 = vpack.c.b16 %v7257, %v7253
  %v7666 = vpack.c.b16 %v7262, %v7258
  %v7667 = vpack.c.b16 %v7263, %v7259
  %v7668 = vpack.c.b16 %v7264, %v7260
  %v7669 = vpack.c.b16 %v7265, %v7261
  %v7670 = vpack.c.b16 %v7270, %v7266
  %v7671 = vpack.c.b16 %v7271, %v7267
  %v7672 = vpack.c.b16 %v7272, %v7268
  %v7673 = vpack.c.b16 %v7273, %v7269
  %v7674 = vpack.c.b16 %v7278, %v7274
  %v7675 = vpack.c.b16 %v7279, %v7275
  %v7676 = vpack.c.b16 %v7280, %v7276
  %v7677 = vpack.c.b16 %v7281, %v7277
  %v7678 = vpack.c.b16 %v7286, %v7282
  %v7679 = vpack.c.b16 %v7287, %v7283
  %v7680 = vpack.c.b16 %v7288, %v7284
  %v7681 = vpack.c.b16 %v7289, %v7285
  %v7682 = vpack.c.b16 %v7294, %v7290
  %v7683 = vpack.c.b16 %v7295, %v7291
  %v7684 = vpack.c.b16 %v7296, %v7292
  %v7685 = vpack.c.b16 %v7297, %v7293
  %v7686 = vpack.c.b16 %v7302, %v7298
  %v7687 = vpack.c.b16 %v7303, %v7299
  %v7688 = vpack.c.b16 %v7304, %v7300
  %v7689 = vpack.c.b16 %v7305, %v7301
  %v7690 = vpack.c.b16 %v7310, %v7306
  %v7691 = vpack.c.b16 %v7311, %v7307
  %v7692 = vpack.c.b16 %v7312, %v7308
  %v7693 = vpack.c.b16 %v7313, %v7309
  %v7694 = vpack.c.b16 %v7318, %v7314
  %v7695 = vpack.c.b16 %v7319, %v7315
  %v7696 = vpack.c.b16 %v7320, %v7316
  %v7697 = vpack.c.b16 %v7321, %v7317
  %v7698 = vpack.c.b16 %v7326, %v7322
  %v7699 = vpack.c.b16 %v7327, %v7323
  %v7700 = vpack.c.b16 %v7328, %v7324
  %v7701 = vpack.c.b16 %v7329, %v7325
  %v7702 = vpack.c.b16 %v7334, %v7330
  %v7703 = vpack.c.b16 %v7335, %v7331
  %v7704 = vpack.c.b16 %v7336, %v7332
  %v7705 = vpack.c.b16 %v7337, %v7333
  %v7706 = vpack.c.b16 %v7342, %v7338
  %v7707 = vpack.c.b16 %v7343, %v7339
  %v7708 = vpack.c.b16 %v7344, %v7340
  %v7709 = vpack.c.b16 %v7345, %v7341
  %v7710 = vpack.c.b16 %v7350, %v7346
  %v7711 = vpack.c.b16 %v7351, %v7347
  %v7712 = vpack.c.b16 %v7352, %v7348
  %v7713 = vpack.c.b16 %v7353, %v7349
  %v7714 = vpack.c.b16 %v7358, %v7354
  %v7715 = vpack.c.b16 %v7359, %v7355
  %v7716 = vpack.c.b16 %v7360, %v7356
  %v7717 = vpack.c.b16 %v7361, %v7357
  %v7718 = vpack.c.b16 %v7366, %v7362
  %v7719 = vpack.c.b16 %v7367, %v7363
  %v7720 = vpack.c.b16 %v7368, %v7364
  %v7721 = vpack.c.b16 %v7369, %v7365
  %v7722 = vpack.c.b16 %v7374, %v7370
  %v7723 = vpack.c.b16 %v7375, %v7371
  %v7724 = vpack.c.b16 %v7376, %v7372
  %v7725 = vpack.c.b16 %v7377, %v7373
  %v7726 = vpack.c.b16 %v7382, %v7378
  %v7727 = vpack.c.b16 %v7383, %v7379
  %v7728 = vpack.c.b16 %v7384, %v7380
  %v7729 = vpack.c.b16 %v7385, %v7381
  %v7730 = vpack.c.b16 %v7390, %v7386
  %v7731 = vpack.c.b16 %v7391, %v7387
  %v7732 = vpack.c.b16 %v7392, %v7388
  %v7733 = vpack.c.b16 %v7393, %v7389
  %v7734 = vpack.c.b16 %v7398, %v7394
  %v7735 = vpack.c.b16 %v7399, %v7395
  %v7736 = vpack.c.b16 %v7400, %v7396
  %v7737 = vpack.c.b16 %v7401, %v7397
  %v7738 = vpack.c.b16 %v7406, %v7402
  %v7739 = vpack.c.b16 %v7407, %v7403
  %v7740 = vpack.c.b16 %v7408, %v7404
  %v7741 = vpack.c.b16 %v7409, %v7405
  %v7742 = vpack.c.b16 %v7414, %v7410
  %v7743 = vpack.c.b16 %v7415, %v7411
  %v7744 = vpack.c.b16 %v7416, %v7412
  %v7745 = vpack.c.b16 %v7417, %v7413
  %v7746 = vpack.c.b16 %v7422, %v7418
  %v7747 = vpack.c.b16 %v7423, %v7419
  %v7748 = vpack.c.b16 %v7424, %v7420
  %v7749 = vpack.c.b16 %v7425, %v7421
  %v7750 = vpack.c.b16 %v7430, %v7426
  %v7751 = vpack.c.b16 %v7431, %v7427
  %v7752 = vpack.c.b16 %v7432, %v7428
  %v7753 = vpack.c.b16 %v7433, %v7429
  %v7754 = vpack.c.b16 %v7438, %v7434
  %v7755 = vpack.c.b16 %v7439, %v7435
  %v7756 = vpack.c.b16 %v7440, %v7436
  %v7757 = vpack.c.b16 %v7441, %v7437
  %v7758 = vpack.c.b16 %v7446, %v7442
  %v7759 = vpack.c.b16 %v7447, %v7443
  %v7760 = vpack.c.b16 %v7448, %v7444
  %v7761 = vpack.c.b16 %v7449, %v7445
  %v7762 = vpack.c.b16 %v7454, %v7450
  %v7763 = vpack.c.b16 %v7455, %v7451
  %v7764 = vpack.c.b16 %v7456, %v7452
  %v7765 = vpack.c.b16 %v7457, %v7453
  %v7766 = vpack.c.b16 %v7462, %v7458
  %v7767 = vpack.c.b16 %v7463, %v7459
  %v7768 = vpack.c.b16 %v7464, %v7460
  %v7769 = vpack.c.b16 %v7465, %v7461
  %v7770 = vpack.c.b16 %v7470, %v7466
  %v7771 = vpack.c.b16 %v7471, %v7467
  %v7772 = vpack.c.b16 %v7472, %v7468
  %v7773 = vpack.c.b16 %v7473, %v7469
  %v7774 = vpack.c.b16 %v7478, %v7474
  %v7775 = vpack.c.b16 %v7479, %v7475
  %v7776 = vpack.c.b16 %v7480, %v7476
  %v7777 = vpack.c.b16 %v7481, %v7477
  %v7778 = vpack.c.b16 %v7486, %v7482
  %v7779 = vpack.c.b16 %v7487, %v7483
  %v7780 = vpack.c.b16 %v7488, %v7484
  %v7781 = vpack.c.b16 %v7489, %v7485
  %v7782 = vpack.c.b16 %v7494, %v7490
  %v7783 = vpack.c.b16 %v7495, %v7491
  %v7784 = vpack.c.b16 %v7496, %v7492
  %v7785 = vpack.c.b16 %v7497, %v7493
  %v7786 = vpack.c.b16 %v7502, %v7498
  %v7787 = vpack.c.b16 %v7503, %v7499
  %v7788 = vpack.c.b16 %v7504, %v7500
  %v7789 = vpack.c.b16 %v7505, %v7501
  %v7790 = vpack.c.b16 %v7510, %v7506
  %v7791 = vpack.c.b16 %v7511, %v7507
  %v7792 = vpack.c.b16 %v7512, %v7508
  %v7793 = vpack.c.b16 %v7513, %v7509
  %v7794 = vpack.c.b16 %v7518, %v7514
  %v7795 = vpack.c.b16 %v7519, %v7515
  %v7796 = vpack.c.b16 %v7520, %v7516
  %v7797 = vpack.c.b16 %v7521, %v7517
  %v7798 = vpack.c.b16 %v7526, %v7522
  %v7799 = vpack.c.b16 %v7527, %v7523
  %v7800 = vpack.c.b16 %v7528, %v7524
  %v7801 = vpack.c.b16 %v7529, %v7525
  %v7802 = vpack.c.b16 %v7534, %v7530
  %v7803 = vpack.c.b16 %v7535, %v7531
  %v7804 = vpack.c.b16 %v7536, %v7532
  %v7805 = vpack.c.b16 %v7537, %v7533
  %v7806 = vpack.c.b16 %v7542, %v7538
  %v7807 = vpack.c.b16 %v7543, %v7539
  %v7808 = vpack.c.b16 %v7544, %v7540
  %v7809 = vpack.c.b16 %v7545, %v7541
  %v7810 = vpack.c.b16 %v7550, %v7546
  %v7811 = vpack.c.b16 %v7551, %v7547
  %v7812 = vpack.c.b16 %v7552, %v7548
  %v7813 = vpack.c.b16 %v7553, %v7549
  %v7814 = vpack.c.b16 %v7558, %v7554
  %v7815 = vpack.c.b16 %v7559, %v7555
  %v7816 = vpack.c.b16 %v7560, %v7556
  %v7817 = vpack.c.b16 %v7561, %v7557
  %8074 = vmatprep.subr.bf16.mxu0 %v7591
  %8075 = vmatpush1.bf16.msra.mxu0 %v7590
  %8076 = vmatprep.subr.bf16.mxu0 %v7587
  %8077 = vmatpush1.bf16.msra.mxu0 %v7586
  %8078 = vmatprep.subr.bf16.mxu0 %v7583
  %8079 = vmatpush1.bf16.msra.mxu0 %v7582
  %8080 = vmatprep.subr.bf16.mxu0 %v7579
  %8081 = vmatpush1.bf16.msra.mxu0 %v7578
  %8082 = vmatprep.subr.bf16.mxu0 %v7575
  %8083 = vmatpush1.bf16.msra.mxu0 %v7574
  %8084 = vmatprep.subr.bf16.mxu0 %v7571
  %8085 = vmatpush1.bf16.msra.mxu0 %v7570
  %8086 = vmatprep.subr.bf16.mxu0 %v7567
  %8087 = vmatpush1.bf16.msra.mxu0 %v7566
  %8088 = vmatprep.subr.bf16.mxu0 %v7563
  %8089 = vmatpush1.bf16.msra.mxu0 %v7562
  %8090 = vmatprep.subr.bf16.mxu0 %v7623
  %8091 = vmatpush2.bf16.msra.mxu0 %v7622
  %8092 = vmatprep.subr.bf16.mxu0 %v7619
  %8093 = vmatpush2.bf16.msra.mxu0 %v7618
  %8094 = vmatprep.subr.bf16.mxu0 %v7615
  %8095 = vmatpush2.bf16.msra.mxu0 %v7614
  %8096 = vmatprep.subr.bf16.mxu0 %v7611
  %8097 = vmatpush2.bf16.msra.mxu0 %v7610
  %8098 = vmatprep.subr.bf16.mxu0 %v7607
  %8099 = vmatpush2.bf16.msra.mxu0 %v7606
  %8100 = vmatprep.subr.bf16.mxu0 %v7603
  %8101 = vmatpush2.bf16.msra.mxu0 %v7602
  %8102 = vmatprep.subr.bf16.mxu0 %v7599
  %8103 = vmatpush2.bf16.msra.mxu0 %v7598
  %8104 = vmatprep.subr.bf16.mxu0 %v7595
  %8105 = vmatpush2.bf16.msra.mxu0 %v7594
  %8106 = vmatprep.mubr.bf16.mxu0 %v6509
  %8107 = vmatmul.mubr.bf16.gmra.mxu0 %v6508
  %v8108 = vpop.f32.mrf.mxu0
  %v8109 = vadd.f32 %v6777, %v8108
  %v8110 = vpop.f32.mrf.mxu0
  %v8111 = vadd.f32 %v6781, %v8110
  %v8112 = vpop.f32.mrf.mxu0
  %v8113 = vpop.f32.mrf.mxu0
  %8114 = vdwg.mxu0
  %8115 = vmatprep.subr.bf16.mxu0 %v7655
  %8116 = vmatpush1.bf16.msra.mxu0 %v7654
  %8117 = vmatprep.subr.bf16.mxu0 %v7651
  %8118 = vmatpush1.bf16.msra.mxu0 %v7650
  %8119 = vmatprep.subr.bf16.mxu0 %v7647
  %8120 = vmatpush1.bf16.msra.mxu0 %v7646
  %8121 = vmatprep.subr.bf16.mxu0 %v7643
  %8122 = vmatpush1.bf16.msra.mxu0 %v7642
  %8123 = vmatprep.subr.bf16.mxu0 %v7639
  %8124 = vmatpush1.bf16.msra.mxu0 %v7638
  %8125 = vmatprep.subr.bf16.mxu0 %v7635
  %8126 = vmatpush1.bf16.msra.mxu0 %v7634
  %8127 = vmatprep.subr.bf16.mxu0 %v7631
  %8128 = vmatpush1.bf16.msra.mxu0 %v7630
  %8129 = vmatprep.subr.bf16.mxu0 %v7627
  %8130 = vmatpush1.bf16.msra.mxu0 %v7626
  %8131 = vmatprep.subr.bf16.mxu0 %v7687
  %8132 = vmatpush2.bf16.msra.mxu0 %v7686
  %8133 = vmatprep.subr.bf16.mxu0 %v7683
  %8134 = vmatpush2.bf16.msra.mxu0 %v7682
  %8135 = vmatprep.subr.bf16.mxu0 %v7679
  %8136 = vmatpush2.bf16.msra.mxu0 %v7678
  %8137 = vmatprep.subr.bf16.mxu0 %v7675
  %8138 = vmatpush2.bf16.msra.mxu0 %v7674
  %8139 = vmatprep.subr.bf16.mxu0 %v7671
  %8140 = vmatpush2.bf16.msra.mxu0 %v7670
  %8141 = vmatprep.subr.bf16.mxu0 %v7667
  %8142 = vmatpush2.bf16.msra.mxu0 %v7666
  %8143 = vmatprep.subr.bf16.mxu0 %v7663
  %8144 = vmatpush2.bf16.msra.mxu0 %v7662
  %8145 = vmatprep.subr.bf16.mxu0 %v7659
  %8146 = vmatpush2.bf16.msra.mxu0 %v7658
  %8147 = vmatprep.mubr.bf16.mxu0 %v6511
  %8148 = vmatmul.mubr.bf16.gmra.mxu0 %v6510
  %v8149 = vpop.f32.mrf.mxu0
  %v8150 = vadd.f32 %v8109, %v8149
  %v8151 = vpop.f32.mrf.mxu0
  %v8152 = vadd.f32 %v8111, %v8151
  %v8153 = vpop.f32.mrf.mxu0
  %v8154 = vpop.f32.mrf.mxu0
  %8155 = vdwg.mxu0
  %8156 = vmatprep.subr.bf16.mxu0 %v7719
  %8157 = vmatpush1.bf16.msra.mxu0 %v7718
  %8158 = vmatprep.subr.bf16.mxu0 %v7715
  %8159 = vmatpush1.bf16.msra.mxu0 %v7714
  %8160 = vmatprep.subr.bf16.mxu0 %v7711
  %8161 = vmatpush1.bf16.msra.mxu0 %v7710
  %8162 = vmatprep.subr.bf16.mxu0 %v7707
  %8163 = vmatpush1.bf16.msra.mxu0 %v7706
  %8164 = vmatprep.subr.bf16.mxu0 %v7703
  %8165 = vmatpush1.bf16.msra.mxu0 %v7702
  %8166 = vmatprep.subr.bf16.mxu0 %v7699
  %8167 = vmatpush1.bf16.msra.mxu0 %v7698
  %8168 = vmatprep.subr.bf16.mxu0 %v7695
  %8169 = vmatpush1.bf16.msra.mxu0 %v7694
  %8170 = vmatprep.subr.bf16.mxu0 %v7691
  %8171 = vmatpush1.bf16.msra.mxu0 %v7690
  %8172 = vmatprep.subr.bf16.mxu0 %v7751
  %8173 = vmatpush2.bf16.msra.mxu0 %v7750
  %8174 = vmatprep.subr.bf16.mxu0 %v7747
  %8175 = vmatpush2.bf16.msra.mxu0 %v7746
  %8176 = vmatprep.subr.bf16.mxu0 %v7743
  %8177 = vmatpush2.bf16.msra.mxu0 %v7742
  %8178 = vmatprep.subr.bf16.mxu0 %v7739
  %8179 = vmatpush2.bf16.msra.mxu0 %v7738
  %8180 = vmatprep.subr.bf16.mxu0 %v7735
  %8181 = vmatpush2.bf16.msra.mxu0 %v7734
  %8182 = vmatprep.subr.bf16.mxu0 %v7731
  %8183 = vmatpush2.bf16.msra.mxu0 %v7730
  %8184 = vmatprep.subr.bf16.mxu0 %v7727
  %8185 = vmatpush2.bf16.msra.mxu0 %v7726
  %8186 = vmatprep.subr.bf16.mxu0 %v7723
  %8187 = vmatpush2.bf16.msra.mxu0 %v7722
  %8188 = vmatprep.mubr.bf16.mxu0 %v6513
  %8189 = vmatmul.mubr.bf16.gmra.mxu0 %v6512
  %v8190 = vpop.f32.mrf.mxu0
  %v8191 = vadd.f32 %v8150, %v8190
  %v8192 = vpop.f32.mrf.mxu0
  %v8193 = vadd.f32 %v8152, %v8192
  %v8194 = vpop.f32.mrf.mxu0
  %v8195 = vpop.f32.mrf.mxu0
  %8196 = vdwg.mxu0
  %8197 = vmatprep.subr.bf16.mxu0 %v7783
  %8198 = vmatpush1.bf16.msra.mxu0 %v7782
  %8199 = vmatprep.subr.bf16.mxu0 %v7779
  %8200 = vmatpush1.bf16.msra.mxu0 %v7778
  %8201 = vmatprep.subr.bf16.mxu0 %v7775
  %8202 = vmatpush1.bf16.msra.mxu0 %v7774
  %8203 = vmatprep.subr.bf16.mxu0 %v7771
  %8204 = vmatpush1.bf16.msra.mxu0 %v7770
  %8205 = vmatprep.subr.bf16.mxu0 %v7767
  %8206 = vmatpush1.bf16.msra.mxu0 %v7766
  %8207 = vmatprep.subr.bf16.mxu0 %v7763
  %8208 = vmatpush1.bf16.msra.mxu0 %v7762
  %8209 = vmatprep.subr.bf16.mxu0 %v7759
  %8210 = vmatpush1.bf16.msra.mxu0 %v7758
  %8211 = vmatprep.subr.bf16.mxu0 %v7755
  %8212 = vmatpush1.bf16.msra.mxu0 %v7754
  %8213 = vmatprep.subr.bf16.mxu0 %v7815
  %8214 = vmatpush2.bf16.msra.mxu0 %v7814
  %8215 = vmatprep.subr.bf16.mxu0 %v7811
  %8216 = vmatpush2.bf16.msra.mxu0 %v7810
  %8217 = vmatprep.subr.bf16.mxu0 %v7807
  %8218 = vmatpush2.bf16.msra.mxu0 %v7806
  %8219 = vmatprep.subr.bf16.mxu0 %v7803
  %8220 = vmatpush2.bf16.msra.mxu0 %v7802
  %8221 = vmatprep.subr.bf16.mxu0 %v7799
  %8222 = vmatpush2.bf16.msra.mxu0 %v7798
  %8223 = vmatprep.subr.bf16.mxu0 %v7795
  %8224 = vmatpush2.bf16.msra.mxu0 %v7794
  %8225 = vmatprep.subr.bf16.mxu0 %v7791
  %8226 = vmatpush2.bf16.msra.mxu0 %v7790
  %8227 = vmatprep.subr.bf16.mxu0 %v7787
  %8228 = vmatpush2.bf16.msra.mxu0 %v7786
  %8229 = vmatprep.mubr.bf16.mxu0 %v6515
  %8230 = vmatmul.mubr.bf16.gmra.mxu0 %v6514
  %v8231 = vpop.f32.mrf.mxu0
  %v8232 = vadd.f32 %v8191, %v8231
  %v8233 = vpop.f32.mrf.mxu0
  %v8234 = vadd.f32 %v8193, %v8233
  %v8235 = vpop.f32.mrf.mxu0
  %v8236 = vpop.f32.mrf.mxu0
  %8237 = vdwg.mxu0
  %8238 = vmatprep.subr.bf16.mxu0 %v7593
  %8239 = vmatpush1.bf16.msra.mxu0 %v7592
  %8240 = vmatprep.subr.bf16.mxu0 %v7589
  %8241 = vmatpush1.bf16.msra.mxu0 %v7588
  %8242 = vmatprep.subr.bf16.mxu0 %v7585
  %8243 = vmatpush1.bf16.msra.mxu0 %v7584
  %8244 = vmatprep.subr.bf16.mxu0 %v7581
  %8245 = vmatpush1.bf16.msra.mxu0 %v7580
  %8246 = vmatprep.subr.bf16.mxu0 %v7577
  %8247 = vmatpush1.bf16.msra.mxu0 %v7576
  %8248 = vmatprep.subr.bf16.mxu0 %v7573
  %8249 = vmatpush1.bf16.msra.mxu0 %v7572
  %8250 = vmatprep.subr.bf16.mxu0 %v7569
  %8251 = vmatpush1.bf16.msra.mxu0 %v7568
  %8252 = vmatprep.subr.bf16.mxu0 %v7565
  %8253 = vmatpush1.bf16.msra.mxu0 %v7564
  %8254 = vmatprep.subr.bf16.mxu0 %v7625
  %8255 = vmatpush2.bf16.msra.mxu0 %v7624
  %8256 = vmatprep.subr.bf16.mxu0 %v7621
  %8257 = vmatpush2.bf16.msra.mxu0 %v7620
  %8258 = vmatprep.subr.bf16.mxu0 %v7617
  %8259 = vmatpush2.bf16.msra.mxu0 %v7616
  %8260 = vmatprep.subr.bf16.mxu0 %v7613
  %8261 = vmatpush2.bf16.msra.mxu0 %v7612
  %8262 = vmatprep.subr.bf16.mxu0 %v7609
  %8263 = vmatpush2.bf16.msra.mxu0 %v7608
  %8264 = vmatprep.subr.bf16.mxu0 %v7605
  %8265 = vmatpush2.bf16.msra.mxu0 %v7604
  %8266 = vmatprep.subr.bf16.mxu0 %v7601
  %8267 = vmatpush2.bf16.msra.mxu0 %v7600
  %8268 = vmatprep.subr.bf16.mxu0 %v7597
  %8269 = vmatpush2.bf16.msra.mxu0 %v7596
  %8270 = vmatprep.mubr.bf16.mxu0 %v6509
  %8271 = vmatmul.mubr.bf16.gmra.mxu0 %v6508
  %v8272 = vpop.f32.mrf.mxu0
  %v8273 = vadd.f32 %v6785, %v8272
  %v8274 = vpop.f32.mrf.mxu0
  %v8275 = vadd.f32 %v6789, %v8274
  %v8276 = vpop.f32.mrf.mxu0
  %v8277 = vpop.f32.mrf.mxu0
  %8278 = vdwg.mxu0
  %8279 = vmatprep.subr.bf16.mxu0 %v7657
  %8280 = vmatpush1.bf16.msra.mxu0 %v7656
  %8281 = vmatprep.subr.bf16.mxu0 %v7653
  %8282 = vmatpush1.bf16.msra.mxu0 %v7652
  %8283 = vmatprep.subr.bf16.mxu0 %v7649
  %8284 = vmatpush1.bf16.msra.mxu0 %v7648
  %8285 = vmatprep.subr.bf16.mxu0 %v7645
  %8286 = vmatpush1.bf16.msra.mxu0 %v7644
  %8287 = vmatprep.subr.bf16.mxu0 %v7641
  %8288 = vmatpush1.bf16.msra.mxu0 %v7640
  %8289 = vmatprep.subr.bf16.mxu0 %v7637
  %8290 = vmatpush1.bf16.msra.mxu0 %v7636
  %8291 = vmatprep.subr.bf16.mxu0 %v7633
  %8292 = vmatpush1.bf16.msra.mxu0 %v7632
  %8293 = vmatprep.subr.bf16.mxu0 %v7629
  %8294 = vmatpush1.bf16.msra.mxu0 %v7628
  %8295 = vmatprep.subr.bf16.mxu0 %v7689
  %8296 = vmatpush2.bf16.msra.mxu0 %v7688
  %8297 = vmatprep.subr.bf16.mxu0 %v7685
  %8298 = vmatpush2.bf16.msra.mxu0 %v7684
  %8299 = vmatprep.subr.bf16.mxu0 %v7681
  %8300 = vmatpush2.bf16.msra.mxu0 %v7680
  %8301 = vmatprep.subr.bf16.mxu0 %v7677
  %8302 = vmatpush2.bf16.msra.mxu0 %v7676
  %8303 = vmatprep.subr.bf16.mxu0 %v7673
  %8304 = vmatpush2.bf16.msra.mxu0 %v7672
  %8305 = vmatprep.subr.bf16.mxu0 %v7669
  %8306 = vmatpush2.bf16.msra.mxu0 %v7668
  %8307 = vmatprep.subr.bf16.mxu0 %v7665
  %8308 = vmatpush2.bf16.msra.mxu0 %v7664
  %8309 = vmatprep.subr.bf16.mxu0 %v7661
  %8310 = vmatpush2.bf16.msra.mxu0 %v7660
  %8311 = vmatprep.mubr.bf16.mxu0 %v6511
  %8312 = vmatmul.mubr.bf16.gmra.mxu0 %v6510
  %v8313 = vpop.f32.mrf.mxu0
  %v8314 = vadd.f32 %v8273, %v8313
  %v8315 = vpop.f32.mrf.mxu0
  %v8316 = vadd.f32 %v8275, %v8315
  %v8317 = vpop.f32.mrf.mxu0
  %v8318 = vpop.f32.mrf.mxu0
  %8319 = vdwg.mxu0
  %8320 = vmatprep.subr.bf16.mxu0 %v7721
  %8321 = vmatpush1.bf16.msra.mxu0 %v7720
  %8322 = vmatprep.subr.bf16.mxu0 %v7717
  %8323 = vmatpush1.bf16.msra.mxu0 %v7716
  %8324 = vmatprep.subr.bf16.mxu0 %v7713
  %8325 = vmatpush1.bf16.msra.mxu0 %v7712
  %8326 = vmatprep.subr.bf16.mxu0 %v7709
  %8327 = vmatpush1.bf16.msra.mxu0 %v7708
  %8328 = vmatprep.subr.bf16.mxu0 %v7705
  %8329 = vmatpush1.bf16.msra.mxu0 %v7704
  %8330 = vmatprep.subr.bf16.mxu0 %v7701
  %8331 = vmatpush1.bf16.msra.mxu0 %v7700
  %8332 = vmatprep.subr.bf16.mxu0 %v7697
  %8333 = vmatpush1.bf16.msra.mxu0 %v7696
  %8334 = vmatprep.subr.bf16.mxu0 %v7693
  %8335 = vmatpush1.bf16.msra.mxu0 %v7692
  %8336 = vmatprep.subr.bf16.mxu0 %v7753
  %8337 = vmatpush2.bf16.msra.mxu0 %v7752
  %8338 = vmatprep.subr.bf16.mxu0 %v7749
  %8339 = vmatpush2.bf16.msra.mxu0 %v7748
  %8340 = vmatprep.subr.bf16.mxu0 %v7745
  %8341 = vmatpush2.bf16.msra.mxu0 %v7744
  %8342 = vmatprep.subr.bf16.mxu0 %v7741
  %8343 = vmatpush2.bf16.msra.mxu0 %v7740
  %8344 = vmatprep.subr.bf16.mxu0 %v7737
  %8345 = vmatpush2.bf16.msra.mxu0 %v7736
  %8346 = vmatprep.subr.bf16.mxu0 %v7733
  %8347 = vmatpush2.bf16.msra.mxu0 %v7732
  %8348 = vmatprep.subr.bf16.mxu0 %v7729
  %8349 = vmatpush2.bf16.msra.mxu0 %v7728
  %8350 = vmatprep.subr.bf16.mxu0 %v7725
  %8351 = vmatpush2.bf16.msra.mxu0 %v7724
  %8352 = vmatprep.mubr.bf16.mxu0 %v6513
  %8353 = vmatmul.mubr.bf16.gmra.mxu0 %v6512
  %v8354 = vpop.f32.mrf.mxu0
  %v8355 = vadd.f32 %v8314, %v8354
  %v8356 = vpop.f32.mrf.mxu0
  %v8357 = vadd.f32 %v8316, %v8356
  %v8358 = vpop.f32.mrf.mxu0
  %v8359 = vpop.f32.mrf.mxu0
  %8360 = vdwg.mxu0
  %8361 = vmatprep.subr.bf16.mxu0 %v7785
  %8362 = vmatpush1.bf16.msra.mxu0 %v7784
  %8363 = vmatprep.subr.bf16.mxu0 %v7781
  %8364 = vmatpush1.bf16.msra.mxu0 %v7780
  %8365 = vmatprep.subr.bf16.mxu0 %v7777
  %8366 = vmatpush1.bf16.msra.mxu0 %v7776
  %8367 = vmatprep.subr.bf16.mxu0 %v7773
  %8368 = vmatpush1.bf16.msra.mxu0 %v7772
  %8369 = vmatprep.subr.bf16.mxu0 %v7769
  %8370 = vmatpush1.bf16.msra.mxu0 %v7768
  %8371 = vmatprep.subr.bf16.mxu0 %v7765
  %8372 = vmatpush1.bf16.msra.mxu0 %v7764
  %8373 = vmatprep.subr.bf16.mxu0 %v7761
  %8374 = vmatpush1.bf16.msra.mxu0 %v7760
  %8375 = vmatprep.subr.bf16.mxu0 %v7757
  %8376 = vmatpush1.bf16.msra.mxu0 %v7756
  %8377 = vmatprep.subr.bf16.mxu0 %v7817
  %8378 = vmatpush2.bf16.msra.mxu0 %v7816
  %8379 = vmatprep.subr.bf16.mxu0 %v7813
  %8380 = vmatpush2.bf16.msra.mxu0 %v7812
  %8381 = vmatprep.subr.bf16.mxu0 %v7809
  %8382 = vmatpush2.bf16.msra.mxu0 %v7808
  %8383 = vmatprep.subr.bf16.mxu0 %v7805
  %8384 = vmatpush2.bf16.msra.mxu0 %v7804
  %8385 = vmatprep.subr.bf16.mxu0 %v7801
  %8386 = vmatpush2.bf16.msra.mxu0 %v7800
  %8387 = vmatprep.subr.bf16.mxu0 %v7797
  %8388 = vmatpush2.bf16.msra.mxu0 %v7796
  %8389 = vmatprep.subr.bf16.mxu0 %v7793
  %8390 = vmatpush2.bf16.msra.mxu0 %v7792
  %8391 = vmatprep.subr.bf16.mxu0 %v7789
  %8392 = vmatpush2.bf16.msra.mxu0 %v7788
  %8393 = vmatprep.mubr.bf16.mxu0 %v6515
  %8394 = vmatmul.mubr.bf16.gmra.mxu0 %v6514
  %v8395 = vpop.f32.mrf.mxu0
  %v8396 = vadd.f32 %v8355, %v8395
  %v8397 = vpop.f32.mrf.mxu0
  %v8398 = vadd.f32 %v8357, %v8397
  %v8399 = vpop.f32.mrf.mxu0
  %v8400 = vpop.f32.mrf.mxu0
  %8401 = vdwg.mxu0
  %v8402 = vmax.f32 %v8232, 0.0
  %v8403 = vmax.f32 %v8234, 0.0
  %v8404 = vmax.f32 %v8396, 0.0
  %v8405 = vmax.f32 %v8398, 0.0
  %v8406 = vpack.c.bf16 %v8402, %v8402
  %v8407 = vpack.c.bf16 %v8403, %v8403
  %v8408 = vpack.c.bf16 %v8404, %v8404
  %v8409 = vpack.c.bf16 %v8405, %v8405
  %v8410 = vld [vmem:[%s7] sm:$0xff]
  %v8411 = vld [vmem:[%s7 + $0x8] sm:$0xf]
  %v8412 = vld [vmem:[%s7 + $0xc] sm:$0xff]
  %v8413 = vld [vmem:[%s7 + $0x14] sm:$0xf]
  %v8414 = vld [vmem:[%s7 + $0x18] sm:$0xff]
  %v8415 = vld [vmem:[%s7 + $0x20] sm:$0xf]
  %v8416 = vld [vmem:[%s7 + $0x24] sm:$0xff]
  %v8417 = vld [vmem:[%s7 + $0x2c] sm:$0xf]
  %v8418 = vld [vmem:[%s7 + $0x30] sm:$0xff]
  %v8419 = vld [vmem:[%s7 + $0x38] sm:$0xf]
  %v8420 = vld [vmem:[%s7 + $0x3c] sm:$0xff]
  %v8421 = vld [vmem:[%s7 + $0x44] sm:$0xf]
  %v8422 = vld [vmem:[%s7 + $0x48] sm:$0xff]
  %v8423 = vld [vmem:[%s7 + $0x50] sm:$0xf]
  %v8424 = vld [vmem:[%s7 + $0x54] sm:$0xff]
  %v8425 = vld [vmem:[%s7 + $0x5c] sm:$0xf]
  %v8426 = vld [vmem:[%s7 + $0x60] sm:$0xff]
  %v8427 = vld [vmem:[%s7 + $0x68] sm:$0xf]
  %v8428 = vld [vmem:[%s7 + $0x6c] sm:$0xff]
  %v8429 = vld [vmem:[%s7 + $0x74] sm:$0xf]
  %v8430 = vld [vmem:[%s7 + $0x78] sm:$0xff]
  %v8431 = vld [vmem:[%s7 + $0x80] sm:$0xf]
  %v8432 = vld [vmem:[%s7 + $0x84] sm:$0xff]
  %v8433 = vld [vmem:[%s7 + $0x8c] sm:$0xf]
  %v8434 = vld [vmem:[%s7 + $0x90] sm:$0xff]
  %v8435 = vld [vmem:[%s7 + $0x98] sm:$0xf]
  %v8436 = vld [vmem:[%s7 + $0x9c] sm:$0xff]
  %v8437 = vld [vmem:[%s7 + $0xa4] sm:$0xf]
  %v8438 = vld [vmem:[%s7 + $0xa8] sm:$0xff]
  %v8439 = vld [vmem:[%s7 + $0xb0] sm:$0xf]
  %v8440 = vld [vmem:[%s7 + $0xb4] sm:$0xff]
  %v8441 = vld [vmem:[%s7 + $0xbc] sm:$0xf]
  %v8442 = vld [vmem:[%s7 + $0xc0] sm:$0xff]
  %v8443 = vld [vmem:[%s7 + $0xc8] sm:$0xf]
  %v8444 = vld [vmem:[%s7 + $0xcc] sm:$0xff]
  %v8445 = vld [vmem:[%s7 + $0xd4] sm:$0xf]
  %v8446 = vld [vmem:[%s7 + $0xd8] sm:$0xff]
  %v8447 = vld [vmem:[%s7 + $0xe0] sm:$0xf]
  %v8448 = vld [vmem:[%s7 + $0xe4] sm:$0xff]
  %v8449 = vld [vmem:[%s7 + $0xec] sm:$0xf]
  %v8450 = vld [vmem:[%s7 + $0xf0] sm:$0xff]
  %v8451 = vld [vmem:[%s7 + $0xf8] sm:$0xf]
  %v8452 = vld [vmem:[%s7 + $0xfc] sm:$0xff]
  %v8453 = vld [vmem:[%s7 + $0x104] sm:$0xf]
  %v8454 = vld [vmem:[%s7 + $0x108] sm:$0xff]
  %v8455 = vld [vmem:[%s7 + $0x110] sm:$0xf]
  %v8456 = vld [vmem:[%s7 + $0x114] sm:$0xff]
  %v8457 = vld [vmem:[%s7 + $0x11c] sm:$0xf]
  %v8458 = vld [vmem:[%s7 + $0x120] sm:$0xff]
  %v8459 = vld [vmem:[%s7 + $0x128] sm:$0xf]
  %v8460 = vld [vmem:[%s7 + $0x12c] sm:$0xff]
  %v8461 = vld [vmem:[%s7 + $0x134] sm:$0xf]
  %v8462 = vld [vmem:[%s7 + $0x138] sm:$0xff]
  %v8463 = vld [vmem:[%s7 + $0x140] sm:$0xf]
  %v8464 = vld [vmem:[%s7 + $0x144] sm:$0xff]
  %v8465 = vld [vmem:[%s7 + $0x14c] sm:$0xf]
  %v8466 = vld [vmem:[%s7 + $0x150] sm:$0xff]
  %v8467 = vld [vmem:[%s7 + $0x158] sm:$0xf]
  %v8468 = vld [vmem:[%s7 + $0x15c] sm:$0xff]
  %v8469 = vld [vmem:[%s7 + $0x164] sm:$0xf]
  %v8470 = vld [vmem:[%s7 + $0x168] sm:$0xff]
  %v8471 = vld [vmem:[%s7 + $0x170] sm:$0xf]
  %v8472 = vld [vmem:[%s7 + $0x174] sm:$0xff]
  %v8473 = vld [vmem:[%s7 + $0x17c] sm:$0xf]
  %v8474 = vld [vmem:[%s7 + $0x180] sm:$0xff]
  %v8475 = vld [vmem:[%s7 + $0x188] sm:$0xf]
  %v8476 = vld [vmem:[%s7 + $0x18c] sm:$0xff]
  %v8477 = vld [vmem:[%s7 + $0x194] sm:$0xf]
  %v8478 = vld [vmem:[%s7 + $0x198] sm:$0xff]
  %v8479 = vld [vmem:[%s7 + $0x1a0] sm:$0xf]
  %v8480 = vld [vmem:[%s7 + $0x1a4] sm:$0xff]
  %v8481 = vld [vmem:[%s7 + $0x1ac] sm:$0xf]
  %v8482 = vld [vmem:[%s7 + $0x1b0] sm:$0xff]
  %v8483 = vld [vmem:[%s7 + $0x1b8] sm:$0xf]
  %v8484 = vld [vmem:[%s7 + $0x1bc] sm:$0xff]
  %v8485 = vld [vmem:[%s7 + $0x1c4] sm:$0xf]
  %v8486 = vld [vmem:[%s7 + $0x1c8] sm:$0xff]
  %v8487 = vld [vmem:[%s7 + $0x1d0] sm:$0xf]
  %v8488 = vld [vmem:[%s7 + $0x1d4] sm:$0xff]
  %v8489 = vld [vmem:[%s7 + $0x1dc] sm:$0xf]
  %v8490 = vld [vmem:[%s7 + $0x1e0] sm:$0xff]
  %v8491 = vld [vmem:[%s7 + $0x1e8] sm:$0xf]
  %v8492 = vld [vmem:[%s7 + $0x1ec] sm:$0xff]
  %v8493 = vld [vmem:[%s7 + $0x1f4] sm:$0xf]
  %v8494 = vld [vmem:[%s7 + $0x1f8] sm:$0xff]
  %v8495 = vld [vmem:[%s7 + $0x200] sm:$0xf]
  %v8496 = vld [vmem:[%s7 + $0x204] sm:$0xff]
  %v8497 = vld [vmem:[%s7 + $0x20c] sm:$0xf]
  %v8498 = vld [vmem:[%s7 + $0x210] sm:$0xff]
  %v8499 = vld [vmem:[%s7 + $0x218] sm:$0xf]
  %v8500 = vld [vmem:[%s7 + $0x21c] sm:$0xff]
  %v8501 = vld [vmem:[%s7 + $0x224] sm:$0xf]
  %v8502 = vld [vmem:[%s7 + $0x228] sm:$0xff]
  %v8503 = vld [vmem:[%s7 + $0x230] sm:$0xf]
  %v8504 = vld [vmem:[%s7 + $0x234] sm:$0xff]
  %v8505 = vld [vmem:[%s7 + $0x23c] sm:$0xf]
  %v8506 = vld [vmem:[%s7 + $0x240] sm:$0xff]
  %v8507 = vld [vmem:[%s7 + $0x248] sm:$0xf]
  %v8508 = vld [vmem:[%s7 + $0x24c] sm:$0xff]
  %v8509 = vld [vmem:[%s7 + $0x254] sm:$0xf]
  %v8510 = vld [vmem:[%s7 + $0x258] sm:$0xff]
  %v8511 = vld [vmem:[%s7 + $0x260] sm:$0xf]
  %v8512 = vld [vmem:[%s7 + $0x264] sm:$0xff]
  %v8513 = vld [vmem:[%s7 + $0x26c] sm:$0xf]
  %v8514 = vld [vmem:[%s7 + $0x270] sm:$0xff]
  %v8515 = vld [vmem:[%s7 + $0x278] sm:$0xf]
  %v8516 = vld [vmem:[%s7 + $0x27c] sm:$0xff]
  %v8517 = vld [vmem:[%s7 + $0x284] sm:$0xf]
  %v8518 = vld [vmem:[%s7 + $0x288] sm:$0xff]
  %v8519 = vld [vmem:[%s7 + $0x290] sm:$0xf]
  %v8520 = vld [vmem:[%s7 + $0x294] sm:$0xff]
  %v8521 = vld [vmem:[%s7 + $0x29c] sm:$0xf]
  %v8522 = vld [vmem:[%s7 + $0x2a0] sm:$0xff]
  %v8523 = vld [vmem:[%s7 + $0x2a8] sm:$0xf]
  %v8524 = vld [vmem:[%s7 + $0x2ac] sm:$0xff]
  %v8525 = vld [vmem:[%s7 + $0x2b4] sm:$0xf]
  %v8526 = vld [vmem:[%s7 + $0x2b8] sm:$0xff]
  %v8527 = vld [vmem:[%s7 + $0x2c0] sm:$0xf]
  %v8528 = vld [vmem:[%s7 + $0x2c4] sm:$0xff]
  %v8529 = vld [vmem:[%s7 + $0x2cc] sm:$0xf]
  %v8530 = vld [vmem:[%s7 + $0x2d0] sm:$0xff]
  %v8531 = vld [vmem:[%s7 + $0x2d8] sm:$0xf]
  %v8532 = vld [vmem:[%s7 + $0x2dc] sm:$0xff]
  %v8533 = vld [vmem:[%s7 + $0x2e4] sm:$0xf]
  %v8534 = vld [vmem:[%s7 + $0x2e8] sm:$0xff]
  %v8535 = vld [vmem:[%s7 + $0x2f0] sm:$0xf]
  %v8536 = vld [vmem:[%s7 + $0x2f4] sm:$0xff]
  %v8537 = vld [vmem:[%s7 + $0x2fc] sm:$0xf]
  %v8538 = vld [vmem:[%s8] sm:$0x7]
  %v8540 = vlaneseq
  %v8541 = vshrl.u32 %v8540, 7
  %v8542 = vsub.s32 0, %v8541
  %v8543 = vrot.slane %v8538, %v8542
  %v8544 = vlaneseq
  %v8545 = vshrl.u32 %v8544, 7
  %v8546 = vsub.s32 1, %v8545
  %v8547 = vrot.slane %v8538, %v8546
  %v8548 = vlaneseq
  %v8549 = vshrl.u32 %v8548, 7
  %v8550 = vsub.s32 2, %v8549
  %v8551 = vrot.slane %v8538, %v8550
  %v8683 = vunpack.c.l.b16 %v8410
  %v8684 = vunpack.c.h.b16 %v8410
  %v8685 = vunpack.c.l.b16 %v8411
  %v8686 = vunpack.c.l.b16 %v8412
  %v8687 = vunpack.c.h.b16 %v8412
  %v8688 = vunpack.c.l.b16 %v8413
  %v8689 = vunpack.c.l.b16 %v8414
  %v8690 = vunpack.c.h.b16 %v8414
  %v8691 = vunpack.c.l.b16 %v8415
  %v8692 = vunpack.c.l.b16 %v8416
  %v8693 = vunpack.c.h.b16 %v8416
  %v8694 = vunpack.c.l.b16 %v8417
  %v8695 = vunpack.c.l.b16 %v8418
  %v8696 = vunpack.c.h.b16 %v8418
  %v8697 = vunpack.c.l.b16 %v8419
  %v8698 = vunpack.c.l.b16 %v8420
  %v8699 = vunpack.c.h.b16 %v8420
  %v8700 = vunpack.c.l.b16 %v8421
  %v8701 = vunpack.c.l.b16 %v8422
  %v8702 = vunpack.c.h.b16 %v8422
  %v8703 = vunpack.c.l.b16 %v8423
  %v8704 = vunpack.c.l.b16 %v8424
  %v8705 = vunpack.c.h.b16 %v8424
  %v8706 = vunpack.c.l.b16 %v8425
  %v8707 = vunpack.c.l.b16 %v8426
  %v8708 = vunpack.c.h.b16 %v8426
  %v8709 = vunpack.c.l.b16 %v8427
  %v8710 = vunpack.c.l.b16 %v8428
  %v8711 = vunpack.c.h.b16 %v8428
  %v8712 = vunpack.c.l.b16 %v8429
  %v8713 = vunpack.c.l.b16 %v8430
  %v8714 = vunpack.c.h.b16 %v8430
  %v8715 = vunpack.c.l.b16 %v8431
  %v8716 = vunpack.c.l.b16 %v8432
  %v8717 = vunpack.c.h.b16 %v8432
  %v8718 = vunpack.c.l.b16 %v8433
  %v8719 = vunpack.c.l.b16 %v8434
  %v8720 = vunpack.c.h.b16 %v8434
  %v8721 = vunpack.c.l.b16 %v8435
  %v8722 = vunpack.c.l.b16 %v8436
  %v8723 = vunpack.c.h.b16 %v8436
  %v8724 = vunpack.c.l.b16 %v8437
  %v8725 = vunpack.c.l.b16 %v8438
  %v8726 = vunpack.c.h.b16 %v8438
  %v8727 = vunpack.c.l.b16 %v8439
  %v8728 = vunpack.c.l.b16 %v8440
  %v8729 = vunpack.c.h.b16 %v8440
  %v8730 = vunpack.c.l.b16 %v8441
  %v8731 = vunpack.c.l.b16 %v8442
  %v8732 = vunpack.c.h.b16 %v8442
  %v8733 = vunpack.c.l.b16 %v8443
  %v8734 = vunpack.c.l.b16 %v8444
  %v8735 = vunpack.c.h.b16 %v8444
  %v8736 = vunpack.c.l.b16 %v8445
  %v8737 = vunpack.c.l.b16 %v8446
  %v8738 = vunpack.c.h.b16 %v8446
  %v8739 = vunpack.c.l.b16 %v8447
  %v8740 = vunpack.c.l.b16 %v8448
  %v8741 = vunpack.c.h.b16 %v8448
  %v8742 = vunpack.c.l.b16 %v8449
  %v8743 = vunpack.c.l.b16 %v8450
  %v8744 = vunpack.c.h.b16 %v8450
  %v8745 = vunpack.c.l.b16 %v8451
  %v8746 = vunpack.c.l.b16 %v8452
  %v8747 = vunpack.c.h.b16 %v8452
  %v8748 = vunpack.c.l.b16 %v8453
  %v8749 = vunpack.c.l.b16 %v8454
  %v8750 = vunpack.c.h.b16 %v8454
  %v8751 = vunpack.c.l.b16 %v8455
  %v8752 = vunpack.c.l.b16 %v8456
  %v8753 = vunpack.c.h.b16 %v8456
  %v8754 = vunpack.c.l.b16 %v8457
  %v8755 = vunpack.c.l.b16 %v8458
  %v8756 = vunpack.c.h.b16 %v8458
  %v8757 = vunpack.c.l.b16 %v8459
  %v8758 = vunpack.c.l.b16 %v8460
  %v8759 = vunpack.c.h.b16 %v8460
  %v8760 = vunpack.c.l.b16 %v8461
  %v8761 = vunpack.c.l.b16 %v8462
  %v8762 = vunpack.c.h.b16 %v8462
  %v8763 = vunpack.c.l.b16 %v8463
  %v8764 = vunpack.c.l.b16 %v8464
  %v8765 = vunpack.c.h.b16 %v8464
  %v8766 = vunpack.c.l.b16 %v8465
  %v8767 = vunpack.c.l.b16 %v8466
  %v8768 = vunpack.c.h.b16 %v8466
  %v8769 = vunpack.c.l.b16 %v8467
  %v8770 = vunpack.c.l.b16 %v8468
  %v8771 = vunpack.c.h.b16 %v8468
  %v8772 = vunpack.c.l.b16 %v8469
  %v8773 = vunpack.c.l.b16 %v8470
  %v8774 = vunpack.c.h.b16 %v8470
  %v8775 = vunpack.c.l.b16 %v8471
  %v8776 = vunpack.c.l.b16 %v8472
  %v8777 = vunpack.c.h.b16 %v8472
  %v8778 = vunpack.c.l.b16 %v8473
  %v8779 = vunpack.c.l.b16 %v8474
  %v8780 = vunpack.c.h.b16 %v8474
  %v8781 = vunpack.c.l.b16 %v8475
  %v8782 = vunpack.c.l.b16 %v8476
  %v8783 = vunpack.c.h.b16 %v8476
  %v8784 = vunpack.c.l.b16 %v8477
  %v8785 = vunpack.c.l.b16 %v8478
  %v8786 = vunpack.c.h.b16 %v8478
  %v8787 = vunpack.c.l.b16 %v8479
  %v8788 = vunpack.c.l.b16 %v8480
  %v8789 = vunpack.c.h.b16 %v8480
  %v8790 = vunpack.c.l.b16 %v8481
  %v8791 = vunpack.c.l.b16 %v8482
  %v8792 = vunpack.c.h.b16 %v8482
  %v8793 = vunpack.c.l.b16 %v8483
  %v8794 = vunpack.c.l.b16 %v8484
  %v8795 = vunpack.c.h.b16 %v8484
  %v8796 = vunpack.c.l.b16 %v8485
  %v8797 = vunpack.c.l.b16 %v8486
  %v8798 = vunpack.c.h.b16 %v8486
  %v8799 = vunpack.c.l.b16 %v8487
  %v8800 = vunpack.c.l.b16 %v8488
  %v8801 = vunpack.c.h.b16 %v8488
  %v8802 = vunpack.c.l.b16 %v8489
  %v8803 = vunpack.c.l.b16 %v8490
  %v8804 = vunpack.c.h.b16 %v8490
  %v8805 = vunpack.c.l.b16 %v8491
  %v8806 = vunpack.c.l.b16 %v8492
  %v8807 = vunpack.c.h.b16 %v8492
  %v8808 = vunpack.c.l.b16 %v8493
  %v8809 = vunpack.c.l.b16 %v8494
  %v8810 = vunpack.c.h.b16 %v8494
  %v8811 = vunpack.c.l.b16 %v8495
  %v8812 = vunpack.c.l.b16 %v8496
  %v8813 = vunpack.c.h.b16 %v8496
  %v8814 = vunpack.c.l.b16 %v8497
  %v8815 = vunpack.c.l.b16 %v8498
  %v8816 = vunpack.c.h.b16 %v8498
  %v8817 = vunpack.c.l.b16 %v8499
  %v8818 = vunpack.c.l.b16 %v8500
  %v8819 = vunpack.c.h.b16 %v8500
  %v8820 = vunpack.c.l.b16 %v8501
  %v8821 = vunpack.c.l.b16 %v8502
  %v8822 = vunpack.c.h.b16 %v8502
  %v8823 = vunpack.c.l.b16 %v8503
  %v8824 = vunpack.c.l.b16 %v8504
  %v8825 = vunpack.c.h.b16 %v8504
  %v8826 = vunpack.c.l.b16 %v8505
  %v8827 = vunpack.c.l.b16 %v8506
  %v8828 = vunpack.c.h.b16 %v8506
  %v8829 = vunpack.c.l.b16 %v8507
  %v8830 = vunpack.c.l.b16 %v8508
  %v8831 = vunpack.c.h.b16 %v8508
  %v8832 = vunpack.c.l.b16 %v8509
  %v8833 = vunpack.c.l.b16 %v8510
  %v8834 = vunpack.c.h.b16 %v8510
  %v8835 = vunpack.c.l.b16 %v8511
  %v8836 = vunpack.c.l.b16 %v8512
  %v8837 = vunpack.c.h.b16 %v8512
  %v8838 = vunpack.c.l.b16 %v8513
  %v8839 = vunpack.c.l.b16 %v8514
  %v8840 = vunpack.c.h.b16 %v8514
  %v8841 = vunpack.c.l.b16 %v8515
  %v8842 = vunpack.c.l.b16 %v8516
  %v8843 = vunpack.c.h.b16 %v8516
  %v8844 = vunpack.c.l.b16 %v8517
  %v8845 = vunpack.c.l.b16 %v8518
  %v8846 = vunpack.c.h.b16 %v8518
  %v8847 = vunpack.c.l.b16 %v8519
  %v8848 = vunpack.c.l.b16 %v8520
  %v8849 = vunpack.c.h.b16 %v8520
  %v8850 = vunpack.c.l.b16 %v8521
  %v8851 = vunpack.c.l.b16 %v8522
  %v8852 = vunpack.c.h.b16 %v8522
  %v8853 = vunpack.c.l.b16 %v8523
  %v8854 = vunpack.c.l.b16 %v8524
  %v8855 = vunpack.c.h.b16 %v8524
  %v8856 = vunpack.c.l.b16 %v8525
  %v8857 = vunpack.c.l.b16 %v8526
  %v8858 = vunpack.c.h.b16 %v8526
  %v8859 = vunpack.c.l.b16 %v8527
  %v8860 = vunpack.c.l.b16 %v8528
  %v8861 = vunpack.c.h.b16 %v8528
  %v8862 = vunpack.c.l.b16 %v8529
  %v8863 = vunpack.c.l.b16 %v8530
  %v8864 = vunpack.c.h.b16 %v8530
  %v8865 = vunpack.c.l.b16 %v8531
  %v8866 = vunpack.c.l.b16 %v8532
  %v8867 = vunpack.c.h.b16 %v8532
  %v8868 = vunpack.c.l.b16 %v8533
  %v8869 = vunpack.c.l.b16 %v8534
  %v8870 = vunpack.c.h.b16 %v8534
  %v8871 = vunpack.c.l.b16 %v8535
  %v8872 = vunpack.c.l.b16 %v8536
  %v8873 = vunpack.c.h.b16 %v8536
  %v8874 = vunpack.c.l.b16 %v8537
  %v8875 = vpack.c.b16 %v8686, %v8683
  %v8876 = vpack.c.b16 %v8687, %v8684
  %v8877 = vpack.c.b16 %v8688, %v8685
  %v8878 = vpack.c.b16 %v8692, %v8689
  %v8879 = vpack.c.b16 %v8693, %v8690
  %v8880 = vpack.c.b16 %v8694, %v8691
  %v8881 = vpack.c.b16 %v8698, %v8695
  %v8882 = vpack.c.b16 %v8699, %v8696
  %v8883 = vpack.c.b16 %v8700, %v8697
  %v8884 = vpack.c.b16 %v8704, %v8701
  %v8885 = vpack.c.b16 %v8705, %v8702
  %v8886 = vpack.c.b16 %v8706, %v8703
  %v8887 = vpack.c.b16 %v8710, %v8707
  %v8888 = vpack.c.b16 %v8711, %v8708
  %v8889 = vpack.c.b16 %v8712, %v8709
  %v8890 = vpack.c.b16 %v8716, %v8713
  %v8891 = vpack.c.b16 %v8717, %v8714
  %v8892 = vpack.c.b16 %v8718, %v8715
  %v8893 = vpack.c.b16 %v8722, %v8719
  %v8894 = vpack.c.b16 %v8723, %v8720
  %v8895 = vpack.c.b16 %v8724, %v8721
  %v8896 = vpack.c.b16 %v8728, %v8725
  %v8897 = vpack.c.b16 %v8729, %v8726
  %v8898 = vpack.c.b16 %v8730, %v8727
  %v8899 = vpack.c.b16 %v8734, %v8731
  %v8900 = vpack.c.b16 %v8735, %v8732
  %v8901 = vpack.c.b16 %v8736, %v8733
  %v8902 = vpack.c.b16 %v8740, %v8737
  %v8903 = vpack.c.b16 %v8741, %v8738
  %v8904 = vpack.c.b16 %v8742, %v8739
  %v8905 = vpack.c.b16 %v8746, %v8743
  %v8906 = vpack.c.b16 %v8747, %v8744
  %v8907 = vpack.c.b16 %v8748, %v8745
  %v8908 = vpack.c.b16 %v8752, %v8749
  %v8909 = vpack.c.b16 %v8753, %v8750
  %v8910 = vpack.c.b16 %v8754, %v8751
  %v8911 = vpack.c.b16 %v8758, %v8755
  %v8912 = vpack.c.b16 %v8759, %v8756
  %v8913 = vpack.c.b16 %v8760, %v8757
  %v8914 = vpack.c.b16 %v8764, %v8761
  %v8915 = vpack.c.b16 %v8765, %v8762
  %v8916 = vpack.c.b16 %v8766, %v8763
  %v8917 = vpack.c.b16 %v8770, %v8767
  %v8918 = vpack.c.b16 %v8771, %v8768
  %v8919 = vpack.c.b16 %v8772, %v8769
  %v8920 = vpack.c.b16 %v8776, %v8773
  %v8921 = vpack.c.b16 %v8777, %v8774
  %v8922 = vpack.c.b16 %v8778, %v8775
  %v8923 = vpack.c.b16 %v8782, %v8779
  %v8924 = vpack.c.b16 %v8783, %v8780
  %v8925 = vpack.c.b16 %v8784, %v8781
  %v8926 = vpack.c.b16 %v8788, %v8785
  %v8927 = vpack.c.b16 %v8789, %v8786
  %v8928 = vpack.c.b16 %v8790, %v8787
  %v8929 = vpack.c.b16 %v8794, %v8791
  %v8930 = vpack.c.b16 %v8795, %v8792
  %v8931 = vpack.c.b16 %v8796, %v8793
  %v8932 = vpack.c.b16 %v8800, %v8797
  %v8933 = vpack.c.b16 %v8801, %v8798
  %v8934 = vpack.c.b16 %v8802, %v8799
  %v8935 = vpack.c.b16 %v8806, %v8803
  %v8936 = vpack.c.b16 %v8807, %v8804
  %v8937 = vpack.c.b16 %v8808, %v8805
  %v8938 = vpack.c.b16 %v8812, %v8809
  %v8939 = vpack.c.b16 %v8813, %v8810
  %v8940 = vpack.c.b16 %v8814, %v8811
  %v8941 = vpack.c.b16 %v8818, %v8815
  %v8942 = vpack.c.b16 %v8819, %v8816
  %v8943 = vpack.c.b16 %v8820, %v8817
  %v8944 = vpack.c.b16 %v8824, %v8821
  %v8945 = vpack.c.b16 %v8825, %v8822
  %v8946 = vpack.c.b16 %v8826, %v8823
  %v8947 = vpack.c.b16 %v8830, %v8827
  %v8948 = vpack.c.b16 %v8831, %v8828
  %v8949 = vpack.c.b16 %v8832, %v8829
  %v8950 = vpack.c.b16 %v8836, %v8833
  %v8951 = vpack.c.b16 %v8837, %v8834
  %v8952 = vpack.c.b16 %v8838, %v8835
  %v8953 = vpack.c.b16 %v8842, %v8839
  %v8954 = vpack.c.b16 %v8843, %v8840
  %v8955 = vpack.c.b16 %v8844, %v8841
  %v8956 = vpack.c.b16 %v8848, %v8845
  %v8957 = vpack.c.b16 %v8849, %v8846
  %v8958 = vpack.c.b16 %v8850, %v8847
  %v8959 = vpack.c.b16 %v8854, %v8851
  %v8960 = vpack.c.b16 %v8855, %v8852
  %v8961 = vpack.c.b16 %v8856, %v8853
  %v8962 = vpack.c.b16 %v8860, %v8857
  %v8963 = vpack.c.b16 %v8861, %v8858
  %v8964 = vpack.c.b16 %v8862, %v8859
  %v8965 = vpack.c.b16 %v8866, %v8863
  %v8966 = vpack.c.b16 %v8867, %v8864
  %v8967 = vpack.c.b16 %v8868, %v8865
  %v8968 = vpack.c.b16 %v8872, %v8869
  %v8969 = vpack.c.b16 %v8873, %v8870
  %v8970 = vpack.c.b16 %v8874, %v8871
  %9067 = vmatprep.subr.bf16.mxu0 %v8897
  %9068 = vmatpush1.bf16.msra.mxu0 %v8896
  %9069 = vmatprep.subr.bf16.mxu0 %v8894
  %9070 = vmatpush1.bf16.msra.mxu0 %v8893
  %9071 = vmatprep.subr.bf16.mxu0 %v8891
  %9072 = vmatpush1.bf16.msra.mxu0 %v8890
  %9073 = vmatprep.subr.bf16.mxu0 %v8888
  %9074 = vmatpush1.bf16.msra.mxu0 %v8887
  %9075 = vmatprep.subr.bf16.mxu0 %v8885
  %9076 = vmatpush1.bf16.msra.mxu0 %v8884
  %9077 = vmatprep.subr.bf16.mxu0 %v8882
  %9078 = vmatpush1.bf16.msra.mxu0 %v8881
  %9079 = vmatprep.subr.bf16.mxu0 %v8879
  %9080 = vmatpush1.bf16.msra.mxu0 %v8878
  %9081 = vmatprep.subr.bf16.mxu0 %v8876
  %9082 = vmatpush1.bf16.msra.mxu0 %v8875
  %9083 = vmatprep.subr.bf16.mxu0 %v8921
  %9084 = vmatpush2.bf16.msra.mxu0 %v8920
  %9085 = vmatprep.subr.bf16.mxu0 %v8918
  %9086 = vmatpush2.bf16.msra.mxu0 %v8917
  %9087 = vmatprep.subr.bf16.mxu0 %v8915
  %9088 = vmatpush2.bf16.msra.mxu0 %v8914
  %9089 = vmatprep.subr.bf16.mxu0 %v8912
  %9090 = vmatpush2.bf16.msra.mxu0 %v8911
  %9091 = vmatprep.subr.bf16.mxu0 %v8909
  %9092 = vmatpush2.bf16.msra.mxu0 %v8908
  %9093 = vmatprep.subr.bf16.mxu0 %v8906
  %9094 = vmatpush2.bf16.msra.mxu0 %v8905
  %9095 = vmatprep.subr.bf16.mxu0 %v8903
  %9096 = vmatpush2.bf16.msra.mxu0 %v8902
  %9097 = vmatprep.subr.bf16.mxu0 %v8900
  %9098 = vmatpush2.bf16.msra.mxu0 %v8899
  %9099 = vmatprep.mubr.bf16.mxu0 %v8407
  %9100 = vmatmul.mubr.bf16.gmra.mxu0 %v8406
  %v9101 = vpop.f32.mrf.mxu0
  %v9102 = vadd.f32 %v8543, %v9101
  %v9103 = vpop.f32.mrf.mxu0
  %v9104 = vadd.f32 %v8547, %v9103
  %v9105 = vpop.f32.mrf.mxu0
  %v9106 = vpop.f32.mrf.mxu0
  %9107 = vdwg.mxu0
  %9108 = vmatprep.subr.bf16.mxu0 %v8945
  %9109 = vmatpush1.bf16.msra.mxu0 %v8944
  %9110 = vmatprep.subr.bf16.mxu0 %v8942
  %9111 = vmatpush1.bf16.msra.mxu0 %v8941
  %9112 = vmatprep.subr.bf16.mxu0 %v8939
  %9113 = vmatpush1.bf16.msra.mxu0 %v8938
  %9114 = vmatprep.subr.bf16.mxu0 %v8936
  %9115 = vmatpush1.bf16.msra.mxu0 %v8935
  %9116 = vmatprep.subr.bf16.mxu0 %v8933
  %9117 = vmatpush1.bf16.msra.mxu0 %v8932
  %9118 = vmatprep.subr.bf16.mxu0 %v8930
  %9119 = vmatpush1.bf16.msra.mxu0 %v8929
  %9120 = vmatprep.subr.bf16.mxu0 %v8927
  %9121 = vmatpush1.bf16.msra.mxu0 %v8926
  %9122 = vmatprep.subr.bf16.mxu0 %v8924
  %9123 = vmatpush1.bf16.msra.mxu0 %v8923
  %9124 = vmatprep.subr.bf16.mxu0 %v8969
  %9125 = vmatpush2.bf16.msra.mxu0 %v8968
  %9126 = vmatprep.subr.bf16.mxu0 %v8966
  %9127 = vmatpush2.bf16.msra.mxu0 %v8965
  %9128 = vmatprep.subr.bf16.mxu0 %v8963
  %9129 = vmatpush2.bf16.msra.mxu0 %v8962
  %9130 = vmatprep.subr.bf16.mxu0 %v8960
  %9131 = vmatpush2.bf16.msra.mxu0 %v8959
  %9132 = vmatprep.subr.bf16.mxu0 %v8957
  %9133 = vmatpush2.bf16.msra.mxu0 %v8956
  %9134 = vmatprep.subr.bf16.mxu0 %v8954
  %9135 = vmatpush2.bf16.msra.mxu0 %v8953
  %9136 = vmatprep.subr.bf16.mxu0 %v8951
  %9137 = vmatpush2.bf16.msra.mxu0 %v8950
  %9138 = vmatprep.subr.bf16.mxu0 %v8948
  %9139 = vmatpush2.bf16.msra.mxu0 %v8947
  %9140 = vmatprep.mubr.bf16.mxu0 %v8409
  %9141 = vmatmul.mubr.bf16.gmra.mxu0 %v8408
  %v9142 = vpop.f32.mrf.mxu0
  %v9143 = vadd.f32 %v9102, %v9142
  %v9144 = vpop.f32.mrf.mxu0
  %v9145 = vadd.f32 %v9104, %v9144
  %v9146 = vpop.f32.mrf.mxu0
  %v9147 = vpop.f32.mrf.mxu0
  %9148 = vdwg.mxu0
  %9149 = vmatprep.subr.bf16.mxu0 0
  %9150 = vmatpush1.bf16.msra.mxu0 %v8898
  %9151 = vmatprep.subr.bf16.mxu0 0
  %9152 = vmatpush1.bf16.msra.mxu0 %v8895
  %9153 = vmatprep.subr.bf16.mxu0 0
  %9154 = vmatpush1.bf16.msra.mxu0 %v8892
  %9155 = vmatprep.subr.bf16.mxu0 0
  %9156 = vmatpush1.bf16.msra.mxu0 %v8889
  %9157 = vmatprep.subr.bf16.mxu0 0
  %9158 = vmatpush1.bf16.msra.mxu0 %v8886
  %9159 = vmatprep.subr.bf16.mxu0 0
  %9160 = vmatpush1.bf16.msra.mxu0 %v8883
  %9161 = vmatprep.subr.bf16.mxu0 0
  %9162 = vmatpush1.bf16.msra.mxu0 %v8880
  %9163 = vmatprep.subr.bf16.mxu0 0
  %9164 = vmatpush1.bf16.msra.mxu0 %v8877
  %9165 = vmatprep.subr.bf16.mxu0 0
  %9166 = vmatpush2.bf16.msra.mxu0 %v8922
  %9167 = vmatprep.subr.bf16.mxu0 0
  %9168 = vmatpush2.bf16.msra.mxu0 %v8919
  %9169 = vmatprep.subr.bf16.mxu0 0
  %9170 = vmatpush2.bf16.msra.mxu0 %v8916
  %9171 = vmatprep.subr.bf16.mxu0 0
  %9172 = vmatpush2.bf16.msra.mxu0 %v8913
  %9173 = vmatprep.subr.bf16.mxu0 0
  %9174 = vmatpush2.bf16.msra.mxu0 %v8910
  %9175 = vmatprep.subr.bf16.mxu0 0
  %9176 = vmatpush2.bf16.msra.mxu0 %v8907
  %9177 = vmatprep.subr.bf16.mxu0 0
  %9178 = vmatpush2.bf16.msra.mxu0 %v8904
  %9179 = vmatprep.subr.bf16.mxu0 0
  %9180 = vmatpush2.bf16.msra.mxu0 %v8901
  %9181 = vmatprep.mubr.bf16.mxu0 %v8407
  %9182 = vmatmul.mubr.bf16.gmra.mxu0 %v8406
  %v9183 = vpop.f32.mrf.mxu0
  %v9184 = vadd.f32 %v8551, %v9183
  %v9185 = vpop.f32.mrf.mxu0
  %v9186 = vpop.f32.mrf.mxu0
  %v9187 = vpop.f32.mrf.mxu0
  %9188 = vdwg.mxu0
  %9189 = vmatprep.subr.bf16.mxu0 0
  %9190 = vmatpush1.bf16.msra.mxu0 %v8946
  %9191 = vmatprep.subr.bf16.mxu0 0
  %9192 = vmatpush1.bf16.msra.mxu0 %v8943
  %9193 = vmatprep.subr.bf16.mxu0 0
  %9194 = vmatpush1.bf16.msra.mxu0 %v8940
  %9195 = vmatprep.subr.bf16.mxu0 0
  %9196 = vmatpush1.bf16.msra.mxu0 %v8937
  %9197 = vmatprep.subr.bf16.mxu0 0
  %9198 = vmatpush1.bf16.msra.mxu0 %v8934
  %9199 = vmatprep.subr.bf16.mxu0 0
  %9200 = vmatpush1.bf16.msra.mxu0 %v8931
  %9201 = vmatprep.subr.bf16.mxu0 0
  %9202 = vmatpush1.bf16.msra.mxu0 %v8928
  %9203 = vmatprep.subr.bf16.mxu0 0
  %9204 = vmatpush1.bf16.msra.mxu0 %v8925
  %9205 = vmatprep.subr.bf16.mxu0 0
  %9206 = vmatpush2.bf16.msra.mxu0 %v8970
  %9207 = vmatprep.subr.bf16.mxu0 0
  %9208 = vmatpush2.bf16.msra.mxu0 %v8967
  %9209 = vmatprep.subr.bf16.mxu0 0
  %9210 = vmatpush2.bf16.msra.mxu0 %v8964
  %9211 = vmatprep.subr.bf16.mxu0 0
  %9212 = vmatpush2.bf16.msra.mxu0 %v8961
  %9213 = vmatprep.subr.bf16.mxu0 0
  %9214 = vmatpush2.bf16.msra.mxu0 %v8958
  %9215 = vmatprep.subr.bf16.mxu0 0
  %9216 = vmatpush2.bf16.msra.mxu0 %v8955
  %9217 = vmatprep.subr.bf16.mxu0 0
  %9218 = vmatpush2.bf16.msra.mxu0 %v8952
  %9219 = vmatprep.subr.bf16.mxu0 0
  %9220 = vmatpush2.bf16.msra.mxu0 %v8949
  %9221 = vmatprep.mubr.bf16.mxu0 %v8409
  %9222 = vmatmul.mubr.bf16.gmra.mxu0 %v8408
  %v9223 = vpop.f32.mrf.mxu0
  %v9224 = vadd.f32 %v9184, %v9223
  %v9225 = vpop.f32.mrf.mxu0
  %v9226 = vpop.f32.mrf.mxu0
  %v9227 = vpop.f32.mrf.mxu0
  %9228 = vdwg.mxu0
  %vm9229 = vcmask 1041408
  %v9230 = vsel %vm9229, %v9143, -inf
  %v9231 = vsel %vm9229, %v9145, -inf
  %v9232 = vsel %vm9229, %v9224, -inf
  %v9233 = vmax.f32 %v9230, %v9231
  %v9234 = vmax.f32 %v9233, %v9232
  %9235 = vmax.xlane.f32.xlu0 %v9234
  %v9236 = vpop.xlane.xlu0 %9235
  %v9237 = vsub.f32 %v9143, %v9236
  %v9238 = vsub.f32 %v9145, %v9236
  %v9239 = vsub.f32 %v9224, %v9236
  %v9240 = vmul.f32 %v9237, 1.442695
  %v9241 = vpow.pop %v9240
  %v9242 = vmul.f32 %v9238, 1.442695
  %v9243 = vpow.pop %v9242
  %v9244 = vmul.f32 %v9239, 1.442695
  %v9245 = vpow.pop %v9244
  %v9246 = vld [vmem:[%s9] sm:$0xff]
  %v9247 = vld [vmem:[%s9 + $0x8] sm:$0xff]
  %v9248 = vld [vmem:[%s9 + $0x10] sm:$0xff]
  %v9249 = vld [vmem:[%s9 + $0x18] sm:$0xff]
  %v9250 = vld [vmem:[%s9 + $0x20] sm:$0xff]
  %v9251 = vld [vmem:[%s9 + $0x28] sm:$0xff]
  %v9252 = vld [vmem:[%s9 + $0x30] sm:$0xff]
  %v9253 = vld [vmem:[%s9 + $0x38] sm:$0xff]
  %v9254 = vld [vmem:[%s9 + $0x40] sm:$0xff]
  %v9255 = vld [vmem:[%s9 + $0x48] sm:$0xff]
  %v9256 = vld [vmem:[%s9 + $0x50] sm:$0xff]
  %v9257 = vld [vmem:[%s9 + $0x58] sm:$0xff]
  %v9258 = vld [vmem:[%s9 + $0x60] sm:$0xff]
  %v9259 = vld [vmem:[%s9 + $0x68] sm:$0xff]
  %v9260 = vld [vmem:[%s9 + $0x70] sm:$0xff]
  %v9261 = vld [vmem:[%s9 + $0x78] sm:$0xff]
  %v9262 = vld [vmem:[%s9 + $0x80] sm:$0xff]
  %v9263 = vld [vmem:[%s9 + $0x88] sm:$0xff]
  %v9264 = vld [vmem:[%s9 + $0x90] sm:$0xff]
  %v9265 = vld [vmem:[%s9 + $0x98] sm:$0xff]
  %v9266 = vld [vmem:[%s9 + $0xa0] sm:$0xff]
  %v9267 = vld [vmem:[%s9 + $0xa8] sm:$0xff]
  %v9268 = vld [vmem:[%s9 + $0xb0] sm:$0xff]
  %v9269 = vld [vmem:[%s9 + $0xb8] sm:$0xff]
  %v9270 = vld [vmem:[%s9 + $0xc0] sm:$0xff]
  %v9271 = vld [vmem:[%s9 + $0xc8] sm:$0xff]
  %v9272 = vld [vmem:[%s9 + $0xd0] sm:$0xff]
  %v9273 = vld [vmem:[%s9 + $0xd8] sm:$0xff]
  %v9274 = vld [vmem:[%s9 + $0xe0] sm:$0xff]
  %v9275 = vld [vmem:[%s9 + $0xe8] sm:$0xff]
  %v9276 = vld [vmem:[%s9 + $0xf0] sm:$0xff]
  %v9277 = vld [vmem:[%s9 + $0xf8] sm:$0xff]
  %v9278 = vld [vmem:[%s9 + $0x100] sm:$0xff]
  %v9279 = vld [vmem:[%s9 + $0x108] sm:$0xff]
  %v9280 = vld [vmem:[%s9 + $0x110] sm:$0xff]
  %v9281 = vld [vmem:[%s9 + $0x118] sm:$0xff]
  %v9282 = vld [vmem:[%s9 + $0x120] sm:$0xff]
  %v9283 = vld [vmem:[%s9 + $0x128] sm:$0xff]
  %v9284 = vld [vmem:[%s9 + $0x130] sm:$0xff]
  %v9285 = vld [vmem:[%s9 + $0x138] sm:$0xff]
  %v9286 = vld [vmem:[%s9 + $0x140] sm:$0xff]
  %v9287 = vld [vmem:[%s9 + $0x148] sm:$0xff]
  %v9288 = vld [vmem:[%s9 + $0x150] sm:$0xff]
  %v9289 = vld [vmem:[%s9 + $0x158] sm:$0xff]
  %v9290 = vld [vmem:[%s9 + $0x160] sm:$0xff]
  %v9291 = vld [vmem:[%s9 + $0x168] sm:$0xff]
  %v9292 = vld [vmem:[%s9 + $0x170] sm:$0xff]
  %v9293 = vld [vmem:[%s9 + $0x178] sm:$0xff]
  %v9294 = vld [vmem:[%s9 + $0x180] sm:$0xff]
  %v9295 = vld [vmem:[%s9 + $0x188] sm:$0xff]
  %v9296 = vld [vmem:[%s9 + $0x190] sm:$0xff]
  %v9297 = vld [vmem:[%s9 + $0x198] sm:$0xff]
  %v9298 = vld [vmem:[%s9 + $0x1a0] sm:$0xff]
  %v9299 = vld [vmem:[%s9 + $0x1a8] sm:$0xff]
  %v9300 = vld [vmem:[%s9 + $0x1b0] sm:$0xff]
  %v9301 = vld [vmem:[%s9 + $0x1b8] sm:$0xff]
  %v9302 = vld [vmem:[%s9 + $0x1c0] sm:$0xff]
  %v9303 = vld [vmem:[%s9 + $0x1c8] sm:$0xff]
  %v9304 = vld [vmem:[%s9 + $0x1d0] sm:$0xff]
  %v9305 = vld [vmem:[%s9 + $0x1d8] sm:$0xff]
  %v9306 = vld [vmem:[%s9 + $0x1e0] sm:$0xff]
  %v9307 = vld [vmem:[%s9 + $0x1e8] sm:$0xff]
  %v9308 = vld [vmem:[%s9 + $0x1f0] sm:$0xff]
  %v9309 = vld [vmem:[%s9 + $0x1f8] sm:$0xff]
  %v9310 = vld [vmem:[%s9 + $0x200] sm:$0xff]
  %v9311 = vld [vmem:[%s9 + $0x208] sm:$0xff]
  %v9312 = vld [vmem:[%s9 + $0x210] sm:$0xff]
  %v9313 = vld [vmem:[%s9 + $0x218] sm:$0xff]
  %v9314 = vld [vmem:[%s9 + $0x220] sm:$0xff]
  %v9315 = vld [vmem:[%s9 + $0x228] sm:$0xff]
  %v9316 = vld [vmem:[%s9 + $0x230] sm:$0xff]
  %v9317 = vld [vmem:[%s9 + $0x238] sm:$0xff]
  %v9318 = vld [vmem:[%s9 + $0x240] sm:$0xff]
  %v9319 = vld [vmem:[%s9 + $0x248] sm:$0xff]
  %v9320 = vld [vmem:[%s9 + $0x250] sm:$0xff]
  %v9321 = vld [vmem:[%s9 + $0x258] sm:$0xff]
  %v9322 = vld [vmem:[%s9 + $0x260] sm:$0xff]
  %v9323 = vld [vmem:[%s9 + $0x268] sm:$0xff]
  %v9324 = vld [vmem:[%s9 + $0x270] sm:$0xff]
  %v9325 = vld [vmem:[%s9 + $0x278] sm:$0xff]
  %v9326 = vld [vmem:[%s9 + $0x280] sm:$0xff]
  %v9327 = vld [vmem:[%s9 + $0x288] sm:$0xff]
  %v9328 = vld [vmem:[%s9 + $0x290] sm:$0xff]
  %v9329 = vld [vmem:[%s9 + $0x298] sm:$0xff]
  %v9330 = vld [vmem:[%s9 + $0x2a0] sm:$0xff]
  %v9331 = vld [vmem:[%s9 + $0x2a8] sm:$0xff]
  %v9332 = vld [vmem:[%s9 + $0x2b0] sm:$0xff]
  %v9333 = vld [vmem:[%s9 + $0x2b8] sm:$0xff]
  %v9334 = vld [vmem:[%s9 + $0x2c0] sm:$0xff]
  %v9335 = vld [vmem:[%s9 + $0x2c8] sm:$0xff]
  %v9336 = vld [vmem:[%s9 + $0x2d0] sm:$0xff]
  %v9337 = vld [vmem:[%s9 + $0x2d8] sm:$0xff]
  %v9338 = vld [vmem:[%s9 + $0x2e0] sm:$0xff]
  %v9339 = vld [vmem:[%s9 + $0x2e8] sm:$0xff]
  %v9340 = vld [vmem:[%s9 + $0x2f0] sm:$0xff]
  %v9341 = vld [vmem:[%s9 + $0x2f8] sm:$0xff]
  %v9342 = vld [vmem:[%s9 + $0x300] sm:$0xff]
  %v9343 = vld [vmem:[%s9 + $0x308] sm:$0xff]
  %v9344 = vld [vmem:[%s9 + $0x310] sm:$0xff]
  %v9345 = vld [vmem:[%s9 + $0x318] sm:$0xff]
  %v9346 = vld [vmem:[%s9 + $0x320] sm:$0xff]
  %v9347 = vld [vmem:[%s9 + $0x328] sm:$0xff]
  %v9348 = vld [vmem:[%s9 + $0x330] sm:$0xff]
  %v9349 = vld [vmem:[%s9 + $0x338] sm:$0xff]
  %v9350 = vld [vmem:[%s9 + $0x340] sm:$0xff]
  %v9351 = vld [vmem:[%s9 + $0x348] sm:$0xff]
  %v9352 = vld [vmem:[%s9 + $0x350] sm:$0xff]
  %v9353 = vld [vmem:[%s9 + $0x358] sm:$0xff]
  %v9354 = vld [vmem:[%s9 + $0x360] sm:$0xff]
  %v9355 = vld [vmem:[%s9 + $0x368] sm:$0xff]
  %v9356 = vld [vmem:[%s9 + $0x370] sm:$0xff]
  %v9357 = vld [vmem:[%s9 + $0x378] sm:$0xff]
  %v9358 = vld [vmem:[%s9 + $0x380] sm:$0xff]
  %v9359 = vld [vmem:[%s9 + $0x388] sm:$0xff]
  %v9360 = vld [vmem:[%s9 + $0x390] sm:$0xff]
  %v9361 = vld [vmem:[%s9 + $0x398] sm:$0xff]
  %v9362 = vld [vmem:[%s9 + $0x3a0] sm:$0xff]
  %v9363 = vld [vmem:[%s9 + $0x3a8] sm:$0xff]
  %v9364 = vld [vmem:[%s9 + $0x3b0] sm:$0xff]
  %v9365 = vld [vmem:[%s9 + $0x3b8] sm:$0xff]
  %v9366 = vld [vmem:[%s9 + $0x3c0] sm:$0xff]
  %v9367 = vld [vmem:[%s9 + $0x3c8] sm:$0xff]
  %v9368 = vld [vmem:[%s9 + $0x3d0] sm:$0xff]
  %v9369 = vld [vmem:[%s9 + $0x3d8] sm:$0xff]
  %v9370 = vld [vmem:[%s9 + $0x3e0] sm:$0xff]
  %v9371 = vld [vmem:[%s9 + $0x3e8] sm:$0xff]
  %v9372 = vld [vmem:[%s9 + $0x3f0] sm:$0xff]
  %v9373 = vld [vmem:[%s9 + $0x3f8] sm:$0xff]
  %v9374 = vld [vmem:[%s9 + $0x400] sm:$0xff]
  %v9375 = vld [vmem:[%s9 + $0x408] sm:$0xff]
  %v9376 = vld [vmem:[%s9 + $0x410] sm:$0xff]
  %v9377 = vld [vmem:[%s9 + $0x418] sm:$0xff]
  %v9378 = vld [vmem:[%s9 + $0x420] sm:$0xff]
  %v9379 = vld [vmem:[%s9 + $0x428] sm:$0xff]
  %v9380 = vld [vmem:[%s9 + $0x430] sm:$0xff]
  %v9381 = vld [vmem:[%s9 + $0x438] sm:$0xff]
  %v9382 = vld [vmem:[%s9 + $0x440] sm:$0xff]
  %v9383 = vld [vmem:[%s9 + $0x448] sm:$0xff]
  %v9384 = vld [vmem:[%s9 + $0x450] sm:$0xff]
  %v9385 = vld [vmem:[%s9 + $0x458] sm:$0xff]
  %v9386 = vld [vmem:[%s9 + $0x460] sm:$0xff]
  %v9387 = vld [vmem:[%s9 + $0x468] sm:$0xff]
  %v9388 = vld [vmem:[%s9 + $0x470] sm:$0xff]
  %v9389 = vld [vmem:[%s9 + $0x478] sm:$0xff]
  %9390 = vmatprep.subr.mxu0 %v9292
  %9391 = vmatpush1.msra.mxu0 %v9291
  %9392 = vmatprep.subr.mxu0 %v9289
  %9393 = vmatpush1.msra.mxu0 %v9288
  %9394 = vmatprep.subr.mxu0 %v9286
  %9395 = vmatpush1.msra.mxu0 %v9285
  %9396 = vmatprep.subr.mxu0 %v9283
  %9397 = vmatpush1.msra.mxu0 %v9282
  %9398 = vmatprep.subr.mxu0 %v9280
  %9399 = vmatpush1.msra.mxu0 %v9279
  %9400 = vmatprep.subr.mxu0 %v9277
  %9401 = vmatpush1.msra.mxu0 %v9276
  %9402 = vmatprep.subr.mxu0 %v9274
  %9403 = vmatpush1.msra.mxu0 %v9273
  %9404 = vmatprep.subr.mxu0 %v9271
  %9405 = vmatpush1.msra.mxu0 %v9270
  %9406 = vmatprep.subr.mxu0 %v9268
  %9407 = vmatpush1.msra.mxu0 %v9267
  %9408 = vmatprep.subr.mxu0 %v9265
  %9409 = vmatpush1.msra.mxu0 %v9264
  %9410 = vmatprep.subr.mxu0 %v9262
  %9411 = vmatpush1.msra.mxu0 %v9261
  %9412 = vmatprep.subr.mxu0 %v9259
  %9413 = vmatpush1.msra.mxu0 %v9258
  %9414 = vmatprep.subr.mxu0 %v9256
  %9415 = vmatpush1.msra.mxu0 %v9255
  %9416 = vmatprep.subr.mxu0 %v9253
  %9417 = vmatpush1.msra.mxu0 %v9252
  %9418 = vmatprep.subr.mxu0 %v9250
  %9419 = vmatpush1.msra.mxu0 %v9249
  %9420 = vmatprep.subr.mxu0 %v9247
  %9421 = vmatpush1.msra.mxu0 %v9246
  %9422 = vmatprep.subr.mxu0 %v9340
  %9423 = vmatpush2.msra.mxu0 %v9339
  %9424 = vmatprep.subr.mxu0 %v9337
  %9425 = vmatpush2.msra.mxu0 %v9336
  %9426 = vmatprep.subr.mxu0 %v9334
  %9427 = vmatpush2.msra.mxu0 %v9333
  %9428 = vmatprep.subr.mxu0 %v9331
  %9429 = vmatpush2.msra.mxu0 %v9330
  %9430 = vmatprep.subr.mxu0 %v9328
  %9431 = vmatpush2.msra.mxu0 %v9327
  %9432 = vmatprep.subr.mxu0 %v9325
  %9433 = vmatpush2.msra.mxu0 %v9324
  %9434 = vmatprep.subr.mxu0 %v9322
  %9435 = vmatpush2.msra.mxu0 %v9321
  %9436 = vmatprep.subr.mxu0 %v9319
  %9437 = vmatpush2.msra.mxu0 %v9318
  %9438 = vmatprep.subr.mxu0 %v9316
  %9439 = vmatpush2.msra.mxu0 %v9315
  %9440 = vmatprep.subr.mxu0 %v9313
  %9441 = vmatpush2.msra.mxu0 %v9312
  %9442 = vmatprep.subr.mxu0 %v9310
  %9443 = vmatpush2.msra.mxu0 %v9309
  %9444 = vmatprep.subr.mxu0 %v9307
  %9445 = vmatpush2.msra.mxu0 %v9306
  %9446 = vmatprep.subr.mxu0 %v9304
  %9447 = vmatpush2.msra.mxu0 %v9303
  %9448 = vmatprep.subr.mxu0 %v9301
  %9449 = vmatpush2.msra.mxu0 %v9300
  %9450 = vmatprep.subr.mxu0 %v9298
  %9451 = vmatpush2.msra.mxu0 %v9297
  %9452 = vmatprep.subr.mxu0 %v9295
  %9453 = vmatpush2.msra.mxu0 %v9294
  %9454 = vmatprep.mubr.f32.mxu0 %v9243
  %9455 = vmatmul.mubr.f32.gmra.mxu0 %v9241
  %v9456 = vpop.f32.mrf.mxu0
  %v9457 = vadd.f32 1e-30, %v9456
  %v9458 = vpop.f32.mrf.mxu0
  %v9459 = vadd.f32 1e-30, %v9458
  %9460 = vdwg.mxu0
  %9461 = vmatprep.subr.mxu0 %v9388
  %9462 = vmatpush1.msra.mxu0 %v9387
  %9463 = vmatprep.subr.mxu0 %v9385
  %9464 = vmatpush1.msra.mxu0 %v9384
  %9465 = vmatprep.subr.mxu0 %v9382
  %9466 = vmatpush1.msra.mxu0 %v9381
  %9467 = vmatprep.subr.mxu0 %v9379
  %9468 = vmatpush1.msra.mxu0 %v9378
  %9469 = vmatprep.subr.mxu0 %v9376
  %9470 = vmatpush1.msra.mxu0 %v9375
  %9471 = vmatprep.subr.mxu0 %v9373
  %9472 = vmatpush1.msra.mxu0 %v9372
  %9473 = vmatprep.subr.mxu0 %v9370
  %9474 = vmatpush1.msra.mxu0 %v9369
  %9475 = vmatprep.subr.mxu0 %v9367
  %9476 = vmatpush1.msra.mxu0 %v9366
  %9477 = vmatprep.subr.mxu0 %v9364
  %9478 = vmatpush1.msra.mxu0 %v9363
  %9479 = vmatprep.subr.mxu0 %v9361
  %9480 = vmatpush1.msra.mxu0 %v9360
  %9481 = vmatprep.subr.mxu0 %v9358
  %9482 = vmatpush1.msra.mxu0 %v9357
  %9483 = vmatprep.subr.mxu0 %v9355
  %9484 = vmatpush1.msra.mxu0 %v9354
  %9485 = vmatprep.subr.mxu0 %v9352
  %9486 = vmatpush1.msra.mxu0 %v9351
  %9487 = vmatprep.subr.mxu0 %v9349
  %9488 = vmatpush1.msra.mxu0 %v9348
  %9489 = vmatprep.subr.mxu0 %v9346
  %9490 = vmatpush1.msra.mxu0 %v9345
  %9491 = vmatprep.subr.mxu0 %v9343
  %9492 = vmatpush1.msra.mxu0 %v9342
  %9493 = vmatprep.subr.mxu0 0.0
  %9494 = vmatpush2.msra.mxu0 0.0
  %9495 = vmatprep.subr.mxu0 0.0
  %9496 = vmatpush2.msra.mxu0 0.0
  %9497 = vmatprep.subr.mxu0 0.0
  %9498 = vmatpush2.msra.mxu0 0.0
  %9499 = vmatprep.subr.mxu0 0.0
  %9500 = vmatpush2.msra.mxu0 0.0
  %9501 = vmatprep.subr.mxu0 0.0
  %9502 = vmatpush2.msra.mxu0 0.0
  %9503 = vmatprep.subr.mxu0 0.0
  %9504 = vmatpush2.msra.mxu0 0.0
  %9505 = vmatprep.subr.mxu0 0.0
  %9506 = vmatpush2.msra.mxu0 0.0
  %9507 = vmatprep.subr.mxu0 0.0
  %9508 = vmatpush2.msra.mxu0 0.0
  %9509 = vmatprep.subr.mxu0 0.0
  %9510 = vmatpush2.msra.mxu0 0.0
  %9511 = vmatprep.subr.mxu0 0.0
  %9512 = vmatpush2.msra.mxu0 0.0
  %9513 = vmatprep.subr.mxu0 0.0
  %9514 = vmatpush2.msra.mxu0 0.0
  %9515 = vmatprep.subr.mxu0 0.0
  %9516 = vmatpush2.msra.mxu0 0.0
  %9517 = vmatprep.subr.mxu0 0.0
  %9518 = vmatpush2.msra.mxu0 0.0
  %9519 = vmatprep.subr.mxu0 0.0
  %9520 = vmatpush2.msra.mxu0 0.0
  %9521 = vmatprep.subr.mxu0 0.0
  %9522 = vmatpush2.msra.mxu0 0.0
  %9523 = vmatprep.subr.mxu0 0.0
  %9524 = vmatpush2.msra.mxu0 0.0
  %9525 = vmatprep.mubr.f32.mxu0 0.0
  %9526 = vmatmul.mubr.f32.gmra.mxu0 %v9245
  %v9527 = vpop.f32.mrf.mxu0
  %v9528 = vadd.f32 %v9457, %v9527
  %v9529 = vpop.f32.mrf.mxu0
  %v9530 = vadd.f32 %v9459, %v9529
  %9531 = vdwg.mxu0
  %9532 = vmatprep.subr.mxu0 0.0
  %9533 = vmatpush1.msra.mxu0 %v9293
  %9534 = vmatprep.subr.mxu0 0.0
  %9535 = vmatpush1.msra.mxu0 %v9290
  %9536 = vmatprep.subr.mxu0 0.0
  %9537 = vmatpush1.msra.mxu0 %v9287
  %9538 = vmatprep.subr.mxu0 0.0
  %9539 = vmatpush1.msra.mxu0 %v9284
  %9540 = vmatprep.subr.mxu0 0.0
  %9541 = vmatpush1.msra.mxu0 %v9281
  %9542 = vmatprep.subr.mxu0 0.0
  %9543 = vmatpush1.msra.mxu0 %v9278
  %9544 = vmatprep.subr.mxu0 0.0
  %9545 = vmatpush1.msra.mxu0 %v9275
  %9546 = vmatprep.subr.mxu0 0.0
  %9547 = vmatpush1.msra.mxu0 %v9272
  %9548 = vmatprep.subr.mxu0 0.0
  %9549 = vmatpush1.msra.mxu0 %v9269
  %9550 = vmatprep.subr.mxu0 0.0
  %9551 = vmatpush1.msra.mxu0 %v9266
  %9552 = vmatprep.subr.mxu0 0.0
  %9553 = vmatpush1.msra.mxu0 %v9263
  %9554 = vmatprep.subr.mxu0 0.0
  %9555 = vmatpush1.msra.mxu0 %v9260
  %9556 = vmatprep.subr.mxu0 0.0
  %9557 = vmatpush1.msra.mxu0 %v9257
  %9558 = vmatprep.subr.mxu0 0.0
  %9559 = vmatpush1.msra.mxu0 %v9254
  %9560 = vmatprep.subr.mxu0 0.0
  %9561 = vmatpush1.msra.mxu0 %v9251
  %9562 = vmatprep.subr.mxu0 0.0
  %9563 = vmatpush1.msra.mxu0 %v9248
  %9564 = vmatprep.subr.mxu0 0.0
  %9565 = vmatpush2.msra.mxu0 %v9341
  %9566 = vmatprep.subr.mxu0 0.0
  %9567 = vmatpush2.msra.mxu0 %v9338
  %9568 = vmatprep.subr.mxu0 0.0
  %9569 = vmatpush2.msra.mxu0 %v9335
  %9570 = vmatprep.subr.mxu0 0.0
  %9571 = vmatpush2.msra.mxu0 %v9332
  %9572 = vmatprep.subr.mxu0 0.0
  %9573 = vmatpush2.msra.mxu0 %v9329
  %9574 = vmatprep.subr.mxu0 0.0
  %9575 = vmatpush2.msra.mxu0 %v9326
  %9576 = vmatprep.subr.mxu0 0.0
  %9577 = vmatpush2.msra.mxu0 %v9323
  %9578 = vmatprep.subr.mxu0 0.0
  %9579 = vmatpush2.msra.mxu0 %v9320
  %9580 = vmatprep.subr.mxu0 0.0
  %9581 = vmatpush2.msra.mxu0 %v9317
  %9582 = vmatprep.subr.mxu0 0.0
  %9583 = vmatpush2.msra.mxu0 %v9314
  %9584 = vmatprep.subr.mxu0 0.0
  %9585 = vmatpush2.msra.mxu0 %v9311
  %9586 = vmatprep.subr.mxu0 0.0
  %9587 = vmatpush2.msra.mxu0 %v9308
  %9588 = vmatprep.subr.mxu0 0.0
  %9589 = vmatpush2.msra.mxu0 %v9305
  %9590 = vmatprep.subr.mxu0 0.0
  %9591 = vmatpush2.msra.mxu0 %v9302
  %9592 = vmatprep.subr.mxu0 0.0
  %9593 = vmatpush2.msra.mxu0 %v9299
  %9594 = vmatprep.subr.mxu0 0.0
  %9595 = vmatpush2.msra.mxu0 %v9296
  %9596 = vmatprep.mubr.f32.mxu0 %v9243
  %9597 = vmatmul.mubr.f32.gmra.mxu0 %v9241
  %v9598 = vpop.f32.mrf.mxu0
  %v9599 = vadd.f32 1e-30, %v9598
  %v9600 = vpop.f32.mrf.mxu0
  %9601 = vdwg.mxu0
  %9602 = vmatprep.subr.mxu0 0.0
  %9603 = vmatpush1.msra.mxu0 %v9389
  %9604 = vmatprep.subr.mxu0 0.0
  %9605 = vmatpush1.msra.mxu0 %v9386
  %9606 = vmatprep.subr.mxu0 0.0
  %9607 = vmatpush1.msra.mxu0 %v9383
  %9608 = vmatprep.subr.mxu0 0.0
  %9609 = vmatpush1.msra.mxu0 %v9380
  %9610 = vmatprep.subr.mxu0 0.0
  %9611 = vmatpush1.msra.mxu0 %v9377
  %9612 = vmatprep.subr.mxu0 0.0
  %9613 = vmatpush1.msra.mxu0 %v9374
  %9614 = vmatprep.subr.mxu0 0.0
  %9615 = vmatpush1.msra.mxu0 %v9371
  %9616 = vmatprep.subr.mxu0 0.0
  %9617 = vmatpush1.msra.mxu0 %v9368
  %9618 = vmatprep.subr.mxu0 0.0
  %9619 = vmatpush1.msra.mxu0 %v9365
  %9620 = vmatprep.subr.mxu0 0.0
  %9621 = vmatpush1.msra.mxu0 %v9362
  %9622 = vmatprep.subr.mxu0 0.0
  %9623 = vmatpush1.msra.mxu0 %v9359
  %9624 = vmatprep.subr.mxu0 0.0
  %9625 = vmatpush1.msra.mxu0 %v9356
  %9626 = vmatprep.subr.mxu0 0.0
  %9627 = vmatpush1.msra.mxu0 %v9353
  %9628 = vmatprep.subr.mxu0 0.0
  %9629 = vmatpush1.msra.mxu0 %v9350
  %9630 = vmatprep.subr.mxu0 0.0
  %9631 = vmatpush1.msra.mxu0 %v9347
  %9632 = vmatprep.subr.mxu0 0.0
  %9633 = vmatpush1.msra.mxu0 %v9344
  %9634 = vmatprep.subr.mxu0 0.0
  %9635 = vmatpush2.msra.mxu0 0.0
  %9636 = vmatprep.subr.mxu0 0.0
  %9637 = vmatpush2.msra.mxu0 0.0
  %9638 = vmatprep.subr.mxu0 0.0
  %9639 = vmatpush2.msra.mxu0 0.0
  %9640 = vmatprep.subr.mxu0 0.0
  %9641 = vmatpush2.msra.mxu0 0.0
  %9642 = vmatprep.subr.mxu0 0.0
  %9643 = vmatpush2.msra.mxu0 0.0
  %9644 = vmatprep.subr.mxu0 0.0
  %9645 = vmatpush2.msra.mxu0 0.0
  %9646 = vmatprep.subr.mxu0 0.0
  %9647 = vmatpush2.msra.mxu0 0.0
  %9648 = vmatprep.subr.mxu0 0.0
  %9649 = vmatpush2.msra.mxu0 0.0
  %9650 = vmatprep.subr.mxu0 0.0
  %9651 = vmatpush2.msra.mxu0 0.0
  %9652 = vmatprep.subr.mxu0 0.0
  %9653 = vmatpush2.msra.mxu0 0.0
  %9654 = vmatprep.subr.mxu0 0.0
  %9655 = vmatpush2.msra.mxu0 0.0
  %9656 = vmatprep.subr.mxu0 0.0
  %9657 = vmatpush2.msra.mxu0 0.0
  %9658 = vmatprep.subr.mxu0 0.0
  %9659 = vmatpush2.msra.mxu0 0.0
  %9660 = vmatprep.subr.mxu0 0.0
  %9661 = vmatpush2.msra.mxu0 0.0
  %9662 = vmatprep.subr.mxu0 0.0
  %9663 = vmatpush2.msra.mxu0 0.0
  %9664 = vmatprep.subr.mxu0 0.0
  %9665 = vmatpush2.msra.mxu0 0.0
  %9666 = vmatprep.mubr.f32.mxu0 0.0
  %9667 = vmatmul.mubr.f32.gmra.mxu0 %v9245
  %v9668 = vpop.f32.mrf.mxu0
  %v9669 = vadd.f32 %v9599, %v9668
  %v9670 = vpop.f32.mrf.mxu0
  %9671 = vdwg.mxu0
  %v9672 = vrcp.pop %v9528
  %v9673 = vrcp.pop %v9530
  %v9674 = vrcp.pop %v9669
  %v9675 = vmul.f32 %v9241, %v9672
  %v9676 = vmul.f32 %v9243, %v9673
  %v9677 = vmul.f32 %v9245, %v9674
  %v9681 = vcombine.low %v9675, %v9676
  %v9683 = vunpack.c.l.s4 1983009808
  %v9684 = vunpack.c.0.s8 %v9683
  %v9685 = vlaneseq
  %v9686 = vshrl.u32 %v9685, 7
  %v9687 = vsub.s32 %v9684, %v9686
  %v9688 = vrot.slane %v9681, %v9687
  %v9690 = vunpack.c.l.s4 1983009808
  %v9691 = vunpack.c.0.s8 %v9690
  %v9692 = vlaneseq
  %v9693 = vshrl.u32 %v9692, 7
  %v9694 = vsub.s32 %v9691, %v9693
  %v9695 = vrot.slane %v9677, %v9694
  %v9696 = vcombine.low %v9688, %v9695
  %9698 = vst [vmem:[%s10] sm:$0x3f] %v9696
  // Predicated region
  $region42: #{_lambda_.5} parent=0 // pred_check
    _
  $region43: #{_lambda_.5} parent=0 // pred_check_branch
    %9700 = sbr.rel (0) target = $region45
  $region44: #{_lambda_.5} parent=0 // pred_region
    _
  $region45: #{_lambda_.5} parent=0 // pred_fallthru
    _
  // Predicated region
  $region46: #{_lambda_.5} parent=0 // pred_check
    _
  $region47: #{_lambda_.5} parent=0 // pred_check_branch
    %9702 = sbr.rel (0) target = $region49
  $region48: #{_lambda_.5} parent=0 // pred_region
    _
  $region49: #{_lambda_.5} parent=0 // pred_fallthru
    _

</llo_original>
